<compile_context>
chip_gen: v5e
topology: v5e:2x2
jax: 0.10.0
libtpu: 0.0.40
codegen_flags: <defaults>
</compile_context>

<pallas_src>
import functools

import jax
import jax.numpy as jnp
import numpy as np
from jax.experimental import pallas as pl
from jax.experimental.pallas import tpu as pltpu


def _double_conv_kernel(x_ref, w1_ref, b1_ref, w2_ref, b2_ref, o_ref, mid_ref,
                        *, TH, W, compute_dtype):
    """One grid step == one (batch, H-strip) tile.

    x_ref:   (TH+4, W+2, C1p)  strip input: 2-row H halo, 1-col W halo, ch-padded
    w1_ref:  (9, C1p, Cmp)     conv1 weights (BN scale folded), tap index dy*3+dx
    b1_ref:  (1, Cmp)          folded BN bias, stage 1 (f32)
    w2_ref:  (9, Cmp, C2p)     conv2 weights (BN scale folded)
    b2_ref:  (1, C2p)          folded BN bias, stage 2 (f32)
    o_ref:   (TH, W, C2p)      output strip
    mid_ref: (TH+2, W+2, Cmp)  f32 scratch: SiLU(BN(conv1)) + zero W-halo cols
    """

    def conv3x3(col, w_ref, rows, cout):
        # col(dx) -> (rows+2, W, cin) shifted by dx along the W (sublane) axis.
        # Hoisting dx means only 3 shifted loads; dy slices of the loaded value
        # along the leading axis are free.  Per-tap accumulated dots (no im2col).
        cols = []
        for dx in range(3):
            c = col(dx)
            if c.dtype != compute_dtype:
                c = c.astype(compute_dtype)
            cols.append(c)
        cin = cols[0].shape[-1]
        acc = None
        for dy in range(3):
            for dx in range(3):
                tap = cols[dx][dy:dy + rows].reshape(rows * W, cin)
                part = jnp.dot(tap, w_ref[3 * dy + dx],
                               preferred_element_type=jnp.float32)
                acc = part if acc is None else acc + part
        return acc.reshape(rows, W, cout)                    # f32

    cm = mid_ref.shape[-1]
    c2 = o_ref.shape[-1]

    # ---- Stage 1: conv1 + folded-BN bias + SiLU -> mid scratch (TH+2 rows) --
    h1 = conv3x3(lambda dx: x_ref[:, dx:dx + W, :], w1_ref, TH + 2, cm)
    h1 = h1 + b1_ref[0]
    h1 = h1 * jax.nn.sigmoid(h1)                             # SiLU

    # Rows of `mid` that lie outside the image are conv2's zero padding:
    # local row 0 on the first strip, local row TH+1 on the last strip.
    k = pl.program_id(1)
    row = jax.lax.broadcasted_iota(jnp.int32, (TH + 2, 1, 1), 0)
    keep = jnp.logical_and(
        jnp.logical_or(k > 0, row > 0),
        jnp.logical_or(k < pl.num_programs(1) - 1, row < TH + 1))
    h1 = jnp.where(keep, h1, 0.0)

    # Zero only the two W-halo columns (cheap) -- together with the interior
    # store below this rewrites every scratch element each step, so no stale
    # data can leak across grid steps or cores.
    zcol = jnp.zeros((TH + 2, 1, cm), jnp.float32)
    mid_ref[:, 0:1, :] = zcol
    mid_ref[:, W + 1:W + 2, :] = zcol
    mid_ref[:, 1:W + 1, :] = h1

    # ---- Stage 2: conv2 + folded-BN bias + SiLU -> output strip -------------
    h2 = conv3x3(lambda dx: mid_ref[:, dx:dx + W, :], w2_ref, TH, c2)
    h2 = h2 + b2_ref[0]
    h2 = h2 * jax.nn.sigmoid(h2)                             # SiLU
    o_ref[...] = h2.astype(o_ref.dtype)


def _round_up(x, m):
    return ((x + m - 1) // m) * m


def _fold_bn(gamma, beta, mean, var, eps=1e-5):
    scale = gamma / jnp.sqrt(var + eps)
    bias = beta - mean * scale
    return scale, bias


def _const_block_spec(shape, single_buffer):
    """Full-array block with a constant index_map; single-buffered if possible."""
    ndim = len(shape)

    def idx(n, k, _nd=ndim):
        return (0,) * _nd

    if single_buffer:
        try:
            return pl.BlockSpec(shape, idx, pipeline_mode=pl.Buffered(1))
        except Exception:  # older/newer JAX without pipeline_mode / Buffered
            pass
    return pl.BlockSpec(shape, idx)


def _auto_strip_rows(H, W, c1p, cmp_, c2p, in_bytes, out_bytes,
                     budget=24 << 20):
    """Largest strip height (divisor of H) whose working set fits the budget."""
    per_row = ((W + 2) * c1p * in_bytes * 2        # input strip, double-buffered
               + (W + 2) * cmp_ * 4                # f32 mid scratch
               + W * c2p * out_bytes * 2)          # output strip, double-buffered
    th = max(1, min(H, budget // max(per_row, 1)))
    while H % th:
        th -= 1
    return th


def double_conv(x_nchw, params, *, strip_rows=None, lane=128,
                compute_dtype=jnp.float32):
    """Forward pass matching DoubleConv(x); PyTorch-style NCHW in / NCHW out."""
    N, Cin, H, W = x_nchw.shape
    w1, w2 = params["w1"], params["w2"]
    Cmid, Cout = w1.shape[-1], w2.shape[-1]

    # Fold inference-mode BN: scale into the conv weights, keep only the bias.
    s1, b1 = _fold_bn(params["gamma1"], params["beta1"],
                      params["mean1"], params["var1"])
    s2, b2 = _fold_bn(params["gamma2"], params["beta2"],
                      params["mean2"], params["var2"])
    w1 = w1 * s1[None, None, None, :]
    w2 = w2 * s2[None, None, None, :]

    # Lane-dense channel padding (zeros are exact no-ops for the math).
    C1p = _round_up(Cin, lane)
    Cmp = _round_up(Cmid, lane)
    C2p = _round_up(Cout, lane)

    in_bytes = jnp.dtype(compute_dtype).itemsize
    out_bytes = jnp.dtype(x_nchw.dtype).itemsize

    # H-strip tiling: strip height TH (divides H), 2-row halo per side.
    if strip_rows is None:
        strip_rows = _auto_strip_rows(H, W, C1p, Cmp, C2p, in_bytes, out_bytes)
    TH = max(1, min(int(strip_rows), H))
    while H % TH:
        TH -= 1
    n_strips = H // TH

    # NCHW -> NHWC, 2-row H halo + 1-col W halo + channel pad, pre-cast.
    x = jnp.transpose(x_nchw, (0, 2, 3, 1))
    x = jnp.pad(x, ((0, 0), (2, 2), (1, 1), (0, C1p - Cin)))
    x = x.astype(compute_dtype)
    # Materialize per-strip slabs (TH+4 rows each) so plain Blocked BlockSpecs
    # express the overlapping halo windows.
    strips = [jax.lax.slice_in_dim(x, k * TH, k * TH + TH + 4, axis=1)
              for k in range(n_strips)]
    x_strips = jnp.stack(strips, axis=1).reshape(N * n_strips, TH + 4, W + 2, C1p)

    # Weights HWIO (3,3,Cin,Cout) -> channel pad -> (9, Cin_p, Cout_p),
    # tap index t = 3*dy + dx, matching the kernel.  Pre-cast to compute dtype.
    w1p = jnp.pad(w1, ((0, 0), (0, 0), (0, C1p - Cin),
                       (0, Cmp - Cmid))).reshape(9, C1p, Cmp).astype(compute_dtype)
    w2p = jnp.pad(w2, ((0, 0), (0, 0), (0, Cmp - Cmid),
                       (0, C2p - Cout))).reshape(9, Cmp, C2p).astype(compute_dtype)
    b1p = jnp.pad(b1, (0, Cmp - Cmid)).reshape(1, Cmp).astype(jnp.float32)
    b2p = jnp.pad(b2, (0, C2p - Cout)).reshape(1, C2p).astype(jnp.float32)

    flops = 2 * N * n_strips * 9 * ((TH + 2) * W * C1p * Cmp
                                    + TH * W * Cmp * C2p)
    transc = N * n_strips * ((TH + 2) * W * Cmp + TH * W * C2p)
    bytes_acc = (x_strips.size * in_bytes
                 + 9 * (C1p * Cmp + Cmp * C2p) * in_bytes
                 + (Cmp + C2p) * 4
                 + N * H * W * C2p * out_bytes)
    cost = pl.CostEstimate(flops=int(flops), transcendentals=int(transc),
                           bytes_accessed=int(bytes_acc))

    kernel = functools.partial(_double_conv_kernel, TH=TH, W=W,
                               compute_dtype=compute_dtype)

    def _run(single_buffer_weights):
        grid_spec = pltpu.PrefetchScalarGridSpec(
            num_scalar_prefetch=0,
            grid=(N, n_strips),
            in_specs=[
                pl.BlockSpec((None, TH + 4, W + 2, C1p),
                             lambda n, k: (n * n_strips + k, 0, 0, 0)),
                _const_block_spec((9, C1p, Cmp), single_buffer_weights),
                _const_block_spec((1, Cmp), single_buffer_weights),
                _const_block_spec((9, Cmp, C2p), single_buffer_weights),
                _const_block_spec((1, C2p), single_buffer_weights),
            ],
            out_specs=pl.BlockSpec((None, TH, W, C2p),
                                   lambda n, k: (n, k, 0, 0)),
            scratch_shapes=[pltpu.VMEM((TH + 2, W + 2, Cmp), jnp.float32)],
        )
        return pl.pallas_call(
            kernel,
            out_shape=jax.ShapeDtypeStruct((N, H, W, C2p), x_nchw.dtype),
            grid_spec=grid_spec,
            compiler_params=pltpu.CompilerParams(
                dimension_semantics=("parallel", "parallel"),
                vmem_limit_bytes=64 * 1024 * 1024),
            cost_estimate=cost,
        )(x_strips, w1p, b1p, w2p, b2p)

    try:
        y = _run(True)
    except Exception:
        # Fallback: default double-buffered weight blocks (always supported).
        y = _run(False)

    y = y[..., :Cout]                                        # drop channel pad
    return jnp.transpose(y, (0, 3, 1, 2))                    # NHWC -> NCHW


def init_double_conv_params(key, in_channels, out_channels, mid_channels=None):
    if not mid_channels:
        mid_channels = out_channels
    ks = jax.random.split(key, 10)

    def conv_w(k, cin, cout):
        fan_in = cin * 9
        bound = 1.0 / np.sqrt(fan_in)
        return jax.random.uniform(k, (3, 3, cin, cout), jnp.float32,
                                  -bound, bound)

    return {
        "w1": conv_w(ks[0], in_channels, mid_channels),
        "gamma1": jax.random.uniform(ks[1], (mid_channels,), jnp.float32, 0.5, 1.5),
        "beta1": 0.1 * jax.random.normal(ks[2], (mid_channels,), jnp.float32),
        "mean1": 0.1 * jax.random.normal(ks[3], (mid_channels,), jnp.float32),
        "var1": jax.random.uniform(ks[4], (mid_channels,), jnp.float32, 0.5, 1.5),
        "w2": conv_w(ks[5], mid_channels, out_channels),
        "gamma2": jax.random.uniform(ks[6], (out_channels,), jnp.float32, 0.5, 1.5),
        "beta2": 0.1 * jax.random.normal(ks[7], (out_channels,), jnp.float32),
        "mean2": 0.1 * jax.random.normal(ks[8], (out_channels,), jnp.float32),
        "var2": jax.random.uniform(ks[9], (out_channels,), jnp.float32, 0.5, 1.5),
    }


def _reference_double_conv(x_nchw, params):
    """Pure-JAX reference (lax conv) for correctness check."""
    def block(x, w, gamma, beta, mean, var):
        y = jax.lax.conv_general_dilated(
            x, w, window_strides=(1, 1), padding=((1, 1), (1, 1)),
            dimension_numbers=("NCHW", "HWIO", "NCHW"))
        s, b = _fold_bn(gamma, beta, mean, var)
        y = y * s[None, :, None, None] + b[None, :, None, None]
        return y * jax.nn.sigmoid(y)

    y = block(x_nchw, params["w1"], params["gamma1"], params["beta1"],
              params["mean1"], params["var1"])
    y = block(y, params["w2"], params["gamma2"], params["beta2"],
              params["mean2"], params["var2"])
    return y


if __name__ == "__main__":
    key = jax.random.PRNGKey(0)
    k_x, k_p = jax.random.split(key)

    N, C_IN, H, W = 2, 4, 16, 16
    C_OUT = 8

    x = jax.random.normal(k_x, (N, C_IN, H, W), jnp.float32)
    params = init_double_conv_params(k_p, C_IN, C_OUT)

    # strip_rows=8 -> 2 H-strips per image: exercises the strip-halo path.
    out = double_conv(x, params, strip_rows=8)
    out = jax.block_until_ready(out)

    ref = _reference_double_conv(x, params)
    assert out.shape == (N, C_OUT, H, W)
    np.testing.assert_allclose(np.asarray(out), np.asarray(ref),
                               rtol=1e-4, atol=1e-4)
    print("KERNEL_OK")
</pallas_src>

<mosaic_0001>
module attributes {stable_mosaic.version = 11 : i64} {
  func.func @_double_conv_kernel(%arg0: i32, %arg1: i32, %arg2: memref<1x12x18x128xf32, #tpu.memory_space<vmem>>, %arg3: memref<9x128x128xf32, #tpu.memory_space<vmem>>, %arg4: memref<1x128xf32, #tpu.memory_space<vmem>>, %arg5: memref<9x128x128xf32, #tpu.memory_space<vmem>>, %arg6: memref<1x128xf32, #tpu.memory_space<vmem>>, %arg7: memref<1x8x16x128xf32, #tpu.memory_space<vmem>>, %arg8: memref<10x18x128xf32, #tpu.memory_space<vmem>>) attributes {dimension_semantics = [#tpu.dimension_semantics<parallel>, #tpu.dimension_semantics<parallel>], iteration_bounds = array<i64: 2, 2>, scalar_prefetch = 0 : i64, scratch_operands = 1 : i64, tpu.core_type = #tpu.core_type<tc>, window_params = [{transform_indices = @transform_0, window_bounds = array<i64: 1, 12, 18, 128>}, {pipeline_mode = #tpu.pipeline_mode<synchronous>, transform_indices = @transform_1, window_bounds = array<i64: 9, 128, 128>}, {pipeline_mode = #tpu.pipeline_mode<synchronous>, transform_indices = @transform_2, window_bounds = array<i64: 1, 128>}, {pipeline_mode = #tpu.pipeline_mode<synchronous>, transform_indices = @transform_3, window_bounds = array<i64: 9, 128, 128>}, {pipeline_mode = #tpu.pipeline_mode<synchronous>, transform_indices = @transform_4, window_bounds = array<i64: 1, 128>}, {transform_indices = @transform_5, window_bounds = array<i64: 1, 8, 16, 128>}]} {
    %c0 = arith.constant 0 : index
    %c0_0 = arith.constant 0 : index
    %c0_1 = arith.constant 0 : index
    %c0_2 = arith.constant 0 : index
    %0 = vector.load %arg2[%c0, %c0_0, %c0_1, %c0_2] : memref<1x12x18x128xf32, #tpu.memory_space<vmem>>, vector<1x12x16x128xf32>
    %1 = vector.shape_cast %0 : vector<1x12x16x128xf32> to vector<12x16x128xf32>
    %c0_3 = arith.constant 0 : index
    %c0_4 = arith.constant 0 : index
    %c1 = arith.constant 1 : index
    %c0_5 = arith.constant 0 : index
    %2 = vector.load %arg2[%c0_3, %c0_4, %c1, %c0_5] : memref<1x12x18x128xf32, #tpu.memory_space<vmem>>, vector<1x12x16x128xf32>
    %3 = vector.shape_cast %2 : vector<1x12x16x128xf32> to vector<12x16x128xf32>
    %c0_6 = arith.constant 0 : index
    %c0_7 = arith.constant 0 : index
    %c2 = arith.constant 2 : index
    %c0_8 = arith.constant 0 : index
    %4 = vector.load %arg2[%c0_6, %c0_7, %c2, %c0_8] : memref<1x12x18x128xf32, #tpu.memory_space<vmem>>, vector<1x12x16x128xf32>
    %5 = vector.shape_cast %4 : vector<1x12x16x128xf32> to vector<12x16x128xf32>
    %6 = vector.extract_strided_slice %1 {offsets = [0, 0, 0], sizes = [10, 16, 128], strides = [1, 1, 1]} : vector<12x16x128xf32> to vector<10x16x128xf32>
    %7 = vector.shape_cast %6 : vector<10x16x128xf32> to vector<160x128xf32>
    %c0_9 = arith.constant 0 : index
    %c0_10 = arith.constant 0 : index
    %c0_11 = arith.constant 0 : index
    %8 = vector.load %arg3[%c0_9, %c0_10, %c0_11] : memref<9x128x128xf32, #tpu.memory_space<vmem>>, vector<1x128x128xf32>
    %9 = vector.shape_cast %8 : vector<1x128x128xf32> to vector<128x128xf32>
    %cst = arith.constant dense<0.000000e+00> : vector<160x128xf32>
    %10 = tpu.matmul %7, %9, %cst {dimension_numbers = #tpu.dot_dimension_numbers<[1], [0], [0], [1], [0, 0, 1, 1], [], []>} : vector<160x128xf32>, vector<128x128xf32>, vector<160x128xf32> -> vector<160x128xf32>
    %11 = vector.extract_strided_slice %3 {offsets = [0, 0, 0], sizes = [10, 16, 128], strides = [1, 1, 1]} : vector<12x16x128xf32> to vector<10x16x128xf32>
    %12 = vector.shape_cast %11 : vector<10x16x128xf32> to vector<160x128xf32>
    %c1_12 = arith.constant 1 : index
    %c0_13 = arith.constant 0 : index
    %c0_14 = arith.constant 0 : index
    %13 = vector.load %arg3[%c1_12, %c0_13, %c0_14] : memref<9x128x128xf32, #tpu.memory_space<vmem>>, vector<1x128x128xf32>
    %14 = vector.shape_cast %13 : vector<1x128x128xf32> to vector<128x128xf32>
    %cst_15 = arith.constant dense<0.000000e+00> : vector<160x128xf32>
    %15 = tpu.matmul %12, %14, %cst_15 {dimension_numbers = #tpu.dot_dimension_numbers<[1], [0], [0], [1], [0, 0, 1, 1], [], []>} : vector<160x128xf32>, vector<128x128xf32>, vector<160x128xf32> -> vector<160x128xf32>
    %16 = arith.addf %10, %15 : vector<160x128xf32>
    %17 = vector.extract_strided_slice %5 {offsets = [0, 0, 0], sizes = [10, 16, 128], strides = [1, 1, 1]} : vector<12x16x128xf32> to vector<10x16x128xf32>
    %18 = vector.shape_cast %17 : vector<10x16x128xf32> to vector<160x128xf32>
    %c2_16 = arith.constant 2 : index
    %c0_17 = arith.constant 0 : index
    %c0_18 = arith.constant 0 : index
    %19 = vector.load %arg3[%c2_16, %c0_17, %c0_18] : memref<9x128x128xf32, #tpu.memory_space<vmem>>, vector<1x128x128xf32>
    %20 = vector.shape_cast %19 : vector<1x128x128xf32> to vector<128x128xf32>
    %cst_19 = arith.constant dense<0.000000e+00> : vector<160x128xf32>
    %21 = tpu.matmul %18, %20, %cst_19 {dimension_numbers = #tpu.dot_dimension_numbers<[1], [0], [0], [1], [0, 0, 1, 1], [], []>} : vector<160x128xf32>, vector<128x128xf32>, vector<160x128xf32> -> vector<160x128xf32>
    %22 = arith.addf %16, %21 : vector<160x128xf32>
    %23 = vector.extract_strided_slice %1 {offsets = [1, 0, 0], sizes = [10, 16, 128], strides = [1, 1, 1]} : vector<12x16x128xf32> to vector<10x16x128xf32>
    %24 = vector.shape_cast %23 : vector<10x16x128xf32> to vector<160x128xf32>
    %c3 = arith.constant 3 : index
    %c0_20 = arith.constant 0 : index
    %c0_21 = arith.constant 0 : index
    %25 = vector.load %arg3[%c3, %c0_20, %c0_21] : memref<9x128x128xf32, #tpu.memory_space<vmem>>, vector<1x128x128xf32>
    %26 = vector.shape_cast %25 : vector<1x128x128xf32> to vector<128x128xf32>
    %cst_22 = arith.constant dense<0.000000e+00> : vector<160x128xf32>
    %27 = tpu.matmul %24, %26, %cst_22 {dimension_numbers = #tpu.dot_dimension_numbers<[1], [0], [0], [1], [0, 0, 1, 1], [], []>} : vector<160x128xf32>, vector<128x128xf32>, vector<160x128xf32> -> vector<160x128xf32>
    %28 = arith.addf %22, %27 : vector<160x128xf32>
    %29 = vector.extract_strided_slice %3 {offsets = [1, 0, 0], sizes = [10, 16, 128], strides = [1, 1, 1]} : vector<12x16x128xf32> to vector<10x16x128xf32>
    %30 = vector.shape_cast %29 : vector<10x16x128xf32> to vector<160x128xf32>
    %c4 = arith.constant 4 : index
    %c0_23 = arith.constant 0 : index
    %c0_24 = arith.constant 0 : index
    %31 = vector.load %arg3[%c4, %c0_23, %c0_24] : memref<9x128x128xf32, #tpu.memory_space<vmem>>, vector<1x128x128xf32>
    %32 = vector.shape_cast %31 : vector<1x128x128xf32> to vector<128x128xf32>
    %cst_25 = arith.constant dense<0.000000e+00> : vector<160x128xf32>
    %33 = tpu.matmul %30, %32, %cst_25 {dimension_numbers = #tpu.dot_dimension_numbers<[1], [0], [0], [1], [0, 0, 1, 1], [], []>} : vector<160x128xf32>, vector<128x128xf32>, vector<160x128xf32> -> vector<160x128xf32>
    %34 = arith.addf %28, %33 : vector<160x128xf32>
    %35 = vector.extract_strided_slice %5 {offsets = [1, 0, 0], sizes = [10, 16, 128], strides = [1, 1, 1]} : vector<12x16x128xf32> to vector<10x16x128xf32>
    %36 = vector.shape_cast %35 : vector<10x16x128xf32> to vector<160x128xf32>
    %c5 = arith.constant 5 : index
    %c0_26 = arith.constant 0 : index
    %c0_27 = arith.constant 0 : index
    %37 = vector.load %arg3[%c5, %c0_26, %c0_27] : memref<9x128x128xf32, #tpu.memory_space<vmem>>, vector<1x128x128xf32>
    %38 = vector.shape_cast %37 : vector<1x128x128xf32> to vector<128x128xf32>
    %cst_28 = arith.constant dense<0.000000e+00> : vector<160x128xf32>
    %39 = tpu.matmul %36, %38, %cst_28 {dimension_numbers = #tpu.dot_dimension_numbers<[1], [0], [0], [1], [0, 0, 1, 1], [], []>} : vector<160x128xf32>, vector<128x128xf32>, vector<160x128xf32> -> vector<160x128xf32>
    %40 = arith.addf %34, %39 : vector<160x128xf32>
    %41 = vector.extract_strided_slice %1 {offsets = [2, 0, 0], sizes = [10, 16, 128], strides = [1, 1, 1]} : vector<12x16x128xf32> to vector<10x16x128xf32>
    %42 = vector.shape_cast %41 : vector<10x16x128xf32> to vector<160x128xf32>
    %c6 = arith.constant 6 : index
    %c0_29 = arith.constant 0 : index
    %c0_30 = arith.constant 0 : index
    %43 = vector.load %arg3[%c6, %c0_29, %c0_30] : memref<9x128x128xf32, #tpu.memory_space<vmem>>, vector<1x128x128xf32>
    %44 = vector.shape_cast %43 : vector<1x128x128xf32> to vector<128x128xf32>
    %cst_31 = arith.constant dense<0.000000e+00> : vector<160x128xf32>
    %45 = tpu.matmul %42, %44, %cst_31 {dimension_numbers = #tpu.dot_dimension_numbers<[1], [0], [0], [1], [0, 0, 1, 1], [], []>} : vector<160x128xf32>, vector<128x128xf32>, vector<160x128xf32> -> vector<160x128xf32>
    %46 = arith.addf %40, %45 : vector<160x128xf32>
    %47 = vector.extract_strided_slice %3 {offsets = [2, 0, 0], sizes = [10, 16, 128], strides = [1, 1, 1]} : vector<12x16x128xf32> to vector<10x16x128xf32>
    %48 = vector.shape_cast %47 : vector<10x16x128xf32> to vector<160x128xf32>
    %c7 = arith.constant 7 : index
    %c0_32 = arith.constant 0 : index
    %c0_33 = arith.constant 0 : index
    %49 = vector.load %arg3[%c7, %c0_32, %c0_33] : memref<9x128x128xf32, #tpu.memory_space<vmem>>, vector<1x128x128xf32>
    %50 = vector.shape_cast %49 : vector<1x128x128xf32> to vector<128x128xf32>
    %cst_34 = arith.constant dense<0.000000e+00> : vector<160x128xf32>
    %51 = tpu.matmul %48, %50, %cst_34 {dimension_numbers = #tpu.dot_dimension_numbers<[1], [0], [0], [1], [0, 0, 1, 1], [], []>} : vector<160x128xf32>, vector<128x128xf32>, vector<160x128xf32> -> vector<160x128xf32>
    %52 = arith.addf %46, %51 : vector<160x128xf32>
    %53 = vector.extract_strided_slice %5 {offsets = [2, 0, 0], sizes = [10, 16, 128], strides = [1, 1, 1]} : vector<12x16x128xf32> to vector<10x16x128xf32>
    %54 = vector.shape_cast %53 : vector<10x16x128xf32> to vector<160x128xf32>
    %c8 = arith.constant 8 : index
    %c0_35 = arith.constant 0 : index
    %c0_36 = arith.constant 0 : index
    %55 = vector.load %arg3[%c8, %c0_35, %c0_36] : memref<9x128x128xf32, #tpu.memory_space<vmem>>, vector<1x128x128xf32>
    %56 = vector.shape_cast %55 : vector<1x128x128xf32> to vector<128x128xf32>
    %cst_37 = arith.constant dense<0.000000e+00> : vector<160x128xf32>
    %57 = tpu.matmul %54, %56, %cst_37 {dimension_numbers = #tpu.dot_dimension_numbers<[1], [0], [0], [1], [0, 0, 1, 1], [], []>} : vector<160x128xf32>, vector<128x128xf32>, vector<160x128xf32> -> vector<160x128xf32>
    %58 = arith.addf %52, %57 : vector<160x128xf32>
    %59 = vector.shape_cast %58 : vector<160x128xf32> to vector<10x16x128xf32>
    %c0_38 = arith.constant 0 : index
    %c0_39 = arith.constant 0 : index
    %60 = vector.load %arg4[%c0_38, %c0_39] : memref<1x128xf32, #tpu.memory_space<vmem>>, vector<1x128xf32>
    %61 = vector.shape_cast %60 : vector<1x128xf32> to vector<128xf32>
    %62 = vector.shape_cast %61 : vector<128xf32> to vector<1x1x128xf32>
    %63 = vector.broadcast %62 : vector<1x1x128xf32> to vector<10x16x128xf32>
    %64 = arith.addf %59, %63 : vector<10x16x128xf32>
    %65 = arith.negf %64 : vector<10x16x128xf32>
    %66 = math.exp %65 : vector<10x16x128xf32>
    %cst_40 = arith.constant 1.000000e+00 : f32
    %67 = vector.broadcast %cst_40 : f32 to vector<10x16x128xf32>
    %68 = arith.addf %67, %66 : vector<10x16x128xf32>
    %69 = arith.divf %67, %68 : vector<10x16x128xf32>
    %70 = arith.mulf %64, %69 : vector<10x16x128xf32>
    %71 = tpu.iota {dimensions = array<i32: 0>} : vector<10x1x1xi32>
    %c0_i32 = arith.constant 0 : i32
    %72 = arith.cmpi sgt, %arg1, %c0_i32 : i32
    %c0_i32_41 = arith.constant 0 : i32
    %73 = vector.broadcast %c0_i32_41 : i32 to vector<10x1x1xi32>
    %74 = arith.cmpi sgt, %71, %73 : vector<10x1x1xi32>
    %75 = vector.broadcast %72 : i1 to vector<10x1x1xi1>
    %76 = arith.ori %75, %74 : vector<10x1x1xi1>
    %c1_i32 = arith.constant 1 : i32
    %77 = arith.cmpi slt, %arg1, %c1_i32 : i32
    %c9_i32 = arith.constant 9 : i32
    %78 = vector.broadcast %c9_i32 : i32 to vector<10x1x1xi32>
    %79 = arith.cmpi slt, %71, %78 : vector<10x1x1xi32>
    %80 = vector.broadcast %77 : i1 to vector<10x1x1xi1>
    %81 = arith.ori %80, %79 : vector<10x1x1xi1>
    %82 = arith.andi %76, %81 : vector<10x1x1xi1>
    %cst_42 = arith.constant 0.000000e+00 : f32
    %83 = vector.shape_cast %82 : vector<10x1x1xi1> to vector<10x1x1xi1>
    %84 = vector.broadcast %83 : vector<10x1x1xi1> to vector<10x16x128xi1>
    %85 = vector.broadcast %cst_42 : f32 to vector<10x16x128xf32>
    %86 = arith.select %84, %70, %85 : vector<10x16x128xi1>, vector<10x16x128xf32>
    %cst_43 = arith.constant 0.000000e+00 : f32
    %87 = vector.broadcast %cst_43 : f32 to vector<10x1x128xf32>
    %c0_44 = arith.constant 0 : index
    %c0_45 = arith.constant 0 : index
    %c0_46 = arith.constant 0 : index
    %88 = vector.load %arg8[%c0_44, %c0_45, %c0_46] : memref<10x18x128xf32, #tpu.memory_space<vmem>>, vector<10x1x128xf32>
    tpu.vector_store %arg8[%c0_44, %c0_45, %c0_46], %87 {strides = array<i32>} : memref<10x18x128xf32, #tpu.memory_space<vmem>>, vector<10x1x128xf32>,
    %c0_47 = arith.constant 0 : index
    %c17 = arith.constant 17 : index
    %c0_48 = arith.constant 0 : index
    %89 = vector.load %arg8[%c0_47, %c17, %c0_48] : memref<10x18x128xf32, #tpu.memory_space<vmem>>, vector<10x1x128xf32>
    tpu.vector_store %arg8[%c0_47, %c17, %c0_48], %87 {strides = array<i32>} : memref<10x18x128xf32, #tpu.memory_space<vmem>>, vector<10x1x128xf32>,
    %c0_49 = arith.constant 0 : index
    %c1_50 = arith.constant 1 : index
    %c0_51 = arith.constant 0 : index
    %90 = vector.load %arg8[%c0_49, %c1_50, %c0_51] : memref<10x18x128xf32, #tpu.memory_space<vmem>>, vector<10x16x128xf32>
    tpu.vector_store %arg8[%c0_49, %c1_50, %c0_51], %86 {strides = array<i32>} : memref<10x18x128xf32, #tpu.memory_space<vmem>>, vector<10x16x128xf32>,
    %c0_52 = arith.constant 0 : index
    %c0_53 = arith.constant 0 : index
    %c0_54 = arith.constant 0 : index
    %91 = vector.load %arg8[%c0_52, %c0_53, %c0_54] : memref<10x18x128xf32, #tpu.memory_space<vmem>>, vector<10x16x128xf32>
    %c0_55 = arith.constant 0 : index
    %c1_56 = arith.constant 1 : index
    %c0_57 = arith.constant 0 : index
    %92 = vector.load %arg8[%c0_55, %c1_56, %c0_57] : memref<10x18x128xf32, #tpu.memory_space<vmem>>, vector<10x16x128xf32>
    %c0_58 = arith.constant 0 : index
    %c2_59 = arith.constant 2 : index
    %c0_60 = arith.constant 0 : index
    %93 = vector.load %arg8[%c0_58, %c2_59, %c0_60] : memref<10x18x128xf32, #tpu.memory_space<vmem>>, vector<10x16x128xf32>
    %94 = vector.extract_strided_slice %91 {offsets = [0, 0, 0], sizes = [8, 16, 128], strides = [1, 1, 1]} : vector<10x16x128xf32> to vector<8x16x128xf32>
    %95 = vector.shape_cast %94 : vector<8x16x128xf32> to vector<128x128xf32>
    %c0_61 = arith.constant 0 : index
    %c0_62 = arith.constant 0 : index
    %c0_63 = arith.constant 0 : index
    %96 = vector.load %arg5[%c0_61, %c0_62, %c0_63] : memref<9x128x128xf32, #tpu.memory_space<vmem>>, vector<1x128x128xf32>
    %97 = vector.shape_cast %96 : vector<1x128x128xf32> to vector<128x128xf32>
    %cst_64 = arith.constant dense<0.000000e+00> : vector<128x128xf32>
    %98 = tpu.matmul %95, %97, %cst_64 {dimension_numbers = #tpu.dot_dimension_numbers<[1], [0], [0], [1], [0, 0, 1, 1], [], []>} : vector<128x128xf32>, vector<128x128xf32>, vector<128x128xf32> -> vector<128x128xf32>
    %99 = vector.extract_strided_slice %92 {offsets = [0, 0, 0], sizes = [8, 16, 128], strides = [1, 1, 1]} : vector<10x16x128xf32> to vector<8x16x128xf32>
    %100 = vector.shape_cast %99 : vector<8x16x128xf32> to vector<128x128xf32>
    %c1_65 = arith.constant 1 : index
    %c0_66 = arith.constant 0 : index
    %c0_67 = arith.constant 0 : index
    %101 = vector.load %arg5[%c1_65, %c0_66, %c0_67] : memref<9x128x128xf32, #tpu.memory_space<vmem>>, vector<1x128x128xf32>
    %102 = vector.shape_cast %101 : vector<1x128x128xf32> to vector<128x128xf32>
    %cst_68 = arith.constant dense<0.000000e+00> : vector<128x128xf32>
    %103 = tpu.matmul %100, %102, %cst_68 {dimension_numbers = #tpu.dot_dimension_numbers<[1], [0], [0], [1], [0, 0, 1, 1], [], []>} : vector<128x128xf32>, vector<128x128xf32>, vector<128x128xf32> -> vector<128x128xf32>
    %104 = arith.addf %98, %103 : vector<128x128xf32>
    %105 = vector.extract_strided_slice %93 {offsets = [0, 0, 0], sizes = [8, 16, 128], strides = [1, 1, 1]} : vector<10x16x128xf32> to vector<8x16x128xf32>
    %106 = vector.shape_cast %105 : vector<8x16x128xf32> to vector<128x128xf32>
    %c2_69 = arith.constant 2 : index
    %c0_70 = arith.constant 0 : index
    %c0_71 = arith.constant 0 : index
    %107 = vector.load %arg5[%c2_69, %c0_70, %c0_71] : memref<9x128x128xf32, #tpu.memory_space<vmem>>, vector<1x128x128xf32>
    %108 = vector.shape_cast %107 : vector<1x128x128xf32> to vector<128x128xf32>
    %cst_72 = arith.constant dense<0.000000e+00> : vector<128x128xf32>
    %109 = tpu.matmul %106, %108, %cst_72 {dimension_numbers = #tpu.dot_dimension_numbers<[1], [0], [0], [1], [0, 0, 1, 1], [], []>} : vector<128x128xf32>, vector<128x128xf32>, vector<128x128xf32> -> vector<128x128xf32>
    %110 = arith.addf %104, %109 : vector<128x128xf32>
    %111 = vector.extract_strided_slice %91 {offsets = [1, 0, 0], sizes = [8, 16, 128], strides = [1, 1, 1]} : vector<10x16x128xf32> to vector<8x16x128xf32>
    %112 = vector.shape_cast %111 : vector<8x16x128xf32> to vector<128x128xf32>
    %c3_73 = arith.constant 3 : index
    %c0_74 = arith.constant 0 : index
    %c0_75 = arith.constant 0 : index
    %113 = vector.load %arg5[%c3_73, %c0_74, %c0_75] : memref<9x128x128xf32, #tpu.memory_space<vmem>>, vector<1x128x128xf32>
    %114 = vector.shape_cast %113 : vector<1x128x128xf32> to vector<128x128xf32>
    %cst_76 = arith.constant dense<0.000000e+00> : vector<128x128xf32>
    %115 = tpu.matmul %112, %114, %cst_76 {dimension_numbers = #tpu.dot_dimension_numbers<[1], [0], [0], [1], [0, 0, 1, 1], [], []>} : vector<128x128xf32>, vector<128x128xf32>, vector<128x128xf32> -> vector<128x128xf32>
    %116 = arith.addf %110, %115 : vector<128x128xf32>
    %117 = vector.extract_strided_slice %92 {offsets = [1, 0, 0], sizes = [8, 16, 128], strides = [1, 1, 1]} : vector<10x16x128xf32> to vector<8x16x128xf32>
    %118 = vector.shape_cast %117 : vector<8x16x128xf32> to vector<128x128xf32>
    %c4_77 = arith.constant 4 : index
    %c0_78 = arith.constant 0 : index
    %c0_79 = arith.constant 0 : index
    %119 = vector.load %arg5[%c4_77, %c0_78, %c0_79] : memref<9x128x128xf32, #tpu.memory_space<vmem>>, vector<1x128x128xf32>
    %120 = vector.shape_cast %119 : vector<1x128x128xf32> to vector<128x128xf32>
    %cst_80 = arith.constant dense<0.000000e+00> : vector<128x128xf32>
    %121 = tpu.matmul %118, %120, %cst_80 {dimension_numbers = #tpu.dot_dimension_numbers<[1], [0], [0], [1], [0, 0, 1, 1], [], []>} : vector<128x128xf32>, vector<128x128xf32>, vector<128x128xf32> -> vector<128x128xf32>
    %122 = arith.addf %116, %121 : vector<128x128xf32>
    %123 = vector.extract_strided_slice %93 {offsets = [1, 0, 0], sizes = [8, 16, 128], strides = [1, 1, 1]} : vector<10x16x128xf32> to vector<8x16x128xf32>
    %124 = vector.shape_cast %123 : vector<8x16x128xf32> to vector<128x128xf32>
    %c5_81 = arith.constant 5 : index
    %c0_82 = arith.constant 0 : index
    %c0_83 = arith.constant 0 : index
    %125 = vector.load %arg5[%c5_81, %c0_82, %c0_83] : memref<9x128x128xf32, #tpu.memory_space<vmem>>, vector<1x128x128xf32>
    %126 = vector.shape_cast %125 : vector<1x128x128xf32> to vector<128x128xf32>
    %cst_84 = arith.constant dense<0.000000e+00> : vector<128x128xf32>
    %127 = tpu.matmul %124, %126, %cst_84 {dimension_numbers = #tpu.dot_dimension_numbers<[1], [0], [0], [1], [0, 0, 1, 1], [], []>} : vector<128x128xf32>, vector<128x128xf32>, vector<128x128xf32> -> vector<128x128xf32>
    %128 = arith.addf %122, %127 : vector<128x128xf32>
    %129 = vector.extract_strided_slice %91 {offsets = [2, 0, 0], sizes = [8, 16, 128], strides = [1, 1, 1]} : vector<10x16x128xf32> to vector<8x16x128xf32>
    %130 = vector.shape_cast %129 : vector<8x16x128xf32> to vector<128x128xf32>
    %c6_85 = arith.constant 6 : index
    %c0_86 = arith.constant 0 : index
    %c0_87 = arith.constant 0 : index
    %131 = vector.load %arg5[%c6_85, %c0_86, %c0_87] : memref<9x128x128xf32, #tpu.memory_space<vmem>>, vector<1x128x128xf32>
    %132 = vector.shape_cast %131 : vector<1x128x128xf32> to vector<128x128xf32>
    %cst_88 = arith.constant dense<0.000000e+00> : vector<128x128xf32>
    %133 = tpu.matmul %130, %132, %cst_88 {dimension_numbers = #tpu.dot_dimension_numbers<[1], [0], [0], [1], [0, 0, 1, 1], [], []>} : vector<128x128xf32>, vector<128x128xf32>, vector<128x128xf32> -> vector<128x128xf32>
    %134 = arith.addf %128, %133 : vector<128x128xf32>
    %135 = vector.extract_strided_slice %92 {offsets = [2, 0, 0], sizes = [8, 16, 128], strides = [1, 1, 1]} : vector<10x16x128xf32> to vector<8x16x128xf32>
    %136 = vector.shape_cast %135 : vector<8x16x128xf32> to vector<128x128xf32>
    %c7_89 = arith.constant 7 : index
    %c0_90 = arith.constant 0 : index
    %c0_91 = arith.constant 0 : index
    %137 = vector.load %arg5[%c7_89, %c0_90, %c0_91] : memref<9x128x128xf32, #tpu.memory_space<vmem>>, vector<1x128x128xf32>
    %138 = vector.shape_cast %137 : vector<1x128x128xf32> to vector<128x128xf32>
    %cst_92 = arith.constant dense<0.000000e+00> : vector<128x128xf32>
    %139 = tpu.matmul %136, %138, %cst_92 {dimension_numbers = #tpu.dot_dimension_numbers<[1], [0], [0], [1], [0, 0, 1, 1], [], []>} : vector<128x128xf32>, vector<128x128xf32>, vector<128x128xf32> -> vector<128x128xf32>
    %140 = arith.addf %134, %139 : vector<128x128xf32>
    %141 = vector.extract_strided_slice %93 {offsets = [2, 0, 0], sizes = [8, 16, 128], strides = [1, 1, 1]} : vector<10x16x128xf32> to vector<8x16x128xf32>
    %142 = vector.shape_cast %141 : vector<8x16x128xf32> to vector<128x128xf32>
    %c8_93 = arith.constant 8 : index
    %c0_94 = arith.constant 0 : index
    %c0_95 = arith.constant 0 : index
    %143 = vector.load %arg5[%c8_93, %c0_94, %c0_95] : memref<9x128x128xf32, #tpu.memory_space<vmem>>, vector<1x128x128xf32>
    %144 = vector.shape_cast %143 : vector<1x128x128xf32> to vector<128x128xf32>
    %cst_96 = arith.constant dense<0.000000e+00> : vector<128x128xf32>
    %145 = tpu.matmul %142, %144, %cst_96 {dimension_numbers = #tpu.dot_dimension_numbers<[1], [0], [0], [1], [0, 0, 1, 1], [], []>} : vector<128x128xf32>, vector<128x128xf32>, vector<128x128xf32> -> vector<128x128xf32>
    %146 = arith.addf %140, %145 : vector<128x128xf32>
    %147 = vector.shape_cast %146 : vector<128x128xf32> to vector<8x16x128xf32>
    %c0_97 = arith.constant 0 : index
    %c0_98 = arith.constant 0 : index
    %148 = vector.load %arg6[%c0_97, %c0_98] : memref<1x128xf32, #tpu.memory_space<vmem>>, vector<1x128xf32>
    %149 = vector.shape_cast %148 : vector<1x128xf32> to vector<128xf32>
    %150 = vector.shape_cast %149 : vector<128xf32> to vector<1x1x128xf32>
    %151 = vector.broadcast %150 : vector<1x1x128xf32> to vector<8x16x128xf32>
    %152 = arith.addf %147, %151 : vector<8x16x128xf32>
    %153 = arith.negf %152 : vector<8x16x128xf32>
    %154 = math.exp %153 : vector<8x16x128xf32>
    %cst_99 = arith.constant 1.000000e+00 : f32
    %155 = vector.broadcast %cst_99 : f32 to vector<8x16x128xf32>
    %156 = arith.addf %155, %154 : vector<8x16x128xf32>
    %157 = arith.divf %155, %156 : vector<8x16x128xf32>
    %158 = arith.mulf %152, %157 : vector<8x16x128xf32>
    %c0_100 = arith.constant 0 : index
    %c0_101 = arith.constant 0 : index
    %c0_102 = arith.constant 0 : index
    %c0_103 = arith.constant 0 : index
    %159 = vector.load %arg7[%c0_100, %c0_101, %c0_102, %c0_103] : memref<1x8x16x128xf32, #tpu.memory_space<vmem>>, vector<1x8x16x128xf32>
    %160 = vector.shape_cast %159 : vector<1x8x16x128xf32> to vector<8x16x128xf32>
    %161 = vector.shape_cast %158 : vector<8x16x128xf32> to vector<1x8x16x128xf32>
    tpu.vector_store %arg7[%c0_100, %c0_101, %c0_102, %c0_103], %161 {strides = array<i32>} : memref<1x8x16x128xf32, #tpu.memory_space<vmem>>, vector<1x8x16x128xf32>,
    return
  }
  func.func @transform_0(%arg0: i32, %arg1: i32) -> (i32, i32, i32, i32) {
    %c2_i32 = arith.constant 2 : i32
    %0 = arith.muli %arg0, %c2_i32 : i32
    %1 = arith.addi %0, %arg1 : i32
    %c0_i32 = arith.constant 0 : i32
    %c0_i32_0 = arith.constant 0 : i32
    %c0_i32_1 = arith.constant 0 : i32
    %c0_i32_2 = arith.constant 0 : i32
    return %1, %c0_i32, %c0_i32_0, %c0_i32_1 : i32, i32, i32, i32
  }
  func.func @transform_1(%arg0: i32, %arg1: i32) -> (i32, i32, i32) {
    %c0_i32 = arith.constant 0 : i32
    %c0_i32_0 = arith.constant 0 : i32
    %c0_i32_1 = arith.constant 0 : i32
    %c0_i32_2 = arith.constant 0 : i32
    return %c0_i32, %c0_i32_0, %c0_i32_1 : i32, i32, i32
  }
  func.func @transform_2(%arg0: i32, %arg1: i32) -> (i32, i32) {
    %c0_i32 = arith.constant 0 : i32
    %c0_i32_0 = arith.constant 0 : i32
    %c0_i32_1 = arith.constant 0 : i32
    return %c0_i32, %c0_i32_0 : i32, i32
  }
  func.func @transform_3(%arg0: i32, %arg1: i32) -> (i32, i32, i32) {
    %c0_i32 = arith.constant 0 : i32
    %c0_i32_0 = arith.constant 0 : i32
    %c0_i32_1 = arith.constant 0 : i32
    %c0_i32_2 = arith.constant 0 : i32
    return %c0_i32, %c0_i32_0, %c0_i32_1 : i32, i32, i32
  }
  func.func @transform_4(%arg0: i32, %arg1: i32) -> (i32, i32) {
    %c0_i32 = arith.constant 0 : i32
    %c0_i32_0 = arith.constant 0 : i32
    %c0_i32_1 = arith.constant 0 : i32
    return %c0_i32, %c0_i32_0 : i32, i32
  }
  func.func @transform_5(%arg0: i32, %arg1: i32) -> (i32, i32, i32, i32) {
    %c0_i32 = arith.constant 0 : i32
    %c0_i32_0 = arith.constant 0 : i32
    %c0_i32_1 = arith.constant 0 : i32
    return %arg0, %arg1, %c0_i32, %c0_i32_0 : i32, i32, i32, i32
  }
}

module attributes {stable_mosaic.version = 11 : i64} {
  func.func @_double_conv_kernel(%arg0: i32, %arg1: i32, %arg2: memref<1x12x18x128xf32, #tpu.memory_space<vmem>>, %arg3: memref<9x128x128xf32, #tpu.memory_space<vmem>>, %arg4: memref<1x128xf32, #tpu.memory_space<vmem>>, %arg5: memref<9x128x128xf32, #tpu.memory_space<vmem>>, %arg6: memref<1x128xf32, #tpu.memory_space<vmem>>, %arg7: memref<1x8x16x128xf32, #tpu.memory_space<vmem>>, %arg8: memref<10x18x128xf32, #tpu.memory_space<vmem>>) attributes {dimension_semantics = [#tpu.dimension_semantics<parallel>, #tpu.dimension_semantics<parallel>], iteration_bounds = array<i64: 2, 2>, scalar_prefetch = 0 : i64, scratch_operands = 1 : i64, tpu.core_type = #tpu.core_type<tc>, window_params = [{transform_indices = @transform_0, window_bounds = array<i64: 1, 12, 18, 128>}, {pipeline_mode = #tpu.pipeline_mode<synchronous>, transform_indices = @transform_1, window_bounds = array<i64: 9, 128, 128>}, {pipeline_mode = #tpu.pipeline_mode<synchronous>, transform_indices = @transform_2, window_bounds = array<i64: 1, 128>}, {pipeline_mode = #tpu.pipeline_mode<synchronous>, transform_indices = @transform_3, window_bounds = array<i64: 9, 128, 128>}, {pipeline_mode = #tpu.pipeline_mode<synchronous>, transform_indices = @transform_4, window_bounds = array<i64: 1, 128>}, {transform_indices = @transform_5, window_bounds = array<i64: 1, 8, 16, 128>}]} {
    %c0 = arith.constant 0 : index
    %c0_0 = arith.constant 0 : index
    %c0_1 = arith.constant 0 : index
    %c0_2 = arith.constant 0 : index
    %0 = vector.load %arg2[%c0, %c0_0, %c0_1, %c0_2] : memref<1x12x18x128xf32, #tpu.memory_space<vmem>>, vector<1x12x16x128xf32>
    %1 = vector.shape_cast %0 : vector<1x12x16x128xf32> to vector<12x16x128xf32>
    %c0_3 = arith.constant 0 : index
    %c0_4 = arith.constant 0 : index
    %c1 = arith.constant 1 : index
    %c0_5 = arith.constant 0 : index
    %2 = vector.load %arg2[%c0_3, %c0_4, %c1, %c0_5] : memref<1x12x18x128xf32, #tpu.memory_space<vmem>>, vector<1x12x16x128xf32>
    %3 = vector.shape_cast %2 : vector<1x12x16x128xf32> to vector<12x16x128xf32>
    %c0_6 = arith.constant 0 : index
    %c0_7 = arith.constant 0 : index
    %c2 = arith.constant 2 : index
    %c0_8 = arith.constant 0 : index
    %4 = vector.load %arg2[%c0_6, %c0_7, %c2, %c0_8] : memref<1x12x18x128xf32, #tpu.memory_space<vmem>>, vector<1x12x16x128xf32>
    %5 = vector.shape_cast %4 : vector<1x12x16x128xf32> to vector<12x16x128xf32>
    %6 = vector.extract_strided_slice %1 {offsets = [0, 0, 0], sizes = [10, 16, 128], strides = [1, 1, 1]} : vector<12x16x128xf32> to vector<10x16x128xf32>
    %7 = vector.shape_cast %6 : vector<10x16x128xf32> to vector<160x128xf32>
    %c0_9 = arith.constant 0 : index
    %c0_10 = arith.constant 0 : index
    %c0_11 = arith.constant 0 : index
    %8 = vector.load %arg3[%c0_9, %c0_10, %c0_11] : memref<9x128x128xf32, #tpu.memory_space<vmem>>, vector<1x128x128xf32>
    %9 = vector.shape_cast %8 : vector<1x128x128xf32> to vector<128x128xf32>
    %cst = arith.constant dense<0.000000e+00> : vector<160x128xf32>
    %10 = tpu.matmul %7, %9, %cst {dimension_numbers = #tpu.dot_dimension_numbers<[1], [0], [0], [1], [0, 0, 1, 1], [], []>} : vector<160x128xf32>, vector<128x128xf32>, vector<160x128xf32> -> vector<160x128xf32>
    %11 = vector.extract_strided_slice %3 {offsets = [0, 0, 0], sizes = [10, 16, 128], strides = [1, 1, 1]} : vector<12x16x128xf32> to vector<10x16x128xf32>
    %12 = vector.shape_cast %11 : vector<10x16x128xf32> to vector<160x128xf32>
    %c1_12 = arith.constant 1 : index
    %c0_13 = arith.constant 0 : index
    %c0_14 = arith.constant 0 : index
    %13 = vector.load %arg3[%c1_12, %c0_13, %c0_14] : memref<9x128x128xf32, #tpu.memory_space<vmem>>, vector<1x128x128xf32>
    %14 = vector.shape_cast %13 : vector<1x128x128xf32> to vector<128x128xf32>
    %cst_15 = arith.constant dense<0.000000e+00> : vector<160x128xf32>
    %15 = tpu.matmul %12, %14, %cst_15 {dimension_numbers = #tpu.dot_dimension_numbers<[1], [0], [0], [1], [0, 0, 1, 1], [], []>} : vector<160x128xf32>, vector<128x128xf32>, vector<160x128xf32> -> vector<160x128xf32>
    %16 = arith.addf %10, %15 : vector<160x128xf32>
    %17 = vector.extract_strided_slice %5 {offsets = [0, 0, 0], sizes = [10, 16, 128], strides = [1, 1, 1]} : vector<12x16x128xf32> to vector<10x16x128xf32>
    %18 = vector.shape_cast %17 : vector<10x16x128xf32> to vector<160x128xf32>
    %c2_16 = arith.constant 2 : index
    %c0_17 = arith.constant 0 : index
    %c0_18 = arith.constant 0 : index
    %19 = vector.load %arg3[%c2_16, %c0_17, %c0_18] : memref<9x128x128xf32, #tpu.memory_space<vmem>>, vector<1x128x128xf32>
    %20 = vector.shape_cast %19 : vector<1x128x128xf32> to vector<128x128xf32>
    %cst_19 = arith.constant dense<0.000000e+00> : vector<160x128xf32>
    %21 = tpu.matmul %18, %20, %cst_19 {dimension_numbers = #tpu.dot_dimension_numbers<[1], [0], [0], [1], [0, 0, 1, 1], [], []>} : vector<160x128xf32>, vector<128x128xf32>, vector<160x128xf32> -> vector<160x128xf32>
    %22 = arith.addf %16, %21 : vector<160x128xf32>
    %23 = vector.extract_strided_slice %1 {offsets = [1, 0, 0], sizes = [10, 16, 128], strides = [1, 1, 1]} : vector<12x16x128xf32> to vector<10x16x128xf32>
    %24 = vector.shape_cast %23 : vector<10x16x128xf32> to vector<160x128xf32>
    %c3 = arith.constant 3 : index
    %c0_20 = arith.constant 0 : index
    %c0_21 = arith.constant 0 : index
    %25 = vector.load %arg3[%c3, %c0_20, %c0_21] : memref<9x128x128xf32, #tpu.memory_space<vmem>>, vector<1x128x128xf32>
    %26 = vector.shape_cast %25 : vector<1x128x128xf32> to vector<128x128xf32>
    %cst_22 = arith.constant dense<0.000000e+00> : vector<160x128xf32>
    %27 = tpu.matmul %24, %26, %cst_22 {dimension_numbers = #tpu.dot_dimension_numbers<[1], [0], [0], [1], [0, 0, 1, 1], [], []>} : vector<160x128xf32>, vector<128x128xf32>, vector<160x128xf32> -> vector<160x128xf32>
    %28 = arith.addf %22, %27 : vector<160x128xf32>
    %29 = vector.extract_strided_slice %3 {offsets = [1, 0, 0], sizes = [10, 16, 128], strides = [1, 1, 1]} : vector<12x16x128xf32> to vector<10x16x128xf32>
    %30 = vector.shape_cast %29 : vector<10x16x128xf32> to vector<160x128xf32>
    %c4 = arith.constant 4 : index
    %c0_23 = arith.constant 0 : index
    %c0_24 = arith.constant 0 : index
    %31 = vector.load %arg3[%c4, %c0_23, %c0_24] : memref<9x128x128xf32, #tpu.memory_space<vmem>>, vector<1x128x128xf32>
    %32 = vector.shape_cast %31 : vector<1x128x128xf32> to vector<128x128xf32>
    %cst_25 = arith.constant dense<0.000000e+00> : vector<160x128xf32>
    %33 = tpu.matmul %30, %32, %cst_25 {dimension_numbers = #tpu.dot_dimension_numbers<[1], [0], [0], [1], [0, 0, 1, 1], [], []>} : vector<160x128xf32>, vector<128x128xf32>, vector<160x128xf32> -> vector<160x128xf32>
    %34 = arith.addf %28, %33 : vector<160x128xf32>
    %35 = vector.extract_strided_slice %5 {offsets = [1, 0, 0], sizes = [10, 16, 128], strides = [1, 1, 1]} : vector<12x16x128xf32> to vector<10x16x128xf32>
    %36 = vector.shape_cast %35 : vector<10x16x128xf32> to vector<160x128xf32>
    %c5 = arith.constant 5 : index
    %c0_26 = arith.constant 0 : index
    %c0_27 = arith.constant 0 : index
    %37 = vector.load %arg3[%c5, %c0_26, %c0_27] : memref<9x128x128xf32, #tpu.memory_space<vmem>>, vector<1x128x128xf32>
    %38 = vector.shape_cast %37 : vector<1x128x128xf32> to vector<128x128xf32>
    %cst_28 = arith.constant dense<0.000000e+00> : vector<160x128xf32>
    %39 = tpu.matmul %36, %38, %cst_28 {dimension_numbers = #tpu.dot_dimension_numbers<[1], [0], [0], [1], [0, 0, 1, 1], [], []>} : vector<160x128xf32>, vector<128x128xf32>, vector<160x128xf32> -> vector<160x128xf32>
    %40 = arith.addf %34, %39 : vector<160x128xf32>
    %41 = vector.extract_strided_slice %1 {offsets = [2, 0, 0], sizes = [10, 16, 128], strides = [1, 1, 1]} : vector<12x16x128xf32> to vector<10x16x128xf32>
    %42 = vector.shape_cast %41 : vector<10x16x128xf32> to vector<160x128xf32>
    %c6 = arith.constant 6 : index
    %c0_29 = arith.constant 0 : index
    %c0_30 = arith.constant 0 : index
    %43 = vector.load %arg3[%c6, %c0_29, %c0_30] : memref<9x128x128xf32, #tpu.memory_space<vmem>>, vector<1x128x128xf32>
    %44 = vector.shape_cast %43 : vector<1x128x128xf32> to vector<128x128xf32>
    %cst_31 = arith.constant dense<0.000000e+00> : vector<160x128xf32>
    %45 = tpu.matmul %42, %44, %cst_31 {dimension_numbers = #tpu.dot_dimension_numbers<[1], [0], [0], [1], [0, 0, 1, 1], [], []>} : vector<160x128xf32>, vector<128x128xf32>, vector<160x128xf32> -> vector<160x128xf32>
    %46 = arith.addf %40, %45 : vector<160x128xf32>
    %47 = vector.extract_strided_slice %3 {offsets = [2, 0, 0], sizes = [10, 16, 128], strides = [1, 1, 1]} : vector<12x16x128xf32> to vector<10x16x128xf32>
    %48 = vector.shape_cast %47 : vector<10x16x128xf32> to vector<160x128xf32>
    %c7 = arith.constant 7 : index
    %c0_32 = arith.constant 0 : index
    %c0_33 = arith.constant 0 : index
    %49 = vector.load %arg3[%c7, %c0_32, %c0_33] : memref<9x128x128xf32, #tpu.memory_space<vmem>>, vector<1x128x128xf32>
    %50 = vector.shape_cast %49 : vector<1x128x128xf32> to vector<128x128xf32>
    %cst_34 = arith.constant dense<0.000000e+00> : vector<160x128xf32>
    %51 = tpu.matmul %48, %50, %cst_34 {dimension_numbers = #tpu.dot_dimension_numbers<[1], [0], [0], [1], [0, 0, 1, 1], [], []>} : vector<160x128xf32>, vector<128x128xf32>, vector<160x128xf32> -> vector<160x128xf32>
    %52 = arith.addf %46, %51 : vector<160x128xf32>
    %53 = vector.extract_strided_slice %5 {offsets = [2, 0, 0], sizes = [10, 16, 128], strides = [1, 1, 1]} : vector<12x16x128xf32> to vector<10x16x128xf32>
    %54 = vector.shape_cast %53 : vector<10x16x128xf32> to vector<160x128xf32>
    %c8 = arith.constant 8 : index
    %c0_35 = arith.constant 0 : index
    %c0_36 = arith.constant 0 : index
    %55 = vector.load %arg3[%c8, %c0_35, %c0_36] : memref<9x128x128xf32, #tpu.memory_space<vmem>>, vector<1x128x128xf32>
    %56 = vector.shape_cast %55 : vector<1x128x128xf32> to vector<128x128xf32>
    %cst_37 = arith.constant dense<0.000000e+00> : vector<160x128xf32>
    %57 = tpu.matmul %54, %56, %cst_37 {dimension_numbers = #tpu.dot_dimension_numbers<[1], [0], [0], [1], [0, 0, 1, 1], [], []>} : vector<160x128xf32>, vector<128x128xf32>, vector<160x128xf32> -> vector<160x128xf32>
    %58 = arith.addf %52, %57 : vector<160x128xf32>
    %59 = vector.shape_cast %58 : vector<160x128xf32> to vector<10x16x128xf32>
    %c0_38 = arith.constant 0 : index
    %c0_39 = arith.constant 0 : index
    %60 = vector.load %arg4[%c0_38, %c0_39] : memref<1x128xf32, #tpu.memory_space<vmem>>, vector<1x128xf32>
    %61 = vector.shape_cast %60 : vector<1x128xf32> to vector<128xf32>
    %62 = vector.shape_cast %61 : vector<128xf32> to vector<1x1x128xf32>
    %63 = vector.broadcast %62 : vector<1x1x128xf32> to vector<10x16x128xf32>
    %64 = arith.addf %59, %63 : vector<10x16x128xf32>
    %65 = arith.negf %64 : vector<10x16x128xf32>
    %66 = math.exp %65 : vector<10x16x128xf32>
    %cst_40 = arith.constant 1.000000e+00 : f32
    %67 = vector.broadcast %cst_40 : f32 to vector<10x16x128xf32>
    %68 = arith.addf %67, %66 : vector<10x16x128xf32>
    %69 = arith.divf %67, %68 : vector<10x16x128xf32>
    %70 = arith.mulf %64, %69 : vector<10x16x128xf32>
    %71 = tpu.iota {dimensions = array<i32: 0>} : vector<10x1x1xi32>
    %c0_i32 = arith.constant 0 : i32
    %72 = arith.cmpi sgt, %arg1, %c0_i32 : i32
    %c0_i32_41 = arith.constant 0 : i32
    %73 = vector.broadcast %c0_i32_41 : i32 to vector<10x1x1xi32>
    %74 = arith.cmpi sgt, %71, %73 : vector<10x1x1xi32>
    %75 = vector.broadcast %72 : i1 to vector<10x1x1xi1>
    %76 = arith.ori %75, %74 : vector<10x1x1xi1>
    %c1_i32 = arith.constant 1 : i32
    %77 = arith.cmpi slt, %arg1, %c1_i32 : i32
    %c9_i32 = arith.constant 9 : i32
    %78 = vector.broadcast %c9_i32 : i32 to vector<10x1x1xi32>
    %79 = arith.cmpi slt, %71, %78 : vector<10x1x1xi32>
    %80 = vector.broadcast %77 : i1 to vector<10x1x1xi1>
    %81 = arith.ori %80, %79 : vector<10x1x1xi1>
    %82 = arith.andi %76, %81 : vector<10x1x1xi1>
    %cst_42 = arith.constant 0.000000e+00 : f32
    %83 = vector.shape_cast %82 : vector<10x1x1xi1> to vector<10x1x1xi1>
    %84 = vector.broadcast %83 : vector<10x1x1xi1> to vector<10x16x128xi1>
    %85 = vector.broadcast %cst_42 : f32 to vector<10x16x128xf32>
    %86 = arith.select %84, %70, %85 : vector<10x16x128xi1>, vector<10x16x128xf32>
    %cst_43 = arith.constant 0.000000e+00 : f32
    %87 = vector.broadcast %cst_43 : f32 to vector<10x1x128xf32>
    %c0_44 = arith.constant 0 : index
    %c0_45 = arith.constant 0 : index
    %c0_46 = arith.constant 0 : index
    %88 = vector.load %arg8[%c0_44, %c0_45, %c0_46] : memref<10x18x128xf32, #tpu.memory_space<vmem>>, vector<10x1x128xf32>
    tpu.vector_store %arg8[%c0_44, %c0_45, %c0_46], %87 {strides = array<i32>} : memref<10x18x128xf32, #tpu.memory_space<vmem>>, vector<10x1x128xf32>,
    %c0_47 = arith.constant 0 : index
    %c17 = arith.constant 17 : index
    %c0_48 = arith.constant 0 : index
    %89 = vector.load %arg8[%c0_47, %c17, %c0_48] : memref<10x18x128xf32, #tpu.memory_space<vmem>>, vector<10x1x128xf32>
    tpu.vector_store %arg8[%c0_47, %c17, %c0_48], %87 {strides = array<i32>} : memref<10x18x128xf32, #tpu.memory_space<vmem>>, vector<10x1x128xf32>,
    %c0_49 = arith.constant 0 : index
    %c1_50 = arith.constant 1 : index
    %c0_51 = arith.constant 0 : index
    %90 = vector.load %arg8[%c0_49, %c1_50, %c0_51] : memref<10x18x128xf32, #tpu.memory_space<vmem>>, vector<10x16x128xf32>
    tpu.vector_store %arg8[%c0_49, %c1_50, %c0_51], %86 {strides = array<i32>} : memref<10x18x128xf32, #tpu.memory_space<vmem>>, vector<10x16x128xf32>,
    %c0_52 = arith.constant 0 : index
    %c0_53 = arith.constant 0 : index
    %c0_54 = arith.constant 0 : index
    %91 = vector.load %arg8[%c0_52, %c0_53, %c0_54] : memref<10x18x128xf32, #tpu.memory_space<vmem>>, vector<10x16x128xf32>
    %c0_55 = arith.constant 0 : index
    %c1_56 = arith.constant 1 : index
    %c0_57 = arith.constant 0 : index
    %92 = vector.load %arg8[%c0_55, %c1_56, %c0_57] : memref<10x18x128xf32, #tpu.memory_space<vmem>>, vector<10x16x128xf32>
    %c0_58 = arith.constant 0 : index
    %c2_59 = arith.constant 2 : index
    %c0_60 = arith.constant 0 : index
    %93 = vector.load %arg8[%c0_58, %c2_59, %c0_60] : memref<10x18x128xf32, #tpu.memory_space<vmem>>, vector<10x16x128xf32>
    %94 = vector.extract_strided_slice %91 {offsets = [0, 0, 0], sizes = [8, 16, 128], strides = [1, 1, 1]} : vector<10x16x128xf32> to vector<8x16x128xf32>
    %95 = vector.shape_cast %94 : vector<8x16x128xf32> to vector<128x128xf32>
    %c0_61 = arith.constant 0 : index
    %c0_62 = arith.constant 0 : index
    %c0_63 = arith.constant 0 : index
    %96 = vector.load %arg5[%c0_61, %c0_62, %c0_63] : memref<9x128x128xf32, #tpu.memory_space<vmem>>, vector<1x128x128xf32>
    %97 = vector.shape_cast %96 : vector<1x128x128xf32> to vector<128x128xf32>
    %cst_64 = arith.constant dense<0.000000e+00> : vector<128x128xf32>
    %98 = tpu.matmul %95, %97, %cst_64 {dimension_numbers = #tpu.dot_dimension_numbers<[1], [0], [0], [1], [0, 0, 1, 1], [], []>} : vector<128x128xf32>, vector<128x128xf32>, vector<128x128xf32> -> vector<128x128xf32>
    %99 = vector.extract_strided_slice %92 {offsets = [0, 0, 0], sizes = [8, 16, 128], strides = [1, 1, 1]} : vector<10x16x128xf32> to vector<8x16x128xf32>
    %100 = vector.shape_cast %99 : vector<8x16x128xf32> to vector<128x128xf32>
    %c1_65 = arith.constant 1 : index
    %c0_66 = arith.constant 0 : index
    %c0_67 = arith.constant 0 : index
    %101 = vector.load %arg5[%c1_65, %c0_66, %c0_67] : memref<9x128x128xf32, #tpu.memory_space<vmem>>, vector<1x128x128xf32>
    %102 = vector.shape_cast %101 : vector<1x128x128xf32> to vector<128x128xf32>
    %cst_68 = arith.constant dense<0.000000e+00> : vector<128x128xf32>
    %103 = tpu.matmul %100, %102, %cst_68 {dimension_numbers = #tpu.dot_dimension_numbers<[1], [0], [0], [1], [0, 0, 1, 1], [], []>} : vector<128x128xf32>, vector<128x128xf32>, vector<128x128xf32> -> vector<128x128xf32>
    %104 = arith.addf %98, %103 : vector<128x128xf32>
    %105 = vector.extract_strided_slice %93 {offsets = [0, 0, 0], sizes = [8, 16, 128], strides = [1, 1, 1]} : vector<10x16x128xf32> to vector<8x16x128xf32>
    %106 = vector.shape_cast %105 : vector<8x16x128xf32> to vector<128x128xf32>
    %c2_69 = arith.constant 2 : index
    %c0_70 = arith.constant 0 : index
    %c0_71 = arith.constant 0 : index
    %107 = vector.load %arg5[%c2_69, %c0_70, %c0_71] : memref<9x128x128xf32, #tpu.memory_space<vmem>>, vector<1x128x128xf32>
    %108 = vector.shape_cast %107 : vector<1x128x128xf32> to vector<128x128xf32>
    %cst_72 = arith.constant dense<0.000000e+00> : vector<128x128xf32>
    %109 = tpu.matmul %106, %108, %cst_72 {dimension_numbers = #tpu.dot_dimension_numbers<[1], [0], [0], [1], [0, 0, 1, 1], [], []>} : vector<128x128xf32>, vector<128x128xf32>, vector<128x128xf32> -> vector<128x128xf32>
    %110 = arith.addf %104, %109 : vector<128x128xf32>
    %111 = vector.extract_strided_slice %91 {offsets = [1, 0, 0], sizes = [8, 16, 128], strides = [1, 1, 1]} : vector<10x16x128xf32> to vector<8x16x128xf32>
    %112 = vector.shape_cast %111 : vector<8x16x128xf32> to vector<128x128xf32>
    %c3_73 = arith.constant 3 : index
    %c0_74 = arith.constant 0 : index
    %c0_75 = arith.constant 0 : index
    %113 = vector.load %arg5[%c3_73, %c0_74, %c0_75] : memref<9x128x128xf32, #tpu.memory_space<vmem>>, vector<1x128x128xf32>
    %114 = vector.shape_cast %113 : vector<1x128x128xf32> to vector<128x128xf32>
    %cst_76 = arith.constant dense<0.000000e+00> : vector<128x128xf32>
    %115 = tpu.matmul %112, %114, %cst_76 {dimension_numbers = #tpu.dot_dimension_numbers<[1], [0], [0], [1], [0, 0, 1, 1], [], []>} : vector<128x128xf32>, vector<128x128xf32>, vector<128x128xf32> -> vector<128x128xf32>
    %116 = arith.addf %110, %115 : vector<128x128xf32>
    %117 = vector.extract_strided_slice %92 {offsets = [1, 0, 0], sizes = [8, 16, 128], strides = [1, 1, 1]} : vector<10x16x128xf32> to vector<8x16x128xf32>
    %118 = vector.shape_cast %117 : vector<8x16x128xf32> to vector<128x128xf32>
    %c4_77 = arith.constant 4 : index
    %c0_78 = arith.constant 0 : index
    %c0_79 = arith.constant 0 : index
    %119 = vector.load %arg5[%c4_77, %c0_78, %c0_79] : memref<9x128x128xf32, #tpu.memory_space<vmem>>, vector<1x128x128xf32>
    %120 = vector.shape_cast %119 : vector<1x128x128xf32> to vector<128x128xf32>
    %cst_80 = arith.constant dense<0.000000e+00> : vector<128x128xf32>
    %121 = tpu.matmul %118, %120, %cst_80 {dimension_numbers = #tpu.dot_dimension_numbers<[1], [0], [0], [1], [0, 0, 1, 1], [], []>} : vector<128x128xf32>, vector<128x128xf32>, vector<128x128xf32> -> vector<128x128xf32>
    %122 = arith.addf %116, %121 : vector<128x128xf32>
    %123 = vector.extract_strided_slice %93 {offsets = [1, 0, 0], sizes = [8, 16, 128], strides = [1, 1, 1]} : vector<10x16x128xf32> to vector<8x16x128xf32>
    %124 = vector.shape_cast %123 : vector<8x16x128xf32> to vector<128x128xf32>
    %c5_81 = arith.constant 5 : index
    %c0_82 = arith.constant 0 : index
    %c0_83 = arith.constant 0 : index
    %125 = vector.load %arg5[%c5_81, %c0_82, %c0_83] : memref<9x128x128xf32, #tpu.memory_space<vmem>>, vector<1x128x128xf32>
    %126 = vector.shape_cast %125 : vector<1x128x128xf32> to vector<128x128xf32>
    %cst_84 = arith.constant dense<0.000000e+00> : vector<128x128xf32>
    %127 = tpu.matmul %124, %126, %cst_84 {dimension_numbers = #tpu.dot_dimension_numbers<[1], [0], [0], [1], [0, 0, 1, 1], [], []>} : vector<128x128xf32>, vector<128x128xf32>, vector<128x128xf32> -> vector<128x128xf32>
    %128 = arith.addf %122, %127 : vector<128x128xf32>
    %129 = vector.extract_strided_slice %91 {offsets = [2, 0, 0], sizes = [8, 16, 128], strides = [1, 1, 1]} : vector<10x16x128xf32> to vector<8x16x128xf32>
    %130 = vector.shape_cast %129 : vector<8x16x128xf32> to vector<128x128xf32>
    %c6_85 = arith.constant 6 : index
    %c0_86 = arith.constant 0 : index
    %c0_87 = arith.constant 0 : index
    %131 = vector.load %arg5[%c6_85, %c0_86, %c0_87] : memref<9x128x128xf32, #tpu.memory_space<vmem>>, vector<1x128x128xf32>
    %132 = vector.shape_cast %131 : vector<1x128x128xf32> to vector<128x128xf32>
    %cst_88 = arith.constant dense<0.000000e+00> : vector<128x128xf32>
    %133 = tpu.matmul %130, %132, %cst_88 {dimension_numbers = #tpu.dot_dimension_numbers<[1], [0], [0], [1], [0, 0, 1, 1], [], []>} : vector<128x128xf32>, vector<128x128xf32>, vector<128x128xf32> -> vector<128x128xf32>
    %134 = arith.addf %128, %133 : vector<128x128xf32>
    %135 = vector.extract_strided_slice %92 {offsets = [2, 0, 0], sizes = [8, 16, 128], strides = [1, 1, 1]} : vector<10x16x128xf32> to vector<8x16x128xf32>
    %136 = vector.shape_cast %135 : vector<8x16x128xf32> to vector<128x128xf32>
    %c7_89 = arith.constant 7 : index
    %c0_90 = arith.constant 0 : index
    %c0_91 = arith.constant 0 : index
    %137 = vector.load %arg5[%c7_89, %c0_90, %c0_91] : memref<9x128x128xf32, #tpu.memory_space<vmem>>, vector<1x128x128xf32>
    %138 = vector.shape_cast %137 : vector<1x128x128xf32> to vector<128x128xf32>
    %cst_92 = arith.constant dense<0.000000e+00> : vector<128x128xf32>
    %139 = tpu.matmul %136, %138, %cst_92 {dimension_numbers = #tpu.dot_dimension_numbers<[1], [0], [0], [1], [0, 0, 1, 1], [], []>} : vector<128x128xf32>, vector<128x128xf32>, vector<128x128xf32> -> vector<128x128xf32>
    %140 = arith.addf %134, %139 : vector<128x128xf32>
    %141 = vector.extract_strided_slice %93 {offsets = [2, 0, 0], sizes = [8, 16, 128], strides = [1, 1, 1]} : vector<10x16x128xf32> to vector<8x16x128xf32>
    %142 = vector.shape_cast %141 : vector<8x16x128xf32> to vector<128x128xf32>
    %c8_93 = arith.constant 8 : index
    %c0_94 = arith.constant 0 : index
    %c0_95 = arith.constant 0 : index
    %143 = vector.load %arg5[%c8_93, %c0_94, %c0_95] : memref<9x128x128xf32, #tpu.memory_space<vmem>>, vector<1x128x128xf32>
    %144 = vector.shape_cast %143 : vector<1x128x128xf32> to vector<128x128xf32>
    %cst_96 = arith.constant dense<0.000000e+00> : vector<128x128xf32>
    %145 = tpu.matmul %142, %144, %cst_96 {dimension_numbers = #tpu.dot_dimension_numbers<[1], [0], [0], [1], [0, 0, 1, 1], [], []>} : vector<128x128xf32>, vector<128x128xf32>, vector<128x128xf32> -> vector<128x128xf32>
    %146 = arith.addf %140, %145 : vector<128x128xf32>
    %147 = vector.shape_cast %146 : vector<128x128xf32> to vector<8x16x128xf32>
    %c0_97 = arith.constant 0 : index
    %c0_98 = arith.constant 0 : index
    %148 = vector.load %arg6[%c0_97, %c0_98] : memref<1x128xf32, #tpu.memory_space<vmem>>, vector<1x128xf32>
    %149 = vector.shape_cast %148 : vector<1x128xf32> to vector<128xf32>
    %150 = vector.shape_cast %149 : vector<128xf32> to vector<1x1x128xf32>
    %151 = vector.broadcast %150 : vector<1x1x128xf32> to vector<8x16x128xf32>
    %152 = arith.addf %147, %151 : vector<8x16x128xf32>
    %153 = arith.negf %152 : vector<8x16x128xf32>
    %154 = math.exp %153 : vector<8x16x128xf32>
    %cst_99 = arith.constant 1.000000e+00 : f32
    %155 = vector.broadcast %cst_99 : f32 to vector<8x16x128xf32>
    %156 = arith.addf %155, %154 : vector<8x16x128xf32>
    %157 = arith.divf %155, %156 : vector<8x16x128xf32>
    %158 = arith.mulf %152, %157 : vector<8x16x128xf32>
    %c0_100 = arith.constant 0 : index
    %c0_101 = arith.constant 0 : index
    %c0_102 = arith.constant 0 : index
    %c0_103 = arith.constant 0 : index
    %159 = vector.load %arg7[%c0_100, %c0_101, %c0_102, %c0_103] : memref<1x8x16x128xf32, #tpu.memory_space<vmem>>, vector<1x8x16x128xf32>
    %160 = vector.shape_cast %159 : vector<1x8x16x128xf32> to vector<8x16x128xf32>
    %161 = vector.shape_cast %158 : vector<8x16x128xf32> to vector<1x8x16x128xf32>
    tpu.vector_store %arg7[%c0_100, %c0_101, %c0_102, %c0_103], %161 {strides = array<i32>} : memref<1x8x16x128xf32, #tpu.memory_space<vmem>>, vector<1x8x16x128xf32>,
    return
  }
  func.func @transform_0(%arg0: i32, %arg1: i32) -> (i32, i32, i32, i32) {
    %c2_i32 = arith.constant 2 : i32
    %0 = arith.muli %arg0, %c2_i32 : i32
    %1 = arith.addi %0, %arg1 : i32
    %c0_i32 = arith.constant 0 : i32
    %c0_i32_0 = arith.constant 0 : i32
    %c0_i32_1 = arith.constant 0 : i32
    %c0_i32_2 = arith.constant 0 : i32
    return %1, %c0_i32, %c0_i32_0, %c0_i32_1 : i32, i32, i32, i32
  }
  func.func @transform_1(%arg0: i32, %arg1: i32) -> (i32, i32, i32) {
    %c0_i32 = arith.constant 0 : i32
    %c0_i32_0 = arith.constant 0 : i32
    %c0_i32_1 = arith.constant 0 : i32
    %c0_i32_2 = arith.constant 0 : i32
    return %c0_i32, %c0_i32_0, %c0_i32_1 : i32, i32, i32
  }
  func.func @transform_2(%arg0: i32, %arg1: i32) -> (i32, i32) {
    %c0_i32 = arith.constant 0 : i32
    %c0_i32_0 = arith.constant 0 : i32
    %c0_i32_1 = arith.constant 0 : i32
    return %c0_i32, %c0_i32_0 : i32, i32
  }
  func.func @transform_3(%arg0: i32, %arg1: i32) -> (i32, i32, i32) {
    %c0_i32 = arith.constant 0 : i32
    %c0_i32_0 = arith.constant 0 : i32
    %c0_i32_1 = arith.constant 0 : i32
    %c0_i32_2 = arith.constant 0 : i32
    return %c0_i32, %c0_i32_0, %c0_i32_1 : i32, i32, i32
  }
  func.func @transform_4(%arg0: i32, %arg1: i32) -> (i32, i32) {
    %c0_i32 = arith.constant 0 : i32
    %c0_i32_0 = arith.constant 0 : i32
    %c0_i32_1 = arith.constant 0 : i32
    return %c0_i32, %c0_i32_0 : i32, i32
  }
  func.func @transform_5(%arg0: i32, %arg1: i32) -> (i32, i32, i32, i32) {
    %c0_i32 = arith.constant 0 : i32
    %c0_i32_0 = arith.constant 0 : i32
    %c0_i32_1 = arith.constant 0 : i32
    return %arg0, %arg1, %c0_i32, %c0_i32_0 : i32, i32, i32, i32
  }
}

</mosaic_0001>

<llo_original>
// kernel: tpu_custom_call.1
$region0: #{tpu_custom_call.1}
  #allocation0 [shape = 'u32[]', space=smem, size = 0x4, offset = 0x4, fixed_abs, tag = 'smem constant byte address 0x4 - core index']
  #allocation1 [shape = 'u32[72,128]{1,0:T(1,128)}', space=vmem, size = 0x9000, scoped, tag = 'internal scratch']
  #allocation2 [shape = 'f32[10,18,128]{2,1,0:T(8,128)}', space=vmem, size = 0x1e000, scoped, tag = 'scratch operand']
  %s0 = inlined_call_operand.vmem [shape: f32[4,12,18,128], index: 0, kind: input, shape index: {}]
  %s1 = inlined_call_operand.vmem [shape: f32[9,128,128], index: 1, kind: input, shape index: {}]
  %s2 = inlined_call_operand.vmem [shape: f32[1,128], index: 2, kind: input, shape index: {}]
  %s3 = inlined_call_operand.hbm [shape: f32[9,128,128], index: 3, kind: input, shape index: {}]
  %s4 = inlined_call_operand.vmem [shape: f32[1,128], index: 4, kind: input, shape index: {}]
  %s5 = inlined_call_operand.hbm [shape: f32[2,16,16,128], index: 5, kind: output, shape index: {}]
  %s6 = sld [smem:[#allocation0]]
  $region57: #{tpu_custom_call.1} parent=0
    _
  %s8 = ssub.s32 1, %s6
  %s9 = scalar_select 0, %s8, %s6
  $region1: #{tpu_custom_call.1} parent=0
    #allocation3 [shape = 'u8[589824]{0}', space=vmem, size = 0x90000, scoped, tag = 'input window, operand 3, single buffered']
    #allocation4 [shape = 's32[2]{0}', space=sflag, size = 0x8, scoped, tag = 'scoped memory for tpu_custom_call.1']
    #allocation5 [shape = 's32[2]{0}', space=sflag, size = 0x8, scoped, tag = 'scoped memory for tpu_custom_call.1']
    #allocation6 [shape = 'u8[131072]{0}', space=vmem, size = 0x20000, scoped, tag = 'output window, operand 0']
    %10 = vsyncpa [#allocation4], 0
    %11 = vsyncpa [#allocation5], 0
    %s12 = scalar_lea.sflag [#allocation5], 1
    %13 = vsyncpa %s12, 0
    loop: start=0, step=1, limit=6
    $region2: #{tpu_custom_call.1} parent=1 // loop_pre_header
      _
    $region3: #{tpu_custom_call.1} parent=1 // loop_header
      %s15 = sphi 0, %s19
      %p16 = scmp.ge.s32.totalorder %s15, 6
      %s22 = sphi 0, %s34
      %s23 = sphi 0, %s30
      %s24 = sphi 0, %s22
      %s25 = sphi 0, %s23
      %s26 = sphi 0, %s24
      %s27 = sphi 0, %s25
      %s41 = sphi 0, %s43
      %s44 = sphi 0, %s41
      %s45 = sphi 0, %s44
      %s61 = sphi 0, %s45
      %s65 = sphi 0, %s65
      %s67 = sphi 0, %s65
      %s68 = sphi 0, %s67
      %s82 = sphi 0, %s68
      %s86 = sphi 0, %s86
      %s88 = sphi 0, %s86
      %s89 = sphi 0, %s88
      %s103 = sphi 0, %s89
      %s107 = sphi 0, %s107
      %s109 = sphi 0, %s107
      %s110 = sphi 0, %s109
      %s124 = sphi 0, %s110
      %s128 = sphi 0, %s128
      %s130 = sphi 0, %s128
      %s131 = sphi 0, %s130
      %s145 = sphi 0, %s131
      %s153 = sphi 0, %s155
      %s156 = sphi 0, %s153
      %s157 = sphi 0, %s156
      %s173 = sphi 0, %s157
    $region4: #{tpu_custom_call.1} parent=1 // loop_header_branch
      %18 = sbr.rel (%p16) target = $region8
    $region5: #{tpu_custom_call.1} parent=1 // loop_body
      %s20 = ssub.s32 %s15, 1
      %s21 = ssub.s32 %s15, 2
      %s28 = sadd.s32 1, %s23
      %p29 = scmp.ge.s32.totalorder %s28, 2
      %s30 = scalar_select %p29, 0, %s28
      %s31 = sadd.s32 1, %s22
      %s32 = scalar_select %p29, %s31, %s22
      %p33 = scmp.ge.s32.totalorder %s32, 2
      %s34 = scalar_select %p33, 0, %s32
      %s35 = smul.u32 %s22, 2
      %s36 = sadd.s32 %s35, %s23
      %s37 = smul.u32 %s34, 2
      %s38 = sadd.s32 %s37, %s30
      %s39 = ssub.s32 %s36, %s38
      %p40 = scmp.eq.s32.totalorder %s39, 0
      %s42 = sadd.s32 %s41, 1
      %s43 = scalar_select %p40, %s41, %s42
      %p46 = pneg %p40
      %p47 = scmp.eq.s32.totalorder %s15, 3
      %p48 = por %p46, %p47
      %p49 = scmp.ne.s32.totalorder %s41, %s44
      %p50 = scmp.eq.s32.totalorder %s15, 0
      %p51 = por %p49, %p50
      %p52 = scmp.ne.s32.totalorder %s41, %s44
      %p53 = scmp.eq.s32.totalorder %s20, 3
      %p54 = por %p52, %p53
      %p55 = scmp.ne.s32.totalorder %s44, %s45
      %p56 = scmp.eq.s32.totalorder %s20, 0
      %p57 = por %p55, %p56
      %p58 = scmp.ne.s32.totalorder %s44, %s45
      %p59 = scmp.eq.s32.totalorder %s21, 3
      %p60 = por %p58, %p59
      %p62 = scmp.ne.s32.totalorder %s45, %s61
      %p63 = scmp.eq.s32.totalorder %s21, 0
      %p64 = por %p62, %p63
      %s66 = sadd.s32 %s65, 1
      %p69 = scmp.eq.s32.totalorder %s15, 3
      %p70 = scmp.ne.s32.totalorder %s65, %s67
      %p71 = scmp.eq.s32.totalorder %s15, 0
      %p72 = por %p70, %p71
      %p73 = scmp.ne.s32.totalorder %s65, %s67
      %p74 = scmp.eq.s32.totalorder %s20, 3
      %p75 = por %p73, %p74
      %p76 = scmp.ne.s32.totalorder %s67, %s68
      %p77 = scmp.eq.s32.totalorder %s20, 0
      %p78 = por %p76, %p77
      %p79 = scmp.ne.s32.totalorder %s67, %s68
      %p80 = scmp.eq.s32.totalorder %s21, 3
      %p81 = por %p79, %p80
      %p83 = scmp.ne.s32.totalorder %s68, %s82
      %p84 = scmp.eq.s32.totalorder %s21, 0
      %p85 = por %p83, %p84
      %s87 = sadd.s32 %s86, 1
      %p90 = scmp.eq.s32.totalorder %s15, 3
      %p91 = scmp.ne.s32.totalorder %s86, %s88
      %p92 = scmp.eq.s32.totalorder %s15, 0
      %p93 = por %p91, %p92
      %p94 = scmp.ne.s32.totalorder %s86, %s88
      %p95 = scmp.eq.s32.totalorder %s20, 3
      %p96 = por %p94, %p95
      %p97 = scmp.ne.s32.totalorder %s88, %s89
      %p98 = scmp.eq.s32.totalorder %s20, 0
      %p99 = por %p97, %p98
      %p100 = scmp.ne.s32.totalorder %s88, %s89
      %p101 = scmp.eq.s32.totalorder %s21, 3
      %p102 = por %p100, %p101
      %p104 = scmp.ne.s32.totalorder %s89, %s103
      %p105 = scmp.eq.s32.totalorder %s21, 0
      %p106 = por %p104, %p105
      %s108 = sadd.s32 %s107, 1
      %p111 = scmp.eq.s32.totalorder %s15, 3
      %p112 = scmp.ne.s32.totalorder %s107, %s109
      %p113 = scmp.eq.s32.totalorder %s15, 0
      %p114 = por %p112, %p113
      %p115 = scmp.ne.s32.totalorder %s107, %s109
      %p116 = scmp.eq.s32.totalorder %s20, 3
      %p117 = por %p115, %p116
      %p118 = scmp.ne.s32.totalorder %s109, %s110
      %p119 = scmp.eq.s32.totalorder %s20, 0
      %p120 = por %p118, %p119
      %p121 = scmp.ne.s32.totalorder %s109, %s110
      %p122 = scmp.eq.s32.totalorder %s21, 3
      %p123 = por %p121, %p122
      %p125 = scmp.ne.s32.totalorder %s110, %s124
      %p126 = scmp.eq.s32.totalorder %s21, 0
      %p127 = por %p125, %p126
      %s129 = sadd.s32 %s128, 1
      %p132 = scmp.eq.s32.totalorder %s15, 3
      %p133 = scmp.ne.s32.totalorder %s128, %s130
      %p134 = scmp.eq.s32.totalorder %s15, 0
      %p135 = por %p133, %p134
      %p136 = scmp.ne.s32.totalorder %s128, %s130
      %p137 = scmp.eq.s32.totalorder %s20, 3
      %p138 = por %p136, %p137
      %p139 = scmp.ne.s32.totalorder %s130, %s131
      %p140 = scmp.eq.s32.totalorder %s20, 0
      %p141 = por %p139, %p140
      %p142 = scmp.ne.s32.totalorder %s130, %s131
      %p143 = scmp.eq.s32.totalorder %s21, 3
      %p144 = por %p142, %p143
      %p146 = scmp.ne.s32.totalorder %s131, %s145
      %p147 = scmp.eq.s32.totalorder %s21, 0
      %p148 = por %p146, %p147
      %s149 = ssub.s32 %s22, %s34
      %s150 = ssub.s32 %s23, %s30
      %s151 = sor.u32 %s149, %s150
      %p152 = scmp.eq.s32.totalorder %s151, 0
      %s154 = sadd.s32 %s153, 1
      %s155 = scalar_select %p152, %s153, %s154
      %p158 = pneg %p152
      %p159 = scmp.eq.s32.totalorder %s15, 3
      %p160 = por %p158, %p159
      %p161 = scmp.ne.s32.totalorder %s153, %s156
      %p162 = scmp.eq.s32.totalorder %s15, 0
      %p163 = por %p161, %p162
      %p164 = scmp.ne.s32.totalorder %s153, %s156
      %p165 = scmp.eq.s32.totalorder %s20, 3
      %p166 = por %p164, %p165
      %p167 = scmp.ne.s32.totalorder %s156, %s157
      %p168 = scmp.eq.s32.totalorder %s20, 0
      %p169 = por %p167, %p168
      %p170 = scmp.ne.s32.totalorder %s156, %s157
      %p171 = scmp.eq.s32.totalorder %s21, 3
      %p172 = por %p170, %p171
      %p174 = scmp.ne.s32.totalorder %s157, %s173
      %p175 = scmp.eq.s32.totalorder %s21, 0
      %p176 = por %p174, %p175
      %p177 = scmp.le.s32.totalorder 1, %s15
      %p178 = scmp.lt.s32.totalorder %s15, 5
      %p179 = pnand %p177, %p178
      %p180 = pneg %p179
      // Predicated region
      $region9: #{tpu_custom_call.1} parent=5 // pred_check
        _
      $region10: #{tpu_custom_call.1} parent=5 // pred_check_branch
        %182 = sbr.rel (%p179) target = $region12
      $region11: #{tpu_custom_call.1} parent=5 // pred_region
        %s183 = ssub.s32 %s15, 1
        // Predicated region
        $region13: #{tpu_custom_call.1} parent=11 // pred_check
          %p184 = pneg %p78
        $region14: #{tpu_custom_call.1} parent=11 // pred_check_branch
          %186 = sbr.rel (%p184) target = $region16
        $region15: #{tpu_custom_call.1} parent=11 // pred_region
          _
        $region16: #{tpu_custom_call.1} parent=11 // pred_fallthru
          _
        // Predicated region
        $region17: #{tpu_custom_call.1} parent=11 // pred_check
          %p187 = pneg %p99
        $region18: #{tpu_custom_call.1} parent=11 // pred_check_branch
          %189 = sbr.rel (%p187) target = $region20
        $region19: #{tpu_custom_call.1} parent=11 // pred_region
          _
        $region20: #{tpu_custom_call.1} parent=11 // pred_fallthru
          _
        // Predicated region
        $region21: #{tpu_custom_call.1} parent=11 // pred_check
          %p190 = pneg %p120
        $region22: #{tpu_custom_call.1} parent=11 // pred_check_branch
          %192 = sbr.rel (%p190) target = $region24
        $region23: #{tpu_custom_call.1} parent=11 // pred_region
          %194 = vsyncadd [#allocation4], 0
          %s195 = sshll.u32 %s3, 4
          %s196 = int_to_ptr.hbm [resolvable:$true] %s195
          %s197 = sshll.u32 [#allocation3], 4
          %s198 = int_to_ptr.vmem [resolvable:$true] %s197
          %203 = dma.hbm_to_vmem [thread:$0]  %s196, 18432, %s198, [#allocation4], 128, 128, 8
        $region24: #{tpu_custom_call.1} parent=11 // pred_fallthru
          _
        // Predicated region
        $region25: #{tpu_custom_call.1} parent=11 // pred_check
          %p204 = pneg %p141
        $region26: #{tpu_custom_call.1} parent=11 // pred_check_branch
          %206 = sbr.rel (%p204) target = $region28
        $region27: #{tpu_custom_call.1} parent=11 // pred_region
          _
        $region28: #{tpu_custom_call.1} parent=11 // pred_fallthru
          _
      $region12: #{tpu_custom_call.1} parent=5 // pred_fallthru
        _
      %p207 = scmp.lt.s32.totalorder %s15, 4
      // Predicated region
      $region29: #{tpu_custom_call.1} parent=5 // pred_check
        %p208 = pneg %p207
      $region30: #{tpu_custom_call.1} parent=5 // pred_check_branch
        %210 = sbr.rel (%p208) target = $region32
      $region31: #{tpu_custom_call.1} parent=5 // pred_region
        // Predicated region
        $region33: #{tpu_custom_call.1} parent=31 // pred_check
          %p211 = pneg %p51
        $region34: #{tpu_custom_call.1} parent=31 // pred_check_branch
          %213 = sbr.rel (%p211) target = $region36
        $region35: #{tpu_custom_call.1} parent=31 // pred_region
          %s214 = smul.u32 %s22, 2
          %s215 = sadd.s32 %s214, %s23
          %p216 = scmp.lt.s32.totalorder %s215, 3
          %s217 = scalar_select %p216, %s215, 3
          %s218 = smul.addr %s217, 36
          %s219 = smul.addr %s218, 8
          %s220 = scalar_lea.vmem %s0, %s219
          %s221 = smul.u32 %s22, 2
          %s222 = sadd.s32 %s221, %s23
        $region36: #{tpu_custom_call.1} parent=31 // pred_fallthru
          _
      $region32: #{tpu_custom_call.1} parent=5 // pred_fallthru
        _
      %p223 = scmp.le.s32.totalorder 1, %s15
      %p224 = scmp.lt.s32.totalorder %s15, 5
      %p225 = pnand %p223, %p224
      %p226 = pneg %p225
      // Predicated region
      $region37: #{tpu_custom_call.1} parent=5 // pred_check
        _
      $region38: #{tpu_custom_call.1} parent=5 // pred_check_branch
        %228 = sbr.rel (%p225) target = $region40
      $region39: #{tpu_custom_call.1} parent=5 // pred_region
        %s229 = ssub.s32 %s15, 1
        // Predicated region
        $region41: #{tpu_custom_call.1} parent=39 // pred_check
          %p230 = pneg %p120
        $region42: #{tpu_custom_call.1} parent=39 // pred_check_branch
          %232 = sbr.rel (%p230) target = $region44
        $region43: #{tpu_custom_call.1} parent=39 // pred_region
          %234 = dma.done [#allocation4], 18432
        $region44: #{tpu_custom_call.1} parent=39 // pred_fallthru
          _
        %s235 = smul.u32 %s24, 2
        %s236 = sadd.s32 %s235, %s25
        %p237 = scmp.lt.s32.totalorder %s236, 3
        %s238 = scalar_select %p237, %s236, 3
        %s239 = smul.addr %s238, 36
        %s240 = smul.addr %s239, 8
        %s241 = scalar_lea.vmem %s0, %s240
        %p242 = pneg %p57
        %p243 = pneg %p54
        %p244 = pneg %p78
        %p245 = pneg %p75
        %p246 = pneg %p99
        %p247 = pneg %p96
        %p248 = pneg %p120
        %p249 = pneg %p117
        %p250 = pneg %p141
        %p251 = pneg %p138
        %p252 = pneg %p169
        %p253 = pneg %p166
        %s254 = sand.u32 %s156, 1
        %s255 = scalar_lea.sflag [#allocation5], %s254
        %s256 = sand.u32 %s156, 1
        %s257 = smul.addr %s256, 128
        %s258 = scalar_lea.vmem [#allocation6], %s257
        %s259 = smul.u32 %s24, 2
        %s260 = sadd.s32 %s259, %s25
        %p261 = scmp.lt.s32.totalorder %s260, 3
        %s262 = scalar_select %p261, %s260, 3
        %s263 = smul.addr %s262, 36
        %s264 = smul.addr %s263, 8
        %s265 = scalar_lea.vmem %s0, %s264
        %s266 = smul.u32 %s24, 2
        %s267 = sadd.s32 %s266, %s25
        %s268 = smul.u32 8, %s25
        %v269 = vld [vmem:[%s265] sm:$0xff]
        %v270 = vld [vmem:[%s265 + $0x8] sm:$0xff]
        %v271 = vld [vmem:[%s265 + $0x18] sm:$0xff]
        %v272 = vld [vmem:[%s265 + $0x20] sm:$0xff]
        %v273 = vld [vmem:[%s265 + $0x30] sm:$0xff]
        %v274 = vld [vmem:[%s265 + $0x38] sm:$0xff]
        %v275 = vld [vmem:[%s265 + $0x48] sm:$0xff]
        %v276 = vld [vmem:[%s265 + $0x50] sm:$0xff]
        %v277 = vld [vmem:[%s265 + $0x60] sm:$0xff]
        %v278 = vld [vmem:[%s265 + $0x68] sm:$0xff]
        %v279 = vld [vmem:[%s265 + $0x78] sm:$0xff]
        %v280 = vld [vmem:[%s265 + $0x80] sm:$0xff]
        %v281 = vld [vmem:[%s265 + $0x90] sm:$0xff]
        %v282 = vld [vmem:[%s265 + $0x98] sm:$0xff]
        %v283 = vld [vmem:[%s265 + $0xa8] sm:$0xff]
        %v284 = vld [vmem:[%s265 + $0xb0] sm:$0xff]
        %v285 = vld [vmem:[%s265 + $0xc0] sm:$0xff]
        %v286 = vld [vmem:[%s265 + $0xc8] sm:$0xff]
        %v287 = vld [vmem:[%s265 + $0xd8] sm:$0xff]
        %v288 = vld [vmem:[%s265 + $0xe0] sm:$0xff]
        %v289 = vld [vmem:[%s265 + $0xf0] sm:$0xff]
        %v290 = vld [vmem:[%s265 + $0xf8] sm:$0xff]
        %v291 = vld [vmem:[%s265 + $0x108] sm:$0xff]
        %v292 = vld [vmem:[%s265 + $0x110] sm:$0xff]
        %v293 = vld [vmem:[%s265 + $0x1] sm:$0xff]
        %v294 = vld [vmem:[%s265 + $0x9] sm:$0xff]
        %v295 = vld [vmem:[%s265 + $0x19] sm:$0xff]
        %v296 = vld [vmem:[%s265 + $0x21] sm:$0xff]
        %v297 = vld [vmem:[%s265 + $0x31] sm:$0xff]
        %v298 = vld [vmem:[%s265 + $0x39] sm:$0xff]
        %v299 = vld [vmem:[%s265 + $0x49] sm:$0xff]
        %v300 = vld [vmem:[%s265 + $0x51] sm:$0xff]
        %v301 = vld [vmem:[%s265 + $0x61] sm:$0xff]
        %v302 = vld [vmem:[%s265 + $0x69] sm:$0xff]
        %v303 = vld [vmem:[%s265 + $0x79] sm:$0xff]
        %v304 = vld [vmem:[%s265 + $0x81] sm:$0xff]
        %v305 = vld [vmem:[%s265 + $0x91] sm:$0xff]
        %v306 = vld [vmem:[%s265 + $0x99] sm:$0xff]
        %v307 = vld [vmem:[%s265 + $0xa9] sm:$0xff]
        %v308 = vld [vmem:[%s265 + $0xb1] sm:$0xff]
        %v309 = vld [vmem:[%s265 + $0xc1] sm:$0xff]
        %v310 = vld [vmem:[%s265 + $0xc9] sm:$0xff]
        %v311 = vld [vmem:[%s265 + $0xd9] sm:$0xff]
        %v312 = vld [vmem:[%s265 + $0xe1] sm:$0xff]
        %v313 = vld [vmem:[%s265 + $0xf1] sm:$0xff]
        %v314 = vld [vmem:[%s265 + $0xf9] sm:$0xff]
        %v315 = vld [vmem:[%s265 + $0x109] sm:$0xff]
        %v316 = vld [vmem:[%s265 + $0x111] sm:$0xff]
        %v317 = vld [vmem:[%s265 + $0x2] sm:$0xff]
        %v318 = vld [vmem:[%s265 + $0xa] sm:$0xff]
        %v319 = vld [vmem:[%s265 + $0x1a] sm:$0xff]
        %v320 = vld [vmem:[%s265 + $0x22] sm:$0xff]
        %v321 = vld [vmem:[%s265 + $0x32] sm:$0xff]
        %v322 = vld [vmem:[%s265 + $0x3a] sm:$0xff]
        %v323 = vld [vmem:[%s265 + $0x4a] sm:$0xff]
        %v324 = vld [vmem:[%s265 + $0x52] sm:$0xff]
        %v325 = vld [vmem:[%s265 + $0x62] sm:$0xff]
        %v326 = vld [vmem:[%s265 + $0x6a] sm:$0xff]
        %v327 = vld [vmem:[%s265 + $0x7a] sm:$0xff]
        %v328 = vld [vmem:[%s265 + $0x82] sm:$0xff]
        %v329 = vld [vmem:[%s265 + $0x92] sm:$0xff]
        %v330 = vld [vmem:[%s265 + $0x9a] sm:$0xff]
        %v331 = vld [vmem:[%s265 + $0xaa] sm:$0xff]
        %v332 = vld [vmem:[%s265 + $0xb2] sm:$0xff]
        %v333 = vld [vmem:[%s265 + $0xc2] sm:$0xff]
        %v334 = vld [vmem:[%s265 + $0xca] sm:$0xff]
        %v335 = vld [vmem:[%s265 + $0xda] sm:$0xff]
        %v336 = vld [vmem:[%s265 + $0xe2] sm:$0xff]
        %v337 = vld [vmem:[%s265 + $0xf2] sm:$0xff]
        %v338 = vld [vmem:[%s265 + $0xfa] sm:$0xff]
        %v339 = vld [vmem:[%s265 + $0x10a] sm:$0xff]
        %v340 = vld [vmem:[%s265 + $0x112] sm:$0xff]
        %v341 = vld [vmem:[%s1] sm:$0xff]
        %v342 = vld [vmem:[%s1 + $0x8] sm:$0xff]
        %v343 = vld [vmem:[%s1 + $0x10] sm:$0xff]
        %v344 = vld [vmem:[%s1 + $0x18] sm:$0xff]
        %v345 = vld [vmem:[%s1 + $0x20] sm:$0xff]
        %v346 = vld [vmem:[%s1 + $0x28] sm:$0xff]
        %v347 = vld [vmem:[%s1 + $0x30] sm:$0xff]
        %v348 = vld [vmem:[%s1 + $0x38] sm:$0xff]
        %v349 = vld [vmem:[%s1 + $0x40] sm:$0xff]
        %v350 = vld [vmem:[%s1 + $0x48] sm:$0xff]
        %v351 = vld [vmem:[%s1 + $0x50] sm:$0xff]
        %v352 = vld [vmem:[%s1 + $0x58] sm:$0xff]
        %v353 = vld [vmem:[%s1 + $0x60] sm:$0xff]
        %v354 = vld [vmem:[%s1 + $0x68] sm:$0xff]
        %v355 = vld [vmem:[%s1 + $0x70] sm:$0xff]
        %v356 = vld [vmem:[%s1 + $0x78] sm:$0xff]
        %s357 = scalar_lea.vmem %s1, 128
        %v358 = vld [vmem:[%s357] sm:$0xff]
        %v359 = vld [vmem:[%s357 + $0x8] sm:$0xff]
        %v360 = vld [vmem:[%s357 + $0x10] sm:$0xff]
        %v361 = vld [vmem:[%s357 + $0x18] sm:$0xff]
        %v362 = vld [vmem:[%s357 + $0x20] sm:$0xff]
        %v363 = vld [vmem:[%s357 + $0x28] sm:$0xff]
        %v364 = vld [vmem:[%s357 + $0x30] sm:$0xff]
        %v365 = vld [vmem:[%s357 + $0x38] sm:$0xff]
        %v366 = vld [vmem:[%s357 + $0x40] sm:$0xff]
        %v367 = vld [vmem:[%s357 + $0x48] sm:$0xff]
        %v368 = vld [vmem:[%s357 + $0x50] sm:$0xff]
        %v369 = vld [vmem:[%s357 + $0x58] sm:$0xff]
        %v370 = vld [vmem:[%s357 + $0x60] sm:$0xff]
        %v371 = vld [vmem:[%s357 + $0x68] sm:$0xff]
        %v372 = vld [vmem:[%s357 + $0x70] sm:$0xff]
        %v373 = vld [vmem:[%s357 + $0x78] sm:$0xff]
        %374 = vmatpush.msra.mxu0 %v373
        %375 = vmatpush.msra.mxu0 %v372
        %376 = vmatpush.msra.mxu0 %v371
        %377 = vmatpush.msra.mxu0 %v370
        %378 = vmatpush.msra.mxu0 %v369
        %379 = vmatpush.msra.mxu0 %v368
        %380 = vmatpush.msra.mxu0 %v367
        %381 = vmatpush.msra.mxu0 %v366
        %382 = vmatpush.msra.mxu0 %v365
        %383 = vmatpush.msra.mxu0 %v364
        %384 = vmatpush.msra.mxu0 %v363
        %385 = vmatpush.msra.mxu0 %v362
        %386 = vmatpush.msra.mxu0 %v361
        %387 = vmatpush.msra.mxu0 %v360
        %388 = vmatpush.msra.mxu0 %v359
        %389 = vmatpush.msra.mxu0 %v358
        %390 = vmatmul.f32.gmra.mxu0 %v293
        %v391 = vpop.f32.mrf.mxu0
        %v392 = vadd.f32 0.0, %v391
        %393 = vmatmul.f32.gmra.mxu0 %v294
        %v394 = vpop.f32.mrf.mxu0
        %v395 = vadd.f32 0.0, %v394
        %396 = vmatmul.f32.gmra.mxu0 %v295
        %v397 = vpop.f32.mrf.mxu0
        %v398 = vadd.f32 0.0, %v397
        %399 = vmatmul.f32.gmra.mxu0 %v296
        %v400 = vpop.f32.mrf.mxu0
        %v401 = vadd.f32 0.0, %v400
        %402 = vmatmul.f32.gmra.mxu0 %v297
        %v403 = vpop.f32.mrf.mxu0
        %v404 = vadd.f32 0.0, %v403
        %405 = vmatmul.f32.gmra.mxu0 %v298
        %v406 = vpop.f32.mrf.mxu0
        %v407 = vadd.f32 0.0, %v406
        %408 = vmatmul.f32.gmra.mxu0 %v299
        %v409 = vpop.f32.mrf.mxu0
        %v410 = vadd.f32 0.0, %v409
        %411 = vmatmul.f32.gmra.mxu0 %v300
        %v412 = vpop.f32.mrf.mxu0
        %v413 = vadd.f32 0.0, %v412
        %414 = vmatmul.f32.gmra.mxu0 %v301
        %v415 = vpop.f32.mrf.mxu0
        %v416 = vadd.f32 0.0, %v415
        %417 = vmatmul.f32.gmra.mxu0 %v302
        %v418 = vpop.f32.mrf.mxu0
        %v419 = vadd.f32 0.0, %v418
        %420 = vmatmul.f32.gmra.mxu0 %v303
        %v421 = vpop.f32.mrf.mxu0
        %v422 = vadd.f32 0.0, %v421
        %423 = vmatmul.f32.gmra.mxu0 %v304
        %v424 = vpop.f32.mrf.mxu0
        %v425 = vadd.f32 0.0, %v424
        %426 = vmatmul.f32.gmra.mxu0 %v305
        %v427 = vpop.f32.mrf.mxu0
        %v428 = vadd.f32 0.0, %v427
        %429 = vmatmul.f32.gmra.mxu0 %v306
        %v430 = vpop.f32.mrf.mxu0
        %v431 = vadd.f32 0.0, %v430
        %432 = vmatmul.f32.gmra.mxu0 %v307
        %v433 = vpop.f32.mrf.mxu0
        %v434 = vadd.f32 0.0, %v433
        %435 = vmatmul.f32.gmra.mxu0 %v308
        %v436 = vpop.f32.mrf.mxu0
        %v437 = vadd.f32 0.0, %v436
        %438 = vmatmul.f32.gmra.mxu0 %v309
        %v439 = vpop.f32.mrf.mxu0
        %v440 = vadd.f32 0.0, %v439
        %441 = vmatmul.f32.gmra.mxu0 %v310
        %v442 = vpop.f32.mrf.mxu0
        %v443 = vadd.f32 0.0, %v442
        %444 = vmatmul.f32.gmra.mxu0 %v311
        %v445 = vpop.f32.mrf.mxu0
        %v446 = vadd.f32 0.0, %v445
        %447 = vmatmul.f32.gmra.mxu0 %v312
        %v448 = vpop.f32.mrf.mxu0
        %v449 = vadd.f32 0.0, %v448
        %450 = vdwg.mxu0
        %451 = vmatpush.msra.mxu0 %v356
        %452 = vmatpush.msra.mxu0 %v355
        %453 = vmatpush.msra.mxu0 %v354
        %454 = vmatpush.msra.mxu0 %v353
        %455 = vmatpush.msra.mxu0 %v352
        %456 = vmatpush.msra.mxu0 %v351
        %457 = vmatpush.msra.mxu0 %v350
        %458 = vmatpush.msra.mxu0 %v349
        %459 = vmatpush.msra.mxu0 %v348
        %460 = vmatpush.msra.mxu0 %v347
        %461 = vmatpush.msra.mxu0 %v346
        %462 = vmatpush.msra.mxu0 %v345
        %463 = vmatpush.msra.mxu0 %v344
        %464 = vmatpush.msra.mxu0 %v343
        %465 = vmatpush.msra.mxu0 %v342
        %466 = vmatpush.msra.mxu0 %v341
        %467 = vmatmul.f32.gmra.mxu0 %v269
        %v468 = vpop.f32.mrf.mxu0
        %v469 = vadd.f32 %v392, %v468
        %470 = vmatmul.f32.gmra.mxu0 %v270
        %v471 = vpop.f32.mrf.mxu0
        %v472 = vadd.f32 %v395, %v471
        %473 = vmatmul.f32.gmra.mxu0 %v271
        %v474 = vpop.f32.mrf.mxu0
        %v475 = vadd.f32 %v398, %v474
        %476 = vmatmul.f32.gmra.mxu0 %v272
        %v477 = vpop.f32.mrf.mxu0
        %v478 = vadd.f32 %v401, %v477
        %479 = vmatmul.f32.gmra.mxu0 %v273
        %v480 = vpop.f32.mrf.mxu0
        %v481 = vadd.f32 %v404, %v480
        %482 = vmatmul.f32.gmra.mxu0 %v274
        %v483 = vpop.f32.mrf.mxu0
        %v484 = vadd.f32 %v407, %v483
        %485 = vmatmul.f32.gmra.mxu0 %v275
        %v486 = vpop.f32.mrf.mxu0
        %v487 = vadd.f32 %v410, %v486
        %488 = vmatmul.f32.gmra.mxu0 %v276
        %v489 = vpop.f32.mrf.mxu0
        %v490 = vadd.f32 %v413, %v489
        %491 = vmatmul.f32.gmra.mxu0 %v277
        %v492 = vpop.f32.mrf.mxu0
        %v493 = vadd.f32 %v416, %v492
        %494 = vmatmul.f32.gmra.mxu0 %v278
        %v495 = vpop.f32.mrf.mxu0
        %v496 = vadd.f32 %v419, %v495
        %497 = vmatmul.f32.gmra.mxu0 %v279
        %v498 = vpop.f32.mrf.mxu0
        %v499 = vadd.f32 %v422, %v498
        %500 = vmatmul.f32.gmra.mxu0 %v280
        %v501 = vpop.f32.mrf.mxu0
        %v502 = vadd.f32 %v425, %v501
        %503 = vmatmul.f32.gmra.mxu0 %v281
        %v504 = vpop.f32.mrf.mxu0
        %v505 = vadd.f32 %v428, %v504
        %506 = vmatmul.f32.gmra.mxu0 %v282
        %v507 = vpop.f32.mrf.mxu0
        %v508 = vadd.f32 %v431, %v507
        %509 = vmatmul.f32.gmra.mxu0 %v283
        %v510 = vpop.f32.mrf.mxu0
        %v511 = vadd.f32 %v434, %v510
        %512 = vmatmul.f32.gmra.mxu0 %v284
        %v513 = vpop.f32.mrf.mxu0
        %v514 = vadd.f32 %v437, %v513
        %515 = vmatmul.f32.gmra.mxu0 %v285
        %v516 = vpop.f32.mrf.mxu0
        %v517 = vadd.f32 %v440, %v516
        %518 = vmatmul.f32.gmra.mxu0 %v286
        %v519 = vpop.f32.mrf.mxu0
        %v520 = vadd.f32 %v443, %v519
        %521 = vmatmul.f32.gmra.mxu0 %v287
        %v522 = vpop.f32.mrf.mxu0
        %v523 = vadd.f32 %v446, %v522
        %524 = vmatmul.f32.gmra.mxu0 %v288
        %v525 = vpop.f32.mrf.mxu0
        %v526 = vadd.f32 %v449, %v525
        %527 = vdwg.mxu0
        %s528 = scalar_lea.vmem %s1, 256
        %v529 = vld [vmem:[%s528] sm:$0xff]
        %v530 = vld [vmem:[%s528 + $0x8] sm:$0xff]
        %v531 = vld [vmem:[%s528 + $0x10] sm:$0xff]
        %v532 = vld [vmem:[%s528 + $0x18] sm:$0xff]
        %v533 = vld [vmem:[%s528 + $0x20] sm:$0xff]
        %v534 = vld [vmem:[%s528 + $0x28] sm:$0xff]
        %v535 = vld [vmem:[%s528 + $0x30] sm:$0xff]
        %v536 = vld [vmem:[%s528 + $0x38] sm:$0xff]
        %v537 = vld [vmem:[%s528 + $0x40] sm:$0xff]
        %v538 = vld [vmem:[%s528 + $0x48] sm:$0xff]
        %v539 = vld [vmem:[%s528 + $0x50] sm:$0xff]
        %v540 = vld [vmem:[%s528 + $0x58] sm:$0xff]
        %v541 = vld [vmem:[%s528 + $0x60] sm:$0xff]
        %v542 = vld [vmem:[%s528 + $0x68] sm:$0xff]
        %v543 = vld [vmem:[%s528 + $0x70] sm:$0xff]
        %v544 = vld [vmem:[%s528 + $0x78] sm:$0xff]
        %545 = vmatpush.msra.mxu0 %v544
        %546 = vmatpush.msra.mxu0 %v543
        %547 = vmatpush.msra.mxu0 %v542
        %548 = vmatpush.msra.mxu0 %v541
        %549 = vmatpush.msra.mxu0 %v540
        %550 = vmatpush.msra.mxu0 %v539
        %551 = vmatpush.msra.mxu0 %v538
        %552 = vmatpush.msra.mxu0 %v537
        %553 = vmatpush.msra.mxu0 %v536
        %554 = vmatpush.msra.mxu0 %v535
        %555 = vmatpush.msra.mxu0 %v534
        %556 = vmatpush.msra.mxu0 %v533
        %557 = vmatpush.msra.mxu0 %v532
        %558 = vmatpush.msra.mxu0 %v531
        %559 = vmatpush.msra.mxu0 %v530
        %560 = vmatpush.msra.mxu0 %v529
        %561 = vmatmul.f32.gmra.mxu0 %v317
        %v562 = vpop.f32.mrf.mxu0
        %v563 = vadd.f32 0.0, %v562
        %564 = vmatmul.f32.gmra.mxu0 %v318
        %v565 = vpop.f32.mrf.mxu0
        %v566 = vadd.f32 0.0, %v565
        %567 = vmatmul.f32.gmra.mxu0 %v319
        %v568 = vpop.f32.mrf.mxu0
        %v569 = vadd.f32 0.0, %v568
        %570 = vmatmul.f32.gmra.mxu0 %v320
        %v571 = vpop.f32.mrf.mxu0
        %v572 = vadd.f32 0.0, %v571
        %573 = vmatmul.f32.gmra.mxu0 %v321
        %v574 = vpop.f32.mrf.mxu0
        %v575 = vadd.f32 0.0, %v574
        %576 = vmatmul.f32.gmra.mxu0 %v322
        %v577 = vpop.f32.mrf.mxu0
        %v578 = vadd.f32 0.0, %v577
        %579 = vmatmul.f32.gmra.mxu0 %v323
        %v580 = vpop.f32.mrf.mxu0
        %v581 = vadd.f32 0.0, %v580
        %582 = vmatmul.f32.gmra.mxu0 %v324
        %v583 = vpop.f32.mrf.mxu0
        %v584 = vadd.f32 0.0, %v583
        %585 = vmatmul.f32.gmra.mxu0 %v325
        %v586 = vpop.f32.mrf.mxu0
        %v587 = vadd.f32 0.0, %v586
        %588 = vmatmul.f32.gmra.mxu0 %v326
        %v589 = vpop.f32.mrf.mxu0
        %v590 = vadd.f32 0.0, %v589
        %591 = vmatmul.f32.gmra.mxu0 %v327
        %v592 = vpop.f32.mrf.mxu0
        %v593 = vadd.f32 0.0, %v592
        %594 = vmatmul.f32.gmra.mxu0 %v328
        %v595 = vpop.f32.mrf.mxu0
        %v596 = vadd.f32 0.0, %v595
        %597 = vmatmul.f32.gmra.mxu0 %v329
        %v598 = vpop.f32.mrf.mxu0
        %v599 = vadd.f32 0.0, %v598
        %600 = vmatmul.f32.gmra.mxu0 %v330
        %v601 = vpop.f32.mrf.mxu0
        %v602 = vadd.f32 0.0, %v601
        %603 = vmatmul.f32.gmra.mxu0 %v331
        %v604 = vpop.f32.mrf.mxu0
        %v605 = vadd.f32 0.0, %v604
        %606 = vmatmul.f32.gmra.mxu0 %v332
        %v607 = vpop.f32.mrf.mxu0
        %v608 = vadd.f32 0.0, %v607
        %609 = vmatmul.f32.gmra.mxu0 %v333
        %v610 = vpop.f32.mrf.mxu0
        %v611 = vadd.f32 0.0, %v610
        %612 = vmatmul.f32.gmra.mxu0 %v334
        %v613 = vpop.f32.mrf.mxu0
        %v614 = vadd.f32 0.0, %v613
        %615 = vmatmul.f32.gmra.mxu0 %v335
        %v616 = vpop.f32.mrf.mxu0
        %v617 = vadd.f32 0.0, %v616
        %618 = vmatmul.f32.gmra.mxu0 %v336
        %v619 = vpop.f32.mrf.mxu0
        %v620 = vadd.f32 0.0, %v619
        %621 = vdwg.mxu0
        %v622 = vadd.f32 %v469, %v563
        %v623 = vadd.f32 %v472, %v566
        %v624 = vadd.f32 %v475, %v569
        %v625 = vadd.f32 %v478, %v572
        %v626 = vadd.f32 %v481, %v575
        %v627 = vadd.f32 %v484, %v578
        %v628 = vadd.f32 %v487, %v581
        %v629 = vadd.f32 %v490, %v584
        %v630 = vadd.f32 %v493, %v587
        %v631 = vadd.f32 %v496, %v590
        %v632 = vadd.f32 %v499, %v593
        %v633 = vadd.f32 %v502, %v596
        %v634 = vadd.f32 %v505, %v599
        %v635 = vadd.f32 %v508, %v602
        %v636 = vadd.f32 %v511, %v605
        %v637 = vadd.f32 %v514, %v608
        %v638 = vadd.f32 %v517, %v611
        %v639 = vadd.f32 %v520, %v614
        %v640 = vadd.f32 %v523, %v617
        %v641 = vadd.f32 %v526, %v620
        %s642 = scalar_lea.vmem %s1, 384
        %v643 = vld [vmem:[%s642] sm:$0xff]
        %v644 = vld [vmem:[%s642 + $0x8] sm:$0xff]
        %v645 = vld [vmem:[%s642 + $0x10] sm:$0xff]
        %v646 = vld [vmem:[%s642 + $0x18] sm:$0xff]
        %v647 = vld [vmem:[%s642 + $0x20] sm:$0xff]
        %v648 = vld [vmem:[%s642 + $0x28] sm:$0xff]
        %v649 = vld [vmem:[%s642 + $0x30] sm:$0xff]
        %v650 = vld [vmem:[%s642 + $0x38] sm:$0xff]
        %v651 = vld [vmem:[%s642 + $0x40] sm:$0xff]
        %v652 = vld [vmem:[%s642 + $0x48] sm:$0xff]
        %v653 = vld [vmem:[%s642 + $0x50] sm:$0xff]
        %v654 = vld [vmem:[%s642 + $0x58] sm:$0xff]
        %v655 = vld [vmem:[%s642 + $0x60] sm:$0xff]
        %v656 = vld [vmem:[%s642 + $0x68] sm:$0xff]
        %v657 = vld [vmem:[%s642 + $0x70] sm:$0xff]
        %v658 = vld [vmem:[%s642 + $0x78] sm:$0xff]
        %659 = vmatpush.msra.mxu0 %v658
        %660 = vmatpush.msra.mxu0 %v657
        %661 = vmatpush.msra.mxu0 %v656
        %662 = vmatpush.msra.mxu0 %v655
        %663 = vmatpush.msra.mxu0 %v654
        %664 = vmatpush.msra.mxu0 %v653
        %665 = vmatpush.msra.mxu0 %v652
        %666 = vmatpush.msra.mxu0 %v651
        %667 = vmatpush.msra.mxu0 %v650
        %668 = vmatpush.msra.mxu0 %v649
        %669 = vmatpush.msra.mxu0 %v648
        %670 = vmatpush.msra.mxu0 %v647
        %671 = vmatpush.msra.mxu0 %v646
        %672 = vmatpush.msra.mxu0 %v645
        %673 = vmatpush.msra.mxu0 %v644
        %674 = vmatpush.msra.mxu0 %v643
        %675 = vmatmul.f32.gmra.mxu0 %v271
        %v676 = vpop.f32.mrf.mxu0
        %v677 = vadd.f32 0.0, %v676
        %678 = vmatmul.f32.gmra.mxu0 %v272
        %v679 = vpop.f32.mrf.mxu0
        %v680 = vadd.f32 0.0, %v679
        %681 = vmatmul.f32.gmra.mxu0 %v273
        %v682 = vpop.f32.mrf.mxu0
        %v683 = vadd.f32 0.0, %v682
        %684 = vmatmul.f32.gmra.mxu0 %v274
        %v685 = vpop.f32.mrf.mxu0
        %v686 = vadd.f32 0.0, %v685
        %687 = vmatmul.f32.gmra.mxu0 %v275
        %v688 = vpop.f32.mrf.mxu0
        %v689 = vadd.f32 0.0, %v688
        %690 = vmatmul.f32.gmra.mxu0 %v276
        %v691 = vpop.f32.mrf.mxu0
        %v692 = vadd.f32 0.0, %v691
        %693 = vmatmul.f32.gmra.mxu0 %v277
        %v694 = vpop.f32.mrf.mxu0
        %v695 = vadd.f32 0.0, %v694
        %696 = vmatmul.f32.gmra.mxu0 %v278
        %v697 = vpop.f32.mrf.mxu0
        %v698 = vadd.f32 0.0, %v697
        %699 = vmatmul.f32.gmra.mxu0 %v279
        %v700 = vpop.f32.mrf.mxu0
        %v701 = vadd.f32 0.0, %v700
        %702 = vmatmul.f32.gmra.mxu0 %v280
        %v703 = vpop.f32.mrf.mxu0
        %v704 = vadd.f32 0.0, %v703
        %705 = vmatmul.f32.gmra.mxu0 %v281
        %v706 = vpop.f32.mrf.mxu0
        %v707 = vadd.f32 0.0, %v706
        %708 = vmatmul.f32.gmra.mxu0 %v282
        %v709 = vpop.f32.mrf.mxu0
        %v710 = vadd.f32 0.0, %v709
        %711 = vmatmul.f32.gmra.mxu0 %v283
        %v712 = vpop.f32.mrf.mxu0
        %v713 = vadd.f32 0.0, %v712
        %714 = vmatmul.f32.gmra.mxu0 %v284
        %v715 = vpop.f32.mrf.mxu0
        %v716 = vadd.f32 0.0, %v715
        %717 = vmatmul.f32.gmra.mxu0 %v285
        %v718 = vpop.f32.mrf.mxu0
        %v719 = vadd.f32 0.0, %v718
        %720 = vmatmul.f32.gmra.mxu0 %v286
        %v721 = vpop.f32.mrf.mxu0
        %v722 = vadd.f32 0.0, %v721
        %723 = vmatmul.f32.gmra.mxu0 %v287
        %v724 = vpop.f32.mrf.mxu0
        %v725 = vadd.f32 0.0, %v724
        %726 = vmatmul.f32.gmra.mxu0 %v288
        %v727 = vpop.f32.mrf.mxu0
        %v728 = vadd.f32 0.0, %v727
        %729 = vmatmul.f32.gmra.mxu0 %v289
        %v730 = vpop.f32.mrf.mxu0
        %v731 = vadd.f32 0.0, %v730
        %732 = vmatmul.f32.gmra.mxu0 %v290
        %v733 = vpop.f32.mrf.mxu0
        %v734 = vadd.f32 0.0, %v733
        %735 = vdwg.mxu0
        %v736 = vadd.f32 %v622, %v677
        %v737 = vadd.f32 %v623, %v680
        %v738 = vadd.f32 %v624, %v683
        %v739 = vadd.f32 %v625, %v686
        %v740 = vadd.f32 %v626, %v689
        %v741 = vadd.f32 %v627, %v692
        %v742 = vadd.f32 %v628, %v695
        %v743 = vadd.f32 %v629, %v698
        %v744 = vadd.f32 %v630, %v701
        %v745 = vadd.f32 %v631, %v704
        %v746 = vadd.f32 %v632, %v707
        %v747 = vadd.f32 %v633, %v710
        %v748 = vadd.f32 %v634, %v713
        %v749 = vadd.f32 %v635, %v716
        %v750 = vadd.f32 %v636, %v719
        %v751 = vadd.f32 %v637, %v722
        %v752 = vadd.f32 %v638, %v725
        %v753 = vadd.f32 %v639, %v728
        %v754 = vadd.f32 %v640, %v731
        %v755 = vadd.f32 %v641, %v734
        %s756 = scalar_lea.vmem %s1, 512
        %v757 = vld [vmem:[%s756] sm:$0xff]
        %v758 = vld [vmem:[%s756 + $0x8] sm:$0xff]
        %v759 = vld [vmem:[%s756 + $0x10] sm:$0xff]
        %v760 = vld [vmem:[%s756 + $0x18] sm:$0xff]
        %v761 = vld [vmem:[%s756 + $0x20] sm:$0xff]
        %v762 = vld [vmem:[%s756 + $0x28] sm:$0xff]
        %v763 = vld [vmem:[%s756 + $0x30] sm:$0xff]
        %v764 = vld [vmem:[%s756 + $0x38] sm:$0xff]
        %v765 = vld [vmem:[%s756 + $0x40] sm:$0xff]
        %v766 = vld [vmem:[%s756 + $0x48] sm:$0xff]
        %v767 = vld [vmem:[%s756 + $0x50] sm:$0xff]
        %v768 = vld [vmem:[%s756 + $0x58] sm:$0xff]
        %v769 = vld [vmem:[%s756 + $0x60] sm:$0xff]
        %v770 = vld [vmem:[%s756 + $0x68] sm:$0xff]
        %v771 = vld [vmem:[%s756 + $0x70] sm:$0xff]
        %v772 = vld [vmem:[%s756 + $0x78] sm:$0xff]
        %773 = vmatpush.msra.mxu0 %v772
        %774 = vmatpush.msra.mxu0 %v771
        %775 = vmatpush.msra.mxu0 %v770
        %776 = vmatpush.msra.mxu0 %v769
        %777 = vmatpush.msra.mxu0 %v768
        %778 = vmatpush.msra.mxu0 %v767
        %779 = vmatpush.msra.mxu0 %v766
        %780 = vmatpush.msra.mxu0 %v765
        %781 = vmatpush.msra.mxu0 %v764
        %782 = vmatpush.msra.mxu0 %v763
        %783 = vmatpush.msra.mxu0 %v762
        %784 = vmatpush.msra.mxu0 %v761
        %785 = vmatpush.msra.mxu0 %v760
        %786 = vmatpush.msra.mxu0 %v759
        %787 = vmatpush.msra.mxu0 %v758
        %788 = vmatpush.msra.mxu0 %v757
        %789 = vmatmul.f32.gmra.mxu0 %v295
        %v790 = vpop.f32.mrf.mxu0
        %v791 = vadd.f32 0.0, %v790
        %792 = vmatmul.f32.gmra.mxu0 %v296
        %v793 = vpop.f32.mrf.mxu0
        %v794 = vadd.f32 0.0, %v793
        %795 = vmatmul.f32.gmra.mxu0 %v297
        %v796 = vpop.f32.mrf.mxu0
        %v797 = vadd.f32 0.0, %v796
        %798 = vmatmul.f32.gmra.mxu0 %v298
        %v799 = vpop.f32.mrf.mxu0
        %v800 = vadd.f32 0.0, %v799
        %801 = vmatmul.f32.gmra.mxu0 %v299
        %v802 = vpop.f32.mrf.mxu0
        %v803 = vadd.f32 0.0, %v802
        %804 = vmatmul.f32.gmra.mxu0 %v300
        %v805 = vpop.f32.mrf.mxu0
        %v806 = vadd.f32 0.0, %v805
        %807 = vmatmul.f32.gmra.mxu0 %v301
        %v808 = vpop.f32.mrf.mxu0
        %v809 = vadd.f32 0.0, %v808
        %810 = vmatmul.f32.gmra.mxu0 %v302
        %v811 = vpop.f32.mrf.mxu0
        %v812 = vadd.f32 0.0, %v811
        %813 = vmatmul.f32.gmra.mxu0 %v303
        %v814 = vpop.f32.mrf.mxu0
        %v815 = vadd.f32 0.0, %v814
        %816 = vmatmul.f32.gmra.mxu0 %v304
        %v817 = vpop.f32.mrf.mxu0
        %v818 = vadd.f32 0.0, %v817
        %819 = vmatmul.f32.gmra.mxu0 %v305
        %v820 = vpop.f32.mrf.mxu0
        %v821 = vadd.f32 0.0, %v820
        %822 = vmatmul.f32.gmra.mxu0 %v306
        %v823 = vpop.f32.mrf.mxu0
        %v824 = vadd.f32 0.0, %v823
        %825 = vmatmul.f32.gmra.mxu0 %v307
        %v826 = vpop.f32.mrf.mxu0
        %v827 = vadd.f32 0.0, %v826
        %828 = vmatmul.f32.gmra.mxu0 %v308
        %v829 = vpop.f32.mrf.mxu0
        %v830 = vadd.f32 0.0, %v829
        %831 = vmatmul.f32.gmra.mxu0 %v309
        %v832 = vpop.f32.mrf.mxu0
        %v833 = vadd.f32 0.0, %v832
        %834 = vmatmul.f32.gmra.mxu0 %v310
        %v835 = vpop.f32.mrf.mxu0
        %v836 = vadd.f32 0.0, %v835
        %837 = vmatmul.f32.gmra.mxu0 %v311
        %v838 = vpop.f32.mrf.mxu0
        %v839 = vadd.f32 0.0, %v838
        %840 = vmatmul.f32.gmra.mxu0 %v312
        %v841 = vpop.f32.mrf.mxu0
        %v842 = vadd.f32 0.0, %v841
        %843 = vmatmul.f32.gmra.mxu0 %v313
        %v844 = vpop.f32.mrf.mxu0
        %v845 = vadd.f32 0.0, %v844
        %846 = vmatmul.f32.gmra.mxu0 %v314
        %v847 = vpop.f32.mrf.mxu0
        %v848 = vadd.f32 0.0, %v847
        %849 = vdwg.mxu0
        %v850 = vadd.f32 %v736, %v791
        %v851 = vadd.f32 %v737, %v794
        %v852 = vadd.f32 %v738, %v797
        %v853 = vadd.f32 %v739, %v800
        %v854 = vadd.f32 %v740, %v803
        %v855 = vadd.f32 %v741, %v806
        %v856 = vadd.f32 %v742, %v809
        %v857 = vadd.f32 %v743, %v812
        %v858 = vadd.f32 %v744, %v815
        %v859 = vadd.f32 %v745, %v818
        %v860 = vadd.f32 %v746, %v821
        %v861 = vadd.f32 %v747, %v824
        %v862 = vadd.f32 %v748, %v827
        %v863 = vadd.f32 %v749, %v830
        %v864 = vadd.f32 %v750, %v833
        %v865 = vadd.f32 %v751, %v836
        %v866 = vadd.f32 %v752, %v839
        %v867 = vadd.f32 %v753, %v842
        %v868 = vadd.f32 %v754, %v845
        %v869 = vadd.f32 %v755, %v848
        %s870 = scalar_lea.vmem %s1, 640
        %v871 = vld [vmem:[%s870] sm:$0xff]
        %v872 = vld [vmem:[%s870 + $0x8] sm:$0xff]
        %v873 = vld [vmem:[%s870 + $0x10] sm:$0xff]
        %v874 = vld [vmem:[%s870 + $0x18] sm:$0xff]
        %v875 = vld [vmem:[%s870 + $0x20] sm:$0xff]
        %v876 = vld [vmem:[%s870 + $0x28] sm:$0xff]
        %v877 = vld [vmem:[%s870 + $0x30] sm:$0xff]
        %v878 = vld [vmem:[%s870 + $0x38] sm:$0xff]
        %v879 = vld [vmem:[%s870 + $0x40] sm:$0xff]
        %v880 = vld [vmem:[%s870 + $0x48] sm:$0xff]
        %v881 = vld [vmem:[%s870 + $0x50] sm:$0xff]
        %v882 = vld [vmem:[%s870 + $0x58] sm:$0xff]
        %v883 = vld [vmem:[%s870 + $0x60] sm:$0xff]
        %v884 = vld [vmem:[%s870 + $0x68] sm:$0xff]
        %v885 = vld [vmem:[%s870 + $0x70] sm:$0xff]
        %v886 = vld [vmem:[%s870 + $0x78] sm:$0xff]
        %887 = vmatpush.msra.mxu0 %v886
        %888 = vmatpush.msra.mxu0 %v885
        %889 = vmatpush.msra.mxu0 %v884
        %890 = vmatpush.msra.mxu0 %v883
        %891 = vmatpush.msra.mxu0 %v882
        %892 = vmatpush.msra.mxu0 %v881
        %893 = vmatpush.msra.mxu0 %v880
        %894 = vmatpush.msra.mxu0 %v879
        %895 = vmatpush.msra.mxu0 %v878
        %896 = vmatpush.msra.mxu0 %v877
        %897 = vmatpush.msra.mxu0 %v876
        %898 = vmatpush.msra.mxu0 %v875
        %899 = vmatpush.msra.mxu0 %v874
        %900 = vmatpush.msra.mxu0 %v873
        %901 = vmatpush.msra.mxu0 %v872
        %902 = vmatpush.msra.mxu0 %v871
        %903 = vmatmul.f32.gmra.mxu0 %v319
        %v904 = vpop.f32.mrf.mxu0
        %v905 = vadd.f32 0.0, %v904
        %906 = vmatmul.f32.gmra.mxu0 %v320
        %v907 = vpop.f32.mrf.mxu0
        %v908 = vadd.f32 0.0, %v907
        %909 = vmatmul.f32.gmra.mxu0 %v321
        %v910 = vpop.f32.mrf.mxu0
        %v911 = vadd.f32 0.0, %v910
        %912 = vmatmul.f32.gmra.mxu0 %v322
        %v913 = vpop.f32.mrf.mxu0
        %v914 = vadd.f32 0.0, %v913
        %915 = vmatmul.f32.gmra.mxu0 %v323
        %v916 = vpop.f32.mrf.mxu0
        %v917 = vadd.f32 0.0, %v916
        %918 = vmatmul.f32.gmra.mxu0 %v324
        %v919 = vpop.f32.mrf.mxu0
        %v920 = vadd.f32 0.0, %v919
        %921 = vmatmul.f32.gmra.mxu0 %v325
        %v922 = vpop.f32.mrf.mxu0
        %v923 = vadd.f32 0.0, %v922
        %924 = vmatmul.f32.gmra.mxu0 %v326
        %v925 = vpop.f32.mrf.mxu0
        %v926 = vadd.f32 0.0, %v925
        %927 = vmatmul.f32.gmra.mxu0 %v327
        %v928 = vpop.f32.mrf.mxu0
        %v929 = vadd.f32 0.0, %v928
        %930 = vmatmul.f32.gmra.mxu0 %v328
        %v931 = vpop.f32.mrf.mxu0
        %v932 = vadd.f32 0.0, %v931
        %933 = vmatmul.f32.gmra.mxu0 %v329
        %v934 = vpop.f32.mrf.mxu0
        %v935 = vadd.f32 0.0, %v934
        %936 = vmatmul.f32.gmra.mxu0 %v330
        %v937 = vpop.f32.mrf.mxu0
        %v938 = vadd.f32 0.0, %v937
        %939 = vmatmul.f32.gmra.mxu0 %v331
        %v940 = vpop.f32.mrf.mxu0
        %v941 = vadd.f32 0.0, %v940
        %942 = vmatmul.f32.gmra.mxu0 %v332
        %v943 = vpop.f32.mrf.mxu0
        %v944 = vadd.f32 0.0, %v943
        %945 = vmatmul.f32.gmra.mxu0 %v333
        %v946 = vpop.f32.mrf.mxu0
        %v947 = vadd.f32 0.0, %v946
        %948 = vmatmul.f32.gmra.mxu0 %v334
        %v949 = vpop.f32.mrf.mxu0
        %v950 = vadd.f32 0.0, %v949
        %951 = vmatmul.f32.gmra.mxu0 %v335
        %v952 = vpop.f32.mrf.mxu0
        %v953 = vadd.f32 0.0, %v952
        %954 = vmatmul.f32.gmra.mxu0 %v336
        %v955 = vpop.f32.mrf.mxu0
        %v956 = vadd.f32 0.0, %v955
        %957 = vmatmul.f32.gmra.mxu0 %v337
        %v958 = vpop.f32.mrf.mxu0
        %v959 = vadd.f32 0.0, %v958
        %960 = vmatmul.f32.gmra.mxu0 %v338
        %v961 = vpop.f32.mrf.mxu0
        %v962 = vadd.f32 0.0, %v961
        %963 = vdwg.mxu0
        %v964 = vadd.f32 %v850, %v905
        %v965 = vadd.f32 %v851, %v908
        %v966 = vadd.f32 %v852, %v911
        %v967 = vadd.f32 %v853, %v914
        %v968 = vadd.f32 %v854, %v917
        %v969 = vadd.f32 %v855, %v920
        %v970 = vadd.f32 %v856, %v923
        %v971 = vadd.f32 %v857, %v926
        %v972 = vadd.f32 %v858, %v929
        %v973 = vadd.f32 %v859, %v932
        %v974 = vadd.f32 %v860, %v935
        %v975 = vadd.f32 %v861, %v938
        %v976 = vadd.f32 %v862, %v941
        %v977 = vadd.f32 %v863, %v944
        %v978 = vadd.f32 %v864, %v947
        %v979 = vadd.f32 %v865, %v950
        %v980 = vadd.f32 %v866, %v953
        %v981 = vadd.f32 %v867, %v956
        %v982 = vadd.f32 %v868, %v959
        %v983 = vadd.f32 %v869, %v962
        %s984 = scalar_lea.vmem %s1, 768
        %v985 = vld [vmem:[%s984] sm:$0xff]
        %v986 = vld [vmem:[%s984 + $0x8] sm:$0xff]
        %v987 = vld [vmem:[%s984 + $0x10] sm:$0xff]
        %v988 = vld [vmem:[%s984 + $0x18] sm:$0xff]
        %v989 = vld [vmem:[%s984 + $0x20] sm:$0xff]
        %v990 = vld [vmem:[%s984 + $0x28] sm:$0xff]
        %v991 = vld [vmem:[%s984 + $0x30] sm:$0xff]
        %v992 = vld [vmem:[%s984 + $0x38] sm:$0xff]
        %v993 = vld [vmem:[%s984 + $0x40] sm:$0xff]
        %v994 = vld [vmem:[%s984 + $0x48] sm:$0xff]
        %v995 = vld [vmem:[%s984 + $0x50] sm:$0xff]
        %v996 = vld [vmem:[%s984 + $0x58] sm:$0xff]
        %v997 = vld [vmem:[%s984 + $0x60] sm:$0xff]
        %v998 = vld [vmem:[%s984 + $0x68] sm:$0xff]
        %v999 = vld [vmem:[%s984 + $0x70] sm:$0xff]
        %v1000 = vld [vmem:[%s984 + $0x78] sm:$0xff]
        %1001 = vmatpush.msra.mxu0 %v1000
        %1002 = vmatpush.msra.mxu0 %v999
        %1003 = vmatpush.msra.mxu0 %v998
        %1004 = vmatpush.msra.mxu0 %v997
        %1005 = vmatpush.msra.mxu0 %v996
        %1006 = vmatpush.msra.mxu0 %v995
        %1007 = vmatpush.msra.mxu0 %v994
        %1008 = vmatpush.msra.mxu0 %v993
        %1009 = vmatpush.msra.mxu0 %v992
        %1010 = vmatpush.msra.mxu0 %v991
        %1011 = vmatpush.msra.mxu0 %v990
        %1012 = vmatpush.msra.mxu0 %v989
        %1013 = vmatpush.msra.mxu0 %v988
        %1014 = vmatpush.msra.mxu0 %v987
        %1015 = vmatpush.msra.mxu0 %v986
        %1016 = vmatpush.msra.mxu0 %v985
        %1017 = vmatmul.f32.gmra.mxu0 %v273
        %v1018 = vpop.f32.mrf.mxu0
        %v1019 = vadd.f32 0.0, %v1018
        %1020 = vmatmul.f32.gmra.mxu0 %v274
        %v1021 = vpop.f32.mrf.mxu0
        %v1022 = vadd.f32 0.0, %v1021
        %1023 = vmatmul.f32.gmra.mxu0 %v275
        %v1024 = vpop.f32.mrf.mxu0
        %v1025 = vadd.f32 0.0, %v1024
        %1026 = vmatmul.f32.gmra.mxu0 %v276
        %v1027 = vpop.f32.mrf.mxu0
        %v1028 = vadd.f32 0.0, %v1027
        %1029 = vmatmul.f32.gmra.mxu0 %v277
        %v1030 = vpop.f32.mrf.mxu0
        %v1031 = vadd.f32 0.0, %v1030
        %1032 = vmatmul.f32.gmra.mxu0 %v278
        %v1033 = vpop.f32.mrf.mxu0
        %v1034 = vadd.f32 0.0, %v1033
        %1035 = vmatmul.f32.gmra.mxu0 %v279
        %v1036 = vpop.f32.mrf.mxu0
        %v1037 = vadd.f32 0.0, %v1036
        %1038 = vmatmul.f32.gmra.mxu0 %v280
        %v1039 = vpop.f32.mrf.mxu0
        %v1040 = vadd.f32 0.0, %v1039
        %1041 = vmatmul.f32.gmra.mxu0 %v281
        %v1042 = vpop.f32.mrf.mxu0
        %v1043 = vadd.f32 0.0, %v1042
        %1044 = vmatmul.f32.gmra.mxu0 %v282
        %v1045 = vpop.f32.mrf.mxu0
        %v1046 = vadd.f32 0.0, %v1045
        %1047 = vmatmul.f32.gmra.mxu0 %v283
        %v1048 = vpop.f32.mrf.mxu0
        %v1049 = vadd.f32 0.0, %v1048
        %1050 = vmatmul.f32.gmra.mxu0 %v284
        %v1051 = vpop.f32.mrf.mxu0
        %v1052 = vadd.f32 0.0, %v1051
        %1053 = vmatmul.f32.gmra.mxu0 %v285
        %v1054 = vpop.f32.mrf.mxu0
        %v1055 = vadd.f32 0.0, %v1054
        %1056 = vmatmul.f32.gmra.mxu0 %v286
        %v1057 = vpop.f32.mrf.mxu0
        %v1058 = vadd.f32 0.0, %v1057
        %1059 = vmatmul.f32.gmra.mxu0 %v287
        %v1060 = vpop.f32.mrf.mxu0
        %v1061 = vadd.f32 0.0, %v1060
        %1062 = vmatmul.f32.gmra.mxu0 %v288
        %v1063 = vpop.f32.mrf.mxu0
        %v1064 = vadd.f32 0.0, %v1063
        %1065 = vmatmul.f32.gmra.mxu0 %v289
        %v1066 = vpop.f32.mrf.mxu0
        %v1067 = vadd.f32 0.0, %v1066
        %1068 = vmatmul.f32.gmra.mxu0 %v290
        %v1069 = vpop.f32.mrf.mxu0
        %v1070 = vadd.f32 0.0, %v1069
        %1071 = vmatmul.f32.gmra.mxu0 %v291
        %v1072 = vpop.f32.mrf.mxu0
        %v1073 = vadd.f32 0.0, %v1072
        %1074 = vmatmul.f32.gmra.mxu0 %v292
        %v1075 = vpop.f32.mrf.mxu0
        %v1076 = vadd.f32 0.0, %v1075
        %1077 = vdwg.mxu0
        %v1078 = vadd.f32 %v964, %v1019
        %v1079 = vadd.f32 %v965, %v1022
        %v1080 = vadd.f32 %v966, %v1025
        %v1081 = vadd.f32 %v967, %v1028
        %v1082 = vadd.f32 %v968, %v1031
        %v1083 = vadd.f32 %v969, %v1034
        %v1084 = vadd.f32 %v970, %v1037
        %v1085 = vadd.f32 %v971, %v1040
        %v1086 = vadd.f32 %v972, %v1043
        %v1087 = vadd.f32 %v973, %v1046
        %v1088 = vadd.f32 %v974, %v1049
        %v1089 = vadd.f32 %v975, %v1052
        %v1090 = vadd.f32 %v976, %v1055
        %v1091 = vadd.f32 %v977, %v1058
        %v1092 = vadd.f32 %v978, %v1061
        %v1093 = vadd.f32 %v979, %v1064
        %v1094 = vadd.f32 %v980, %v1067
        %v1095 = vadd.f32 %v981, %v1070
        %v1096 = vadd.f32 %v982, %v1073
        %v1097 = vadd.f32 %v983, %v1076
        %s1098 = scalar_lea.vmem %s1, 896
        %v1099 = vld [vmem:[%s1098] sm:$0xff]
        %v1100 = vld [vmem:[%s1098 + $0x8] sm:$0xff]
        %v1101 = vld [vmem:[%s1098 + $0x10] sm:$0xff]
        %v1102 = vld [vmem:[%s1098 + $0x18] sm:$0xff]
        %v1103 = vld [vmem:[%s1098 + $0x20] sm:$0xff]
        %v1104 = vld [vmem:[%s1098 + $0x28] sm:$0xff]
        %v1105 = vld [vmem:[%s1098 + $0x30] sm:$0xff]
        %v1106 = vld [vmem:[%s1098 + $0x38] sm:$0xff]
        %v1107 = vld [vmem:[%s1098 + $0x40] sm:$0xff]
        %v1108 = vld [vmem:[%s1098 + $0x48] sm:$0xff]
        %v1109 = vld [vmem:[%s1098 + $0x50] sm:$0xff]
        %v1110 = vld [vmem:[%s1098 + $0x58] sm:$0xff]
        %v1111 = vld [vmem:[%s1098 + $0x60] sm:$0xff]
        %v1112 = vld [vmem:[%s1098 + $0x68] sm:$0xff]
        %v1113 = vld [vmem:[%s1098 + $0x70] sm:$0xff]
        %v1114 = vld [vmem:[%s1098 + $0x78] sm:$0xff]
        %1115 = vmatpush.msra.mxu0 %v1114
        %1116 = vmatpush.msra.mxu0 %v1113
        %1117 = vmatpush.msra.mxu0 %v1112
        %1118 = vmatpush.msra.mxu0 %v1111
        %1119 = vmatpush.msra.mxu0 %v1110
        %1120 = vmatpush.msra.mxu0 %v1109
        %1121 = vmatpush.msra.mxu0 %v1108
        %1122 = vmatpush.msra.mxu0 %v1107
        %1123 = vmatpush.msra.mxu0 %v1106
        %1124 = vmatpush.msra.mxu0 %v1105
        %1125 = vmatpush.msra.mxu0 %v1104
        %1126 = vmatpush.msra.mxu0 %v1103
        %1127 = vmatpush.msra.mxu0 %v1102
        %1128 = vmatpush.msra.mxu0 %v1101
        %1129 = vmatpush.msra.mxu0 %v1100
        %1130 = vmatpush.msra.mxu0 %v1099
        %1131 = vmatmul.f32.gmra.mxu0 %v297
        %v1132 = vpop.f32.mrf.mxu0
        %v1133 = vadd.f32 0.0, %v1132
        %1134 = vmatmul.f32.gmra.mxu0 %v298
        %v1135 = vpop.f32.mrf.mxu0
        %v1136 = vadd.f32 0.0, %v1135
        %1137 = vmatmul.f32.gmra.mxu0 %v299
        %v1138 = vpop.f32.mrf.mxu0
        %v1139 = vadd.f32 0.0, %v1138
        %1140 = vmatmul.f32.gmra.mxu0 %v300
        %v1141 = vpop.f32.mrf.mxu0
        %v1142 = vadd.f32 0.0, %v1141
        %1143 = vmatmul.f32.gmra.mxu0 %v301
        %v1144 = vpop.f32.mrf.mxu0
        %v1145 = vadd.f32 0.0, %v1144
        %1146 = vmatmul.f32.gmra.mxu0 %v302
        %v1147 = vpop.f32.mrf.mxu0
        %v1148 = vadd.f32 0.0, %v1147
        %1149 = vmatmul.f32.gmra.mxu0 %v303
        %v1150 = vpop.f32.mrf.mxu0
        %v1151 = vadd.f32 0.0, %v1150
        %1152 = vmatmul.f32.gmra.mxu0 %v304
        %v1153 = vpop.f32.mrf.mxu0
        %v1154 = vadd.f32 0.0, %v1153
        %1155 = vmatmul.f32.gmra.mxu0 %v305
        %v1156 = vpop.f32.mrf.mxu0
        %v1157 = vadd.f32 0.0, %v1156
        %1158 = vmatmul.f32.gmra.mxu0 %v306
        %v1159 = vpop.f32.mrf.mxu0
        %v1160 = vadd.f32 0.0, %v1159
        %1161 = vmatmul.f32.gmra.mxu0 %v307
        %v1162 = vpop.f32.mrf.mxu0
        %v1163 = vadd.f32 0.0, %v1162
        %1164 = vmatmul.f32.gmra.mxu0 %v308
        %v1165 = vpop.f32.mrf.mxu0
        %v1166 = vadd.f32 0.0, %v1165
        %1167 = vmatmul.f32.gmra.mxu0 %v309
        %v1168 = vpop.f32.mrf.mxu0
        %v1169 = vadd.f32 0.0, %v1168
        %1170 = vmatmul.f32.gmra.mxu0 %v310
        %v1171 = vpop.f32.mrf.mxu0
        %v1172 = vadd.f32 0.0, %v1171
        %1173 = vmatmul.f32.gmra.mxu0 %v311
        %v1174 = vpop.f32.mrf.mxu0
        %v1175 = vadd.f32 0.0, %v1174
        %1176 = vmatmul.f32.gmra.mxu0 %v312
        %v1177 = vpop.f32.mrf.mxu0
        %v1178 = vadd.f32 0.0, %v1177
        %1179 = vmatmul.f32.gmra.mxu0 %v313
        %v1180 = vpop.f32.mrf.mxu0
        %v1181 = vadd.f32 0.0, %v1180
        %1182 = vmatmul.f32.gmra.mxu0 %v314
        %v1183 = vpop.f32.mrf.mxu0
        %v1184 = vadd.f32 0.0, %v1183
        %1185 = vmatmul.f32.gmra.mxu0 %v315
        %v1186 = vpop.f32.mrf.mxu0
        %v1187 = vadd.f32 0.0, %v1186
        %1188 = vmatmul.f32.gmra.mxu0 %v316
        %v1189 = vpop.f32.mrf.mxu0
        %v1190 = vadd.f32 0.0, %v1189
        %1191 = vdwg.mxu0
        %v1192 = vadd.f32 %v1078, %v1133
        %v1193 = vadd.f32 %v1079, %v1136
        %v1194 = vadd.f32 %v1080, %v1139
        %v1195 = vadd.f32 %v1081, %v1142
        %v1196 = vadd.f32 %v1082, %v1145
        %v1197 = vadd.f32 %v1083, %v1148
        %v1198 = vadd.f32 %v1084, %v1151
        %v1199 = vadd.f32 %v1085, %v1154
        %v1200 = vadd.f32 %v1086, %v1157
        %v1201 = vadd.f32 %v1087, %v1160
        %v1202 = vadd.f32 %v1088, %v1163
        %v1203 = vadd.f32 %v1089, %v1166
        %v1204 = vadd.f32 %v1090, %v1169
        %v1205 = vadd.f32 %v1091, %v1172
        %v1206 = vadd.f32 %v1092, %v1175
        %v1207 = vadd.f32 %v1093, %v1178
        %v1208 = vadd.f32 %v1094, %v1181
        %v1209 = vadd.f32 %v1095, %v1184
        %v1210 = vadd.f32 %v1096, %v1187
        %v1211 = vadd.f32 %v1097, %v1190
        %s1212 = scalar_lea.vmem %s1, 1024
        %v1213 = vld [vmem:[%s1212] sm:$0xff]
        %v1214 = vld [vmem:[%s1212 + $0x8] sm:$0xff]
        %v1215 = vld [vmem:[%s1212 + $0x10] sm:$0xff]
        %v1216 = vld [vmem:[%s1212 + $0x18] sm:$0xff]
        %v1217 = vld [vmem:[%s1212 + $0x20] sm:$0xff]
        %v1218 = vld [vmem:[%s1212 + $0x28] sm:$0xff]
        %v1219 = vld [vmem:[%s1212 + $0x30] sm:$0xff]
        %v1220 = vld [vmem:[%s1212 + $0x38] sm:$0xff]
        %v1221 = vld [vmem:[%s1212 + $0x40] sm:$0xff]
        %v1222 = vld [vmem:[%s1212 + $0x48] sm:$0xff]
        %v1223 = vld [vmem:[%s1212 + $0x50] sm:$0xff]
        %v1224 = vld [vmem:[%s1212 + $0x58] sm:$0xff]
        %v1225 = vld [vmem:[%s1212 + $0x60] sm:$0xff]
        %v1226 = vld [vmem:[%s1212 + $0x68] sm:$0xff]
        %v1227 = vld [vmem:[%s1212 + $0x70] sm:$0xff]
        %v1228 = vld [vmem:[%s1212 + $0x78] sm:$0xff]
        %1229 = vmatpush.msra.mxu0 %v1228
        %1230 = vmatpush.msra.mxu0 %v1227
        %1231 = vmatpush.msra.mxu0 %v1226
        %1232 = vmatpush.msra.mxu0 %v1225
        %1233 = vmatpush.msra.mxu0 %v1224
        %1234 = vmatpush.msra.mxu0 %v1223
        %1235 = vmatpush.msra.mxu0 %v1222
        %1236 = vmatpush.msra.mxu0 %v1221
        %1237 = vmatpush.msra.mxu0 %v1220
        %1238 = vmatpush.msra.mxu0 %v1219
        %1239 = vmatpush.msra.mxu0 %v1218
        %1240 = vmatpush.msra.mxu0 %v1217
        %1241 = vmatpush.msra.mxu0 %v1216
        %1242 = vmatpush.msra.mxu0 %v1215
        %1243 = vmatpush.msra.mxu0 %v1214
        %1244 = vmatpush.msra.mxu0 %v1213
        %1245 = vmatmul.f32.gmra.mxu0 %v321
        %v1246 = vpop.f32.mrf.mxu0
        %v1247 = vadd.f32 0.0, %v1246
        %1248 = vmatmul.f32.gmra.mxu0 %v322
        %v1249 = vpop.f32.mrf.mxu0
        %v1250 = vadd.f32 0.0, %v1249
        %1251 = vmatmul.f32.gmra.mxu0 %v323
        %v1252 = vpop.f32.mrf.mxu0
        %v1253 = vadd.f32 0.0, %v1252
        %1254 = vmatmul.f32.gmra.mxu0 %v324
        %v1255 = vpop.f32.mrf.mxu0
        %v1256 = vadd.f32 0.0, %v1255
        %1257 = vmatmul.f32.gmra.mxu0 %v325
        %v1258 = vpop.f32.mrf.mxu0
        %v1259 = vadd.f32 0.0, %v1258
        %1260 = vmatmul.f32.gmra.mxu0 %v326
        %v1261 = vpop.f32.mrf.mxu0
        %v1262 = vadd.f32 0.0, %v1261
        %1263 = vmatmul.f32.gmra.mxu0 %v327
        %v1264 = vpop.f32.mrf.mxu0
        %v1265 = vadd.f32 0.0, %v1264
        %1266 = vmatmul.f32.gmra.mxu0 %v328
        %v1267 = vpop.f32.mrf.mxu0
        %v1268 = vadd.f32 0.0, %v1267
        %1269 = vmatmul.f32.gmra.mxu0 %v329
        %v1270 = vpop.f32.mrf.mxu0
        %v1271 = vadd.f32 0.0, %v1270
        %1272 = vmatmul.f32.gmra.mxu0 %v330
        %v1273 = vpop.f32.mrf.mxu0
        %v1274 = vadd.f32 0.0, %v1273
        %1275 = vmatmul.f32.gmra.mxu0 %v331
        %v1276 = vpop.f32.mrf.mxu0
        %v1277 = vadd.f32 0.0, %v1276
        %1278 = vmatmul.f32.gmra.mxu0 %v332
        %v1279 = vpop.f32.mrf.mxu0
        %v1280 = vadd.f32 0.0, %v1279
        %1281 = vmatmul.f32.gmra.mxu0 %v333
        %v1282 = vpop.f32.mrf.mxu0
        %v1283 = vadd.f32 0.0, %v1282
        %1284 = vmatmul.f32.gmra.mxu0 %v334
        %v1285 = vpop.f32.mrf.mxu0
        %v1286 = vadd.f32 0.0, %v1285
        %1287 = vmatmul.f32.gmra.mxu0 %v335
        %v1288 = vpop.f32.mrf.mxu0
        %v1289 = vadd.f32 0.0, %v1288
        %1290 = vmatmul.f32.gmra.mxu0 %v336
        %v1291 = vpop.f32.mrf.mxu0
        %v1292 = vadd.f32 0.0, %v1291
        %1293 = vmatmul.f32.gmra.mxu0 %v337
        %v1294 = vpop.f32.mrf.mxu0
        %v1295 = vadd.f32 0.0, %v1294
        %1296 = vmatmul.f32.gmra.mxu0 %v338
        %v1297 = vpop.f32.mrf.mxu0
        %v1298 = vadd.f32 0.0, %v1297
        %1299 = vmatmul.f32.gmra.mxu0 %v339
        %v1300 = vpop.f32.mrf.mxu0
        %v1301 = vadd.f32 0.0, %v1300
        %1302 = vmatmul.f32.gmra.mxu0 %v340
        %v1303 = vpop.f32.mrf.mxu0
        %v1304 = vadd.f32 0.0, %v1303
        %1305 = vdwg.mxu0
        %v1306 = vadd.f32 %v1192, %v1247
        %v1307 = vadd.f32 %v1193, %v1250
        %v1308 = vadd.f32 %v1194, %v1253
        %v1309 = vadd.f32 %v1195, %v1256
        %v1310 = vadd.f32 %v1196, %v1259
        %v1311 = vadd.f32 %v1197, %v1262
        %v1312 = vadd.f32 %v1198, %v1265
        %v1313 = vadd.f32 %v1199, %v1268
        %v1314 = vadd.f32 %v1200, %v1271
        %v1315 = vadd.f32 %v1201, %v1274
        %v1316 = vadd.f32 %v1202, %v1277
        %v1317 = vadd.f32 %v1203, %v1280
        %v1318 = vadd.f32 %v1204, %v1283
        %v1319 = vadd.f32 %v1205, %v1286
        %v1320 = vadd.f32 %v1206, %v1289
        %v1321 = vadd.f32 %v1207, %v1292
        %v1322 = vadd.f32 %v1208, %v1295
        %v1323 = vadd.f32 %v1209, %v1298
        %v1324 = vadd.f32 %v1210, %v1301
        %v1325 = vadd.f32 %v1211, %v1304
        %v1326 = vld [vmem:[%s2] sm:$0x1]
        %v1328 = vperm.slane %v1326, 0
        %v1330 = vadd.f32 %v1306, %v1328
        %v1331 = vadd.f32 %v1307, %v1328
        %v1332 = vadd.f32 %v1308, %v1328
        %v1333 = vadd.f32 %v1309, %v1328
        %v1334 = vadd.f32 %v1310, %v1328
        %v1335 = vadd.f32 %v1311, %v1328
        %v1336 = vadd.f32 %v1312, %v1328
        %v1337 = vadd.f32 %v1313, %v1328
        %v1338 = vadd.f32 %v1314, %v1328
        %v1339 = vadd.f32 %v1315, %v1328
        %v1340 = vadd.f32 %v1316, %v1328
        %v1341 = vadd.f32 %v1317, %v1328
        %v1342 = vadd.f32 %v1318, %v1328
        %v1343 = vadd.f32 %v1319, %v1328
        %v1344 = vadd.f32 %v1320, %v1328
        %v1345 = vadd.f32 %v1321, %v1328
        %v1346 = vadd.f32 %v1322, %v1328
        %v1347 = vadd.f32 %v1323, %v1328
        %v1348 = vadd.f32 %v1324, %v1328
        %v1349 = vadd.f32 %v1325, %v1328
        %v1350 = vxor.u32 %v1330, 2147483648
        %v1351 = vxor.u32 %v1331, 2147483648
        %v1352 = vxor.u32 %v1332, 2147483648
        %v1353 = vxor.u32 %v1333, 2147483648
        %v1354 = vxor.u32 %v1334, 2147483648
        %v1355 = vxor.u32 %v1335, 2147483648
        %v1356 = vxor.u32 %v1336, 2147483648
        %v1357 = vxor.u32 %v1337, 2147483648
        %v1358 = vxor.u32 %v1338, 2147483648
        %v1359 = vxor.u32 %v1339, 2147483648
        %v1360 = vxor.u32 %v1340, 2147483648
        %v1361 = vxor.u32 %v1341, 2147483648
        %v1362 = vxor.u32 %v1342, 2147483648
        %v1363 = vxor.u32 %v1343, 2147483648
        %v1364 = vxor.u32 %v1344, 2147483648
        %v1365 = vxor.u32 %v1345, 2147483648
        %v1366 = vxor.u32 %v1346, 2147483648
        %v1367 = vxor.u32 %v1347, 2147483648
        %v1368 = vxor.u32 %v1348, 2147483648
        %v1369 = vxor.u32 %v1349, 2147483648
        %v1370 = vmul.f32 %v1350, 1.442695
        %v1371 = vpow.pop %v1370
        %v1372 = vmul.f32 %v1351, 1.442695
        %v1373 = vpow.pop %v1372
        %v1374 = vmul.f32 %v1352, 1.442695
        %v1375 = vpow.pop %v1374
        %v1376 = vmul.f32 %v1353, 1.442695
        %v1377 = vpow.pop %v1376
        %v1378 = vmul.f32 %v1354, 1.442695
        %v1379 = vpow.pop %v1378
        %v1380 = vmul.f32 %v1355, 1.442695
        %v1381 = vpow.pop %v1380
        %v1382 = vmul.f32 %v1356, 1.442695
        %v1383 = vpow.pop %v1382
        %v1384 = vmul.f32 %v1357, 1.442695
        %v1385 = vpow.pop %v1384
        %v1386 = vmul.f32 %v1358, 1.442695
        %v1387 = vpow.pop %v1386
        %v1388 = vmul.f32 %v1359, 1.442695
        %v1389 = vpow.pop %v1388
        %v1390 = vmul.f32 %v1360, 1.442695
        %v1391 = vpow.pop %v1390
        %v1392 = vmul.f32 %v1361, 1.442695
        %v1393 = vpow.pop %v1392
        %v1394 = vmul.f32 %v1362, 1.442695
        %v1395 = vpow.pop %v1394
        %v1396 = vmul.f32 %v1363, 1.442695
        %v1397 = vpow.pop %v1396
        %v1398 = vmul.f32 %v1364, 1.442695
        %v1399 = vpow.pop %v1398
        %v1400 = vmul.f32 %v1365, 1.442695
        %v1401 = vpow.pop %v1400
        %v1402 = vmul.f32 %v1366, 1.442695
        %v1403 = vpow.pop %v1402
        %v1404 = vmul.f32 %v1367, 1.442695
        %v1405 = vpow.pop %v1404
        %v1406 = vmul.f32 %v1368, 1.442695
        %v1407 = vpow.pop %v1406
        %v1408 = vmul.f32 %v1369, 1.442695
        %v1409 = vpow.pop %v1408
        %v1410 = vadd.f32 %v1371, 1.0
        %v1411 = vadd.f32 %v1373, 1.0
        %v1412 = vadd.f32 %v1375, 1.0
        %v1413 = vadd.f32 %v1377, 1.0
        %v1414 = vadd.f32 %v1379, 1.0
        %v1415 = vadd.f32 %v1381, 1.0
        %v1416 = vadd.f32 %v1383, 1.0
        %v1417 = vadd.f32 %v1385, 1.0
        %v1418 = vadd.f32 %v1387, 1.0
        %v1419 = vadd.f32 %v1389, 1.0
        %v1420 = vadd.f32 %v1391, 1.0
        %v1421 = vadd.f32 %v1393, 1.0
        %v1422 = vadd.f32 %v1395, 1.0
        %v1423 = vadd.f32 %v1397, 1.0
        %v1424 = vadd.f32 %v1399, 1.0
        %v1425 = vadd.f32 %v1401, 1.0
        %v1426 = vadd.f32 %v1403, 1.0
        %v1427 = vadd.f32 %v1405, 1.0
        %v1428 = vadd.f32 %v1407, 1.0
        %v1429 = vadd.f32 %v1409, 1.0
        %v1430 = vrcp.pop %v1410
        %v1431 = vmul.f32 %v1410, %v1430
        %v1432 = vsub.f32 1.0, %v1431
        %v1433 = vmul.f32 %v1430, %v1432
        %v1434 = vadd.f32 %v1430, %v1433
        %vm1435 = vweird.f32 %v1410
        %vm1436 = vweird.f32 %v1430
        %vm1437 = vmor %vm1435, %vm1436
        %v1438 = vsel %vm1437, %v1430, %v1434
        %v1439 = vand.u32 2147483647, %v1410
        %vm1440 = vcmp.eq.f32.partialorder %v1439, 8.507059e+37
        %v1441 = vand.u32 %v1410, 2147483648
        %v1442 = vor.u32 1.1754944e-38, %v1441
        %v1443 = vsel %vm1440, %v1442, %v1438
        %v1444 = vmul.f32 1.0, %v1443
        %v1445 = vrcp.pop %v1411
        %v1446 = vmul.f32 %v1411, %v1445
        %v1447 = vsub.f32 1.0, %v1446
        %v1448 = vmul.f32 %v1445, %v1447
        %v1449 = vadd.f32 %v1445, %v1448
        %vm1450 = vweird.f32 %v1411
        %vm1451 = vweird.f32 %v1445
        %vm1452 = vmor %vm1450, %vm1451
        %v1453 = vsel %vm1452, %v1445, %v1449
        %v1454 = vand.u32 2147483647, %v1411
        %vm1455 = vcmp.eq.f32.partialorder %v1454, 8.507059e+37
        %v1456 = vand.u32 %v1411, 2147483648
        %v1457 = vor.u32 1.1754944e-38, %v1456
        %v1458 = vsel %vm1455, %v1457, %v1453
        %v1459 = vmul.f32 1.0, %v1458
        %v1460 = vrcp.pop %v1412
        %v1461 = vmul.f32 %v1412, %v1460
        %v1462 = vsub.f32 1.0, %v1461
        %v1463 = vmul.f32 %v1460, %v1462
        %v1464 = vadd.f32 %v1460, %v1463
        %vm1465 = vweird.f32 %v1412
        %vm1466 = vweird.f32 %v1460
        %vm1467 = vmor %vm1465, %vm1466
        %v1468 = vsel %vm1467, %v1460, %v1464
        %v1469 = vand.u32 2147483647, %v1412
        %vm1470 = vcmp.eq.f32.partialorder %v1469, 8.507059e+37
        %v1471 = vand.u32 %v1412, 2147483648
        %v1472 = vor.u32 1.1754944e-38, %v1471
        %v1473 = vsel %vm1470, %v1472, %v1468
        %v1474 = vmul.f32 1.0, %v1473
        %v1475 = vrcp.pop %v1413
        %v1476 = vmul.f32 %v1413, %v1475
        %v1477 = vsub.f32 1.0, %v1476
        %v1478 = vmul.f32 %v1475, %v1477
        %v1479 = vadd.f32 %v1475, %v1478
        %vm1480 = vweird.f32 %v1413
        %vm1481 = vweird.f32 %v1475
        %vm1482 = vmor %vm1480, %vm1481
        %v1483 = vsel %vm1482, %v1475, %v1479
        %v1484 = vand.u32 2147483647, %v1413
        %vm1485 = vcmp.eq.f32.partialorder %v1484, 8.507059e+37
        %v1486 = vand.u32 %v1413, 2147483648
        %v1487 = vor.u32 1.1754944e-38, %v1486
        %v1488 = vsel %vm1485, %v1487, %v1483
        %v1489 = vmul.f32 1.0, %v1488
        %v1490 = vrcp.pop %v1414
        %v1491 = vmul.f32 %v1414, %v1490
        %v1492 = vsub.f32 1.0, %v1491
        %v1493 = vmul.f32 %v1490, %v1492
        %v1494 = vadd.f32 %v1490, %v1493
        %vm1495 = vweird.f32 %v1414
        %vm1496 = vweird.f32 %v1490
        %vm1497 = vmor %vm1495, %vm1496
        %v1498 = vsel %vm1497, %v1490, %v1494
        %v1499 = vand.u32 2147483647, %v1414
        %vm1500 = vcmp.eq.f32.partialorder %v1499, 8.507059e+37
        %v1501 = vand.u32 %v1414, 2147483648
        %v1502 = vor.u32 1.1754944e-38, %v1501
        %v1503 = vsel %vm1500, %v1502, %v1498
        %v1504 = vmul.f32 1.0, %v1503
        %v1505 = vrcp.pop %v1415
        %v1506 = vmul.f32 %v1415, %v1505
        %v1507 = vsub.f32 1.0, %v1506
        %v1508 = vmul.f32 %v1505, %v1507
        %v1509 = vadd.f32 %v1505, %v1508
        %vm1510 = vweird.f32 %v1415
        %vm1511 = vweird.f32 %v1505
        %vm1512 = vmor %vm1510, %vm1511
        %v1513 = vsel %vm1512, %v1505, %v1509
        %v1514 = vand.u32 2147483647, %v1415
        %vm1515 = vcmp.eq.f32.partialorder %v1514, 8.507059e+37
        %v1516 = vand.u32 %v1415, 2147483648
        %v1517 = vor.u32 1.1754944e-38, %v1516
        %v1518 = vsel %vm1515, %v1517, %v1513
        %v1519 = vmul.f32 1.0, %v1518
        %v1520 = vrcp.pop %v1416
        %v1521 = vmul.f32 %v1416, %v1520
        %v1522 = vsub.f32 1.0, %v1521
        %v1523 = vmul.f32 %v1520, %v1522
        %v1524 = vadd.f32 %v1520, %v1523
        %vm1525 = vweird.f32 %v1416
        %vm1526 = vweird.f32 %v1520
        %vm1527 = vmor %vm1525, %vm1526
        %v1528 = vsel %vm1527, %v1520, %v1524
        %v1529 = vand.u32 2147483647, %v1416
        %vm1530 = vcmp.eq.f32.partialorder %v1529, 8.507059e+37
        %v1531 = vand.u32 %v1416, 2147483648
        %v1532 = vor.u32 1.1754944e-38, %v1531
        %v1533 = vsel %vm1530, %v1532, %v1528
        %v1534 = vmul.f32 1.0, %v1533
        %v1535 = vrcp.pop %v1417
        %v1536 = vmul.f32 %v1417, %v1535
        %v1537 = vsub.f32 1.0, %v1536
        %v1538 = vmul.f32 %v1535, %v1537
        %v1539 = vadd.f32 %v1535, %v1538
        %vm1540 = vweird.f32 %v1417
        %vm1541 = vweird.f32 %v1535
        %vm1542 = vmor %vm1540, %vm1541
        %v1543 = vsel %vm1542, %v1535, %v1539
        %v1544 = vand.u32 2147483647, %v1417
        %vm1545 = vcmp.eq.f32.partialorder %v1544, 8.507059e+37
        %v1546 = vand.u32 %v1417, 2147483648
        %v1547 = vor.u32 1.1754944e-38, %v1546
        %v1548 = vsel %vm1545, %v1547, %v1543
        %v1549 = vmul.f32 1.0, %v1548
        %v1550 = vrcp.pop %v1418
        %v1551 = vmul.f32 %v1418, %v1550
        %v1552 = vsub.f32 1.0, %v1551
        %v1553 = vmul.f32 %v1550, %v1552
        %v1554 = vadd.f32 %v1550, %v1553
        %vm1555 = vweird.f32 %v1418
        %vm1556 = vweird.f32 %v1550
        %vm1557 = vmor %vm1555, %vm1556
        %v1558 = vsel %vm1557, %v1550, %v1554
        %v1559 = vand.u32 2147483647, %v1418
        %vm1560 = vcmp.eq.f32.partialorder %v1559, 8.507059e+37
        %v1561 = vand.u32 %v1418, 2147483648
        %v1562 = vor.u32 1.1754944e-38, %v1561
        %v1563 = vsel %vm1560, %v1562, %v1558
        %v1564 = vmul.f32 1.0, %v1563
        %v1565 = vrcp.pop %v1419
        %v1566 = vmul.f32 %v1419, %v1565
        %v1567 = vsub.f32 1.0, %v1566
        %v1568 = vmul.f32 %v1565, %v1567
        %v1569 = vadd.f32 %v1565, %v1568
        %vm1570 = vweird.f32 %v1419
        %vm1571 = vweird.f32 %v1565
        %vm1572 = vmor %vm1570, %vm1571
        %v1573 = vsel %vm1572, %v1565, %v1569
        %v1574 = vand.u32 2147483647, %v1419
        %vm1575 = vcmp.eq.f32.partialorder %v1574, 8.507059e+37
        %v1576 = vand.u32 %v1419, 2147483648
        %v1577 = vor.u32 1.1754944e-38, %v1576
        %v1578 = vsel %vm1575, %v1577, %v1573
        %v1579 = vmul.f32 1.0, %v1578
        %v1580 = vrcp.pop %v1420
        %v1581 = vmul.f32 %v1420, %v1580
        %v1582 = vsub.f32 1.0, %v1581
        %v1583 = vmul.f32 %v1580, %v1582
        %v1584 = vadd.f32 %v1580, %v1583
        %vm1585 = vweird.f32 %v1420
        %vm1586 = vweird.f32 %v1580
        %vm1587 = vmor %vm1585, %vm1586
        %v1588 = vsel %vm1587, %v1580, %v1584
        %v1589 = vand.u32 2147483647, %v1420
        %vm1590 = vcmp.eq.f32.partialorder %v1589, 8.507059e+37
        %v1591 = vand.u32 %v1420, 2147483648
        %v1592 = vor.u32 1.1754944e-38, %v1591
        %v1593 = vsel %vm1590, %v1592, %v1588
        %v1594 = vmul.f32 1.0, %v1593
        %v1595 = vrcp.pop %v1421
        %v1596 = vmul.f32 %v1421, %v1595
        %v1597 = vsub.f32 1.0, %v1596
        %v1598 = vmul.f32 %v1595, %v1597
        %v1599 = vadd.f32 %v1595, %v1598
        %vm1600 = vweird.f32 %v1421
        %vm1601 = vweird.f32 %v1595
        %vm1602 = vmor %vm1600, %vm1601
        %v1603 = vsel %vm1602, %v1595, %v1599
        %v1604 = vand.u32 2147483647, %v1421
        %vm1605 = vcmp.eq.f32.partialorder %v1604, 8.507059e+37
        %v1606 = vand.u32 %v1421, 2147483648
        %v1607 = vor.u32 1.1754944e-38, %v1606
        %v1608 = vsel %vm1605, %v1607, %v1603
        %v1609 = vmul.f32 1.0, %v1608
        %v1610 = vrcp.pop %v1422
        %v1611 = vmul.f32 %v1422, %v1610
        %v1612 = vsub.f32 1.0, %v1611
        %v1613 = vmul.f32 %v1610, %v1612
        %v1614 = vadd.f32 %v1610, %v1613
        %vm1615 = vweird.f32 %v1422
        %vm1616 = vweird.f32 %v1610
        %vm1617 = vmor %vm1615, %vm1616
        %v1618 = vsel %vm1617, %v1610, %v1614
        %v1619 = vand.u32 2147483647, %v1422
        %vm1620 = vcmp.eq.f32.partialorder %v1619, 8.507059e+37
        %v1621 = vand.u32 %v1422, 2147483648
        %v1622 = vor.u32 1.1754944e-38, %v1621
        %v1623 = vsel %vm1620, %v1622, %v1618
        %v1624 = vmul.f32 1.0, %v1623
        %v1625 = vrcp.pop %v1423
        %v1626 = vmul.f32 %v1423, %v1625
        %v1627 = vsub.f32 1.0, %v1626
        %v1628 = vmul.f32 %v1625, %v1627
        %v1629 = vadd.f32 %v1625, %v1628
        %vm1630 = vweird.f32 %v1423
        %vm1631 = vweird.f32 %v1625
        %vm1632 = vmor %vm1630, %vm1631
        %v1633 = vsel %vm1632, %v1625, %v1629
        %v1634 = vand.u32 2147483647, %v1423
        %vm1635 = vcmp.eq.f32.partialorder %v1634, 8.507059e+37
        %v1636 = vand.u32 %v1423, 2147483648
        %v1637 = vor.u32 1.1754944e-38, %v1636
        %v1638 = vsel %vm1635, %v1637, %v1633
        %v1639 = vmul.f32 1.0, %v1638
        %v1640 = vrcp.pop %v1424
        %v1641 = vmul.f32 %v1424, %v1640
        %v1642 = vsub.f32 1.0, %v1641
        %v1643 = vmul.f32 %v1640, %v1642
        %v1644 = vadd.f32 %v1640, %v1643
        %vm1645 = vweird.f32 %v1424
        %vm1646 = vweird.f32 %v1640
        %vm1647 = vmor %vm1645, %vm1646
        %v1648 = vsel %vm1647, %v1640, %v1644
        %v1649 = vand.u32 2147483647, %v1424
        %vm1650 = vcmp.eq.f32.partialorder %v1649, 8.507059e+37
        %v1651 = vand.u32 %v1424, 2147483648
        %v1652 = vor.u32 1.1754944e-38, %v1651
        %v1653 = vsel %vm1650, %v1652, %v1648
        %v1654 = vmul.f32 1.0, %v1653
        %v1655 = vrcp.pop %v1425
        %v1656 = vmul.f32 %v1425, %v1655
        %v1657 = vsub.f32 1.0, %v1656
        %v1658 = vmul.f32 %v1655, %v1657
        %v1659 = vadd.f32 %v1655, %v1658
        %vm1660 = vweird.f32 %v1425
        %vm1661 = vweird.f32 %v1655
        %vm1662 = vmor %vm1660, %vm1661
        %v1663 = vsel %vm1662, %v1655, %v1659
        %v1664 = vand.u32 2147483647, %v1425
        %vm1665 = vcmp.eq.f32.partialorder %v1664, 8.507059e+37
        %v1666 = vand.u32 %v1425, 2147483648
        %v1667 = vor.u32 1.1754944e-38, %v1666
        %v1668 = vsel %vm1665, %v1667, %v1663
        %v1669 = vmul.f32 1.0, %v1668
        %v1670 = vrcp.pop %v1426
        %v1671 = vmul.f32 %v1426, %v1670
        %v1672 = vsub.f32 1.0, %v1671
        %v1673 = vmul.f32 %v1670, %v1672
        %v1674 = vadd.f32 %v1670, %v1673
        %vm1675 = vweird.f32 %v1426
        %vm1676 = vweird.f32 %v1670
        %vm1677 = vmor %vm1675, %vm1676
        %v1678 = vsel %vm1677, %v1670, %v1674
        %v1679 = vand.u32 2147483647, %v1426
        %vm1680 = vcmp.eq.f32.partialorder %v1679, 8.507059e+37
        %v1681 = vand.u32 %v1426, 2147483648
        %v1682 = vor.u32 1.1754944e-38, %v1681
        %v1683 = vsel %vm1680, %v1682, %v1678
        %v1684 = vmul.f32 1.0, %v1683
        %v1685 = vrcp.pop %v1427
        %v1686 = vmul.f32 %v1427, %v1685
        %v1687 = vsub.f32 1.0, %v1686
        %v1688 = vmul.f32 %v1685, %v1687
        %v1689 = vadd.f32 %v1685, %v1688
        %vm1690 = vweird.f32 %v1427
        %vm1691 = vweird.f32 %v1685
        %vm1692 = vmor %vm1690, %vm1691
        %v1693 = vsel %vm1692, %v1685, %v1689
        %v1694 = vand.u32 2147483647, %v1427
        %vm1695 = vcmp.eq.f32.partialorder %v1694, 8.507059e+37
        %v1696 = vand.u32 %v1427, 2147483648
        %v1697 = vor.u32 1.1754944e-38, %v1696
        %v1698 = vsel %vm1695, %v1697, %v1693
        %v1699 = vmul.f32 1.0, %v1698
        %v1700 = vrcp.pop %v1428
        %v1701 = vmul.f32 %v1428, %v1700
        %v1702 = vsub.f32 1.0, %v1701
        %v1703 = vmul.f32 %v1700, %v1702
        %v1704 = vadd.f32 %v1700, %v1703
        %vm1705 = vweird.f32 %v1428
        %vm1706 = vweird.f32 %v1700
        %vm1707 = vmor %vm1705, %vm1706
        %v1708 = vsel %vm1707, %v1700, %v1704
        %v1709 = vand.u32 2147483647, %v1428
        %vm1710 = vcmp.eq.f32.partialorder %v1709, 8.507059e+37
        %v1711 = vand.u32 %v1428, 2147483648
        %v1712 = vor.u32 1.1754944e-38, %v1711
        %v1713 = vsel %vm1710, %v1712, %v1708
        %v1714 = vmul.f32 1.0, %v1713
        %v1715 = vrcp.pop %v1429
        %v1716 = vmul.f32 %v1429, %v1715
        %v1717 = vsub.f32 1.0, %v1716
        %v1718 = vmul.f32 %v1715, %v1717
        %v1719 = vadd.f32 %v1715, %v1718
        %vm1720 = vweird.f32 %v1429
        %vm1721 = vweird.f32 %v1715
        %vm1722 = vmor %vm1720, %vm1721
        %v1723 = vsel %vm1722, %v1715, %v1719
        %v1724 = vand.u32 2147483647, %v1429
        %vm1725 = vcmp.eq.f32.partialorder %v1724, 8.507059e+37
        %v1726 = vand.u32 %v1429, 2147483648
        %v1727 = vor.u32 1.1754944e-38, %v1726
        %v1728 = vsel %vm1725, %v1727, %v1723
        %v1729 = vmul.f32 1.0, %v1728
        %v1730 = vmul.f32 %v1330, %v1444
        %v1731 = vmul.f32 %v1331, %v1459
        %v1732 = vmul.f32 %v1332, %v1474
        %v1733 = vmul.f32 %v1333, %v1489
        %v1734 = vmul.f32 %v1334, %v1504
        %v1735 = vmul.f32 %v1335, %v1519
        %v1736 = vmul.f32 %v1336, %v1534
        %v1737 = vmul.f32 %v1337, %v1549
        %v1738 = vmul.f32 %v1338, %v1564
        %v1739 = vmul.f32 %v1339, %v1579
        %v1740 = vmul.f32 %v1340, %v1594
        %v1741 = vmul.f32 %v1341, %v1609
        %v1742 = vmul.f32 %v1342, %v1624
        %v1743 = vmul.f32 %v1343, %v1639
        %v1744 = vmul.f32 %v1344, %v1654
        %v1745 = vmul.f32 %v1345, %v1669
        %v1746 = vmul.f32 %v1346, %v1684
        %v1747 = vmul.f32 %v1347, %v1699
        %v1748 = vmul.f32 %v1348, %v1714
        %v1749 = vmul.f32 %v1349, %v1729
        %p1750 = scmp.gt.s32.totalorder %s25, 0
        %s1751 = scalar_select %p1750, 1, 0
        %v1752 = vstv %s1751
        %vm1753 = vcmp.eq.s32.totalorder %v1752, 1
        %p1754 = scmp.lt.s32.totalorder %s25, 1
        %s1755 = scalar_select %p1754, 1, 0
        %v1756 = vstv %s1755
        %vm1757 = vcmp.eq.s32.totalorder %v1756, 1
        %v1758 = vsel %vm1753, 1, 0
        %v1759 = vsel %vm1757, 1, 0
        %vm1760 = vcmp.eq.s32.totalorder %v1758, 1
        %vm1761 = vcmp.eq.s32.totalorder %v1759, 1
        %v1762 = vsel %vm1760, %v1730, 0.0
        %v1763 = vsel %vm1760, %v1731, 0.0
        %v1764 = vsel 1, %v1732, 0.0
        %v1765 = vsel 1, %v1733, 0.0
        %v1766 = vsel 1, %v1734, 0.0
        %v1767 = vsel 1, %v1735, 0.0
        %v1768 = vsel 1, %v1736, 0.0
        %v1769 = vsel 1, %v1737, 0.0
        %v1770 = vsel 1, %v1738, 0.0
        %v1771 = vsel 1, %v1739, 0.0
        %v1772 = vsel 1, %v1740, 0.0
        %v1773 = vsel 1, %v1741, 0.0
        %v1774 = vsel 1, %v1742, 0.0
        %v1775 = vsel 1, %v1743, 0.0
        %v1776 = vsel 1, %v1744, 0.0
        %v1777 = vsel 1, %v1745, 0.0
        %v1778 = vsel 1, %v1746, 0.0
        %v1779 = vsel 1, %v1747, 0.0
        %v1780 = vsel %vm1761, %v1748, 0.0
        %v1781 = vsel %vm1761, %v1749, 0.0
        %1782 = vst [vmem:[#allocation2] sm:$0x1] 0.0
        %1783 = vst [vmem:[#allocation2 + $0x18] sm:$0x1] 0.0
        %1784 = vst [vmem:[#allocation2 + $0x30] sm:$0x1] 0.0
        %1785 = vst [vmem:[#allocation2 + $0x48] sm:$0x1] 0.0
        %1786 = vst [vmem:[#allocation2 + $0x60] sm:$0x1] 0.0
        %1787 = vst [vmem:[#allocation2 + $0x78] sm:$0x1] 0.0
        %1788 = vst [vmem:[#allocation2 + $0x90] sm:$0x1] 0.0
        %1789 = vst [vmem:[#allocation2 + $0xa8] sm:$0x1] 0.0
        %1790 = vst [vmem:[#allocation2 + $0xc0] sm:$0x1] 0.0
        %1791 = vst [vmem:[#allocation2 + $0xd8] sm:$0x1] 0.0
        %1792 = vst [vmem:[#allocation2 + $0x11] sm:$0x1] 0.0
        %1793 = vst [vmem:[#allocation2 + $0x29] sm:$0x1] 0.0
        %1794 = vst [vmem:[#allocation2 + $0x41] sm:$0x1] 0.0
        %1795 = vst [vmem:[#allocation2 + $0x59] sm:$0x1] 0.0
        %1796 = vst [vmem:[#allocation2 + $0x71] sm:$0x1] 0.0
        %1797 = vst [vmem:[#allocation2 + $0x89] sm:$0x1] 0.0
        %1798 = vst [vmem:[#allocation2 + $0xa1] sm:$0x1] 0.0
        %1799 = vst [vmem:[#allocation2 + $0xb9] sm:$0x1] 0.0
        %1800 = vst [vmem:[#allocation2 + $0xd1] sm:$0x1] 0.0
        %1801 = vst [vmem:[#allocation2 + $0xe9] sm:$0x1] 0.0
        %1802 = vst [vmem:[#allocation2 + $0x1] sm:$0xff] %v1762
        %1803 = vst [vmem:[#allocation2 + $0x9] sm:$0xff] %v1763
        %1804 = vst [vmem:[#allocation2 + $0x19] sm:$0xff] %v1764
        %1805 = vst [vmem:[#allocation2 + $0x21] sm:$0xff] %v1765
        %1806 = vst [vmem:[#allocation2 + $0x31] sm:$0xff] %v1766
        %1807 = vst [vmem:[#allocation2 + $0x39] sm:$0xff] %v1767
        %1808 = vst [vmem:[#allocation2 + $0x49] sm:$0xff] %v1768
        %1809 = vst [vmem:[#allocation2 + $0x51] sm:$0xff] %v1769
        %1810 = vst [vmem:[#allocation2 + $0x61] sm:$0xff] %v1770
        %1811 = vst [vmem:[#allocation2 + $0x69] sm:$0xff] %v1771
        %1812 = vst [vmem:[#allocation2 + $0x79] sm:$0xff] %v1772
        %1813 = vst [vmem:[#allocation2 + $0x81] sm:$0xff] %v1773
        %1814 = vst [vmem:[#allocation2 + $0x91] sm:$0xff] %v1774
        %1815 = vst [vmem:[#allocation2 + $0x99] sm:$0xff] %v1775
        %1816 = vst [vmem:[#allocation2 + $0xa9] sm:$0xff] %v1776
        %1817 = vst [vmem:[#allocation2 + $0xb1] sm:$0xff] %v1777
        %1818 = vst [vmem:[#allocation2 + $0xc1] sm:$0xff] %v1778
        %1819 = vst [vmem:[#allocation2 + $0xc9] sm:$0xff] %v1779
        %1820 = vst [vmem:[#allocation2 + $0xd9] sm:$0xff] %v1780
        %1821 = vst [vmem:[#allocation2 + $0xe1] sm:$0xff] %v1781
        %v1822 = vld [vmem:[#allocation2] sm:$0xff]
        %v1823 = vld [vmem:[#allocation2 + $0x8] sm:$0xff]
        %v1824 = vld [vmem:[#allocation2 + $0x18] sm:$0xff]
        %v1825 = vld [vmem:[#allocation2 + $0x20] sm:$0xff]
        %v1826 = vld [vmem:[#allocation2 + $0x30] sm:$0xff]
        %v1827 = vld [vmem:[#allocation2 + $0x38] sm:$0xff]
        %v1828 = vld [vmem:[#allocation2 + $0x48] sm:$0xff]
        %v1829 = vld [vmem:[#allocation2 + $0x50] sm:$0xff]
        %v1830 = vld [vmem:[#allocation2 + $0x60] sm:$0xff]
        %v1831 = vld [vmem:[#allocation2 + $0x68] sm:$0xff]
        %v1832 = vld [vmem:[#allocation2 + $0x78] sm:$0xff]
        %v1833 = vld [vmem:[#allocation2 + $0x80] sm:$0xff]
        %v1834 = vld [vmem:[#allocation2 + $0x90] sm:$0xff]
        %v1835 = vld [vmem:[#allocation2 + $0x98] sm:$0xff]
        %v1836 = vld [vmem:[#allocation2 + $0xa8] sm:$0xff]
        %v1837 = vld [vmem:[#allocation2 + $0xb0] sm:$0xff]
        %v1838 = vld [vmem:[#allocation2 + $0xc0] sm:$0xff]
        %v1839 = vld [vmem:[#allocation2 + $0xc8] sm:$0xff]
        %v1840 = vld [vmem:[#allocation2 + $0xd8] sm:$0xff]
        %v1841 = vld [vmem:[#allocation2 + $0xe0] sm:$0xff]
        %v1842 = vld [vmem:[#allocation2 + $0x1] sm:$0xff]
        %v1843 = vld [vmem:[#allocation2 + $0x9] sm:$0xff]
        %v1844 = vld [vmem:[#allocation2 + $0x19] sm:$0xff]
        %v1845 = vld [vmem:[#allocation2 + $0x21] sm:$0xff]
        %v1846 = vld [vmem:[#allocation2 + $0x31] sm:$0xff]
        %v1847 = vld [vmem:[#allocation2 + $0x39] sm:$0xff]
        %v1848 = vld [vmem:[#allocation2 + $0x49] sm:$0xff]
        %v1849 = vld [vmem:[#allocation2 + $0x51] sm:$0xff]
        %v1850 = vld [vmem:[#allocation2 + $0x61] sm:$0xff]
        %v1851 = vld [vmem:[#allocation2 + $0x69] sm:$0xff]
        %v1852 = vld [vmem:[#allocation2 + $0x79] sm:$0xff]
        %v1853 = vld [vmem:[#allocation2 + $0x81] sm:$0xff]
        %v1854 = vld [vmem:[#allocation2 + $0x91] sm:$0xff]
        %v1855 = vld [vmem:[#allocation2 + $0x99] sm:$0xff]
        %v1856 = vld [vmem:[#allocation2 + $0xa9] sm:$0xff]
        %v1857 = vld [vmem:[#allocation2 + $0xb1] sm:$0xff]
        %v1858 = vld [vmem:[#allocation2 + $0xc1] sm:$0xff]
        %v1859 = vld [vmem:[#allocation2 + $0xc9] sm:$0xff]
        %v1860 = vld [vmem:[#allocation2 + $0xd9] sm:$0xff]
        %v1861 = vld [vmem:[#allocation2 + $0xe1] sm:$0xff]
        %v1862 = vld [vmem:[#allocation2 + $0x2] sm:$0xff]
        %v1863 = vld [vmem:[#allocation2 + $0xa] sm:$0xff]
        %v1864 = vld [vmem:[#allocation2 + $0x1a] sm:$0xff]
        %v1865 = vld [vmem:[#allocation2 + $0x22] sm:$0xff]
        %v1866 = vld [vmem:[#allocation2 + $0x32] sm:$0xff]
        %v1867 = vld [vmem:[#allocation2 + $0x3a] sm:$0xff]
        %v1868 = vld [vmem:[#allocation2 + $0x4a] sm:$0xff]
        %v1869 = vld [vmem:[#allocation2 + $0x52] sm:$0xff]
        %v1870 = vld [vmem:[#allocation2 + $0x62] sm:$0xff]
        %v1871 = vld [vmem:[#allocation2 + $0x6a] sm:$0xff]
        %v1872 = vld [vmem:[#allocation2 + $0x7a] sm:$0xff]
        %v1873 = vld [vmem:[#allocation2 + $0x82] sm:$0xff]
        %v1874 = vld [vmem:[#allocation2 + $0x92] sm:$0xff]
        %v1875 = vld [vmem:[#allocation2 + $0x9a] sm:$0xff]
        %v1876 = vld [vmem:[#allocation2 + $0xaa] sm:$0xff]
        %v1877 = vld [vmem:[#allocation2 + $0xb2] sm:$0xff]
        %v1878 = vld [vmem:[#allocation2 + $0xc2] sm:$0xff]
        %v1879 = vld [vmem:[#allocation2 + $0xca] sm:$0xff]
        %v1880 = vld [vmem:[#allocation2 + $0xda] sm:$0xff]
        %v1881 = vld [vmem:[#allocation2 + $0xe2] sm:$0xff]
        %v1882 = vld [vmem:[#allocation3] sm:$0xff]
        %v1883 = vld [vmem:[#allocation3 + $0x8] sm:$0xff]
        %v1884 = vld [vmem:[#allocation3 + $0x10] sm:$0xff]
        %v1885 = vld [vmem:[#allocation3 + $0x18] sm:$0xff]
        %v1886 = vld [vmem:[#allocation3 + $0x20] sm:$0xff]
        %v1887 = vld [vmem:[#allocation3 + $0x28] sm:$0xff]
        %v1888 = vld [vmem:[#allocation3 + $0x30] sm:$0xff]
        %v1889 = vld [vmem:[#allocation3 + $0x38] sm:$0xff]
        %v1890 = vld [vmem:[#allocation3 + $0x40] sm:$0xff]
        %v1891 = vld [vmem:[#allocation3 + $0x48] sm:$0xff]
        %v1892 = vld [vmem:[#allocation3 + $0x50] sm:$0xff]
        %v1893 = vld [vmem:[#allocation3 + $0x58] sm:$0xff]
        %v1894 = vld [vmem:[#allocation3 + $0x60] sm:$0xff]
        %v1895 = vld [vmem:[#allocation3 + $0x68] sm:$0xff]
        %v1896 = vld [vmem:[#allocation3 + $0x70] sm:$0xff]
        %v1897 = vld [vmem:[#allocation3 + $0x78] sm:$0xff]
        %s1898 = scalar_lea.vmem [#allocation3], 128
        %v1899 = vld [vmem:[%s1898] sm:$0xff]
        %v1900 = vld [vmem:[%s1898 + $0x8] sm:$0xff]
        %v1901 = vld [vmem:[%s1898 + $0x10] sm:$0xff]
        %v1902 = vld [vmem:[%s1898 + $0x18] sm:$0xff]
        %v1903 = vld [vmem:[%s1898 + $0x20] sm:$0xff]
        %v1904 = vld [vmem:[%s1898 + $0x28] sm:$0xff]
        %v1905 = vld [vmem:[%s1898 + $0x30] sm:$0xff]
        %v1906 = vld [vmem:[%s1898 + $0x38] sm:$0xff]
        %v1907 = vld [vmem:[%s1898 + $0x40] sm:$0xff]
        %v1908 = vld [vmem:[%s1898 + $0x48] sm:$0xff]
        %v1909 = vld [vmem:[%s1898 + $0x50] sm:$0xff]
        %v1910 = vld [vmem:[%s1898 + $0x58] sm:$0xff]
        %v1911 = vld [vmem:[%s1898 + $0x60] sm:$0xff]
        %v1912 = vld [vmem:[%s1898 + $0x68] sm:$0xff]
        %v1913 = vld [vmem:[%s1898 + $0x70] sm:$0xff]
        %v1914 = vld [vmem:[%s1898 + $0x78] sm:$0xff]
        %1915 = vmatpush.msra.mxu0 %v1914
        %1916 = vmatpush.msra.mxu0 %v1913
        %1917 = vmatpush.msra.mxu0 %v1912
        %1918 = vmatpush.msra.mxu0 %v1911
        %1919 = vmatpush.msra.mxu0 %v1910
        %1920 = vmatpush.msra.mxu0 %v1909
        %1921 = vmatpush.msra.mxu0 %v1908
        %1922 = vmatpush.msra.mxu0 %v1907
        %1923 = vmatpush.msra.mxu0 %v1906
        %1924 = vmatpush.msra.mxu0 %v1905
        %1925 = vmatpush.msra.mxu0 %v1904
        %1926 = vmatpush.msra.mxu0 %v1903
        %1927 = vmatpush.msra.mxu0 %v1902
        %1928 = vmatpush.msra.mxu0 %v1901
        %1929 = vmatpush.msra.mxu0 %v1900
        %1930 = vmatpush.msra.mxu0 %v1899
        %1931 = vmatmul.f32.gmra.mxu0 %v1842
        %v1932 = vpop.f32.mrf.mxu0
        %v1933 = vadd.f32 0.0, %v1932
        %1934 = vmatmul.f32.gmra.mxu0 %v1843
        %v1935 = vpop.f32.mrf.mxu0
        %v1936 = vadd.f32 0.0, %v1935
        %1937 = vmatmul.f32.gmra.mxu0 %v1844
        %v1938 = vpop.f32.mrf.mxu0
        %v1939 = vadd.f32 0.0, %v1938
        %1940 = vmatmul.f32.gmra.mxu0 %v1845
        %v1941 = vpop.f32.mrf.mxu0
        %v1942 = vadd.f32 0.0, %v1941
        %1943 = vmatmul.f32.gmra.mxu0 %v1846
        %v1944 = vpop.f32.mrf.mxu0
        %v1945 = vadd.f32 0.0, %v1944
        %1946 = vmatmul.f32.gmra.mxu0 %v1847
        %v1947 = vpop.f32.mrf.mxu0
        %v1948 = vadd.f32 0.0, %v1947
        %1949 = vmatmul.f32.gmra.mxu0 %v1848
        %v1950 = vpop.f32.mrf.mxu0
        %v1951 = vadd.f32 0.0, %v1950
        %1952 = vmatmul.f32.gmra.mxu0 %v1849
        %v1953 = vpop.f32.mrf.mxu0
        %v1954 = vadd.f32 0.0, %v1953
        %1955 = vmatmul.f32.gmra.mxu0 %v1850
        %v1956 = vpop.f32.mrf.mxu0
        %v1957 = vadd.f32 0.0, %v1956
        %1958 = vmatmul.f32.gmra.mxu0 %v1851
        %v1959 = vpop.f32.mrf.mxu0
        %v1960 = vadd.f32 0.0, %v1959
        %1961 = vmatmul.f32.gmra.mxu0 %v1852
        %v1962 = vpop.f32.mrf.mxu0
        %v1963 = vadd.f32 0.0, %v1962
        %1964 = vmatmul.f32.gmra.mxu0 %v1853
        %v1965 = vpop.f32.mrf.mxu0
        %v1966 = vadd.f32 0.0, %v1965
        %1967 = vmatmul.f32.gmra.mxu0 %v1854
        %v1968 = vpop.f32.mrf.mxu0
        %v1969 = vadd.f32 0.0, %v1968
        %1970 = vmatmul.f32.gmra.mxu0 %v1855
        %v1971 = vpop.f32.mrf.mxu0
        %v1972 = vadd.f32 0.0, %v1971
        %1973 = vmatmul.f32.gmra.mxu0 %v1856
        %v1974 = vpop.f32.mrf.mxu0
        %v1975 = vadd.f32 0.0, %v1974
        %1976 = vmatmul.f32.gmra.mxu0 %v1857
        %v1977 = vpop.f32.mrf.mxu0
        %v1978 = vadd.f32 0.0, %v1977
        %1979 = vdwg.mxu0
        %1980 = vmatpush.msra.mxu0 %v1897
        %1981 = vmatpush.msra.mxu0 %v1896
        %1982 = vmatpush.msra.mxu0 %v1895
        %1983 = vmatpush.msra.mxu0 %v1894
        %1984 = vmatpush.msra.mxu0 %v1893
        %1985 = vmatpush.msra.mxu0 %v1892
        %1986 = vmatpush.msra.mxu0 %v1891
        %1987 = vmatpush.msra.mxu0 %v1890
        %1988 = vmatpush.msra.mxu0 %v1889
        %1989 = vmatpush.msra.mxu0 %v1888
        %1990 = vmatpush.msra.mxu0 %v1887
        %1991 = vmatpush.msra.mxu0 %v1886
        %1992 = vmatpush.msra.mxu0 %v1885
        %1993 = vmatpush.msra.mxu0 %v1884
        %1994 = vmatpush.msra.mxu0 %v1883
        %1995 = vmatpush.msra.mxu0 %v1882
        %1996 = vmatmul.f32.gmra.mxu0 %v1822
        %v1997 = vpop.f32.mrf.mxu0
        %v1998 = vadd.f32 %v1933, %v1997
        %1999 = vmatmul.f32.gmra.mxu0 %v1823
        %v2000 = vpop.f32.mrf.mxu0
        %v2001 = vadd.f32 %v1936, %v2000
        %2002 = vmatmul.f32.gmra.mxu0 %v1824
        %v2003 = vpop.f32.mrf.mxu0
        %v2004 = vadd.f32 %v1939, %v2003
        %2005 = vmatmul.f32.gmra.mxu0 %v1825
        %v2006 = vpop.f32.mrf.mxu0
        %v2007 = vadd.f32 %v1942, %v2006
        %2008 = vmatmul.f32.gmra.mxu0 %v1826
        %v2009 = vpop.f32.mrf.mxu0
        %v2010 = vadd.f32 %v1945, %v2009
        %2011 = vmatmul.f32.gmra.mxu0 %v1827
        %v2012 = vpop.f32.mrf.mxu0
        %v2013 = vadd.f32 %v1948, %v2012
        %2014 = vmatmul.f32.gmra.mxu0 %v1828
        %v2015 = vpop.f32.mrf.mxu0
        %v2016 = vadd.f32 %v1951, %v2015
        %2017 = vmatmul.f32.gmra.mxu0 %v1829
        %v2018 = vpop.f32.mrf.mxu0
        %v2019 = vadd.f32 %v1954, %v2018
        %2020 = vmatmul.f32.gmra.mxu0 %v1830
        %v2021 = vpop.f32.mrf.mxu0
        %v2022 = vadd.f32 %v1957, %v2021
        %2023 = vmatmul.f32.gmra.mxu0 %v1831
        %v2024 = vpop.f32.mrf.mxu0
        %v2025 = vadd.f32 %v1960, %v2024
        %2026 = vmatmul.f32.gmra.mxu0 %v1832
        %v2027 = vpop.f32.mrf.mxu0
        %v2028 = vadd.f32 %v1963, %v2027
        %2029 = vmatmul.f32.gmra.mxu0 %v1833
        %v2030 = vpop.f32.mrf.mxu0
        %v2031 = vadd.f32 %v1966, %v2030
        %2032 = vmatmul.f32.gmra.mxu0 %v1834
        %v2033 = vpop.f32.mrf.mxu0
        %v2034 = vadd.f32 %v1969, %v2033
        %2035 = vmatmul.f32.gmra.mxu0 %v1835
        %v2036 = vpop.f32.mrf.mxu0
        %v2037 = vadd.f32 %v1972, %v2036
        %2038 = vmatmul.f32.gmra.mxu0 %v1836
        %v2039 = vpop.f32.mrf.mxu0
        %v2040 = vadd.f32 %v1975, %v2039
        %2041 = vmatmul.f32.gmra.mxu0 %v1837
        %v2042 = vpop.f32.mrf.mxu0
        %v2043 = vadd.f32 %v1978, %v2042
        %2044 = vdwg.mxu0
        %s2045 = scalar_lea.vmem [#allocation3], 256
        %v2046 = vld [vmem:[%s2045] sm:$0xff]
        %v2047 = vld [vmem:[%s2045 + $0x8] sm:$0xff]
        %v2048 = vld [vmem:[%s2045 + $0x10] sm:$0xff]
        %v2049 = vld [vmem:[%s2045 + $0x18] sm:$0xff]
        %v2050 = vld [vmem:[%s2045 + $0x20] sm:$0xff]
        %v2051 = vld [vmem:[%s2045 + $0x28] sm:$0xff]
        %v2052 = vld [vmem:[%s2045 + $0x30] sm:$0xff]
        %v2053 = vld [vmem:[%s2045 + $0x38] sm:$0xff]
        %v2054 = vld [vmem:[%s2045 + $0x40] sm:$0xff]
        %v2055 = vld [vmem:[%s2045 + $0x48] sm:$0xff]
        %v2056 = vld [vmem:[%s2045 + $0x50] sm:$0xff]
        %v2057 = vld [vmem:[%s2045 + $0x58] sm:$0xff]
        %v2058 = vld [vmem:[%s2045 + $0x60] sm:$0xff]
        %v2059 = vld [vmem:[%s2045 + $0x68] sm:$0xff]
        %v2060 = vld [vmem:[%s2045 + $0x70] sm:$0xff]
        %v2061 = vld [vmem:[%s2045 + $0x78] sm:$0xff]
        %2062 = vmatpush.msra.mxu0 %v2061
        %2063 = vmatpush.msra.mxu0 %v2060
        %2064 = vmatpush.msra.mxu0 %v2059
        %2065 = vmatpush.msra.mxu0 %v2058
        %2066 = vmatpush.msra.mxu0 %v2057
        %2067 = vmatpush.msra.mxu0 %v2056
        %2068 = vmatpush.msra.mxu0 %v2055
        %2069 = vmatpush.msra.mxu0 %v2054
        %2070 = vmatpush.msra.mxu0 %v2053
        %2071 = vmatpush.msra.mxu0 %v2052
        %2072 = vmatpush.msra.mxu0 %v2051
        %2073 = vmatpush.msra.mxu0 %v2050
        %2074 = vmatpush.msra.mxu0 %v2049
        %2075 = vmatpush.msra.mxu0 %v2048
        %2076 = vmatpush.msra.mxu0 %v2047
        %2077 = vmatpush.msra.mxu0 %v2046
        %2078 = vmatmul.f32.gmra.mxu0 %v1862
        %v2079 = vpop.f32.mrf.mxu0
        %v2080 = vadd.f32 0.0, %v2079
        %2081 = vmatmul.f32.gmra.mxu0 %v1863
        %v2082 = vpop.f32.mrf.mxu0
        %v2083 = vadd.f32 0.0, %v2082
        %2084 = vmatmul.f32.gmra.mxu0 %v1864
        %v2085 = vpop.f32.mrf.mxu0
        %v2086 = vadd.f32 0.0, %v2085
        %2087 = vmatmul.f32.gmra.mxu0 %v1865
        %v2088 = vpop.f32.mrf.mxu0
        %v2089 = vadd.f32 0.0, %v2088
        %2090 = vmatmul.f32.gmra.mxu0 %v1866
        %v2091 = vpop.f32.mrf.mxu0
        %v2092 = vadd.f32 0.0, %v2091
        %2093 = vmatmul.f32.gmra.mxu0 %v1867
        %v2094 = vpop.f32.mrf.mxu0
        %v2095 = vadd.f32 0.0, %v2094
        %2096 = vmatmul.f32.gmra.mxu0 %v1868
        %v2097 = vpop.f32.mrf.mxu0
        %v2098 = vadd.f32 0.0, %v2097
        %2099 = vmatmul.f32.gmra.mxu0 %v1869
        %v2100 = vpop.f32.mrf.mxu0
        %v2101 = vadd.f32 0.0, %v2100
        %2102 = vmatmul.f32.gmra.mxu0 %v1870
        %v2103 = vpop.f32.mrf.mxu0
        %v2104 = vadd.f32 0.0, %v2103
        %2105 = vmatmul.f32.gmra.mxu0 %v1871
        %v2106 = vpop.f32.mrf.mxu0
        %v2107 = vadd.f32 0.0, %v2106
        %2108 = vmatmul.f32.gmra.mxu0 %v1872
        %v2109 = vpop.f32.mrf.mxu0
        %v2110 = vadd.f32 0.0, %v2109
        %2111 = vmatmul.f32.gmra.mxu0 %v1873
        %v2112 = vpop.f32.mrf.mxu0
        %v2113 = vadd.f32 0.0, %v2112
        %2114 = vmatmul.f32.gmra.mxu0 %v1874
        %v2115 = vpop.f32.mrf.mxu0
        %v2116 = vadd.f32 0.0, %v2115
        %2117 = vmatmul.f32.gmra.mxu0 %v1875
        %v2118 = vpop.f32.mrf.mxu0
        %v2119 = vadd.f32 0.0, %v2118
        %2120 = vmatmul.f32.gmra.mxu0 %v1876
        %v2121 = vpop.f32.mrf.mxu0
        %v2122 = vadd.f32 0.0, %v2121
        %2123 = vmatmul.f32.gmra.mxu0 %v1877
        %v2124 = vpop.f32.mrf.mxu0
        %v2125 = vadd.f32 0.0, %v2124
        %2126 = vdwg.mxu0
        %v2127 = vadd.f32 %v1998, %v2080
        %v2128 = vadd.f32 %v2001, %v2083
        %v2129 = vadd.f32 %v2004, %v2086
        %v2130 = vadd.f32 %v2007, %v2089
        %v2131 = vadd.f32 %v2010, %v2092
        %v2132 = vadd.f32 %v2013, %v2095
        %v2133 = vadd.f32 %v2016, %v2098
        %v2134 = vadd.f32 %v2019, %v2101
        %v2135 = vadd.f32 %v2022, %v2104
        %v2136 = vadd.f32 %v2025, %v2107
        %v2137 = vadd.f32 %v2028, %v2110
        %v2138 = vadd.f32 %v2031, %v2113
        %v2139 = vadd.f32 %v2034, %v2116
        %v2140 = vadd.f32 %v2037, %v2119
        %v2141 = vadd.f32 %v2040, %v2122
        %v2142 = vadd.f32 %v2043, %v2125
        %s2143 = scalar_lea.vmem [#allocation3], 384
        %v2144 = vld [vmem:[%s2143] sm:$0xff]
        %v2145 = vld [vmem:[%s2143 + $0x8] sm:$0xff]
        %v2146 = vld [vmem:[%s2143 + $0x10] sm:$0xff]
        %v2147 = vld [vmem:[%s2143 + $0x18] sm:$0xff]
        %v2148 = vld [vmem:[%s2143 + $0x20] sm:$0xff]
        %v2149 = vld [vmem:[%s2143 + $0x28] sm:$0xff]
        %v2150 = vld [vmem:[%s2143 + $0x30] sm:$0xff]
        %v2151 = vld [vmem:[%s2143 + $0x38] sm:$0xff]
        %v2152 = vld [vmem:[%s2143 + $0x40] sm:$0xff]
        %v2153 = vld [vmem:[%s2143 + $0x48] sm:$0xff]
        %v2154 = vld [vmem:[%s2143 + $0x50] sm:$0xff]
        %v2155 = vld [vmem:[%s2143 + $0x58] sm:$0xff]
        %v2156 = vld [vmem:[%s2143 + $0x60] sm:$0xff]
        %v2157 = vld [vmem:[%s2143 + $0x68] sm:$0xff]
        %v2158 = vld [vmem:[%s2143 + $0x70] sm:$0xff]
        %v2159 = vld [vmem:[%s2143 + $0x78] sm:$0xff]
        %2160 = vmatpush.msra.mxu0 %v2159
        %2161 = vmatpush.msra.mxu0 %v2158
        %2162 = vmatpush.msra.mxu0 %v2157
        %2163 = vmatpush.msra.mxu0 %v2156
        %2164 = vmatpush.msra.mxu0 %v2155
        %2165 = vmatpush.msra.mxu0 %v2154
        %2166 = vmatpush.msra.mxu0 %v2153
        %2167 = vmatpush.msra.mxu0 %v2152
        %2168 = vmatpush.msra.mxu0 %v2151
        %2169 = vmatpush.msra.mxu0 %v2150
        %2170 = vmatpush.msra.mxu0 %v2149
        %2171 = vmatpush.msra.mxu0 %v2148
        %2172 = vmatpush.msra.mxu0 %v2147
        %2173 = vmatpush.msra.mxu0 %v2146
        %2174 = vmatpush.msra.mxu0 %v2145
        %2175 = vmatpush.msra.mxu0 %v2144
        %2176 = vmatmul.f32.gmra.mxu0 %v1824
        %v2177 = vpop.f32.mrf.mxu0
        %v2178 = vadd.f32 0.0, %v2177
        %2179 = vmatmul.f32.gmra.mxu0 %v1825
        %v2180 = vpop.f32.mrf.mxu0
        %v2181 = vadd.f32 0.0, %v2180
        %2182 = vmatmul.f32.gmra.mxu0 %v1826
        %v2183 = vpop.f32.mrf.mxu0
        %v2184 = vadd.f32 0.0, %v2183
        %2185 = vmatmul.f32.gmra.mxu0 %v1827
        %v2186 = vpop.f32.mrf.mxu0
        %v2187 = vadd.f32 0.0, %v2186
        %2188 = vmatmul.f32.gmra.mxu0 %v1828
        %v2189 = vpop.f32.mrf.mxu0
        %v2190 = vadd.f32 0.0, %v2189
        %2191 = vmatmul.f32.gmra.mxu0 %v1829
        %v2192 = vpop.f32.mrf.mxu0
        %v2193 = vadd.f32 0.0, %v2192
        %2194 = vmatmul.f32.gmra.mxu0 %v1830
        %v2195 = vpop.f32.mrf.mxu0
        %v2196 = vadd.f32 0.0, %v2195
        %2197 = vmatmul.f32.gmra.mxu0 %v1831
        %v2198 = vpop.f32.mrf.mxu0
        %v2199 = vadd.f32 0.0, %v2198
        %2200 = vmatmul.f32.gmra.mxu0 %v1832
        %v2201 = vpop.f32.mrf.mxu0
        %v2202 = vadd.f32 0.0, %v2201
        %2203 = vmatmul.f32.gmra.mxu0 %v1833
        %v2204 = vpop.f32.mrf.mxu0
        %v2205 = vadd.f32 0.0, %v2204
        %2206 = vmatmul.f32.gmra.mxu0 %v1834
        %v2207 = vpop.f32.mrf.mxu0
        %v2208 = vadd.f32 0.0, %v2207
        %2209 = vmatmul.f32.gmra.mxu0 %v1835
        %v2210 = vpop.f32.mrf.mxu0
        %v2211 = vadd.f32 0.0, %v2210
        %2212 = vmatmul.f32.gmra.mxu0 %v1836
        %v2213 = vpop.f32.mrf.mxu0
        %v2214 = vadd.f32 0.0, %v2213
        %2215 = vmatmul.f32.gmra.mxu0 %v1837
        %v2216 = vpop.f32.mrf.mxu0
        %v2217 = vadd.f32 0.0, %v2216
        %2218 = vmatmul.f32.gmra.mxu0 %v1838
        %v2219 = vpop.f32.mrf.mxu0
        %v2220 = vadd.f32 0.0, %v2219
        %2221 = vmatmul.f32.gmra.mxu0 %v1839
        %v2222 = vpop.f32.mrf.mxu0
        %v2223 = vadd.f32 0.0, %v2222
        %2224 = vdwg.mxu0
        %v2225 = vadd.f32 %v2127, %v2178
        %v2226 = vadd.f32 %v2128, %v2181
        %v2227 = vadd.f32 %v2129, %v2184
        %v2228 = vadd.f32 %v2130, %v2187
        %v2229 = vadd.f32 %v2131, %v2190
        %v2230 = vadd.f32 %v2132, %v2193
        %v2231 = vadd.f32 %v2133, %v2196
        %v2232 = vadd.f32 %v2134, %v2199
        %v2233 = vadd.f32 %v2135, %v2202
        %v2234 = vadd.f32 %v2136, %v2205
        %v2235 = vadd.f32 %v2137, %v2208
        %v2236 = vadd.f32 %v2138, %v2211
        %v2237 = vadd.f32 %v2139, %v2214
        %v2238 = vadd.f32 %v2140, %v2217
        %v2239 = vadd.f32 %v2141, %v2220
        %v2240 = vadd.f32 %v2142, %v2223
        %s2241 = scalar_lea.vmem [#allocation3], 512
        %v2242 = vld [vmem:[%s2241] sm:$0xff]
        %v2243 = vld [vmem:[%s2241 + $0x8] sm:$0xff]
        %v2244 = vld [vmem:[%s2241 + $0x10] sm:$0xff]
        %v2245 = vld [vmem:[%s2241 + $0x18] sm:$0xff]
        %v2246 = vld [vmem:[%s2241 + $0x20] sm:$0xff]
        %v2247 = vld [vmem:[%s2241 + $0x28] sm:$0xff]
        %v2248 = vld [vmem:[%s2241 + $0x30] sm:$0xff]
        %v2249 = vld [vmem:[%s2241 + $0x38] sm:$0xff]
        %v2250 = vld [vmem:[%s2241 + $0x40] sm:$0xff]
        %v2251 = vld [vmem:[%s2241 + $0x48] sm:$0xff]
        %v2252 = vld [vmem:[%s2241 + $0x50] sm:$0xff]
        %v2253 = vld [vmem:[%s2241 + $0x58] sm:$0xff]
        %v2254 = vld [vmem:[%s2241 + $0x60] sm:$0xff]
        %v2255 = vld [vmem:[%s2241 + $0x68] sm:$0xff]
        %v2256 = vld [vmem:[%s2241 + $0x70] sm:$0xff]
        %v2257 = vld [vmem:[%s2241 + $0x78] sm:$0xff]
        %2258 = vmatpush.msra.mxu0 %v2257
        %2259 = vmatpush.msra.mxu0 %v2256
        %2260 = vmatpush.msra.mxu0 %v2255
        %2261 = vmatpush.msra.mxu0 %v2254
        %2262 = vmatpush.msra.mxu0 %v2253
        %2263 = vmatpush.msra.mxu0 %v2252
        %2264 = vmatpush.msra.mxu0 %v2251
        %2265 = vmatpush.msra.mxu0 %v2250
        %2266 = vmatpush.msra.mxu0 %v2249
        %2267 = vmatpush.msra.mxu0 %v2248
        %2268 = vmatpush.msra.mxu0 %v2247
        %2269 = vmatpush.msra.mxu0 %v2246
        %2270 = vmatpush.msra.mxu0 %v2245
        %2271 = vmatpush.msra.mxu0 %v2244
        %2272 = vmatpush.msra.mxu0 %v2243
        %2273 = vmatpush.msra.mxu0 %v2242
        %2274 = vmatmul.f32.gmra.mxu0 %v1844
        %v2275 = vpop.f32.mrf.mxu0
        %v2276 = vadd.f32 0.0, %v2275
        %2277 = vmatmul.f32.gmra.mxu0 %v1845
        %v2278 = vpop.f32.mrf.mxu0
        %v2279 = vadd.f32 0.0, %v2278
        %2280 = vmatmul.f32.gmra.mxu0 %v1846
        %v2281 = vpop.f32.mrf.mxu0
        %v2282 = vadd.f32 0.0, %v2281
        %2283 = vmatmul.f32.gmra.mxu0 %v1847
        %v2284 = vpop.f32.mrf.mxu0
        %v2285 = vadd.f32 0.0, %v2284
        %2286 = vmatmul.f32.gmra.mxu0 %v1848
        %v2287 = vpop.f32.mrf.mxu0
        %v2288 = vadd.f32 0.0, %v2287
        %2289 = vmatmul.f32.gmra.mxu0 %v1849
        %v2290 = vpop.f32.mrf.mxu0
        %v2291 = vadd.f32 0.0, %v2290
        %2292 = vmatmul.f32.gmra.mxu0 %v1850
        %v2293 = vpop.f32.mrf.mxu0
        %v2294 = vadd.f32 0.0, %v2293
        %2295 = vmatmul.f32.gmra.mxu0 %v1851
        %v2296 = vpop.f32.mrf.mxu0
        %v2297 = vadd.f32 0.0, %v2296
        %2298 = vmatmul.f32.gmra.mxu0 %v1852
        %v2299 = vpop.f32.mrf.mxu0
        %v2300 = vadd.f32 0.0, %v2299
        %2301 = vmatmul.f32.gmra.mxu0 %v1853
        %v2302 = vpop.f32.mrf.mxu0
        %v2303 = vadd.f32 0.0, %v2302
        %2304 = vmatmul.f32.gmra.mxu0 %v1854
        %v2305 = vpop.f32.mrf.mxu0
        %v2306 = vadd.f32 0.0, %v2305
        %2307 = vmatmul.f32.gmra.mxu0 %v1855
        %v2308 = vpop.f32.mrf.mxu0
        %v2309 = vadd.f32 0.0, %v2308
        %2310 = vmatmul.f32.gmra.mxu0 %v1856
        %v2311 = vpop.f32.mrf.mxu0
        %v2312 = vadd.f32 0.0, %v2311
        %2313 = vmatmul.f32.gmra.mxu0 %v1857
        %v2314 = vpop.f32.mrf.mxu0
        %v2315 = vadd.f32 0.0, %v2314
        %2316 = vmatmul.f32.gmra.mxu0 %v1858
        %v2317 = vpop.f32.mrf.mxu0
        %v2318 = vadd.f32 0.0, %v2317
        %2319 = vmatmul.f32.gmra.mxu0 %v1859
        %v2320 = vpop.f32.mrf.mxu0
        %v2321 = vadd.f32 0.0, %v2320
        %2322 = vdwg.mxu0
        %v2323 = vadd.f32 %v2225, %v2276
        %v2324 = vadd.f32 %v2226, %v2279
        %v2325 = vadd.f32 %v2227, %v2282
        %v2326 = vadd.f32 %v2228, %v2285
        %v2327 = vadd.f32 %v2229, %v2288
        %v2328 = vadd.f32 %v2230, %v2291
        %v2329 = vadd.f32 %v2231, %v2294
        %v2330 = vadd.f32 %v2232, %v2297
        %v2331 = vadd.f32 %v2233, %v2300
        %v2332 = vadd.f32 %v2234, %v2303
        %v2333 = vadd.f32 %v2235, %v2306
        %v2334 = vadd.f32 %v2236, %v2309
        %v2335 = vadd.f32 %v2237, %v2312
        %v2336 = vadd.f32 %v2238, %v2315
        %v2337 = vadd.f32 %v2239, %v2318
        %v2338 = vadd.f32 %v2240, %v2321
        %s2339 = scalar_lea.vmem [#allocation3], 640
        %v2340 = vld [vmem:[%s2339] sm:$0xff]
        %v2341 = vld [vmem:[%s2339 + $0x8] sm:$0xff]
        %v2342 = vld [vmem:[%s2339 + $0x10] sm:$0xff]
        %v2343 = vld [vmem:[%s2339 + $0x18] sm:$0xff]
        %v2344 = vld [vmem:[%s2339 + $0x20] sm:$0xff]
        %v2345 = vld [vmem:[%s2339 + $0x28] sm:$0xff]
        %v2346 = vld [vmem:[%s2339 + $0x30] sm:$0xff]
        %v2347 = vld [vmem:[%s2339 + $0x38] sm:$0xff]
        %v2348 = vld [vmem:[%s2339 + $0x40] sm:$0xff]
        %v2349 = vld [vmem:[%s2339 + $0x48] sm:$0xff]
        %v2350 = vld [vmem:[%s2339 + $0x50] sm:$0xff]
        %v2351 = vld [vmem:[%s2339 + $0x58] sm:$0xff]
        %v2352 = vld [vmem:[%s2339 + $0x60] sm:$0xff]
        %v2353 = vld [vmem:[%s2339 + $0x68] sm:$0xff]
        %v2354 = vld [vmem:[%s2339 + $0x70] sm:$0xff]
        %v2355 = vld [vmem:[%s2339 + $0x78] sm:$0xff]
        %2356 = vmatpush.msra.mxu0 %v2355
        %2357 = vmatpush.msra.mxu0 %v2354
        %2358 = vmatpush.msra.mxu0 %v2353
        %2359 = vmatpush.msra.mxu0 %v2352
        %2360 = vmatpush.msra.mxu0 %v2351
        %2361 = vmatpush.msra.mxu0 %v2350
        %2362 = vmatpush.msra.mxu0 %v2349
        %2363 = vmatpush.msra.mxu0 %v2348
        %2364 = vmatpush.msra.mxu0 %v2347
        %2365 = vmatpush.msra.mxu0 %v2346
        %2366 = vmatpush.msra.mxu0 %v2345
        %2367 = vmatpush.msra.mxu0 %v2344
        %2368 = vmatpush.msra.mxu0 %v2343
        %2369 = vmatpush.msra.mxu0 %v2342
        %2370 = vmatpush.msra.mxu0 %v2341
        %2371 = vmatpush.msra.mxu0 %v2340
        %2372 = vmatmul.f32.gmra.mxu0 %v1864
        %v2373 = vpop.f32.mrf.mxu0
        %v2374 = vadd.f32 0.0, %v2373
        %2375 = vmatmul.f32.gmra.mxu0 %v1865
        %v2376 = vpop.f32.mrf.mxu0
        %v2377 = vadd.f32 0.0, %v2376
        %2378 = vmatmul.f32.gmra.mxu0 %v1866
        %v2379 = vpop.f32.mrf.mxu0
        %v2380 = vadd.f32 0.0, %v2379
        %2381 = vmatmul.f32.gmra.mxu0 %v1867
        %v2382 = vpop.f32.mrf.mxu0
        %v2383 = vadd.f32 0.0, %v2382
        %2384 = vmatmul.f32.gmra.mxu0 %v1868
        %v2385 = vpop.f32.mrf.mxu0
        %v2386 = vadd.f32 0.0, %v2385
        %2387 = vmatmul.f32.gmra.mxu0 %v1869
        %v2388 = vpop.f32.mrf.mxu0
        %v2389 = vadd.f32 0.0, %v2388
        %2390 = vmatmul.f32.gmra.mxu0 %v1870
        %v2391 = vpop.f32.mrf.mxu0
        %v2392 = vadd.f32 0.0, %v2391
        %2393 = vmatmul.f32.gmra.mxu0 %v1871
        %v2394 = vpop.f32.mrf.mxu0
        %v2395 = vadd.f32 0.0, %v2394
        %2396 = vmatmul.f32.gmra.mxu0 %v1872
        %v2397 = vpop.f32.mrf.mxu0
        %v2398 = vadd.f32 0.0, %v2397
        %2399 = vmatmul.f32.gmra.mxu0 %v1873
        %v2400 = vpop.f32.mrf.mxu0
        %v2401 = vadd.f32 0.0, %v2400
        %2402 = vmatmul.f32.gmra.mxu0 %v1874
        %v2403 = vpop.f32.mrf.mxu0
        %v2404 = vadd.f32 0.0, %v2403
        %2405 = vmatmul.f32.gmra.mxu0 %v1875
        %v2406 = vpop.f32.mrf.mxu0
        %v2407 = vadd.f32 0.0, %v2406
        %2408 = vmatmul.f32.gmra.mxu0 %v1876
        %v2409 = vpop.f32.mrf.mxu0
        %v2410 = vadd.f32 0.0, %v2409
        %2411 = vmatmul.f32.gmra.mxu0 %v1877
        %v2412 = vpop.f32.mrf.mxu0
        %v2413 = vadd.f32 0.0, %v2412
        %2414 = vmatmul.f32.gmra.mxu0 %v1878
        %v2415 = vpop.f32.mrf.mxu0
        %v2416 = vadd.f32 0.0, %v2415
        %2417 = vmatmul.f32.gmra.mxu0 %v1879
        %v2418 = vpop.f32.mrf.mxu0
        %v2419 = vadd.f32 0.0, %v2418
        %2420 = vdwg.mxu0
        %v2421 = vadd.f32 %v2323, %v2374
        %v2422 = vadd.f32 %v2324, %v2377
        %v2423 = vadd.f32 %v2325, %v2380
        %v2424 = vadd.f32 %v2326, %v2383
        %v2425 = vadd.f32 %v2327, %v2386
        %v2426 = vadd.f32 %v2328, %v2389
        %v2427 = vadd.f32 %v2329, %v2392
        %v2428 = vadd.f32 %v2330, %v2395
        %v2429 = vadd.f32 %v2331, %v2398
        %v2430 = vadd.f32 %v2332, %v2401
        %v2431 = vadd.f32 %v2333, %v2404
        %v2432 = vadd.f32 %v2334, %v2407
        %v2433 = vadd.f32 %v2335, %v2410
        %v2434 = vadd.f32 %v2336, %v2413
        %v2435 = vadd.f32 %v2337, %v2416
        %v2436 = vadd.f32 %v2338, %v2419
        %s2437 = scalar_lea.vmem [#allocation3], 768
        %v2438 = vld [vmem:[%s2437] sm:$0xff]
        %v2439 = vld [vmem:[%s2437 + $0x8] sm:$0xff]
        %v2440 = vld [vmem:[%s2437 + $0x10] sm:$0xff]
        %v2441 = vld [vmem:[%s2437 + $0x18] sm:$0xff]
        %v2442 = vld [vmem:[%s2437 + $0x20] sm:$0xff]
        %v2443 = vld [vmem:[%s2437 + $0x28] sm:$0xff]
        %v2444 = vld [vmem:[%s2437 + $0x30] sm:$0xff]
        %v2445 = vld [vmem:[%s2437 + $0x38] sm:$0xff]
        %v2446 = vld [vmem:[%s2437 + $0x40] sm:$0xff]
        %v2447 = vld [vmem:[%s2437 + $0x48] sm:$0xff]
        %v2448 = vld [vmem:[%s2437 + $0x50] sm:$0xff]
        %v2449 = vld [vmem:[%s2437 + $0x58] sm:$0xff]
        %v2450 = vld [vmem:[%s2437 + $0x60] sm:$0xff]
        %v2451 = vld [vmem:[%s2437 + $0x68] sm:$0xff]
        %v2452 = vld [vmem:[%s2437 + $0x70] sm:$0xff]
        %v2453 = vld [vmem:[%s2437 + $0x78] sm:$0xff]
        %2454 = vmatpush.msra.mxu0 %v2453
        %2455 = vmatpush.msra.mxu0 %v2452
        %2456 = vmatpush.msra.mxu0 %v2451
        %2457 = vmatpush.msra.mxu0 %v2450
        %2458 = vmatpush.msra.mxu0 %v2449
        %2459 = vmatpush.msra.mxu0 %v2448
        %2460 = vmatpush.msra.mxu0 %v2447
        %2461 = vmatpush.msra.mxu0 %v2446
        %2462 = vmatpush.msra.mxu0 %v2445
        %2463 = vmatpush.msra.mxu0 %v2444
        %2464 = vmatpush.msra.mxu0 %v2443
        %2465 = vmatpush.msra.mxu0 %v2442
        %2466 = vmatpush.msra.mxu0 %v2441
        %2467 = vmatpush.msra.mxu0 %v2440
        %2468 = vmatpush.msra.mxu0 %v2439
        %2469 = vmatpush.msra.mxu0 %v2438
        %2470 = vmatmul.f32.gmra.mxu0 %v1826
        %v2471 = vpop.f32.mrf.mxu0
        %v2472 = vadd.f32 0.0, %v2471
        %2473 = vmatmul.f32.gmra.mxu0 %v1827
        %v2474 = vpop.f32.mrf.mxu0
        %v2475 = vadd.f32 0.0, %v2474
        %2476 = vmatmul.f32.gmra.mxu0 %v1828
        %v2477 = vpop.f32.mrf.mxu0
        %v2478 = vadd.f32 0.0, %v2477
        %2479 = vmatmul.f32.gmra.mxu0 %v1829
        %v2480 = vpop.f32.mrf.mxu0
        %v2481 = vadd.f32 0.0, %v2480
        %2482 = vmatmul.f32.gmra.mxu0 %v1830
        %v2483 = vpop.f32.mrf.mxu0
        %v2484 = vadd.f32 0.0, %v2483
        %2485 = vmatmul.f32.gmra.mxu0 %v1831
        %v2486 = vpop.f32.mrf.mxu0
        %v2487 = vadd.f32 0.0, %v2486
        %2488 = vmatmul.f32.gmra.mxu0 %v1832
        %v2489 = vpop.f32.mrf.mxu0
        %v2490 = vadd.f32 0.0, %v2489
        %2491 = vmatmul.f32.gmra.mxu0 %v1833
        %v2492 = vpop.f32.mrf.mxu0
        %v2493 = vadd.f32 0.0, %v2492
        %2494 = vmatmul.f32.gmra.mxu0 %v1834
        %v2495 = vpop.f32.mrf.mxu0
        %v2496 = vadd.f32 0.0, %v2495
        %2497 = vmatmul.f32.gmra.mxu0 %v1835
        %v2498 = vpop.f32.mrf.mxu0
        %v2499 = vadd.f32 0.0, %v2498
        %2500 = vmatmul.f32.gmra.mxu0 %v1836
        %v2501 = vpop.f32.mrf.mxu0
        %v2502 = vadd.f32 0.0, %v2501
        %2503 = vmatmul.f32.gmra.mxu0 %v1837
        %v2504 = vpop.f32.mrf.mxu0
        %v2505 = vadd.f32 0.0, %v2504
        %2506 = vmatmul.f32.gmra.mxu0 %v1838
        %v2507 = vpop.f32.mrf.mxu0
        %v2508 = vadd.f32 0.0, %v2507
        %2509 = vmatmul.f32.gmra.mxu0 %v1839
        %v2510 = vpop.f32.mrf.mxu0
        %v2511 = vadd.f32 0.0, %v2510
        %2512 = vmatmul.f32.gmra.mxu0 %v1840
        %v2513 = vpop.f32.mrf.mxu0
        %v2514 = vadd.f32 0.0, %v2513
        %2515 = vmatmul.f32.gmra.mxu0 %v1841
        %v2516 = vpop.f32.mrf.mxu0
        %v2517 = vadd.f32 0.0, %v2516
        %2518 = vdwg.mxu0
        %v2519 = vadd.f32 %v2421, %v2472
        %v2520 = vadd.f32 %v2422, %v2475
        %v2521 = vadd.f32 %v2423, %v2478
        %v2522 = vadd.f32 %v2424, %v2481
        %v2523 = vadd.f32 %v2425, %v2484
        %v2524 = vadd.f32 %v2426, %v2487
        %v2525 = vadd.f32 %v2427, %v2490
        %v2526 = vadd.f32 %v2428, %v2493
        %v2527 = vadd.f32 %v2429, %v2496
        %v2528 = vadd.f32 %v2430, %v2499
        %v2529 = vadd.f32 %v2431, %v2502
        %v2530 = vadd.f32 %v2432, %v2505
        %v2531 = vadd.f32 %v2433, %v2508
        %v2532 = vadd.f32 %v2434, %v2511
        %v2533 = vadd.f32 %v2435, %v2514
        %v2534 = vadd.f32 %v2436, %v2517
        %s2535 = scalar_lea.vmem [#allocation3], 896
        %v2536 = vld [vmem:[%s2535] sm:$0xff]
        %v2537 = vld [vmem:[%s2535 + $0x8] sm:$0xff]
        %v2538 = vld [vmem:[%s2535 + $0x10] sm:$0xff]
        %v2539 = vld [vmem:[%s2535 + $0x18] sm:$0xff]
        %v2540 = vld [vmem:[%s2535 + $0x20] sm:$0xff]
        %v2541 = vld [vmem:[%s2535 + $0x28] sm:$0xff]
        %v2542 = vld [vmem:[%s2535 + $0x30] sm:$0xff]
        %v2543 = vld [vmem:[%s2535 + $0x38] sm:$0xff]
        %v2544 = vld [vmem:[%s2535 + $0x40] sm:$0xff]
        %v2545 = vld [vmem:[%s2535 + $0x48] sm:$0xff]
        %v2546 = vld [vmem:[%s2535 + $0x50] sm:$0xff]
        %v2547 = vld [vmem:[%s2535 + $0x58] sm:$0xff]
        %v2548 = vld [vmem:[%s2535 + $0x60] sm:$0xff]
        %v2549 = vld [vmem:[%s2535 + $0x68] sm:$0xff]
        %v2550 = vld [vmem:[%s2535 + $0x70] sm:$0xff]
        %v2551 = vld [vmem:[%s2535 + $0x78] sm:$0xff]
        %2552 = vmatpush.msra.mxu0 %v2551
        %2553 = vmatpush.msra.mxu0 %v2550
        %2554 = vmatpush.msra.mxu0 %v2549
        %2555 = vmatpush.msra.mxu0 %v2548
        %2556 = vmatpush.msra.mxu0 %v2547
        %2557 = vmatpush.msra.mxu0 %v2546
        %2558 = vmatpush.msra.mxu0 %v2545
        %2559 = vmatpush.msra.mxu0 %v2544
        %2560 = vmatpush.msra.mxu0 %v2543
        %2561 = vmatpush.msra.mxu0 %v2542
        %2562 = vmatpush.msra.mxu0 %v2541
        %2563 = vmatpush.msra.mxu0 %v2540
        %2564 = vmatpush.msra.mxu0 %v2539
        %2565 = vmatpush.msra.mxu0 %v2538
        %2566 = vmatpush.msra.mxu0 %v2537
        %2567 = vmatpush.msra.mxu0 %v2536
        %2568 = vmatmul.f32.gmra.mxu0 %v1846
        %v2569 = vpop.f32.mrf.mxu0
        %v2570 = vadd.f32 0.0, %v2569
        %2571 = vmatmul.f32.gmra.mxu0 %v1847
        %v2572 = vpop.f32.mrf.mxu0
        %v2573 = vadd.f32 0.0, %v2572
        %2574 = vmatmul.f32.gmra.mxu0 %v1848
        %v2575 = vpop.f32.mrf.mxu0
        %v2576 = vadd.f32 0.0, %v2575
        %2577 = vmatmul.f32.gmra.mxu0 %v1849
        %v2578 = vpop.f32.mrf.mxu0
        %v2579 = vadd.f32 0.0, %v2578
        %2580 = vmatmul.f32.gmra.mxu0 %v1850
        %v2581 = vpop.f32.mrf.mxu0
        %v2582 = vadd.f32 0.0, %v2581
        %2583 = vmatmul.f32.gmra.mxu0 %v1851
        %v2584 = vpop.f32.mrf.mxu0
        %v2585 = vadd.f32 0.0, %v2584
        %2586 = vmatmul.f32.gmra.mxu0 %v1852
        %v2587 = vpop.f32.mrf.mxu0
        %v2588 = vadd.f32 0.0, %v2587
        %2589 = vmatmul.f32.gmra.mxu0 %v1853
        %v2590 = vpop.f32.mrf.mxu0
        %v2591 = vadd.f32 0.0, %v2590
        %2592 = vmatmul.f32.gmra.mxu0 %v1854
        %v2593 = vpop.f32.mrf.mxu0
        %v2594 = vadd.f32 0.0, %v2593
        %2595 = vmatmul.f32.gmra.mxu0 %v1855
        %v2596 = vpop.f32.mrf.mxu0
        %v2597 = vadd.f32 0.0, %v2596
        %2598 = vmatmul.f32.gmra.mxu0 %v1856
        %v2599 = vpop.f32.mrf.mxu0
        %v2600 = vadd.f32 0.0, %v2599
        %2601 = vmatmul.f32.gmra.mxu0 %v1857
        %v2602 = vpop.f32.mrf.mxu0
        %v2603 = vadd.f32 0.0, %v2602
        %2604 = vmatmul.f32.gmra.mxu0 %v1858
        %v2605 = vpop.f32.mrf.mxu0
        %v2606 = vadd.f32 0.0, %v2605
        %2607 = vmatmul.f32.gmra.mxu0 %v1859
        %v2608 = vpop.f32.mrf.mxu0
        %v2609 = vadd.f32 0.0, %v2608
        %2610 = vmatmul.f32.gmra.mxu0 %v1860
        %v2611 = vpop.f32.mrf.mxu0
        %v2612 = vadd.f32 0.0, %v2611
        %2613 = vmatmul.f32.gmra.mxu0 %v1861
        %v2614 = vpop.f32.mrf.mxu0
        %v2615 = vadd.f32 0.0, %v2614
        %2616 = vdwg.mxu0
        %v2617 = vadd.f32 %v2519, %v2570
        %v2618 = vadd.f32 %v2520, %v2573
        %v2619 = vadd.f32 %v2521, %v2576
        %v2620 = vadd.f32 %v2522, %v2579
        %v2621 = vadd.f32 %v2523, %v2582
        %v2622 = vadd.f32 %v2524, %v2585
        %v2623 = vadd.f32 %v2525, %v2588
        %v2624 = vadd.f32 %v2526, %v2591
        %v2625 = vadd.f32 %v2527, %v2594
        %v2626 = vadd.f32 %v2528, %v2597
        %v2627 = vadd.f32 %v2529, %v2600
        %v2628 = vadd.f32 %v2530, %v2603
        %v2629 = vadd.f32 %v2531, %v2606
        %v2630 = vadd.f32 %v2532, %v2609
        %v2631 = vadd.f32 %v2533, %v2612
        %v2632 = vadd.f32 %v2534, %v2615
        %s2633 = scalar_lea.vmem [#allocation3], 1024
        %v2634 = vld [vmem:[%s2633] sm:$0xff]
        %v2635 = vld [vmem:[%s2633 + $0x8] sm:$0xff]
        %v2636 = vld [vmem:[%s2633 + $0x10] sm:$0xff]
        %v2637 = vld [vmem:[%s2633 + $0x18] sm:$0xff]
        %v2638 = vld [vmem:[%s2633 + $0x20] sm:$0xff]
        %v2639 = vld [vmem:[%s2633 + $0x28] sm:$0xff]
        %v2640 = vld [vmem:[%s2633 + $0x30] sm:$0xff]
        %v2641 = vld [vmem:[%s2633 + $0x38] sm:$0xff]
        %v2642 = vld [vmem:[%s2633 + $0x40] sm:$0xff]
        %v2643 = vld [vmem:[%s2633 + $0x48] sm:$0xff]
        %v2644 = vld [vmem:[%s2633 + $0x50] sm:$0xff]
        %v2645 = vld [vmem:[%s2633 + $0x58] sm:$0xff]
        %v2646 = vld [vmem:[%s2633 + $0x60] sm:$0xff]
        %v2647 = vld [vmem:[%s2633 + $0x68] sm:$0xff]
        %v2648 = vld [vmem:[%s2633 + $0x70] sm:$0xff]
        %v2649 = vld [vmem:[%s2633 + $0x78] sm:$0xff]
        %2650 = vmatpush.msra.mxu0 %v2649
        %2651 = vmatpush.msra.mxu0 %v2648
        %2652 = vmatpush.msra.mxu0 %v2647
        %2653 = vmatpush.msra.mxu0 %v2646
        %2654 = vmatpush.msra.mxu0 %v2645
        %2655 = vmatpush.msra.mxu0 %v2644
        %2656 = vmatpush.msra.mxu0 %v2643
        %2657 = vmatpush.msra.mxu0 %v2642
        %2658 = vmatpush.msra.mxu0 %v2641
        %2659 = vmatpush.msra.mxu0 %v2640
        %2660 = vmatpush.msra.mxu0 %v2639
        %2661 = vmatpush.msra.mxu0 %v2638
        %2662 = vmatpush.msra.mxu0 %v2637
        %2663 = vmatpush.msra.mxu0 %v2636
        %2664 = vmatpush.msra.mxu0 %v2635
        %2665 = vmatpush.msra.mxu0 %v2634
        %2666 = vmatmul.f32.gmra.mxu0 %v1866
        %v2667 = vpop.f32.mrf.mxu0
        %v2668 = vadd.f32 0.0, %v2667
        %2669 = vmatmul.f32.gmra.mxu0 %v1867
        %v2670 = vpop.f32.mrf.mxu0
        %v2671 = vadd.f32 0.0, %v2670
        %2672 = vmatmul.f32.gmra.mxu0 %v1868
        %v2673 = vpop.f32.mrf.mxu0
        %v2674 = vadd.f32 0.0, %v2673
        %2675 = vmatmul.f32.gmra.mxu0 %v1869
        %v2676 = vpop.f32.mrf.mxu0
        %v2677 = vadd.f32 0.0, %v2676
        %2678 = vmatmul.f32.gmra.mxu0 %v1870
        %v2679 = vpop.f32.mrf.mxu0
        %v2680 = vadd.f32 0.0, %v2679
        %2681 = vmatmul.f32.gmra.mxu0 %v1871
        %v2682 = vpop.f32.mrf.mxu0
        %v2683 = vadd.f32 0.0, %v2682
        %2684 = vmatmul.f32.gmra.mxu0 %v1872
        %v2685 = vpop.f32.mrf.mxu0
        %v2686 = vadd.f32 0.0, %v2685
        %2687 = vmatmul.f32.gmra.mxu0 %v1873
        %v2688 = vpop.f32.mrf.mxu0
        %v2689 = vadd.f32 0.0, %v2688
        %2690 = vmatmul.f32.gmra.mxu0 %v1874
        %v2691 = vpop.f32.mrf.mxu0
        %v2692 = vadd.f32 0.0, %v2691
        %2693 = vmatmul.f32.gmra.mxu0 %v1875
        %v2694 = vpop.f32.mrf.mxu0
        %v2695 = vadd.f32 0.0, %v2694
        %2696 = vmatmul.f32.gmra.mxu0 %v1876
        %v2697 = vpop.f32.mrf.mxu0
        %v2698 = vadd.f32 0.0, %v2697
        %2699 = vmatmul.f32.gmra.mxu0 %v1877
        %v2700 = vpop.f32.mrf.mxu0
        %v2701 = vadd.f32 0.0, %v2700
        %2702 = vmatmul.f32.gmra.mxu0 %v1878
        %v2703 = vpop.f32.mrf.mxu0
        %v2704 = vadd.f32 0.0, %v2703
        %2705 = vmatmul.f32.gmra.mxu0 %v1879
        %v2706 = vpop.f32.mrf.mxu0
        %v2707 = vadd.f32 0.0, %v2706
        %2708 = vmatmul.f32.gmra.mxu0 %v1880
        %v2709 = vpop.f32.mrf.mxu0
        %v2710 = vadd.f32 0.0, %v2709
        %2711 = vmatmul.f32.gmra.mxu0 %v1881
        %v2712 = vpop.f32.mrf.mxu0
        %v2713 = vadd.f32 0.0, %v2712
        %2714 = vdwg.mxu0
        %v2715 = vadd.f32 %v2617, %v2668
        %v2716 = vadd.f32 %v2618, %v2671
        %v2717 = vadd.f32 %v2619, %v2674
        %v2718 = vadd.f32 %v2620, %v2677
        %v2719 = vadd.f32 %v2621, %v2680
        %v2720 = vadd.f32 %v2622, %v2683
        %v2721 = vadd.f32 %v2623, %v2686
        %v2722 = vadd.f32 %v2624, %v2689
        %v2723 = vadd.f32 %v2625, %v2692
        %v2724 = vadd.f32 %v2626, %v2695
        %v2725 = vadd.f32 %v2627, %v2698
        %v2726 = vadd.f32 %v2628, %v2701
        %v2727 = vadd.f32 %v2629, %v2704
        %v2728 = vadd.f32 %v2630, %v2707
        %v2729 = vadd.f32 %v2631, %v2710
        %v2730 = vadd.f32 %v2632, %v2713
        %v2731 = vld [vmem:[%s4] sm:$0x1]
        %v2733 = vperm.slane %v2731, 0
        %v2735 = vadd.f32 %v2715, %v2733
        %v2736 = vadd.f32 %v2716, %v2733
        %v2737 = vadd.f32 %v2717, %v2733
        %v2738 = vadd.f32 %v2718, %v2733
        %v2739 = vadd.f32 %v2719, %v2733
        %v2740 = vadd.f32 %v2720, %v2733
        %v2741 = vadd.f32 %v2721, %v2733
        %v2742 = vadd.f32 %v2722, %v2733
        %v2743 = vadd.f32 %v2723, %v2733
        %v2744 = vadd.f32 %v2724, %v2733
        %v2745 = vadd.f32 %v2725, %v2733
        %v2746 = vadd.f32 %v2726, %v2733
        %v2747 = vadd.f32 %v2727, %v2733
        %v2748 = vadd.f32 %v2728, %v2733
        %v2749 = vadd.f32 %v2729, %v2733
        %v2750 = vadd.f32 %v2730, %v2733
        %v2751 = vxor.u32 %v2735, 2147483648
        %v2752 = vxor.u32 %v2736, 2147483648
        %v2753 = vxor.u32 %v2737, 2147483648
        %v2754 = vxor.u32 %v2738, 2147483648
        %v2755 = vxor.u32 %v2739, 2147483648
        %v2756 = vxor.u32 %v2740, 2147483648
        %v2757 = vxor.u32 %v2741, 2147483648
        %v2758 = vxor.u32 %v2742, 2147483648
        %v2759 = vxor.u32 %v2743, 2147483648
        %v2760 = vxor.u32 %v2744, 2147483648
        %v2761 = vxor.u32 %v2745, 2147483648
        %v2762 = vxor.u32 %v2746, 2147483648
        %v2763 = vxor.u32 %v2747, 2147483648
        %v2764 = vxor.u32 %v2748, 2147483648
        %v2765 = vxor.u32 %v2749, 2147483648
        %v2766 = vxor.u32 %v2750, 2147483648
        %v2767 = vmul.f32 %v2751, 1.442695
        %v2768 = vpow.pop %v2767
        %v2769 = vmul.f32 %v2752, 1.442695
        %v2770 = vpow.pop %v2769
        %v2771 = vmul.f32 %v2753, 1.442695
        %v2772 = vpow.pop %v2771
        %v2773 = vmul.f32 %v2754, 1.442695
        %v2774 = vpow.pop %v2773
        %v2775 = vmul.f32 %v2755, 1.442695
        %v2776 = vpow.pop %v2775
        %v2777 = vmul.f32 %v2756, 1.442695
        %v2778 = vpow.pop %v2777
        %v2779 = vmul.f32 %v2757, 1.442695
        %v2780 = vpow.pop %v2779
        %v2781 = vmul.f32 %v2758, 1.442695
        %v2782 = vpow.pop %v2781
        %v2783 = vmul.f32 %v2759, 1.442695
        %v2784 = vpow.pop %v2783
        %v2785 = vmul.f32 %v2760, 1.442695
        %v2786 = vpow.pop %v2785
        %v2787 = vmul.f32 %v2761, 1.442695
        %v2788 = vpow.pop %v2787
        %v2789 = vmul.f32 %v2762, 1.442695
        %v2790 = vpow.pop %v2789
        %v2791 = vmul.f32 %v2763, 1.442695
        %v2792 = vpow.pop %v2791
        %v2793 = vmul.f32 %v2764, 1.442695
        %v2794 = vpow.pop %v2793
        %v2795 = vmul.f32 %v2765, 1.442695
        %v2796 = vpow.pop %v2795
        %v2797 = vmul.f32 %v2766, 1.442695
        %v2798 = vpow.pop %v2797
        %v2799 = vadd.f32 %v2768, 1.0
        %v2800 = vadd.f32 %v2770, 1.0
        %v2801 = vadd.f32 %v2772, 1.0
        %v2802 = vadd.f32 %v2774, 1.0
        %v2803 = vadd.f32 %v2776, 1.0
        %v2804 = vadd.f32 %v2778, 1.0
        %v2805 = vadd.f32 %v2780, 1.0
        %v2806 = vadd.f32 %v2782, 1.0
        %v2807 = vadd.f32 %v2784, 1.0
        %v2808 = vadd.f32 %v2786, 1.0
        %v2809 = vadd.f32 %v2788, 1.0
        %v2810 = vadd.f32 %v2790, 1.0
        %v2811 = vadd.f32 %v2792, 1.0
        %v2812 = vadd.f32 %v2794, 1.0
        %v2813 = vadd.f32 %v2796, 1.0
        %v2814 = vadd.f32 %v2798, 1.0
        %v2815 = vrcp.pop %v2799
        %v2816 = vmul.f32 %v2799, %v2815
        %v2817 = vsub.f32 1.0, %v2816
        %v2818 = vmul.f32 %v2815, %v2817
        %v2819 = vadd.f32 %v2815, %v2818
        %vm2820 = vweird.f32 %v2799
        %vm2821 = vweird.f32 %v2815
        %vm2822 = vmor %vm2820, %vm2821
        %v2823 = vsel %vm2822, %v2815, %v2819
        %v2824 = vand.u32 2147483647, %v2799
        %vm2825 = vcmp.eq.f32.partialorder %v2824, 8.507059e+37
        %v2826 = vand.u32 %v2799, 2147483648
        %v2827 = vor.u32 1.1754944e-38, %v2826
        %v2828 = vsel %vm2825, %v2827, %v2823
        %v2829 = vmul.f32 1.0, %v2828
        %v2830 = vrcp.pop %v2800
        %v2831 = vmul.f32 %v2800, %v2830
        %v2832 = vsub.f32 1.0, %v2831
        %v2833 = vmul.f32 %v2830, %v2832
        %v2834 = vadd.f32 %v2830, %v2833
        %vm2835 = vweird.f32 %v2800
        %vm2836 = vweird.f32 %v2830
        %vm2837 = vmor %vm2835, %vm2836
        %v2838 = vsel %vm2837, %v2830, %v2834
        %v2839 = vand.u32 2147483647, %v2800
        %vm2840 = vcmp.eq.f32.partialorder %v2839, 8.507059e+37
        %v2841 = vand.u32 %v2800, 2147483648
        %v2842 = vor.u32 1.1754944e-38, %v2841
        %v2843 = vsel %vm2840, %v2842, %v2838
        %v2844 = vmul.f32 1.0, %v2843
        %v2845 = vrcp.pop %v2801
        %v2846 = vmul.f32 %v2801, %v2845
        %v2847 = vsub.f32 1.0, %v2846
        %v2848 = vmul.f32 %v2845, %v2847
        %v2849 = vadd.f32 %v2845, %v2848
        %vm2850 = vweird.f32 %v2801
        %vm2851 = vweird.f32 %v2845
        %vm2852 = vmor %vm2850, %vm2851
        %v2853 = vsel %vm2852, %v2845, %v2849
        %v2854 = vand.u32 2147483647, %v2801
        %vm2855 = vcmp.eq.f32.partialorder %v2854, 8.507059e+37
        %v2856 = vand.u32 %v2801, 2147483648
        %v2857 = vor.u32 1.1754944e-38, %v2856
        %v2858 = vsel %vm2855, %v2857, %v2853
        %v2859 = vmul.f32 1.0, %v2858
        %v2860 = vrcp.pop %v2802
        %v2861 = vmul.f32 %v2802, %v2860
        %v2862 = vsub.f32 1.0, %v2861
        %v2863 = vmul.f32 %v2860, %v2862
        %v2864 = vadd.f32 %v2860, %v2863
        %vm2865 = vweird.f32 %v2802
        %vm2866 = vweird.f32 %v2860
        %vm2867 = vmor %vm2865, %vm2866
        %v2868 = vsel %vm2867, %v2860, %v2864
        %v2869 = vand.u32 2147483647, %v2802
        %vm2870 = vcmp.eq.f32.partialorder %v2869, 8.507059e+37
        %v2871 = vand.u32 %v2802, 2147483648
        %v2872 = vor.u32 1.1754944e-38, %v2871
        %v2873 = vsel %vm2870, %v2872, %v2868
        %v2874 = vmul.f32 1.0, %v2873
        %v2875 = vrcp.pop %v2803
        %v2876 = vmul.f32 %v2803, %v2875
        %v2877 = vsub.f32 1.0, %v2876
        %v2878 = vmul.f32 %v2875, %v2877
        %v2879 = vadd.f32 %v2875, %v2878
        %vm2880 = vweird.f32 %v2803
        %vm2881 = vweird.f32 %v2875
        %vm2882 = vmor %vm2880, %vm2881
        %v2883 = vsel %vm2882, %v2875, %v2879
        %v2884 = vand.u32 2147483647, %v2803
        %vm2885 = vcmp.eq.f32.partialorder %v2884, 8.507059e+37
        %v2886 = vand.u32 %v2803, 2147483648
        %v2887 = vor.u32 1.1754944e-38, %v2886
        %v2888 = vsel %vm2885, %v2887, %v2883
        %v2889 = vmul.f32 1.0, %v2888
        %v2890 = vrcp.pop %v2804
        %v2891 = vmul.f32 %v2804, %v2890
        %v2892 = vsub.f32 1.0, %v2891
        %v2893 = vmul.f32 %v2890, %v2892
        %v2894 = vadd.f32 %v2890, %v2893
        %vm2895 = vweird.f32 %v2804
        %vm2896 = vweird.f32 %v2890
        %vm2897 = vmor %vm2895, %vm2896
        %v2898 = vsel %vm2897, %v2890, %v2894
        %v2899 = vand.u32 2147483647, %v2804
        %vm2900 = vcmp.eq.f32.partialorder %v2899, 8.507059e+37
        %v2901 = vand.u32 %v2804, 2147483648
        %v2902 = vor.u32 1.1754944e-38, %v2901
        %v2903 = vsel %vm2900, %v2902, %v2898
        %v2904 = vmul.f32 1.0, %v2903
        %v2905 = vrcp.pop %v2805
        %v2906 = vmul.f32 %v2805, %v2905
        %v2907 = vsub.f32 1.0, %v2906
        %v2908 = vmul.f32 %v2905, %v2907
        %v2909 = vadd.f32 %v2905, %v2908
        %vm2910 = vweird.f32 %v2805
        %vm2911 = vweird.f32 %v2905
        %vm2912 = vmor %vm2910, %vm2911
        %v2913 = vsel %vm2912, %v2905, %v2909
        %v2914 = vand.u32 2147483647, %v2805
        %vm2915 = vcmp.eq.f32.partialorder %v2914, 8.507059e+37
        %v2916 = vand.u32 %v2805, 2147483648
        %v2917 = vor.u32 1.1754944e-38, %v2916
        %v2918 = vsel %vm2915, %v2917, %v2913
        %v2919 = vmul.f32 1.0, %v2918
        %v2920 = vrcp.pop %v2806
        %v2921 = vmul.f32 %v2806, %v2920
        %v2922 = vsub.f32 1.0, %v2921
        %v2923 = vmul.f32 %v2920, %v2922
        %v2924 = vadd.f32 %v2920, %v2923
        %vm2925 = vweird.f32 %v2806
        %vm2926 = vweird.f32 %v2920
        %vm2927 = vmor %vm2925, %vm2926
        %v2928 = vsel %vm2927, %v2920, %v2924
        %v2929 = vand.u32 2147483647, %v2806
        %vm2930 = vcmp.eq.f32.partialorder %v2929, 8.507059e+37
        %v2931 = vand.u32 %v2806, 2147483648
        %v2932 = vor.u32 1.1754944e-38, %v2931
        %v2933 = vsel %vm2930, %v2932, %v2928
        %v2934 = vmul.f32 1.0, %v2933
        %v2935 = vrcp.pop %v2807
        %v2936 = vmul.f32 %v2807, %v2935
        %v2937 = vsub.f32 1.0, %v2936
        %v2938 = vmul.f32 %v2935, %v2937
        %v2939 = vadd.f32 %v2935, %v2938
        %vm2940 = vweird.f32 %v2807
        %vm2941 = vweird.f32 %v2935
        %vm2942 = vmor %vm2940, %vm2941
        %v2943 = vsel %vm2942, %v2935, %v2939
        %v2944 = vand.u32 2147483647, %v2807
        %vm2945 = vcmp.eq.f32.partialorder %v2944, 8.507059e+37
        %v2946 = vand.u32 %v2807, 2147483648
        %v2947 = vor.u32 1.1754944e-38, %v2946
        %v2948 = vsel %vm2945, %v2947, %v2943
        %v2949 = vmul.f32 1.0, %v2948
        %v2950 = vrcp.pop %v2808
        %v2951 = vmul.f32 %v2808, %v2950
        %v2952 = vsub.f32 1.0, %v2951
        %v2953 = vmul.f32 %v2950, %v2952
        %v2954 = vadd.f32 %v2950, %v2953
        %vm2955 = vweird.f32 %v2808
        %vm2956 = vweird.f32 %v2950
        %vm2957 = vmor %vm2955, %vm2956
        %v2958 = vsel %vm2957, %v2950, %v2954
        %v2959 = vand.u32 2147483647, %v2808
        %vm2960 = vcmp.eq.f32.partialorder %v2959, 8.507059e+37
        %v2961 = vand.u32 %v2808, 2147483648
        %v2962 = vor.u32 1.1754944e-38, %v2961
        %v2963 = vsel %vm2960, %v2962, %v2958
        %v2964 = vmul.f32 1.0, %v2963
        %v2965 = vrcp.pop %v2809
        %v2966 = vmul.f32 %v2809, %v2965
        %v2967 = vsub.f32 1.0, %v2966
        %v2968 = vmul.f32 %v2965, %v2967
        %v2969 = vadd.f32 %v2965, %v2968
        %vm2970 = vweird.f32 %v2809
        %vm2971 = vweird.f32 %v2965
        %vm2972 = vmor %vm2970, %vm2971
        %v2973 = vsel %vm2972, %v2965, %v2969
        %v2974 = vand.u32 2147483647, %v2809
        %vm2975 = vcmp.eq.f32.partialorder %v2974, 8.507059e+37
        %v2976 = vand.u32 %v2809, 2147483648
        %v2977 = vor.u32 1.1754944e-38, %v2976
        %v2978 = vsel %vm2975, %v2977, %v2973
        %v2979 = vmul.f32 1.0, %v2978
        %v2980 = vrcp.pop %v2810
        %v2981 = vmul.f32 %v2810, %v2980
        %v2982 = vsub.f32 1.0, %v2981
        %v2983 = vmul.f32 %v2980, %v2982
        %v2984 = vadd.f32 %v2980, %v2983
        %vm2985 = vweird.f32 %v2810
        %vm2986 = vweird.f32 %v2980
        %vm2987 = vmor %vm2985, %vm2986
        %v2988 = vsel %vm2987, %v2980, %v2984
        %v2989 = vand.u32 2147483647, %v2810
        %vm2990 = vcmp.eq.f32.partialorder %v2989, 8.507059e+37
        %v2991 = vand.u32 %v2810, 2147483648
        %v2992 = vor.u32 1.1754944e-38, %v2991
        %v2993 = vsel %vm2990, %v2992, %v2988
        %v2994 = vmul.f32 1.0, %v2993
        %v2995 = vrcp.pop %v2811
        %v2996 = vmul.f32 %v2811, %v2995
        %v2997 = vsub.f32 1.0, %v2996
        %v2998 = vmul.f32 %v2995, %v2997
        %v2999 = vadd.f32 %v2995, %v2998
        %vm3000 = vweird.f32 %v2811
        %vm3001 = vweird.f32 %v2995
        %vm3002 = vmor %vm3000, %vm3001
        %v3003 = vsel %vm3002, %v2995, %v2999
        %v3004 = vand.u32 2147483647, %v2811
        %vm3005 = vcmp.eq.f32.partialorder %v3004, 8.507059e+37
        %v3006 = vand.u32 %v2811, 2147483648
        %v3007 = vor.u32 1.1754944e-38, %v3006
        %v3008 = vsel %vm3005, %v3007, %v3003
        %v3009 = vmul.f32 1.0, %v3008
        %v3010 = vrcp.pop %v2812
        %v3011 = vmul.f32 %v2812, %v3010
        %v3012 = vsub.f32 1.0, %v3011
        %v3013 = vmul.f32 %v3010, %v3012
        %v3014 = vadd.f32 %v3010, %v3013
        %vm3015 = vweird.f32 %v2812
        %vm3016 = vweird.f32 %v3010
        %vm3017 = vmor %vm3015, %vm3016
        %v3018 = vsel %vm3017, %v3010, %v3014
        %v3019 = vand.u32 2147483647, %v2812
        %vm3020 = vcmp.eq.f32.partialorder %v3019, 8.507059e+37
        %v3021 = vand.u32 %v2812, 2147483648
        %v3022 = vor.u32 1.1754944e-38, %v3021
        %v3023 = vsel %vm3020, %v3022, %v3018
        %v3024 = vmul.f32 1.0, %v3023
        %v3025 = vrcp.pop %v2813
        %v3026 = vmul.f32 %v2813, %v3025
        %v3027 = vsub.f32 1.0, %v3026
        %v3028 = vmul.f32 %v3025, %v3027
        %v3029 = vadd.f32 %v3025, %v3028
        %vm3030 = vweird.f32 %v2813
        %vm3031 = vweird.f32 %v3025
        %vm3032 = vmor %vm3030, %vm3031
        %v3033 = vsel %vm3032, %v3025, %v3029
        %v3034 = vand.u32 2147483647, %v2813
        %vm3035 = vcmp.eq.f32.partialorder %v3034, 8.507059e+37
        %v3036 = vand.u32 %v2813, 2147483648
        %v3037 = vor.u32 1.1754944e-38, %v3036
        %v3038 = vsel %vm3035, %v3037, %v3033
        %v3039 = vmul.f32 1.0, %v3038
        %v3040 = vrcp.pop %v2814
        %v3041 = vmul.f32 %v2814, %v3040
        %v3042 = vsub.f32 1.0, %v3041
        %v3043 = vmul.f32 %v3040, %v3042
        %v3044 = vadd.f32 %v3040, %v3043
        %vm3045 = vweird.f32 %v2814
        %vm3046 = vweird.f32 %v3040
        %vm3047 = vmor %vm3045, %vm3046
        %v3048 = vsel %vm3047, %v3040, %v3044
        %v3049 = vand.u32 2147483647, %v2814
        %vm3050 = vcmp.eq.f32.partialorder %v3049, 8.507059e+37
        %v3051 = vand.u32 %v2814, 2147483648
        %v3052 = vor.u32 1.1754944e-38, %v3051
        %v3053 = vsel %vm3050, %v3052, %v3048
        %v3054 = vmul.f32 1.0, %v3053
        %v3055 = vmul.f32 %v2735, %v2829
        %v3056 = vmul.f32 %v2736, %v2844
        %v3057 = vmul.f32 %v2737, %v2859
        %v3058 = vmul.f32 %v2738, %v2874
        %v3059 = vmul.f32 %v2739, %v2889
        %v3060 = vmul.f32 %v2740, %v2904
        %v3061 = vmul.f32 %v2741, %v2919
        %v3062 = vmul.f32 %v2742, %v2934
        %v3063 = vmul.f32 %v2743, %v2949
        %v3064 = vmul.f32 %v2744, %v2964
        %v3065 = vmul.f32 %v2745, %v2979
        %v3066 = vmul.f32 %v2746, %v2994
        %v3067 = vmul.f32 %v2747, %v3009
        %v3068 = vmul.f32 %v2748, %v3024
        %v3069 = vmul.f32 %v2749, %v3039
        %v3070 = vmul.f32 %v2750, %v3054
        %3071 = vst [vmem:[%s258] sm:$0xff] %v3055
        %3072 = vst [vmem:[%s258 + $0x8] sm:$0xff] %v3056
        %3073 = vst [vmem:[%s258 + $0x10] sm:$0xff] %v3057
        %3074 = vst [vmem:[%s258 + $0x18] sm:$0xff] %v3058
        %3075 = vst [vmem:[%s258 + $0x20] sm:$0xff] %v3059
        %3076 = vst [vmem:[%s258 + $0x28] sm:$0xff] %v3060
        %3077 = vst [vmem:[%s258 + $0x30] sm:$0xff] %v3061
        %3078 = vst [vmem:[%s258 + $0x38] sm:$0xff] %v3062
        %3079 = vst [vmem:[%s258 + $0x40] sm:$0xff] %v3063
        %3080 = vst [vmem:[%s258 + $0x48] sm:$0xff] %v3064
        %3081 = vst [vmem:[%s258 + $0x50] sm:$0xff] %v3065
        %3082 = vst [vmem:[%s258 + $0x58] sm:$0xff] %v3066
        %3083 = vst [vmem:[%s258 + $0x60] sm:$0xff] %v3067
        %3084 = vst [vmem:[%s258 + $0x68] sm:$0xff] %v3068
        %3085 = vst [vmem:[%s258 + $0x70] sm:$0xff] %v3069
        %3086 = vst [vmem:[%s258 + $0x78] sm:$0xff] %v3070
        %s3087 = sand.u32 %s156, 1
        %s3088 = scalar_lea.sflag [#allocation5], %s3087
        %s3089 = sand.u32 %s156, 1
        %s3090 = smul.addr %s3089, 128
        %s3091 = scalar_lea.vmem [#allocation6], %s3090
        // Predicated region
        $region45: #{tpu_custom_call.1} parent=39 // pred_check
          %p3092 = pneg %p166
        $region46: #{tpu_custom_call.1} parent=39 // pred_check_branch
          %3094 = sbr.rel (%p3092) target = $region48
        $region47: #{tpu_custom_call.1} parent=39 // pred_region
          %s3095 = smul.u32 8, %s25
          %3097 = vsyncadd %s3088, 0
          %s3098 = smul.addr %s3095, 2
          %s3099 = smul.addr %s24, 32
          %s3100 = sadd.s32 %s3098, %s3099
          %s3101 = smul.addr %s3100, 8
          %s3102 = scalar_lea.hbm %s5, %s3101
          %s3103 = sshll.u32 %s3091, 4
          %s3104 = int_to_ptr.vmem [resolvable:$true] %s3103
          %s3105 = sshll.u32 %s3102, 4
          %s3106 = int_to_ptr.hbm [resolvable:$true] %s3105
          %3111 = dma.vmem_to_hbm [thread:$0]  %s3104, 2048, %s3106, %s3088, 128, 128, 8
        $region48: #{tpu_custom_call.1} parent=39 // pred_fallthru
          _
      $region40: #{tpu_custom_call.1} parent=5 // pred_fallthru
        _
      %p3112 = scmp.le.s32.totalorder 2, %s15
      // Predicated region
      $region49: #{tpu_custom_call.1} parent=5 // pred_check
        %p3113 = pneg %p3112
      $region50: #{tpu_custom_call.1} parent=5 // pred_check_branch
        %3115 = sbr.rel (%p3113) target = $region52
      $region51: #{tpu_custom_call.1} parent=5 // pred_region
        %s3116 = ssub.s32 %s15, 2
        // Predicated region
        $region53: #{tpu_custom_call.1} parent=51 // pred_check
          %p3117 = pneg %p172
        $region54: #{tpu_custom_call.1} parent=51 // pred_check_branch
          %3119 = sbr.rel (%p3117) target = $region56
        $region55: #{tpu_custom_call.1} parent=51 // pred_region
          %s3120 = sand.u32 %s157, 1
          %s3121 = scalar_lea.sflag [#allocation5], %s3120
          %s3122 = sand.u32 %s157, 1
          %s3123 = smul.addr %s3122, 128
          %s3124 = scalar_lea.vmem [#allocation6], %s3123
          %3126 = dma.done %s3121, 2048
        $region56: #{tpu_custom_call.1} parent=51 // pred_fallthru
          _
      $region52: #{tpu_custom_call.1} parent=5 // pred_fallthru
        _
    $region6: #{tpu_custom_call.1} parent=1 // loop_footer
      %s19 = sadd.s32 1, %s15
    $region7: #{tpu_custom_call.1} parent=1 // loop_footer_branch
      %14 = sbr.rel target = $region3
    $region8: #{tpu_custom_call.1} parent=1 // loop_exit
      _
    %3127 = vsyncpa [#allocation4], 1
    %s3128 = scalar_lea.sflag [#allocation4], 1
    %3129 = vsyncpa %s3128, 1
    %3130 = vsyncpa [#allocation5], 1
    %s3131 = scalar_lea.sflag [#allocation5], 1
    %3132 = vsyncpa %s3131, 1

// kernel: tpu_custom_call.1
$region0: #{tpu_custom_call.1}
  #allocation0 [shape = 'u32[]', space=smem, size = 0x4, offset = 0x4, fixed_abs, tag = 'smem constant byte address 0x4 - core index']
  #allocation1 [shape = 'u32[72,128]{1,0:T(1,128)}', space=vmem, size = 0x9000, scoped, tag = 'internal scratch']
  #allocation2 [shape = 'f32[10,18,128]{2,1,0:T(8,128)}', space=vmem, size = 0x1e000, scoped, tag = 'scratch operand']
  %s0 = inlined_call_operand.vmem [shape: f32[4,12,18,128], index: 0, kind: input, shape index: {}]
  %s1 = inlined_call_operand.vmem [shape: f32[9,128,128], index: 1, kind: input, shape index: {}]
  %s2 = inlined_call_operand.vmem [shape: f32[1,128], index: 2, kind: input, shape index: {}]
  %s3 = inlined_call_operand.hbm [shape: f32[9,128,128], index: 3, kind: input, shape index: {}]
  %s4 = inlined_call_operand.vmem [shape: f32[1,128], index: 4, kind: input, shape index: {}]
  %s5 = inlined_call_operand.hbm [shape: f32[2,16,16,128], index: 5, kind: output, shape index: {}]
  %s6 = sld [smem:[#allocation0]]
  $region57: #{tpu_custom_call.1} parent=0
    _
  %s8 = ssub.s32 1, %s6
  %s9 = scalar_select 0, %s8, %s6
  $region1: #{tpu_custom_call.1} parent=0
    #allocation3 [shape = 'u8[589824]{0}', space=vmem, size = 0x90000, scoped, tag = 'input window, operand 3, single buffered']
    #allocation4 [shape = 's32[2]{0}', space=sflag, size = 0x8, scoped, tag = 'scoped memory for tpu_custom_call.1']
    #allocation5 [shape = 's32[2]{0}', space=sflag, size = 0x8, scoped, tag = 'scoped memory for tpu_custom_call.1']
    #allocation6 [shape = 'u8[131072]{0}', space=vmem, size = 0x20000, scoped, tag = 'output window, operand 0']
    %10 = vsyncpa [#allocation4], 0
    %11 = vsyncpa [#allocation5], 0
    %s12 = scalar_lea.sflag [#allocation5], 1
    %13 = vsyncpa %s12, 0
    loop: start=0, step=1, limit=6
    $region2: #{tpu_custom_call.1} parent=1 // loop_pre_header
      _
    $region3: #{tpu_custom_call.1} parent=1 // loop_header
      %s15 = sphi 0, %s19
      %p16 = scmp.ge.s32.totalorder %s15, 6
      %s22 = sphi 0, %s34
      %s23 = sphi 0, %s30
      %s24 = sphi 0, %s22
      %s25 = sphi 0, %s23
      %s26 = sphi 0, %s24
      %s27 = sphi 0, %s25
      %s41 = sphi 0, %s43
      %s44 = sphi 0, %s41
      %s45 = sphi 0, %s44
      %s61 = sphi 0, %s45
      %s65 = sphi 0, %s65
      %s67 = sphi 0, %s65
      %s68 = sphi 0, %s67
      %s82 = sphi 0, %s68
      %s86 = sphi 0, %s86
      %s88 = sphi 0, %s86
      %s89 = sphi 0, %s88
      %s103 = sphi 0, %s89
      %s107 = sphi 0, %s107
      %s109 = sphi 0, %s107
      %s110 = sphi 0, %s109
      %s124 = sphi 0, %s110
      %s128 = sphi 0, %s128
      %s130 = sphi 0, %s128
      %s131 = sphi 0, %s130
      %s145 = sphi 0, %s131
      %s153 = sphi 0, %s155
      %s156 = sphi 0, %s153
      %s157 = sphi 0, %s156
      %s173 = sphi 0, %s157
    $region4: #{tpu_custom_call.1} parent=1 // loop_header_branch
      %18 = sbr.rel (%p16) target = $region8
    $region5: #{tpu_custom_call.1} parent=1 // loop_body
      %s20 = ssub.s32 %s15, 1
      %s21 = ssub.s32 %s15, 2
      %s28 = sadd.s32 1, %s23
      %p29 = scmp.ge.s32.totalorder %s28, 2
      %s30 = scalar_select %p29, 0, %s28
      %s31 = sadd.s32 1, %s22
      %s32 = scalar_select %p29, %s31, %s22
      %p33 = scmp.ge.s32.totalorder %s32, 2
      %s34 = scalar_select %p33, 0, %s32
      %s35 = smul.u32 %s22, 2
      %s36 = sadd.s32 %s35, %s23
      %s37 = smul.u32 %s34, 2
      %s38 = sadd.s32 %s37, %s30
      %s39 = ssub.s32 %s36, %s38
      %p40 = scmp.eq.s32.totalorder %s39, 0
      %s42 = sadd.s32 %s41, 1
      %s43 = scalar_select %p40, %s41, %s42
      %p46 = pneg %p40
      %p47 = scmp.eq.s32.totalorder %s15, 3
      %p48 = por %p46, %p47
      %p49 = scmp.ne.s32.totalorder %s41, %s44
      %p50 = scmp.eq.s32.totalorder %s15, 0
      %p51 = por %p49, %p50
      %p52 = scmp.ne.s32.totalorder %s41, %s44
      %p53 = scmp.eq.s32.totalorder %s20, 3
      %p54 = por %p52, %p53
      %p55 = scmp.ne.s32.totalorder %s44, %s45
      %p56 = scmp.eq.s32.totalorder %s20, 0
      %p57 = por %p55, %p56
      %p58 = scmp.ne.s32.totalorder %s44, %s45
      %p59 = scmp.eq.s32.totalorder %s21, 3
      %p60 = por %p58, %p59
      %p62 = scmp.ne.s32.totalorder %s45, %s61
      %p63 = scmp.eq.s32.totalorder %s21, 0
      %p64 = por %p62, %p63
      %s66 = sadd.s32 %s65, 1
      %p69 = scmp.eq.s32.totalorder %s15, 3
      %p70 = scmp.ne.s32.totalorder %s65, %s67
      %p71 = scmp.eq.s32.totalorder %s15, 0
      %p72 = por %p70, %p71
      %p73 = scmp.ne.s32.totalorder %s65, %s67
      %p74 = scmp.eq.s32.totalorder %s20, 3
      %p75 = por %p73, %p74
      %p76 = scmp.ne.s32.totalorder %s67, %s68
      %p77 = scmp.eq.s32.totalorder %s20, 0
      %p78 = por %p76, %p77
      %p79 = scmp.ne.s32.totalorder %s67, %s68
      %p80 = scmp.eq.s32.totalorder %s21, 3
      %p81 = por %p79, %p80
      %p83 = scmp.ne.s32.totalorder %s68, %s82
      %p84 = scmp.eq.s32.totalorder %s21, 0
      %p85 = por %p83, %p84
      %s87 = sadd.s32 %s86, 1
      %p90 = scmp.eq.s32.totalorder %s15, 3
      %p91 = scmp.ne.s32.totalorder %s86, %s88
      %p92 = scmp.eq.s32.totalorder %s15, 0
      %p93 = por %p91, %p92
      %p94 = scmp.ne.s32.totalorder %s86, %s88
      %p95 = scmp.eq.s32.totalorder %s20, 3
      %p96 = por %p94, %p95
      %p97 = scmp.ne.s32.totalorder %s88, %s89
      %p98 = scmp.eq.s32.totalorder %s20, 0
      %p99 = por %p97, %p98
      %p100 = scmp.ne.s32.totalorder %s88, %s89
      %p101 = scmp.eq.s32.totalorder %s21, 3
      %p102 = por %p100, %p101
      %p104 = scmp.ne.s32.totalorder %s89, %s103
      %p105 = scmp.eq.s32.totalorder %s21, 0
      %p106 = por %p104, %p105
      %s108 = sadd.s32 %s107, 1
      %p111 = scmp.eq.s32.totalorder %s15, 3
      %p112 = scmp.ne.s32.totalorder %s107, %s109
      %p113 = scmp.eq.s32.totalorder %s15, 0
      %p114 = por %p112, %p113
      %p115 = scmp.ne.s32.totalorder %s107, %s109
      %p116 = scmp.eq.s32.totalorder %s20, 3
      %p117 = por %p115, %p116
      %p118 = scmp.ne.s32.totalorder %s109, %s110
      %p119 = scmp.eq.s32.totalorder %s20, 0
      %p120 = por %p118, %p119
      %p121 = scmp.ne.s32.totalorder %s109, %s110
      %p122 = scmp.eq.s32.totalorder %s21, 3
      %p123 = por %p121, %p122
      %p125 = scmp.ne.s32.totalorder %s110, %s124
      %p126 = scmp.eq.s32.totalorder %s21, 0
      %p127 = por %p125, %p126
      %s129 = sadd.s32 %s128, 1
      %p132 = scmp.eq.s32.totalorder %s15, 3
      %p133 = scmp.ne.s32.totalorder %s128, %s130
      %p134 = scmp.eq.s32.totalorder %s15, 0
      %p135 = por %p133, %p134
      %p136 = scmp.ne.s32.totalorder %s128, %s130
      %p137 = scmp.eq.s32.totalorder %s20, 3
      %p138 = por %p136, %p137
      %p139 = scmp.ne.s32.totalorder %s130, %s131
      %p140 = scmp.eq.s32.totalorder %s20, 0
      %p141 = por %p139, %p140
      %p142 = scmp.ne.s32.totalorder %s130, %s131
      %p143 = scmp.eq.s32.totalorder %s21, 3
      %p144 = por %p142, %p143
      %p146 = scmp.ne.s32.totalorder %s131, %s145
      %p147 = scmp.eq.s32.totalorder %s21, 0
      %p148 = por %p146, %p147
      %s149 = ssub.s32 %s22, %s34
      %s150 = ssub.s32 %s23, %s30
      %s151 = sor.u32 %s149, %s150
      %p152 = scmp.eq.s32.totalorder %s151, 0
      %s154 = sadd.s32 %s153, 1
      %s155 = scalar_select %p152, %s153, %s154
      %p158 = pneg %p152
      %p159 = scmp.eq.s32.totalorder %s15, 3
      %p160 = por %p158, %p159
      %p161 = scmp.ne.s32.totalorder %s153, %s156
      %p162 = scmp.eq.s32.totalorder %s15, 0
      %p163 = por %p161, %p162
      %p164 = scmp.ne.s32.totalorder %s153, %s156
      %p165 = scmp.eq.s32.totalorder %s20, 3
      %p166 = por %p164, %p165
      %p167 = scmp.ne.s32.totalorder %s156, %s157
      %p168 = scmp.eq.s32.totalorder %s20, 0
      %p169 = por %p167, %p168
      %p170 = scmp.ne.s32.totalorder %s156, %s157
      %p171 = scmp.eq.s32.totalorder %s21, 3
      %p172 = por %p170, %p171
      %p174 = scmp.ne.s32.totalorder %s157, %s173
      %p175 = scmp.eq.s32.totalorder %s21, 0
      %p176 = por %p174, %p175
      %p177 = scmp.le.s32.totalorder 1, %s15
      %p178 = scmp.lt.s32.totalorder %s15, 5
      %p179 = pnand %p177, %p178
      %p180 = pneg %p179
      // Predicated region
      $region9: #{tpu_custom_call.1} parent=5 // pred_check
        _
      $region10: #{tpu_custom_call.1} parent=5 // pred_check_branch
        %182 = sbr.rel (%p179) target = $region12
      $region11: #{tpu_custom_call.1} parent=5 // pred_region
        %s183 = ssub.s32 %s15, 1
        // Predicated region
        $region13: #{tpu_custom_call.1} parent=11 // pred_check
          %p184 = pneg %p78
        $region14: #{tpu_custom_call.1} parent=11 // pred_check_branch
          %186 = sbr.rel (%p184) target = $region16
        $region15: #{tpu_custom_call.1} parent=11 // pred_region
          _
        $region16: #{tpu_custom_call.1} parent=11 // pred_fallthru
          _
        // Predicated region
        $region17: #{tpu_custom_call.1} parent=11 // pred_check
          %p187 = pneg %p99
        $region18: #{tpu_custom_call.1} parent=11 // pred_check_branch
          %189 = sbr.rel (%p187) target = $region20
        $region19: #{tpu_custom_call.1} parent=11 // pred_region
          _
        $region20: #{tpu_custom_call.1} parent=11 // pred_fallthru
          _
        // Predicated region
        $region21: #{tpu_custom_call.1} parent=11 // pred_check
          %p190 = pneg %p120
        $region22: #{tpu_custom_call.1} parent=11 // pred_check_branch
          %192 = sbr.rel (%p190) target = $region24
        $region23: #{tpu_custom_call.1} parent=11 // pred_region
          %194 = vsyncadd [#allocation4], 0
          %s195 = sshll.u32 %s3, 4
          %s196 = int_to_ptr.hbm [resolvable:$true] %s195
          %s197 = sshll.u32 [#allocation3], 4
          %s198 = int_to_ptr.vmem [resolvable:$true] %s197
          %203 = dma.hbm_to_vmem [thread:$0]  %s196, 18432, %s198, [#allocation4], 128, 128, 8
        $region24: #{tpu_custom_call.1} parent=11 // pred_fallthru
          _
        // Predicated region
        $region25: #{tpu_custom_call.1} parent=11 // pred_check
          %p204 = pneg %p141
        $region26: #{tpu_custom_call.1} parent=11 // pred_check_branch
          %206 = sbr.rel (%p204) target = $region28
        $region27: #{tpu_custom_call.1} parent=11 // pred_region
          _
        $region28: #{tpu_custom_call.1} parent=11 // pred_fallthru
          _
      $region12: #{tpu_custom_call.1} parent=5 // pred_fallthru
        _
      %p207 = scmp.lt.s32.totalorder %s15, 4
      // Predicated region
      $region29: #{tpu_custom_call.1} parent=5 // pred_check
        %p208 = pneg %p207
      $region30: #{tpu_custom_call.1} parent=5 // pred_check_branch
        %210 = sbr.rel (%p208) target = $region32
      $region31: #{tpu_custom_call.1} parent=5 // pred_region
        // Predicated region
        $region33: #{tpu_custom_call.1} parent=31 // pred_check
          %p211 = pneg %p51
        $region34: #{tpu_custom_call.1} parent=31 // pred_check_branch
          %213 = sbr.rel (%p211) target = $region36
        $region35: #{tpu_custom_call.1} parent=31 // pred_region
          %s214 = smul.u32 %s22, 2
          %s215 = sadd.s32 %s214, %s23
          %p216 = scmp.lt.s32.totalorder %s215, 3
          %s217 = scalar_select %p216, %s215, 3
          %s218 = smul.addr %s217, 36
          %s219 = smul.addr %s218, 8
          %s220 = scalar_lea.vmem %s0, %s219
          %s221 = smul.u32 %s22, 2
          %s222 = sadd.s32 %s221, %s23
        $region36: #{tpu_custom_call.1} parent=31 // pred_fallthru
          _
      $region32: #{tpu_custom_call.1} parent=5 // pred_fallthru
        _
      %p223 = scmp.le.s32.totalorder 1, %s15
      %p224 = scmp.lt.s32.totalorder %s15, 5
      %p225 = pnand %p223, %p224
      %p226 = pneg %p225
      // Predicated region
      $region37: #{tpu_custom_call.1} parent=5 // pred_check
        _
      $region38: #{tpu_custom_call.1} parent=5 // pred_check_branch
        %228 = sbr.rel (%p225) target = $region40
      $region39: #{tpu_custom_call.1} parent=5 // pred_region
        %s229 = ssub.s32 %s15, 1
        // Predicated region
        $region41: #{tpu_custom_call.1} parent=39 // pred_check
          %p230 = pneg %p120
        $region42: #{tpu_custom_call.1} parent=39 // pred_check_branch
          %232 = sbr.rel (%p230) target = $region44
        $region43: #{tpu_custom_call.1} parent=39 // pred_region
          %234 = dma.done [#allocation4], 18432
        $region44: #{tpu_custom_call.1} parent=39 // pred_fallthru
          _
        %s235 = smul.u32 %s24, 2
        %s236 = sadd.s32 %s235, %s25
        %p237 = scmp.lt.s32.totalorder %s236, 3
        %s238 = scalar_select %p237, %s236, 3
        %s239 = smul.addr %s238, 36
        %s240 = smul.addr %s239, 8
        %s241 = scalar_lea.vmem %s0, %s240
        %p242 = pneg %p57
        %p243 = pneg %p54
        %p244 = pneg %p78
        %p245 = pneg %p75
        %p246 = pneg %p99
        %p247 = pneg %p96
        %p248 = pneg %p120
        %p249 = pneg %p117
        %p250 = pneg %p141
        %p251 = pneg %p138
        %p252 = pneg %p169
        %p253 = pneg %p166
        %s254 = sand.u32 %s156, 1
        %s255 = scalar_lea.sflag [#allocation5], %s254
        %s256 = sand.u32 %s156, 1
        %s257 = smul.addr %s256, 128
        %s258 = scalar_lea.vmem [#allocation6], %s257
        %s259 = smul.u32 %s24, 2
        %s260 = sadd.s32 %s259, %s25
        %p261 = scmp.lt.s32.totalorder %s260, 3
        %s262 = scalar_select %p261, %s260, 3
        %s263 = smul.addr %s262, 36
        %s264 = smul.addr %s263, 8
        %s265 = scalar_lea.vmem %s0, %s264
        %s266 = smul.u32 %s24, 2
        %s267 = sadd.s32 %s266, %s25
        %s268 = smul.u32 8, %s25
        %v269 = vld [vmem:[%s265] sm:$0xff]
        %v270 = vld [vmem:[%s265 + $0x8] sm:$0xff]
        %v271 = vld [vmem:[%s265 + $0x18] sm:$0xff]
        %v272 = vld [vmem:[%s265 + $0x20] sm:$0xff]
        %v273 = vld [vmem:[%s265 + $0x30] sm:$0xff]
        %v274 = vld [vmem:[%s265 + $0x38] sm:$0xff]
        %v275 = vld [vmem:[%s265 + $0x48] sm:$0xff]
        %v276 = vld [vmem:[%s265 + $0x50] sm:$0xff]
        %v277 = vld [vmem:[%s265 + $0x60] sm:$0xff]
        %v278 = vld [vmem:[%s265 + $0x68] sm:$0xff]
        %v279 = vld [vmem:[%s265 + $0x78] sm:$0xff]
        %v280 = vld [vmem:[%s265 + $0x80] sm:$0xff]
        %v281 = vld [vmem:[%s265 + $0x90] sm:$0xff]
        %v282 = vld [vmem:[%s265 + $0x98] sm:$0xff]
        %v283 = vld [vmem:[%s265 + $0xa8] sm:$0xff]
        %v284 = vld [vmem:[%s265 + $0xb0] sm:$0xff]
        %v285 = vld [vmem:[%s265 + $0xc0] sm:$0xff]
        %v286 = vld [vmem:[%s265 + $0xc8] sm:$0xff]
        %v287 = vld [vmem:[%s265 + $0xd8] sm:$0xff]
        %v288 = vld [vmem:[%s265 + $0xe0] sm:$0xff]
        %v289 = vld [vmem:[%s265 + $0xf0] sm:$0xff]
        %v290 = vld [vmem:[%s265 + $0xf8] sm:$0xff]
        %v291 = vld [vmem:[%s265 + $0x108] sm:$0xff]
        %v292 = vld [vmem:[%s265 + $0x110] sm:$0xff]
        %v293 = vld [vmem:[%s265 + $0x1] sm:$0xff]
        %v294 = vld [vmem:[%s265 + $0x9] sm:$0xff]
        %v295 = vld [vmem:[%s265 + $0x19] sm:$0xff]
        %v296 = vld [vmem:[%s265 + $0x21] sm:$0xff]
        %v297 = vld [vmem:[%s265 + $0x31] sm:$0xff]
        %v298 = vld [vmem:[%s265 + $0x39] sm:$0xff]
        %v299 = vld [vmem:[%s265 + $0x49] sm:$0xff]
        %v300 = vld [vmem:[%s265 + $0x51] sm:$0xff]
        %v301 = vld [vmem:[%s265 + $0x61] sm:$0xff]
        %v302 = vld [vmem:[%s265 + $0x69] sm:$0xff]
        %v303 = vld [vmem:[%s265 + $0x79] sm:$0xff]
        %v304 = vld [vmem:[%s265 + $0x81] sm:$0xff]
        %v305 = vld [vmem:[%s265 + $0x91] sm:$0xff]
        %v306 = vld [vmem:[%s265 + $0x99] sm:$0xff]
        %v307 = vld [vmem:[%s265 + $0xa9] sm:$0xff]
        %v308 = vld [vmem:[%s265 + $0xb1] sm:$0xff]
        %v309 = vld [vmem:[%s265 + $0xc1] sm:$0xff]
        %v310 = vld [vmem:[%s265 + $0xc9] sm:$0xff]
        %v311 = vld [vmem:[%s265 + $0xd9] sm:$0xff]
        %v312 = vld [vmem:[%s265 + $0xe1] sm:$0xff]
        %v313 = vld [vmem:[%s265 + $0xf1] sm:$0xff]
        %v314 = vld [vmem:[%s265 + $0xf9] sm:$0xff]
        %v315 = vld [vmem:[%s265 + $0x109] sm:$0xff]
        %v316 = vld [vmem:[%s265 + $0x111] sm:$0xff]
        %v317 = vld [vmem:[%s265 + $0x2] sm:$0xff]
        %v318 = vld [vmem:[%s265 + $0xa] sm:$0xff]
        %v319 = vld [vmem:[%s265 + $0x1a] sm:$0xff]
        %v320 = vld [vmem:[%s265 + $0x22] sm:$0xff]
        %v321 = vld [vmem:[%s265 + $0x32] sm:$0xff]
        %v322 = vld [vmem:[%s265 + $0x3a] sm:$0xff]
        %v323 = vld [vmem:[%s265 + $0x4a] sm:$0xff]
        %v324 = vld [vmem:[%s265 + $0x52] sm:$0xff]
        %v325 = vld [vmem:[%s265 + $0x62] sm:$0xff]
        %v326 = vld [vmem:[%s265 + $0x6a] sm:$0xff]
        %v327 = vld [vmem:[%s265 + $0x7a] sm:$0xff]
        %v328 = vld [vmem:[%s265 + $0x82] sm:$0xff]
        %v329 = vld [vmem:[%s265 + $0x92] sm:$0xff]
        %v330 = vld [vmem:[%s265 + $0x9a] sm:$0xff]
        %v331 = vld [vmem:[%s265 + $0xaa] sm:$0xff]
        %v332 = vld [vmem:[%s265 + $0xb2] sm:$0xff]
        %v333 = vld [vmem:[%s265 + $0xc2] sm:$0xff]
        %v334 = vld [vmem:[%s265 + $0xca] sm:$0xff]
        %v335 = vld [vmem:[%s265 + $0xda] sm:$0xff]
        %v336 = vld [vmem:[%s265 + $0xe2] sm:$0xff]
        %v337 = vld [vmem:[%s265 + $0xf2] sm:$0xff]
        %v338 = vld [vmem:[%s265 + $0xfa] sm:$0xff]
        %v339 = vld [vmem:[%s265 + $0x10a] sm:$0xff]
        %v340 = vld [vmem:[%s265 + $0x112] sm:$0xff]
        %v341 = vld [vmem:[%s1] sm:$0xff]
        %v342 = vld [vmem:[%s1 + $0x8] sm:$0xff]
        %v343 = vld [vmem:[%s1 + $0x10] sm:$0xff]
        %v344 = vld [vmem:[%s1 + $0x18] sm:$0xff]
        %v345 = vld [vmem:[%s1 + $0x20] sm:$0xff]
        %v346 = vld [vmem:[%s1 + $0x28] sm:$0xff]
        %v347 = vld [vmem:[%s1 + $0x30] sm:$0xff]
        %v348 = vld [vmem:[%s1 + $0x38] sm:$0xff]
        %v349 = vld [vmem:[%s1 + $0x40] sm:$0xff]
        %v350 = vld [vmem:[%s1 + $0x48] sm:$0xff]
        %v351 = vld [vmem:[%s1 + $0x50] sm:$0xff]
        %v352 = vld [vmem:[%s1 + $0x58] sm:$0xff]
        %v353 = vld [vmem:[%s1 + $0x60] sm:$0xff]
        %v354 = vld [vmem:[%s1 + $0x68] sm:$0xff]
        %v355 = vld [vmem:[%s1 + $0x70] sm:$0xff]
        %v356 = vld [vmem:[%s1 + $0x78] sm:$0xff]
        %s357 = scalar_lea.vmem %s1, 128
        %v358 = vld [vmem:[%s357] sm:$0xff]
        %v359 = vld [vmem:[%s357 + $0x8] sm:$0xff]
        %v360 = vld [vmem:[%s357 + $0x10] sm:$0xff]
        %v361 = vld [vmem:[%s357 + $0x18] sm:$0xff]
        %v362 = vld [vmem:[%s357 + $0x20] sm:$0xff]
        %v363 = vld [vmem:[%s357 + $0x28] sm:$0xff]
        %v364 = vld [vmem:[%s357 + $0x30] sm:$0xff]
        %v365 = vld [vmem:[%s357 + $0x38] sm:$0xff]
        %v366 = vld [vmem:[%s357 + $0x40] sm:$0xff]
        %v367 = vld [vmem:[%s357 + $0x48] sm:$0xff]
        %v368 = vld [vmem:[%s357 + $0x50] sm:$0xff]
        %v369 = vld [vmem:[%s357 + $0x58] sm:$0xff]
        %v370 = vld [vmem:[%s357 + $0x60] sm:$0xff]
        %v371 = vld [vmem:[%s357 + $0x68] sm:$0xff]
        %v372 = vld [vmem:[%s357 + $0x70] sm:$0xff]
        %v373 = vld [vmem:[%s357 + $0x78] sm:$0xff]
        %374 = vmatpush.msra.mxu0 %v373
        %375 = vmatpush.msra.mxu0 %v372
        %376 = vmatpush.msra.mxu0 %v371
        %377 = vmatpush.msra.mxu0 %v370
        %378 = vmatpush.msra.mxu0 %v369
        %379 = vmatpush.msra.mxu0 %v368
        %380 = vmatpush.msra.mxu0 %v367
        %381 = vmatpush.msra.mxu0 %v366
        %382 = vmatpush.msra.mxu0 %v365
        %383 = vmatpush.msra.mxu0 %v364
        %384 = vmatpush.msra.mxu0 %v363
        %385 = vmatpush.msra.mxu0 %v362
        %386 = vmatpush.msra.mxu0 %v361
        %387 = vmatpush.msra.mxu0 %v360
        %388 = vmatpush.msra.mxu0 %v359
        %389 = vmatpush.msra.mxu0 %v358
        %390 = vmatmul.f32.gmra.mxu0 %v293
        %v391 = vpop.f32.mrf.mxu0
        %v392 = vadd.f32 0.0, %v391
        %393 = vmatmul.f32.gmra.mxu0 %v294
        %v394 = vpop.f32.mrf.mxu0
        %v395 = vadd.f32 0.0, %v394
        %396 = vmatmul.f32.gmra.mxu0 %v295
        %v397 = vpop.f32.mrf.mxu0
        %v398 = vadd.f32 0.0, %v397
        %399 = vmatmul.f32.gmra.mxu0 %v296
        %v400 = vpop.f32.mrf.mxu0
        %v401 = vadd.f32 0.0, %v400
        %402 = vmatmul.f32.gmra.mxu0 %v297
        %v403 = vpop.f32.mrf.mxu0
        %v404 = vadd.f32 0.0, %v403
        %405 = vmatmul.f32.gmra.mxu0 %v298
        %v406 = vpop.f32.mrf.mxu0
        %v407 = vadd.f32 0.0, %v406
        %408 = vmatmul.f32.gmra.mxu0 %v299
        %v409 = vpop.f32.mrf.mxu0
        %v410 = vadd.f32 0.0, %v409
        %411 = vmatmul.f32.gmra.mxu0 %v300
        %v412 = vpop.f32.mrf.mxu0
        %v413 = vadd.f32 0.0, %v412
        %414 = vmatmul.f32.gmra.mxu0 %v301
        %v415 = vpop.f32.mrf.mxu0
        %v416 = vadd.f32 0.0, %v415
        %417 = vmatmul.f32.gmra.mxu0 %v302
        %v418 = vpop.f32.mrf.mxu0
        %v419 = vadd.f32 0.0, %v418
        %420 = vmatmul.f32.gmra.mxu0 %v303
        %v421 = vpop.f32.mrf.mxu0
        %v422 = vadd.f32 0.0, %v421
        %423 = vmatmul.f32.gmra.mxu0 %v304
        %v424 = vpop.f32.mrf.mxu0
        %v425 = vadd.f32 0.0, %v424
        %426 = vmatmul.f32.gmra.mxu0 %v305
        %v427 = vpop.f32.mrf.mxu0
        %v428 = vadd.f32 0.0, %v427
        %429 = vmatmul.f32.gmra.mxu0 %v306
        %v430 = vpop.f32.mrf.mxu0
        %v431 = vadd.f32 0.0, %v430
        %432 = vmatmul.f32.gmra.mxu0 %v307
        %v433 = vpop.f32.mrf.mxu0
        %v434 = vadd.f32 0.0, %v433
        %435 = vmatmul.f32.gmra.mxu0 %v308
        %v436 = vpop.f32.mrf.mxu0
        %v437 = vadd.f32 0.0, %v436
        %438 = vmatmul.f32.gmra.mxu0 %v309
        %v439 = vpop.f32.mrf.mxu0
        %v440 = vadd.f32 0.0, %v439
        %441 = vmatmul.f32.gmra.mxu0 %v310
        %v442 = vpop.f32.mrf.mxu0
        %v443 = vadd.f32 0.0, %v442
        %444 = vmatmul.f32.gmra.mxu0 %v311
        %v445 = vpop.f32.mrf.mxu0
        %v446 = vadd.f32 0.0, %v445
        %447 = vmatmul.f32.gmra.mxu0 %v312
        %v448 = vpop.f32.mrf.mxu0
        %v449 = vadd.f32 0.0, %v448
        %450 = vdwg.mxu0
        %451 = vmatpush.msra.mxu0 %v356
        %452 = vmatpush.msra.mxu0 %v355
        %453 = vmatpush.msra.mxu0 %v354
        %454 = vmatpush.msra.mxu0 %v353
        %455 = vmatpush.msra.mxu0 %v352
        %456 = vmatpush.msra.mxu0 %v351
        %457 = vmatpush.msra.mxu0 %v350
        %458 = vmatpush.msra.mxu0 %v349
        %459 = vmatpush.msra.mxu0 %v348
        %460 = vmatpush.msra.mxu0 %v347
        %461 = vmatpush.msra.mxu0 %v346
        %462 = vmatpush.msra.mxu0 %v345
        %463 = vmatpush.msra.mxu0 %v344
        %464 = vmatpush.msra.mxu0 %v343
        %465 = vmatpush.msra.mxu0 %v342
        %466 = vmatpush.msra.mxu0 %v341
        %467 = vmatmul.f32.gmra.mxu0 %v269
        %v468 = vpop.f32.mrf.mxu0
        %v469 = vadd.f32 %v392, %v468
        %470 = vmatmul.f32.gmra.mxu0 %v270
        %v471 = vpop.f32.mrf.mxu0
        %v472 = vadd.f32 %v395, %v471
        %473 = vmatmul.f32.gmra.mxu0 %v271
        %v474 = vpop.f32.mrf.mxu0
        %v475 = vadd.f32 %v398, %v474
        %476 = vmatmul.f32.gmra.mxu0 %v272
        %v477 = vpop.f32.mrf.mxu0
        %v478 = vadd.f32 %v401, %v477
        %479 = vmatmul.f32.gmra.mxu0 %v273
        %v480 = vpop.f32.mrf.mxu0
        %v481 = vadd.f32 %v404, %v480
        %482 = vmatmul.f32.gmra.mxu0 %v274
        %v483 = vpop.f32.mrf.mxu0
        %v484 = vadd.f32 %v407, %v483
        %485 = vmatmul.f32.gmra.mxu0 %v275
        %v486 = vpop.f32.mrf.mxu0
        %v487 = vadd.f32 %v410, %v486
        %488 = vmatmul.f32.gmra.mxu0 %v276
        %v489 = vpop.f32.mrf.mxu0
        %v490 = vadd.f32 %v413, %v489
        %491 = vmatmul.f32.gmra.mxu0 %v277
        %v492 = vpop.f32.mrf.mxu0
        %v493 = vadd.f32 %v416, %v492
        %494 = vmatmul.f32.gmra.mxu0 %v278
        %v495 = vpop.f32.mrf.mxu0
        %v496 = vadd.f32 %v419, %v495
        %497 = vmatmul.f32.gmra.mxu0 %v279
        %v498 = vpop.f32.mrf.mxu0
        %v499 = vadd.f32 %v422, %v498
        %500 = vmatmul.f32.gmra.mxu0 %v280
        %v501 = vpop.f32.mrf.mxu0
        %v502 = vadd.f32 %v425, %v501
        %503 = vmatmul.f32.gmra.mxu0 %v281
        %v504 = vpop.f32.mrf.mxu0
        %v505 = vadd.f32 %v428, %v504
        %506 = vmatmul.f32.gmra.mxu0 %v282
        %v507 = vpop.f32.mrf.mxu0
        %v508 = vadd.f32 %v431, %v507
        %509 = vmatmul.f32.gmra.mxu0 %v283
        %v510 = vpop.f32.mrf.mxu0
        %v511 = vadd.f32 %v434, %v510
        %512 = vmatmul.f32.gmra.mxu0 %v284
        %v513 = vpop.f32.mrf.mxu0
        %v514 = vadd.f32 %v437, %v513
        %515 = vmatmul.f32.gmra.mxu0 %v285
        %v516 = vpop.f32.mrf.mxu0
        %v517 = vadd.f32 %v440, %v516
        %518 = vmatmul.f32.gmra.mxu0 %v286
        %v519 = vpop.f32.mrf.mxu0
        %v520 = vadd.f32 %v443, %v519
        %521 = vmatmul.f32.gmra.mxu0 %v287
        %v522 = vpop.f32.mrf.mxu0
        %v523 = vadd.f32 %v446, %v522
        %524 = vmatmul.f32.gmra.mxu0 %v288
        %v525 = vpop.f32.mrf.mxu0
        %v526 = vadd.f32 %v449, %v525
        %527 = vdwg.mxu0
        %s528 = scalar_lea.vmem %s1, 256
        %v529 = vld [vmem:[%s528] sm:$0xff]
        %v530 = vld [vmem:[%s528 + $0x8] sm:$0xff]
        %v531 = vld [vmem:[%s528 + $0x10] sm:$0xff]
        %v532 = vld [vmem:[%s528 + $0x18] sm:$0xff]
        %v533 = vld [vmem:[%s528 + $0x20] sm:$0xff]
        %v534 = vld [vmem:[%s528 + $0x28] sm:$0xff]
        %v535 = vld [vmem:[%s528 + $0x30] sm:$0xff]
        %v536 = vld [vmem:[%s528 + $0x38] sm:$0xff]
        %v537 = vld [vmem:[%s528 + $0x40] sm:$0xff]
        %v538 = vld [vmem:[%s528 + $0x48] sm:$0xff]
        %v539 = vld [vmem:[%s528 + $0x50] sm:$0xff]
        %v540 = vld [vmem:[%s528 + $0x58] sm:$0xff]
        %v541 = vld [vmem:[%s528 + $0x60] sm:$0xff]
        %v542 = vld [vmem:[%s528 + $0x68] sm:$0xff]
        %v543 = vld [vmem:[%s528 + $0x70] sm:$0xff]
        %v544 = vld [vmem:[%s528 + $0x78] sm:$0xff]
        %545 = vmatpush.msra.mxu0 %v544
        %546 = vmatpush.msra.mxu0 %v543
        %547 = vmatpush.msra.mxu0 %v542
        %548 = vmatpush.msra.mxu0 %v541
        %549 = vmatpush.msra.mxu0 %v540
        %550 = vmatpush.msra.mxu0 %v539
        %551 = vmatpush.msra.mxu0 %v538
        %552 = vmatpush.msra.mxu0 %v537
        %553 = vmatpush.msra.mxu0 %v536
        %554 = vmatpush.msra.mxu0 %v535
        %555 = vmatpush.msra.mxu0 %v534
        %556 = vmatpush.msra.mxu0 %v533
        %557 = vmatpush.msra.mxu0 %v532
        %558 = vmatpush.msra.mxu0 %v531
        %559 = vmatpush.msra.mxu0 %v530
        %560 = vmatpush.msra.mxu0 %v529
        %561 = vmatmul.f32.gmra.mxu0 %v317
        %v562 = vpop.f32.mrf.mxu0
        %v563 = vadd.f32 0.0, %v562
        %564 = vmatmul.f32.gmra.mxu0 %v318
        %v565 = vpop.f32.mrf.mxu0
        %v566 = vadd.f32 0.0, %v565
        %567 = vmatmul.f32.gmra.mxu0 %v319
        %v568 = vpop.f32.mrf.mxu0
        %v569 = vadd.f32 0.0, %v568
        %570 = vmatmul.f32.gmra.mxu0 %v320
        %v571 = vpop.f32.mrf.mxu0
        %v572 = vadd.f32 0.0, %v571
        %573 = vmatmul.f32.gmra.mxu0 %v321
        %v574 = vpop.f32.mrf.mxu0
        %v575 = vadd.f32 0.0, %v574
        %576 = vmatmul.f32.gmra.mxu0 %v322
        %v577 = vpop.f32.mrf.mxu0
        %v578 = vadd.f32 0.0, %v577
        %579 = vmatmul.f32.gmra.mxu0 %v323
        %v580 = vpop.f32.mrf.mxu0
        %v581 = vadd.f32 0.0, %v580
        %582 = vmatmul.f32.gmra.mxu0 %v324
        %v583 = vpop.f32.mrf.mxu0
        %v584 = vadd.f32 0.0, %v583
        %585 = vmatmul.f32.gmra.mxu0 %v325
        %v586 = vpop.f32.mrf.mxu0
        %v587 = vadd.f32 0.0, %v586
        %588 = vmatmul.f32.gmra.mxu0 %v326
        %v589 = vpop.f32.mrf.mxu0
        %v590 = vadd.f32 0.0, %v589
        %591 = vmatmul.f32.gmra.mxu0 %v327
        %v592 = vpop.f32.mrf.mxu0
        %v593 = vadd.f32 0.0, %v592
        %594 = vmatmul.f32.gmra.mxu0 %v328
        %v595 = vpop.f32.mrf.mxu0
        %v596 = vadd.f32 0.0, %v595
        %597 = vmatmul.f32.gmra.mxu0 %v329
        %v598 = vpop.f32.mrf.mxu0
        %v599 = vadd.f32 0.0, %v598
        %600 = vmatmul.f32.gmra.mxu0 %v330
        %v601 = vpop.f32.mrf.mxu0
        %v602 = vadd.f32 0.0, %v601
        %603 = vmatmul.f32.gmra.mxu0 %v331
        %v604 = vpop.f32.mrf.mxu0
        %v605 = vadd.f32 0.0, %v604
        %606 = vmatmul.f32.gmra.mxu0 %v332
        %v607 = vpop.f32.mrf.mxu0
        %v608 = vadd.f32 0.0, %v607
        %609 = vmatmul.f32.gmra.mxu0 %v333
        %v610 = vpop.f32.mrf.mxu0
        %v611 = vadd.f32 0.0, %v610
        %612 = vmatmul.f32.gmra.mxu0 %v334
        %v613 = vpop.f32.mrf.mxu0
        %v614 = vadd.f32 0.0, %v613
        %615 = vmatmul.f32.gmra.mxu0 %v335
        %v616 = vpop.f32.mrf.mxu0
        %v617 = vadd.f32 0.0, %v616
        %618 = vmatmul.f32.gmra.mxu0 %v336
        %v619 = vpop.f32.mrf.mxu0
        %v620 = vadd.f32 0.0, %v619
        %621 = vdwg.mxu0
        %v622 = vadd.f32 %v469, %v563
        %v623 = vadd.f32 %v472, %v566
        %v624 = vadd.f32 %v475, %v569
        %v625 = vadd.f32 %v478, %v572
        %v626 = vadd.f32 %v481, %v575
        %v627 = vadd.f32 %v484, %v578
        %v628 = vadd.f32 %v487, %v581
        %v629 = vadd.f32 %v490, %v584
        %v630 = vadd.f32 %v493, %v587
        %v631 = vadd.f32 %v496, %v590
        %v632 = vadd.f32 %v499, %v593
        %v633 = vadd.f32 %v502, %v596
        %v634 = vadd.f32 %v505, %v599
        %v635 = vadd.f32 %v508, %v602
        %v636 = vadd.f32 %v511, %v605
        %v637 = vadd.f32 %v514, %v608
        %v638 = vadd.f32 %v517, %v611
        %v639 = vadd.f32 %v520, %v614
        %v640 = vadd.f32 %v523, %v617
        %v641 = vadd.f32 %v526, %v620
        %s642 = scalar_lea.vmem %s1, 384
        %v643 = vld [vmem:[%s642] sm:$0xff]
        %v644 = vld [vmem:[%s642 + $0x8] sm:$0xff]
        %v645 = vld [vmem:[%s642 + $0x10] sm:$0xff]
        %v646 = vld [vmem:[%s642 + $0x18] sm:$0xff]
        %v647 = vld [vmem:[%s642 + $0x20] sm:$0xff]
        %v648 = vld [vmem:[%s642 + $0x28] sm:$0xff]
        %v649 = vld [vmem:[%s642 + $0x30] sm:$0xff]
        %v650 = vld [vmem:[%s642 + $0x38] sm:$0xff]
        %v651 = vld [vmem:[%s642 + $0x40] sm:$0xff]
        %v652 = vld [vmem:[%s642 + $0x48] sm:$0xff]
        %v653 = vld [vmem:[%s642 + $0x50] sm:$0xff]
        %v654 = vld [vmem:[%s642 + $0x58] sm:$0xff]
        %v655 = vld [vmem:[%s642 + $0x60] sm:$0xff]
        %v656 = vld [vmem:[%s642 + $0x68] sm:$0xff]
        %v657 = vld [vmem:[%s642 + $0x70] sm:$0xff]
        %v658 = vld [vmem:[%s642 + $0x78] sm:$0xff]
        %659 = vmatpush.msra.mxu0 %v658
        %660 = vmatpush.msra.mxu0 %v657
        %661 = vmatpush.msra.mxu0 %v656
        %662 = vmatpush.msra.mxu0 %v655
        %663 = vmatpush.msra.mxu0 %v654
        %664 = vmatpush.msra.mxu0 %v653
        %665 = vmatpush.msra.mxu0 %v652
        %666 = vmatpush.msra.mxu0 %v651
        %667 = vmatpush.msra.mxu0 %v650
        %668 = vmatpush.msra.mxu0 %v649
        %669 = vmatpush.msra.mxu0 %v648
        %670 = vmatpush.msra.mxu0 %v647
        %671 = vmatpush.msra.mxu0 %v646
        %672 = vmatpush.msra.mxu0 %v645
        %673 = vmatpush.msra.mxu0 %v644
        %674 = vmatpush.msra.mxu0 %v643
        %675 = vmatmul.f32.gmra.mxu0 %v271
        %v676 = vpop.f32.mrf.mxu0
        %v677 = vadd.f32 0.0, %v676
        %678 = vmatmul.f32.gmra.mxu0 %v272
        %v679 = vpop.f32.mrf.mxu0
        %v680 = vadd.f32 0.0, %v679
        %681 = vmatmul.f32.gmra.mxu0 %v273
        %v682 = vpop.f32.mrf.mxu0
        %v683 = vadd.f32 0.0, %v682
        %684 = vmatmul.f32.gmra.mxu0 %v274
        %v685 = vpop.f32.mrf.mxu0
        %v686 = vadd.f32 0.0, %v685
        %687 = vmatmul.f32.gmra.mxu0 %v275
        %v688 = vpop.f32.mrf.mxu0
        %v689 = vadd.f32 0.0, %v688
        %690 = vmatmul.f32.gmra.mxu0 %v276
        %v691 = vpop.f32.mrf.mxu0
        %v692 = vadd.f32 0.0, %v691
        %693 = vmatmul.f32.gmra.mxu0 %v277
        %v694 = vpop.f32.mrf.mxu0
        %v695 = vadd.f32 0.0, %v694
        %696 = vmatmul.f32.gmra.mxu0 %v278
        %v697 = vpop.f32.mrf.mxu0
        %v698 = vadd.f32 0.0, %v697
        %699 = vmatmul.f32.gmra.mxu0 %v279
        %v700 = vpop.f32.mrf.mxu0
        %v701 = vadd.f32 0.0, %v700
        %702 = vmatmul.f32.gmra.mxu0 %v280
        %v703 = vpop.f32.mrf.mxu0
        %v704 = vadd.f32 0.0, %v703
        %705 = vmatmul.f32.gmra.mxu0 %v281
        %v706 = vpop.f32.mrf.mxu0
        %v707 = vadd.f32 0.0, %v706
        %708 = vmatmul.f32.gmra.mxu0 %v282
        %v709 = vpop.f32.mrf.mxu0
        %v710 = vadd.f32 0.0, %v709
        %711 = vmatmul.f32.gmra.mxu0 %v283
        %v712 = vpop.f32.mrf.mxu0
        %v713 = vadd.f32 0.0, %v712
        %714 = vmatmul.f32.gmra.mxu0 %v284
        %v715 = vpop.f32.mrf.mxu0
        %v716 = vadd.f32 0.0, %v715
        %717 = vmatmul.f32.gmra.mxu0 %v285
        %v718 = vpop.f32.mrf.mxu0
        %v719 = vadd.f32 0.0, %v718
        %720 = vmatmul.f32.gmra.mxu0 %v286
        %v721 = vpop.f32.mrf.mxu0
        %v722 = vadd.f32 0.0, %v721
        %723 = vmatmul.f32.gmra.mxu0 %v287
        %v724 = vpop.f32.mrf.mxu0
        %v725 = vadd.f32 0.0, %v724
        %726 = vmatmul.f32.gmra.mxu0 %v288
        %v727 = vpop.f32.mrf.mxu0
        %v728 = vadd.f32 0.0, %v727
        %729 = vmatmul.f32.gmra.mxu0 %v289
        %v730 = vpop.f32.mrf.mxu0
        %v731 = vadd.f32 0.0, %v730
        %732 = vmatmul.f32.gmra.mxu0 %v290
        %v733 = vpop.f32.mrf.mxu0
        %v734 = vadd.f32 0.0, %v733
        %735 = vdwg.mxu0
        %v736 = vadd.f32 %v622, %v677
        %v737 = vadd.f32 %v623, %v680
        %v738 = vadd.f32 %v624, %v683
        %v739 = vadd.f32 %v625, %v686
        %v740 = vadd.f32 %v626, %v689
        %v741 = vadd.f32 %v627, %v692
        %v742 = vadd.f32 %v628, %v695
        %v743 = vadd.f32 %v629, %v698
        %v744 = vadd.f32 %v630, %v701
        %v745 = vadd.f32 %v631, %v704
        %v746 = vadd.f32 %v632, %v707
        %v747 = vadd.f32 %v633, %v710
        %v748 = vadd.f32 %v634, %v713
        %v749 = vadd.f32 %v635, %v716
        %v750 = vadd.f32 %v636, %v719
        %v751 = vadd.f32 %v637, %v722
        %v752 = vadd.f32 %v638, %v725
        %v753 = vadd.f32 %v639, %v728
        %v754 = vadd.f32 %v640, %v731
        %v755 = vadd.f32 %v641, %v734
        %s756 = scalar_lea.vmem %s1, 512
        %v757 = vld [vmem:[%s756] sm:$0xff]
        %v758 = vld [vmem:[%s756 + $0x8] sm:$0xff]
        %v759 = vld [vmem:[%s756 + $0x10] sm:$0xff]
        %v760 = vld [vmem:[%s756 + $0x18] sm:$0xff]
        %v761 = vld [vmem:[%s756 + $0x20] sm:$0xff]
        %v762 = vld [vmem:[%s756 + $0x28] sm:$0xff]
        %v763 = vld [vmem:[%s756 + $0x30] sm:$0xff]
        %v764 = vld [vmem:[%s756 + $0x38] sm:$0xff]
        %v765 = vld [vmem:[%s756 + $0x40] sm:$0xff]
        %v766 = vld [vmem:[%s756 + $0x48] sm:$0xff]
        %v767 = vld [vmem:[%s756 + $0x50] sm:$0xff]
        %v768 = vld [vmem:[%s756 + $0x58] sm:$0xff]
        %v769 = vld [vmem:[%s756 + $0x60] sm:$0xff]
        %v770 = vld [vmem:[%s756 + $0x68] sm:$0xff]
        %v771 = vld [vmem:[%s756 + $0x70] sm:$0xff]
        %v772 = vld [vmem:[%s756 + $0x78] sm:$0xff]
        %773 = vmatpush.msra.mxu0 %v772
        %774 = vmatpush.msra.mxu0 %v771
        %775 = vmatpush.msra.mxu0 %v770
        %776 = vmatpush.msra.mxu0 %v769
        %777 = vmatpush.msra.mxu0 %v768
        %778 = vmatpush.msra.mxu0 %v767
        %779 = vmatpush.msra.mxu0 %v766
        %780 = vmatpush.msra.mxu0 %v765
        %781 = vmatpush.msra.mxu0 %v764
        %782 = vmatpush.msra.mxu0 %v763
        %783 = vmatpush.msra.mxu0 %v762
        %784 = vmatpush.msra.mxu0 %v761
        %785 = vmatpush.msra.mxu0 %v760
        %786 = vmatpush.msra.mxu0 %v759
        %787 = vmatpush.msra.mxu0 %v758
        %788 = vmatpush.msra.mxu0 %v757
        %789 = vmatmul.f32.gmra.mxu0 %v295
        %v790 = vpop.f32.mrf.mxu0
        %v791 = vadd.f32 0.0, %v790
        %792 = vmatmul.f32.gmra.mxu0 %v296
        %v793 = vpop.f32.mrf.mxu0
        %v794 = vadd.f32 0.0, %v793
        %795 = vmatmul.f32.gmra.mxu0 %v297
        %v796 = vpop.f32.mrf.mxu0
        %v797 = vadd.f32 0.0, %v796
        %798 = vmatmul.f32.gmra.mxu0 %v298
        %v799 = vpop.f32.mrf.mxu0
        %v800 = vadd.f32 0.0, %v799
        %801 = vmatmul.f32.gmra.mxu0 %v299
        %v802 = vpop.f32.mrf.mxu0
        %v803 = vadd.f32 0.0, %v802
        %804 = vmatmul.f32.gmra.mxu0 %v300
        %v805 = vpop.f32.mrf.mxu0
        %v806 = vadd.f32 0.0, %v805
        %807 = vmatmul.f32.gmra.mxu0 %v301
        %v808 = vpop.f32.mrf.mxu0
        %v809 = vadd.f32 0.0, %v808
        %810 = vmatmul.f32.gmra.mxu0 %v302
        %v811 = vpop.f32.mrf.mxu0
        %v812 = vadd.f32 0.0, %v811
        %813 = vmatmul.f32.gmra.mxu0 %v303
        %v814 = vpop.f32.mrf.mxu0
        %v815 = vadd.f32 0.0, %v814
        %816 = vmatmul.f32.gmra.mxu0 %v304
        %v817 = vpop.f32.mrf.mxu0
        %v818 = vadd.f32 0.0, %v817
        %819 = vmatmul.f32.gmra.mxu0 %v305
        %v820 = vpop.f32.mrf.mxu0
        %v821 = vadd.f32 0.0, %v820
        %822 = vmatmul.f32.gmra.mxu0 %v306
        %v823 = vpop.f32.mrf.mxu0
        %v824 = vadd.f32 0.0, %v823
        %825 = vmatmul.f32.gmra.mxu0 %v307
        %v826 = vpop.f32.mrf.mxu0
        %v827 = vadd.f32 0.0, %v826
        %828 = vmatmul.f32.gmra.mxu0 %v308
        %v829 = vpop.f32.mrf.mxu0
        %v830 = vadd.f32 0.0, %v829
        %831 = vmatmul.f32.gmra.mxu0 %v309
        %v832 = vpop.f32.mrf.mxu0
        %v833 = vadd.f32 0.0, %v832
        %834 = vmatmul.f32.gmra.mxu0 %v310
        %v835 = vpop.f32.mrf.mxu0
        %v836 = vadd.f32 0.0, %v835
        %837 = vmatmul.f32.gmra.mxu0 %v311
        %v838 = vpop.f32.mrf.mxu0
        %v839 = vadd.f32 0.0, %v838
        %840 = vmatmul.f32.gmra.mxu0 %v312
        %v841 = vpop.f32.mrf.mxu0
        %v842 = vadd.f32 0.0, %v841
        %843 = vmatmul.f32.gmra.mxu0 %v313
        %v844 = vpop.f32.mrf.mxu0
        %v845 = vadd.f32 0.0, %v844
        %846 = vmatmul.f32.gmra.mxu0 %v314
        %v847 = vpop.f32.mrf.mxu0
        %v848 = vadd.f32 0.0, %v847
        %849 = vdwg.mxu0
        %v850 = vadd.f32 %v736, %v791
        %v851 = vadd.f32 %v737, %v794
        %v852 = vadd.f32 %v738, %v797
        %v853 = vadd.f32 %v739, %v800
        %v854 = vadd.f32 %v740, %v803
        %v855 = vadd.f32 %v741, %v806
        %v856 = vadd.f32 %v742, %v809
        %v857 = vadd.f32 %v743, %v812
        %v858 = vadd.f32 %v744, %v815
        %v859 = vadd.f32 %v745, %v818
        %v860 = vadd.f32 %v746, %v821
        %v861 = vadd.f32 %v747, %v824
        %v862 = vadd.f32 %v748, %v827
        %v863 = vadd.f32 %v749, %v830
        %v864 = vadd.f32 %v750, %v833
        %v865 = vadd.f32 %v751, %v836
        %v866 = vadd.f32 %v752, %v839
        %v867 = vadd.f32 %v753, %v842
        %v868 = vadd.f32 %v754, %v845
        %v869 = vadd.f32 %v755, %v848
        %s870 = scalar_lea.vmem %s1, 640
        %v871 = vld [vmem:[%s870] sm:$0xff]
        %v872 = vld [vmem:[%s870 + $0x8] sm:$0xff]
        %v873 = vld [vmem:[%s870 + $0x10] sm:$0xff]
        %v874 = vld [vmem:[%s870 + $0x18] sm:$0xff]
        %v875 = vld [vmem:[%s870 + $0x20] sm:$0xff]
        %v876 = vld [vmem:[%s870 + $0x28] sm:$0xff]
        %v877 = vld [vmem:[%s870 + $0x30] sm:$0xff]
        %v878 = vld [vmem:[%s870 + $0x38] sm:$0xff]
        %v879 = vld [vmem:[%s870 + $0x40] sm:$0xff]
        %v880 = vld [vmem:[%s870 + $0x48] sm:$0xff]
        %v881 = vld [vmem:[%s870 + $0x50] sm:$0xff]
        %v882 = vld [vmem:[%s870 + $0x58] sm:$0xff]
        %v883 = vld [vmem:[%s870 + $0x60] sm:$0xff]
        %v884 = vld [vmem:[%s870 + $0x68] sm:$0xff]
        %v885 = vld [vmem:[%s870 + $0x70] sm:$0xff]
        %v886 = vld [vmem:[%s870 + $0x78] sm:$0xff]
        %887 = vmatpush.msra.mxu0 %v886
        %888 = vmatpush.msra.mxu0 %v885
        %889 = vmatpush.msra.mxu0 %v884
        %890 = vmatpush.msra.mxu0 %v883
        %891 = vmatpush.msra.mxu0 %v882
        %892 = vmatpush.msra.mxu0 %v881
        %893 = vmatpush.msra.mxu0 %v880
        %894 = vmatpush.msra.mxu0 %v879
        %895 = vmatpush.msra.mxu0 %v878
        %896 = vmatpush.msra.mxu0 %v877
        %897 = vmatpush.msra.mxu0 %v876
        %898 = vmatpush.msra.mxu0 %v875
        %899 = vmatpush.msra.mxu0 %v874
        %900 = vmatpush.msra.mxu0 %v873
        %901 = vmatpush.msra.mxu0 %v872
        %902 = vmatpush.msra.mxu0 %v871
        %903 = vmatmul.f32.gmra.mxu0 %v319
        %v904 = vpop.f32.mrf.mxu0
        %v905 = vadd.f32 0.0, %v904
        %906 = vmatmul.f32.gmra.mxu0 %v320
        %v907 = vpop.f32.mrf.mxu0
        %v908 = vadd.f32 0.0, %v907
        %909 = vmatmul.f32.gmra.mxu0 %v321
        %v910 = vpop.f32.mrf.mxu0
        %v911 = vadd.f32 0.0, %v910
        %912 = vmatmul.f32.gmra.mxu0 %v322
        %v913 = vpop.f32.mrf.mxu0
        %v914 = vadd.f32 0.0, %v913
        %915 = vmatmul.f32.gmra.mxu0 %v323
        %v916 = vpop.f32.mrf.mxu0
        %v917 = vadd.f32 0.0, %v916
        %918 = vmatmul.f32.gmra.mxu0 %v324
        %v919 = vpop.f32.mrf.mxu0
        %v920 = vadd.f32 0.0, %v919
        %921 = vmatmul.f32.gmra.mxu0 %v325
        %v922 = vpop.f32.mrf.mxu0
        %v923 = vadd.f32 0.0, %v922
        %924 = vmatmul.f32.gmra.mxu0 %v326
        %v925 = vpop.f32.mrf.mxu0
        %v926 = vadd.f32 0.0, %v925
        %927 = vmatmul.f32.gmra.mxu0 %v327
        %v928 = vpop.f32.mrf.mxu0
        %v929 = vadd.f32 0.0, %v928
        %930 = vmatmul.f32.gmra.mxu0 %v328
        %v931 = vpop.f32.mrf.mxu0
        %v932 = vadd.f32 0.0, %v931
        %933 = vmatmul.f32.gmra.mxu0 %v329
        %v934 = vpop.f32.mrf.mxu0
        %v935 = vadd.f32 0.0, %v934
        %936 = vmatmul.f32.gmra.mxu0 %v330
        %v937 = vpop.f32.mrf.mxu0
        %v938 = vadd.f32 0.0, %v937
        %939 = vmatmul.f32.gmra.mxu0 %v331
        %v940 = vpop.f32.mrf.mxu0
        %v941 = vadd.f32 0.0, %v940
        %942 = vmatmul.f32.gmra.mxu0 %v332
        %v943 = vpop.f32.mrf.mxu0
        %v944 = vadd.f32 0.0, %v943
        %945 = vmatmul.f32.gmra.mxu0 %v333
        %v946 = vpop.f32.mrf.mxu0
        %v947 = vadd.f32 0.0, %v946
        %948 = vmatmul.f32.gmra.mxu0 %v334
        %v949 = vpop.f32.mrf.mxu0
        %v950 = vadd.f32 0.0, %v949
        %951 = vmatmul.f32.gmra.mxu0 %v335
        %v952 = vpop.f32.mrf.mxu0
        %v953 = vadd.f32 0.0, %v952
        %954 = vmatmul.f32.gmra.mxu0 %v336
        %v955 = vpop.f32.mrf.mxu0
        %v956 = vadd.f32 0.0, %v955
        %957 = vmatmul.f32.gmra.mxu0 %v337
        %v958 = vpop.f32.mrf.mxu0
        %v959 = vadd.f32 0.0, %v958
        %960 = vmatmul.f32.gmra.mxu0 %v338
        %v961 = vpop.f32.mrf.mxu0
        %v962 = vadd.f32 0.0, %v961
        %963 = vdwg.mxu0
        %v964 = vadd.f32 %v850, %v905
        %v965 = vadd.f32 %v851, %v908
        %v966 = vadd.f32 %v852, %v911
        %v967 = vadd.f32 %v853, %v914
        %v968 = vadd.f32 %v854, %v917
        %v969 = vadd.f32 %v855, %v920
        %v970 = vadd.f32 %v856, %v923
        %v971 = vadd.f32 %v857, %v926
        %v972 = vadd.f32 %v858, %v929
        %v973 = vadd.f32 %v859, %v932
        %v974 = vadd.f32 %v860, %v935
        %v975 = vadd.f32 %v861, %v938
        %v976 = vadd.f32 %v862, %v941
        %v977 = vadd.f32 %v863, %v944
        %v978 = vadd.f32 %v864, %v947
        %v979 = vadd.f32 %v865, %v950
        %v980 = vadd.f32 %v866, %v953
        %v981 = vadd.f32 %v867, %v956
        %v982 = vadd.f32 %v868, %v959
        %v983 = vadd.f32 %v869, %v962
        %s984 = scalar_lea.vmem %s1, 768
        %v985 = vld [vmem:[%s984] sm:$0xff]
        %v986 = vld [vmem:[%s984 + $0x8] sm:$0xff]
        %v987 = vld [vmem:[%s984 + $0x10] sm:$0xff]
        %v988 = vld [vmem:[%s984 + $0x18] sm:$0xff]
        %v989 = vld [vmem:[%s984 + $0x20] sm:$0xff]
        %v990 = vld [vmem:[%s984 + $0x28] sm:$0xff]
        %v991 = vld [vmem:[%s984 + $0x30] sm:$0xff]
        %v992 = vld [vmem:[%s984 + $0x38] sm:$0xff]
        %v993 = vld [vmem:[%s984 + $0x40] sm:$0xff]
        %v994 = vld [vmem:[%s984 + $0x48] sm:$0xff]
        %v995 = vld [vmem:[%s984 + $0x50] sm:$0xff]
        %v996 = vld [vmem:[%s984 + $0x58] sm:$0xff]
        %v997 = vld [vmem:[%s984 + $0x60] sm:$0xff]
        %v998 = vld [vmem:[%s984 + $0x68] sm:$0xff]
        %v999 = vld [vmem:[%s984 + $0x70] sm:$0xff]
        %v1000 = vld [vmem:[%s984 + $0x78] sm:$0xff]
        %1001 = vmatpush.msra.mxu0 %v1000
        %1002 = vmatpush.msra.mxu0 %v999
        %1003 = vmatpush.msra.mxu0 %v998
        %1004 = vmatpush.msra.mxu0 %v997
        %1005 = vmatpush.msra.mxu0 %v996
        %1006 = vmatpush.msra.mxu0 %v995
        %1007 = vmatpush.msra.mxu0 %v994
        %1008 = vmatpush.msra.mxu0 %v993
        %1009 = vmatpush.msra.mxu0 %v992
        %1010 = vmatpush.msra.mxu0 %v991
        %1011 = vmatpush.msra.mxu0 %v990
        %1012 = vmatpush.msra.mxu0 %v989
        %1013 = vmatpush.msra.mxu0 %v988
        %1014 = vmatpush.msra.mxu0 %v987
        %1015 = vmatpush.msra.mxu0 %v986
        %1016 = vmatpush.msra.mxu0 %v985
        %1017 = vmatmul.f32.gmra.mxu0 %v273
        %v1018 = vpop.f32.mrf.mxu0
        %v1019 = vadd.f32 0.0, %v1018
        %1020 = vmatmul.f32.gmra.mxu0 %v274
        %v1021 = vpop.f32.mrf.mxu0
        %v1022 = vadd.f32 0.0, %v1021
        %1023 = vmatmul.f32.gmra.mxu0 %v275
        %v1024 = vpop.f32.mrf.mxu0
        %v1025 = vadd.f32 0.0, %v1024
        %1026 = vmatmul.f32.gmra.mxu0 %v276
        %v1027 = vpop.f32.mrf.mxu0
        %v1028 = vadd.f32 0.0, %v1027
        %1029 = vmatmul.f32.gmra.mxu0 %v277
        %v1030 = vpop.f32.mrf.mxu0
        %v1031 = vadd.f32 0.0, %v1030
        %1032 = vmatmul.f32.gmra.mxu0 %v278
        %v1033 = vpop.f32.mrf.mxu0
        %v1034 = vadd.f32 0.0, %v1033
        %1035 = vmatmul.f32.gmra.mxu0 %v279
        %v1036 = vpop.f32.mrf.mxu0
        %v1037 = vadd.f32 0.0, %v1036
        %1038 = vmatmul.f32.gmra.mxu0 %v280
        %v1039 = vpop.f32.mrf.mxu0
        %v1040 = vadd.f32 0.0, %v1039
        %1041 = vmatmul.f32.gmra.mxu0 %v281
        %v1042 = vpop.f32.mrf.mxu0
        %v1043 = vadd.f32 0.0, %v1042
        %1044 = vmatmul.f32.gmra.mxu0 %v282
        %v1045 = vpop.f32.mrf.mxu0
        %v1046 = vadd.f32 0.0, %v1045
        %1047 = vmatmul.f32.gmra.mxu0 %v283
        %v1048 = vpop.f32.mrf.mxu0
        %v1049 = vadd.f32 0.0, %v1048
        %1050 = vmatmul.f32.gmra.mxu0 %v284
        %v1051 = vpop.f32.mrf.mxu0
        %v1052 = vadd.f32 0.0, %v1051
        %1053 = vmatmul.f32.gmra.mxu0 %v285
        %v1054 = vpop.f32.mrf.mxu0
        %v1055 = vadd.f32 0.0, %v1054
        %1056 = vmatmul.f32.gmra.mxu0 %v286
        %v1057 = vpop.f32.mrf.mxu0
        %v1058 = vadd.f32 0.0, %v1057
        %1059 = vmatmul.f32.gmra.mxu0 %v287
        %v1060 = vpop.f32.mrf.mxu0
        %v1061 = vadd.f32 0.0, %v1060
        %1062 = vmatmul.f32.gmra.mxu0 %v288
        %v1063 = vpop.f32.mrf.mxu0
        %v1064 = vadd.f32 0.0, %v1063
        %1065 = vmatmul.f32.gmra.mxu0 %v289
        %v1066 = vpop.f32.mrf.mxu0
        %v1067 = vadd.f32 0.0, %v1066
        %1068 = vmatmul.f32.gmra.mxu0 %v290
        %v1069 = vpop.f32.mrf.mxu0
        %v1070 = vadd.f32 0.0, %v1069
        %1071 = vmatmul.f32.gmra.mxu0 %v291
        %v1072 = vpop.f32.mrf.mxu0
        %v1073 = vadd.f32 0.0, %v1072
        %1074 = vmatmul.f32.gmra.mxu0 %v292
        %v1075 = vpop.f32.mrf.mxu0
        %v1076 = vadd.f32 0.0, %v1075
        %1077 = vdwg.mxu0
        %v1078 = vadd.f32 %v964, %v1019
        %v1079 = vadd.f32 %v965, %v1022
        %v1080 = vadd.f32 %v966, %v1025
        %v1081 = vadd.f32 %v967, %v1028
        %v1082 = vadd.f32 %v968, %v1031
        %v1083 = vadd.f32 %v969, %v1034
        %v1084 = vadd.f32 %v970, %v1037
        %v1085 = vadd.f32 %v971, %v1040
        %v1086 = vadd.f32 %v972, %v1043
        %v1087 = vadd.f32 %v973, %v1046
        %v1088 = vadd.f32 %v974, %v1049
        %v1089 = vadd.f32 %v975, %v1052
        %v1090 = vadd.f32 %v976, %v1055
        %v1091 = vadd.f32 %v977, %v1058
        %v1092 = vadd.f32 %v978, %v1061
        %v1093 = vadd.f32 %v979, %v1064
        %v1094 = vadd.f32 %v980, %v1067
        %v1095 = vadd.f32 %v981, %v1070
        %v1096 = vadd.f32 %v982, %v1073
        %v1097 = vadd.f32 %v983, %v1076
        %s1098 = scalar_lea.vmem %s1, 896
        %v1099 = vld [vmem:[%s1098] sm:$0xff]
        %v1100 = vld [vmem:[%s1098 + $0x8] sm:$0xff]
        %v1101 = vld [vmem:[%s1098 + $0x10] sm:$0xff]
        %v1102 = vld [vmem:[%s1098 + $0x18] sm:$0xff]
        %v1103 = vld [vmem:[%s1098 + $0x20] sm:$0xff]
        %v1104 = vld [vmem:[%s1098 + $0x28] sm:$0xff]
        %v1105 = vld [vmem:[%s1098 + $0x30] sm:$0xff]
        %v1106 = vld [vmem:[%s1098 + $0x38] sm:$0xff]
        %v1107 = vld [vmem:[%s1098 + $0x40] sm:$0xff]
        %v1108 = vld [vmem:[%s1098 + $0x48] sm:$0xff]
        %v1109 = vld [vmem:[%s1098 + $0x50] sm:$0xff]
        %v1110 = vld [vmem:[%s1098 + $0x58] sm:$0xff]
        %v1111 = vld [vmem:[%s1098 + $0x60] sm:$0xff]
        %v1112 = vld [vmem:[%s1098 + $0x68] sm:$0xff]
        %v1113 = vld [vmem:[%s1098 + $0x70] sm:$0xff]
        %v1114 = vld [vmem:[%s1098 + $0x78] sm:$0xff]
        %1115 = vmatpush.msra.mxu0 %v1114
        %1116 = vmatpush.msra.mxu0 %v1113
        %1117 = vmatpush.msra.mxu0 %v1112
        %1118 = vmatpush.msra.mxu0 %v1111
        %1119 = vmatpush.msra.mxu0 %v1110
        %1120 = vmatpush.msra.mxu0 %v1109
        %1121 = vmatpush.msra.mxu0 %v1108
        %1122 = vmatpush.msra.mxu0 %v1107
        %1123 = vmatpush.msra.mxu0 %v1106
        %1124 = vmatpush.msra.mxu0 %v1105
        %1125 = vmatpush.msra.mxu0 %v1104
        %1126 = vmatpush.msra.mxu0 %v1103
        %1127 = vmatpush.msra.mxu0 %v1102
        %1128 = vmatpush.msra.mxu0 %v1101
        %1129 = vmatpush.msra.mxu0 %v1100
        %1130 = vmatpush.msra.mxu0 %v1099
        %1131 = vmatmul.f32.gmra.mxu0 %v297
        %v1132 = vpop.f32.mrf.mxu0
        %v1133 = vadd.f32 0.0, %v1132
        %1134 = vmatmul.f32.gmra.mxu0 %v298
        %v1135 = vpop.f32.mrf.mxu0
        %v1136 = vadd.f32 0.0, %v1135
        %1137 = vmatmul.f32.gmra.mxu0 %v299
        %v1138 = vpop.f32.mrf.mxu0
        %v1139 = vadd.f32 0.0, %v1138
        %1140 = vmatmul.f32.gmra.mxu0 %v300
        %v1141 = vpop.f32.mrf.mxu0
        %v1142 = vadd.f32 0.0, %v1141
        %1143 = vmatmul.f32.gmra.mxu0 %v301
        %v1144 = vpop.f32.mrf.mxu0
        %v1145 = vadd.f32 0.0, %v1144
        %1146 = vmatmul.f32.gmra.mxu0 %v302
        %v1147 = vpop.f32.mrf.mxu0
        %v1148 = vadd.f32 0.0, %v1147
        %1149 = vmatmul.f32.gmra.mxu0 %v303
        %v1150 = vpop.f32.mrf.mxu0
        %v1151 = vadd.f32 0.0, %v1150
        %1152 = vmatmul.f32.gmra.mxu0 %v304
        %v1153 = vpop.f32.mrf.mxu0
        %v1154 = vadd.f32 0.0, %v1153
        %1155 = vmatmul.f32.gmra.mxu0 %v305
        %v1156 = vpop.f32.mrf.mxu0
        %v1157 = vadd.f32 0.0, %v1156
        %1158 = vmatmul.f32.gmra.mxu0 %v306
        %v1159 = vpop.f32.mrf.mxu0
        %v1160 = vadd.f32 0.0, %v1159
        %1161 = vmatmul.f32.gmra.mxu0 %v307
        %v1162 = vpop.f32.mrf.mxu0
        %v1163 = vadd.f32 0.0, %v1162
        %1164 = vmatmul.f32.gmra.mxu0 %v308
        %v1165 = vpop.f32.mrf.mxu0
        %v1166 = vadd.f32 0.0, %v1165
        %1167 = vmatmul.f32.gmra.mxu0 %v309
        %v1168 = vpop.f32.mrf.mxu0
        %v1169 = vadd.f32 0.0, %v1168
        %1170 = vmatmul.f32.gmra.mxu0 %v310
        %v1171 = vpop.f32.mrf.mxu0
        %v1172 = vadd.f32 0.0, %v1171
        %1173 = vmatmul.f32.gmra.mxu0 %v311
        %v1174 = vpop.f32.mrf.mxu0
        %v1175 = vadd.f32 0.0, %v1174
        %1176 = vmatmul.f32.gmra.mxu0 %v312
        %v1177 = vpop.f32.mrf.mxu0
        %v1178 = vadd.f32 0.0, %v1177
        %1179 = vmatmul.f32.gmra.mxu0 %v313
        %v1180 = vpop.f32.mrf.mxu0
        %v1181 = vadd.f32 0.0, %v1180
        %1182 = vmatmul.f32.gmra.mxu0 %v314
        %v1183 = vpop.f32.mrf.mxu0
        %v1184 = vadd.f32 0.0, %v1183
        %1185 = vmatmul.f32.gmra.mxu0 %v315
        %v1186 = vpop.f32.mrf.mxu0
        %v1187 = vadd.f32 0.0, %v1186
        %1188 = vmatmul.f32.gmra.mxu0 %v316
        %v1189 = vpop.f32.mrf.mxu0
        %v1190 = vadd.f32 0.0, %v1189
        %1191 = vdwg.mxu0
        %v1192 = vadd.f32 %v1078, %v1133
        %v1193 = vadd.f32 %v1079, %v1136
        %v1194 = vadd.f32 %v1080, %v1139
        %v1195 = vadd.f32 %v1081, %v1142
        %v1196 = vadd.f32 %v1082, %v1145
        %v1197 = vadd.f32 %v1083, %v1148
        %v1198 = vadd.f32 %v1084, %v1151
        %v1199 = vadd.f32 %v1085, %v1154
        %v1200 = vadd.f32 %v1086, %v1157
        %v1201 = vadd.f32 %v1087, %v1160
        %v1202 = vadd.f32 %v1088, %v1163
        %v1203 = vadd.f32 %v1089, %v1166
        %v1204 = vadd.f32 %v1090, %v1169
        %v1205 = vadd.f32 %v1091, %v1172
        %v1206 = vadd.f32 %v1092, %v1175
        %v1207 = vadd.f32 %v1093, %v1178
        %v1208 = vadd.f32 %v1094, %v1181
        %v1209 = vadd.f32 %v1095, %v1184
        %v1210 = vadd.f32 %v1096, %v1187
        %v1211 = vadd.f32 %v1097, %v1190
        %s1212 = scalar_lea.vmem %s1, 1024
        %v1213 = vld [vmem:[%s1212] sm:$0xff]
        %v1214 = vld [vmem:[%s1212 + $0x8] sm:$0xff]
        %v1215 = vld [vmem:[%s1212 + $0x10] sm:$0xff]
        %v1216 = vld [vmem:[%s1212 + $0x18] sm:$0xff]
        %v1217 = vld [vmem:[%s1212 + $0x20] sm:$0xff]
        %v1218 = vld [vmem:[%s1212 + $0x28] sm:$0xff]
        %v1219 = vld [vmem:[%s1212 + $0x30] sm:$0xff]
        %v1220 = vld [vmem:[%s1212 + $0x38] sm:$0xff]
        %v1221 = vld [vmem:[%s1212 + $0x40] sm:$0xff]
        %v1222 = vld [vmem:[%s1212 + $0x48] sm:$0xff]
        %v1223 = vld [vmem:[%s1212 + $0x50] sm:$0xff]
        %v1224 = vld [vmem:[%s1212 + $0x58] sm:$0xff]
        %v1225 = vld [vmem:[%s1212 + $0x60] sm:$0xff]
        %v1226 = vld [vmem:[%s1212 + $0x68] sm:$0xff]
        %v1227 = vld [vmem:[%s1212 + $0x70] sm:$0xff]
        %v1228 = vld [vmem:[%s1212 + $0x78] sm:$0xff]
        %1229 = vmatpush.msra.mxu0 %v1228
        %1230 = vmatpush.msra.mxu0 %v1227
        %1231 = vmatpush.msra.mxu0 %v1226
        %1232 = vmatpush.msra.mxu0 %v1225
        %1233 = vmatpush.msra.mxu0 %v1224
        %1234 = vmatpush.msra.mxu0 %v1223
        %1235 = vmatpush.msra.mxu0 %v1222
        %1236 = vmatpush.msra.mxu0 %v1221
        %1237 = vmatpush.msra.mxu0 %v1220
        %1238 = vmatpush.msra.mxu0 %v1219
        %1239 = vmatpush.msra.mxu0 %v1218
        %1240 = vmatpush.msra.mxu0 %v1217
        %1241 = vmatpush.msra.mxu0 %v1216
        %1242 = vmatpush.msra.mxu0 %v1215
        %1243 = vmatpush.msra.mxu0 %v1214
        %1244 = vmatpush.msra.mxu0 %v1213
        %1245 = vmatmul.f32.gmra.mxu0 %v321
        %v1246 = vpop.f32.mrf.mxu0
        %v1247 = vadd.f32 0.0, %v1246
        %1248 = vmatmul.f32.gmra.mxu0 %v322
        %v1249 = vpop.f32.mrf.mxu0
        %v1250 = vadd.f32 0.0, %v1249
        %1251 = vmatmul.f32.gmra.mxu0 %v323
        %v1252 = vpop.f32.mrf.mxu0
        %v1253 = vadd.f32 0.0, %v1252
        %1254 = vmatmul.f32.gmra.mxu0 %v324
        %v1255 = vpop.f32.mrf.mxu0
        %v1256 = vadd.f32 0.0, %v1255
        %1257 = vmatmul.f32.gmra.mxu0 %v325
        %v1258 = vpop.f32.mrf.mxu0
        %v1259 = vadd.f32 0.0, %v1258
        %1260 = vmatmul.f32.gmra.mxu0 %v326
        %v1261 = vpop.f32.mrf.mxu0
        %v1262 = vadd.f32 0.0, %v1261
        %1263 = vmatmul.f32.gmra.mxu0 %v327
        %v1264 = vpop.f32.mrf.mxu0
        %v1265 = vadd.f32 0.0, %v1264
        %1266 = vmatmul.f32.gmra.mxu0 %v328
        %v1267 = vpop.f32.mrf.mxu0
        %v1268 = vadd.f32 0.0, %v1267
        %1269 = vmatmul.f32.gmra.mxu0 %v329
        %v1270 = vpop.f32.mrf.mxu0
        %v1271 = vadd.f32 0.0, %v1270
        %1272 = vmatmul.f32.gmra.mxu0 %v330
        %v1273 = vpop.f32.mrf.mxu0
        %v1274 = vadd.f32 0.0, %v1273
        %1275 = vmatmul.f32.gmra.mxu0 %v331
        %v1276 = vpop.f32.mrf.mxu0
        %v1277 = vadd.f32 0.0, %v1276
        %1278 = vmatmul.f32.gmra.mxu0 %v332
        %v1279 = vpop.f32.mrf.mxu0
        %v1280 = vadd.f32 0.0, %v1279
        %1281 = vmatmul.f32.gmra.mxu0 %v333
        %v1282 = vpop.f32.mrf.mxu0
        %v1283 = vadd.f32 0.0, %v1282
        %1284 = vmatmul.f32.gmra.mxu0 %v334
        %v1285 = vpop.f32.mrf.mxu0
        %v1286 = vadd.f32 0.0, %v1285
        %1287 = vmatmul.f32.gmra.mxu0 %v335
        %v1288 = vpop.f32.mrf.mxu0
        %v1289 = vadd.f32 0.0, %v1288
        %1290 = vmatmul.f32.gmra.mxu0 %v336
        %v1291 = vpop.f32.mrf.mxu0
        %v1292 = vadd.f32 0.0, %v1291
        %1293 = vmatmul.f32.gmra.mxu0 %v337
        %v1294 = vpop.f32.mrf.mxu0
        %v1295 = vadd.f32 0.0, %v1294
        %1296 = vmatmul.f32.gmra.mxu0 %v338
        %v1297 = vpop.f32.mrf.mxu0
        %v1298 = vadd.f32 0.0, %v1297
        %1299 = vmatmul.f32.gmra.mxu0 %v339
        %v1300 = vpop.f32.mrf.mxu0
        %v1301 = vadd.f32 0.0, %v1300
        %1302 = vmatmul.f32.gmra.mxu0 %v340
        %v1303 = vpop.f32.mrf.mxu0
        %v1304 = vadd.f32 0.0, %v1303
        %1305 = vdwg.mxu0
        %v1306 = vadd.f32 %v1192, %v1247
        %v1307 = vadd.f32 %v1193, %v1250
        %v1308 = vadd.f32 %v1194, %v1253
        %v1309 = vadd.f32 %v1195, %v1256
        %v1310 = vadd.f32 %v1196, %v1259
        %v1311 = vadd.f32 %v1197, %v1262
        %v1312 = vadd.f32 %v1198, %v1265
        %v1313 = vadd.f32 %v1199, %v1268
        %v1314 = vadd.f32 %v1200, %v1271
        %v1315 = vadd.f32 %v1201, %v1274
        %v1316 = vadd.f32 %v1202, %v1277
        %v1317 = vadd.f32 %v1203, %v1280
        %v1318 = vadd.f32 %v1204, %v1283
        %v1319 = vadd.f32 %v1205, %v1286
        %v1320 = vadd.f32 %v1206, %v1289
        %v1321 = vadd.f32 %v1207, %v1292
        %v1322 = vadd.f32 %v1208, %v1295
        %v1323 = vadd.f32 %v1209, %v1298
        %v1324 = vadd.f32 %v1210, %v1301
        %v1325 = vadd.f32 %v1211, %v1304
        %v1326 = vld [vmem:[%s2] sm:$0x1]
        %v1328 = vperm.slane %v1326, 0
        %v1330 = vadd.f32 %v1306, %v1328
        %v1331 = vadd.f32 %v1307, %v1328
        %v1332 = vadd.f32 %v1308, %v1328
        %v1333 = vadd.f32 %v1309, %v1328
        %v1334 = vadd.f32 %v1310, %v1328
        %v1335 = vadd.f32 %v1311, %v1328
        %v1336 = vadd.f32 %v1312, %v1328
        %v1337 = vadd.f32 %v1313, %v1328
        %v1338 = vadd.f32 %v1314, %v1328
        %v1339 = vadd.f32 %v1315, %v1328
        %v1340 = vadd.f32 %v1316, %v1328
        %v1341 = vadd.f32 %v1317, %v1328
        %v1342 = vadd.f32 %v1318, %v1328
        %v1343 = vadd.f32 %v1319, %v1328
        %v1344 = vadd.f32 %v1320, %v1328
        %v1345 = vadd.f32 %v1321, %v1328
        %v1346 = vadd.f32 %v1322, %v1328
        %v1347 = vadd.f32 %v1323, %v1328
        %v1348 = vadd.f32 %v1324, %v1328
        %v1349 = vadd.f32 %v1325, %v1328
        %v1350 = vxor.u32 %v1330, 2147483648
        %v1351 = vxor.u32 %v1331, 2147483648
        %v1352 = vxor.u32 %v1332, 2147483648
        %v1353 = vxor.u32 %v1333, 2147483648
        %v1354 = vxor.u32 %v1334, 2147483648
        %v1355 = vxor.u32 %v1335, 2147483648
        %v1356 = vxor.u32 %v1336, 2147483648
        %v1357 = vxor.u32 %v1337, 2147483648
        %v1358 = vxor.u32 %v1338, 2147483648
        %v1359 = vxor.u32 %v1339, 2147483648
        %v1360 = vxor.u32 %v1340, 2147483648
        %v1361 = vxor.u32 %v1341, 2147483648
        %v1362 = vxor.u32 %v1342, 2147483648
        %v1363 = vxor.u32 %v1343, 2147483648
        %v1364 = vxor.u32 %v1344, 2147483648
        %v1365 = vxor.u32 %v1345, 2147483648
        %v1366 = vxor.u32 %v1346, 2147483648
        %v1367 = vxor.u32 %v1347, 2147483648
        %v1368 = vxor.u32 %v1348, 2147483648
        %v1369 = vxor.u32 %v1349, 2147483648
        %v1370 = vmul.f32 %v1350, 1.442695
        %v1371 = vpow.pop %v1370
        %v1372 = vmul.f32 %v1351, 1.442695
        %v1373 = vpow.pop %v1372
        %v1374 = vmul.f32 %v1352, 1.442695
        %v1375 = vpow.pop %v1374
        %v1376 = vmul.f32 %v1353, 1.442695
        %v1377 = vpow.pop %v1376
        %v1378 = vmul.f32 %v1354, 1.442695
        %v1379 = vpow.pop %v1378
        %v1380 = vmul.f32 %v1355, 1.442695
        %v1381 = vpow.pop %v1380
        %v1382 = vmul.f32 %v1356, 1.442695
        %v1383 = vpow.pop %v1382
        %v1384 = vmul.f32 %v1357, 1.442695
        %v1385 = vpow.pop %v1384
        %v1386 = vmul.f32 %v1358, 1.442695
        %v1387 = vpow.pop %v1386
        %v1388 = vmul.f32 %v1359, 1.442695
        %v1389 = vpow.pop %v1388
        %v1390 = vmul.f32 %v1360, 1.442695
        %v1391 = vpow.pop %v1390
        %v1392 = vmul.f32 %v1361, 1.442695
        %v1393 = vpow.pop %v1392
        %v1394 = vmul.f32 %v1362, 1.442695
        %v1395 = vpow.pop %v1394
        %v1396 = vmul.f32 %v1363, 1.442695
        %v1397 = vpow.pop %v1396
        %v1398 = vmul.f32 %v1364, 1.442695
        %v1399 = vpow.pop %v1398
        %v1400 = vmul.f32 %v1365, 1.442695
        %v1401 = vpow.pop %v1400
        %v1402 = vmul.f32 %v1366, 1.442695
        %v1403 = vpow.pop %v1402
        %v1404 = vmul.f32 %v1367, 1.442695
        %v1405 = vpow.pop %v1404
        %v1406 = vmul.f32 %v1368, 1.442695
        %v1407 = vpow.pop %v1406
        %v1408 = vmul.f32 %v1369, 1.442695
        %v1409 = vpow.pop %v1408
        %v1410 = vadd.f32 %v1371, 1.0
        %v1411 = vadd.f32 %v1373, 1.0
        %v1412 = vadd.f32 %v1375, 1.0
        %v1413 = vadd.f32 %v1377, 1.0
        %v1414 = vadd.f32 %v1379, 1.0
        %v1415 = vadd.f32 %v1381, 1.0
        %v1416 = vadd.f32 %v1383, 1.0
        %v1417 = vadd.f32 %v1385, 1.0
        %v1418 = vadd.f32 %v1387, 1.0
        %v1419 = vadd.f32 %v1389, 1.0
        %v1420 = vadd.f32 %v1391, 1.0
        %v1421 = vadd.f32 %v1393, 1.0
        %v1422 = vadd.f32 %v1395, 1.0
        %v1423 = vadd.f32 %v1397, 1.0
        %v1424 = vadd.f32 %v1399, 1.0
        %v1425 = vadd.f32 %v1401, 1.0
        %v1426 = vadd.f32 %v1403, 1.0
        %v1427 = vadd.f32 %v1405, 1.0
        %v1428 = vadd.f32 %v1407, 1.0
        %v1429 = vadd.f32 %v1409, 1.0
        %v1430 = vrcp.pop %v1410
        %v1431 = vmul.f32 %v1410, %v1430
        %v1432 = vsub.f32 1.0, %v1431
        %v1433 = vmul.f32 %v1430, %v1432
        %v1434 = vadd.f32 %v1430, %v1433
        %vm1435 = vweird.f32 %v1410
        %vm1436 = vweird.f32 %v1430
        %vm1437 = vmor %vm1435, %vm1436
        %v1438 = vsel %vm1437, %v1430, %v1434
        %v1439 = vand.u32 2147483647, %v1410
        %vm1440 = vcmp.eq.f32.partialorder %v1439, 8.507059e+37
        %v1441 = vand.u32 %v1410, 2147483648
        %v1442 = vor.u32 1.1754944e-38, %v1441
        %v1443 = vsel %vm1440, %v1442, %v1438
        %v1444 = vmul.f32 1.0, %v1443
        %v1445 = vrcp.pop %v1411
        %v1446 = vmul.f32 %v1411, %v1445
        %v1447 = vsub.f32 1.0, %v1446
        %v1448 = vmul.f32 %v1445, %v1447
        %v1449 = vadd.f32 %v1445, %v1448
        %vm1450 = vweird.f32 %v1411
        %vm1451 = vweird.f32 %v1445
        %vm1452 = vmor %vm1450, %vm1451
        %v1453 = vsel %vm1452, %v1445, %v1449
        %v1454 = vand.u32 2147483647, %v1411
        %vm1455 = vcmp.eq.f32.partialorder %v1454, 8.507059e+37
        %v1456 = vand.u32 %v1411, 2147483648
        %v1457 = vor.u32 1.1754944e-38, %v1456
        %v1458 = vsel %vm1455, %v1457, %v1453
        %v1459 = vmul.f32 1.0, %v1458
        %v1460 = vrcp.pop %v1412
        %v1461 = vmul.f32 %v1412, %v1460
        %v1462 = vsub.f32 1.0, %v1461
        %v1463 = vmul.f32 %v1460, %v1462
        %v1464 = vadd.f32 %v1460, %v1463
        %vm1465 = vweird.f32 %v1412
        %vm1466 = vweird.f32 %v1460
        %vm1467 = vmor %vm1465, %vm1466
        %v1468 = vsel %vm1467, %v1460, %v1464
        %v1469 = vand.u32 2147483647, %v1412
        %vm1470 = vcmp.eq.f32.partialorder %v1469, 8.507059e+37
        %v1471 = vand.u32 %v1412, 2147483648
        %v1472 = vor.u32 1.1754944e-38, %v1471
        %v1473 = vsel %vm1470, %v1472, %v1468
        %v1474 = vmul.f32 1.0, %v1473
        %v1475 = vrcp.pop %v1413
        %v1476 = vmul.f32 %v1413, %v1475
        %v1477 = vsub.f32 1.0, %v1476
        %v1478 = vmul.f32 %v1475, %v1477
        %v1479 = vadd.f32 %v1475, %v1478
        %vm1480 = vweird.f32 %v1413
        %vm1481 = vweird.f32 %v1475
        %vm1482 = vmor %vm1480, %vm1481
        %v1483 = vsel %vm1482, %v1475, %v1479
        %v1484 = vand.u32 2147483647, %v1413
        %vm1485 = vcmp.eq.f32.partialorder %v1484, 8.507059e+37
        %v1486 = vand.u32 %v1413, 2147483648
        %v1487 = vor.u32 1.1754944e-38, %v1486
        %v1488 = vsel %vm1485, %v1487, %v1483
        %v1489 = vmul.f32 1.0, %v1488
        %v1490 = vrcp.pop %v1414
        %v1491 = vmul.f32 %v1414, %v1490
        %v1492 = vsub.f32 1.0, %v1491
        %v1493 = vmul.f32 %v1490, %v1492
        %v1494 = vadd.f32 %v1490, %v1493
        %vm1495 = vweird.f32 %v1414
        %vm1496 = vweird.f32 %v1490
        %vm1497 = vmor %vm1495, %vm1496
        %v1498 = vsel %vm1497, %v1490, %v1494
        %v1499 = vand.u32 2147483647, %v1414
        %vm1500 = vcmp.eq.f32.partialorder %v1499, 8.507059e+37
        %v1501 = vand.u32 %v1414, 2147483648
        %v1502 = vor.u32 1.1754944e-38, %v1501
        %v1503 = vsel %vm1500, %v1502, %v1498
        %v1504 = vmul.f32 1.0, %v1503
        %v1505 = vrcp.pop %v1415
        %v1506 = vmul.f32 %v1415, %v1505
        %v1507 = vsub.f32 1.0, %v1506
        %v1508 = vmul.f32 %v1505, %v1507
        %v1509 = vadd.f32 %v1505, %v1508
        %vm1510 = vweird.f32 %v1415
        %vm1511 = vweird.f32 %v1505
        %vm1512 = vmor %vm1510, %vm1511
        %v1513 = vsel %vm1512, %v1505, %v1509
        %v1514 = vand.u32 2147483647, %v1415
        %vm1515 = vcmp.eq.f32.partialorder %v1514, 8.507059e+37
        %v1516 = vand.u32 %v1415, 2147483648
        %v1517 = vor.u32 1.1754944e-38, %v1516
        %v1518 = vsel %vm1515, %v1517, %v1513
        %v1519 = vmul.f32 1.0, %v1518
        %v1520 = vrcp.pop %v1416
        %v1521 = vmul.f32 %v1416, %v1520
        %v1522 = vsub.f32 1.0, %v1521
        %v1523 = vmul.f32 %v1520, %v1522
        %v1524 = vadd.f32 %v1520, %v1523
        %vm1525 = vweird.f32 %v1416
        %vm1526 = vweird.f32 %v1520
        %vm1527 = vmor %vm1525, %vm1526
        %v1528 = vsel %vm1527, %v1520, %v1524
        %v1529 = vand.u32 2147483647, %v1416
        %vm1530 = vcmp.eq.f32.partialorder %v1529, 8.507059e+37
        %v1531 = vand.u32 %v1416, 2147483648
        %v1532 = vor.u32 1.1754944e-38, %v1531
        %v1533 = vsel %vm1530, %v1532, %v1528
        %v1534 = vmul.f32 1.0, %v1533
        %v1535 = vrcp.pop %v1417
        %v1536 = vmul.f32 %v1417, %v1535
        %v1537 = vsub.f32 1.0, %v1536
        %v1538 = vmul.f32 %v1535, %v1537
        %v1539 = vadd.f32 %v1535, %v1538
        %vm1540 = vweird.f32 %v1417
        %vm1541 = vweird.f32 %v1535
        %vm1542 = vmor %vm1540, %vm1541
        %v1543 = vsel %vm1542, %v1535, %v1539
        %v1544 = vand.u32 2147483647, %v1417
        %vm1545 = vcmp.eq.f32.partialorder %v1544, 8.507059e+37
        %v1546 = vand.u32 %v1417, 2147483648
        %v1547 = vor.u32 1.1754944e-38, %v1546
        %v1548 = vsel %vm1545, %v1547, %v1543
        %v1549 = vmul.f32 1.0, %v1548
        %v1550 = vrcp.pop %v1418
        %v1551 = vmul.f32 %v1418, %v1550
        %v1552 = vsub.f32 1.0, %v1551
        %v1553 = vmul.f32 %v1550, %v1552
        %v1554 = vadd.f32 %v1550, %v1553
        %vm1555 = vweird.f32 %v1418
        %vm1556 = vweird.f32 %v1550
        %vm1557 = vmor %vm1555, %vm1556
        %v1558 = vsel %vm1557, %v1550, %v1554
        %v1559 = vand.u32 2147483647, %v1418
        %vm1560 = vcmp.eq.f32.partialorder %v1559, 8.507059e+37
        %v1561 = vand.u32 %v1418, 2147483648
        %v1562 = vor.u32 1.1754944e-38, %v1561
        %v1563 = vsel %vm1560, %v1562, %v1558
        %v1564 = vmul.f32 1.0, %v1563
        %v1565 = vrcp.pop %v1419
        %v1566 = vmul.f32 %v1419, %v1565
        %v1567 = vsub.f32 1.0, %v1566
        %v1568 = vmul.f32 %v1565, %v1567
        %v1569 = vadd.f32 %v1565, %v1568
        %vm1570 = vweird.f32 %v1419
        %vm1571 = vweird.f32 %v1565
        %vm1572 = vmor %vm1570, %vm1571
        %v1573 = vsel %vm1572, %v1565, %v1569
        %v1574 = vand.u32 2147483647, %v1419
        %vm1575 = vcmp.eq.f32.partialorder %v1574, 8.507059e+37
        %v1576 = vand.u32 %v1419, 2147483648
        %v1577 = vor.u32 1.1754944e-38, %v1576
        %v1578 = vsel %vm1575, %v1577, %v1573
        %v1579 = vmul.f32 1.0, %v1578
        %v1580 = vrcp.pop %v1420
        %v1581 = vmul.f32 %v1420, %v1580
        %v1582 = vsub.f32 1.0, %v1581
        %v1583 = vmul.f32 %v1580, %v1582
        %v1584 = vadd.f32 %v1580, %v1583
        %vm1585 = vweird.f32 %v1420
        %vm1586 = vweird.f32 %v1580
        %vm1587 = vmor %vm1585, %vm1586
        %v1588 = vsel %vm1587, %v1580, %v1584
        %v1589 = vand.u32 2147483647, %v1420
        %vm1590 = vcmp.eq.f32.partialorder %v1589, 8.507059e+37
        %v1591 = vand.u32 %v1420, 2147483648
        %v1592 = vor.u32 1.1754944e-38, %v1591
        %v1593 = vsel %vm1590, %v1592, %v1588
        %v1594 = vmul.f32 1.0, %v1593
        %v1595 = vrcp.pop %v1421
        %v1596 = vmul.f32 %v1421, %v1595
        %v1597 = vsub.f32 1.0, %v1596
        %v1598 = vmul.f32 %v1595, %v1597
        %v1599 = vadd.f32 %v1595, %v1598
        %vm1600 = vweird.f32 %v1421
        %vm1601 = vweird.f32 %v1595
        %vm1602 = vmor %vm1600, %vm1601
        %v1603 = vsel %vm1602, %v1595, %v1599
        %v1604 = vand.u32 2147483647, %v1421
        %vm1605 = vcmp.eq.f32.partialorder %v1604, 8.507059e+37
        %v1606 = vand.u32 %v1421, 2147483648
        %v1607 = vor.u32 1.1754944e-38, %v1606
        %v1608 = vsel %vm1605, %v1607, %v1603
        %v1609 = vmul.f32 1.0, %v1608
        %v1610 = vrcp.pop %v1422
        %v1611 = vmul.f32 %v1422, %v1610
        %v1612 = vsub.f32 1.0, %v1611
        %v1613 = vmul.f32 %v1610, %v1612
        %v1614 = vadd.f32 %v1610, %v1613
        %vm1615 = vweird.f32 %v1422
        %vm1616 = vweird.f32 %v1610
        %vm1617 = vmor %vm1615, %vm1616
        %v1618 = vsel %vm1617, %v1610, %v1614
        %v1619 = vand.u32 2147483647, %v1422
        %vm1620 = vcmp.eq.f32.partialorder %v1619, 8.507059e+37
        %v1621 = vand.u32 %v1422, 2147483648
        %v1622 = vor.u32 1.1754944e-38, %v1621
        %v1623 = vsel %vm1620, %v1622, %v1618
        %v1624 = vmul.f32 1.0, %v1623
        %v1625 = vrcp.pop %v1423
        %v1626 = vmul.f32 %v1423, %v1625
        %v1627 = vsub.f32 1.0, %v1626
        %v1628 = vmul.f32 %v1625, %v1627
        %v1629 = vadd.f32 %v1625, %v1628
        %vm1630 = vweird.f32 %v1423
        %vm1631 = vweird.f32 %v1625
        %vm1632 = vmor %vm1630, %vm1631
        %v1633 = vsel %vm1632, %v1625, %v1629
        %v1634 = vand.u32 2147483647, %v1423
        %vm1635 = vcmp.eq.f32.partialorder %v1634, 8.507059e+37
        %v1636 = vand.u32 %v1423, 2147483648
        %v1637 = vor.u32 1.1754944e-38, %v1636
        %v1638 = vsel %vm1635, %v1637, %v1633
        %v1639 = vmul.f32 1.0, %v1638
        %v1640 = vrcp.pop %v1424
        %v1641 = vmul.f32 %v1424, %v1640
        %v1642 = vsub.f32 1.0, %v1641
        %v1643 = vmul.f32 %v1640, %v1642
        %v1644 = vadd.f32 %v1640, %v1643
        %vm1645 = vweird.f32 %v1424
        %vm1646 = vweird.f32 %v1640
        %vm1647 = vmor %vm1645, %vm1646
        %v1648 = vsel %vm1647, %v1640, %v1644
        %v1649 = vand.u32 2147483647, %v1424
        %vm1650 = vcmp.eq.f32.partialorder %v1649, 8.507059e+37
        %v1651 = vand.u32 %v1424, 2147483648
        %v1652 = vor.u32 1.1754944e-38, %v1651
        %v1653 = vsel %vm1650, %v1652, %v1648
        %v1654 = vmul.f32 1.0, %v1653
        %v1655 = vrcp.pop %v1425
        %v1656 = vmul.f32 %v1425, %v1655
        %v1657 = vsub.f32 1.0, %v1656
        %v1658 = vmul.f32 %v1655, %v1657
        %v1659 = vadd.f32 %v1655, %v1658
        %vm1660 = vweird.f32 %v1425
        %vm1661 = vweird.f32 %v1655
        %vm1662 = vmor %vm1660, %vm1661
        %v1663 = vsel %vm1662, %v1655, %v1659
        %v1664 = vand.u32 2147483647, %v1425
        %vm1665 = vcmp.eq.f32.partialorder %v1664, 8.507059e+37
        %v1666 = vand.u32 %v1425, 2147483648
        %v1667 = vor.u32 1.1754944e-38, %v1666
        %v1668 = vsel %vm1665, %v1667, %v1663
        %v1669 = vmul.f32 1.0, %v1668
        %v1670 = vrcp.pop %v1426
        %v1671 = vmul.f32 %v1426, %v1670
        %v1672 = vsub.f32 1.0, %v1671
        %v1673 = vmul.f32 %v1670, %v1672
        %v1674 = vadd.f32 %v1670, %v1673
        %vm1675 = vweird.f32 %v1426
        %vm1676 = vweird.f32 %v1670
        %vm1677 = vmor %vm1675, %vm1676
        %v1678 = vsel %vm1677, %v1670, %v1674
        %v1679 = vand.u32 2147483647, %v1426
        %vm1680 = vcmp.eq.f32.partialorder %v1679, 8.507059e+37
        %v1681 = vand.u32 %v1426, 2147483648
        %v1682 = vor.u32 1.1754944e-38, %v1681
        %v1683 = vsel %vm1680, %v1682, %v1678
        %v1684 = vmul.f32 1.0, %v1683
        %v1685 = vrcp.pop %v1427
        %v1686 = vmul.f32 %v1427, %v1685
        %v1687 = vsub.f32 1.0, %v1686
        %v1688 = vmul.f32 %v1685, %v1687
        %v1689 = vadd.f32 %v1685, %v1688
        %vm1690 = vweird.f32 %v1427
        %vm1691 = vweird.f32 %v1685
        %vm1692 = vmor %vm1690, %vm1691
        %v1693 = vsel %vm1692, %v1685, %v1689
        %v1694 = vand.u32 2147483647, %v1427
        %vm1695 = vcmp.eq.f32.partialorder %v1694, 8.507059e+37
        %v1696 = vand.u32 %v1427, 2147483648
        %v1697 = vor.u32 1.1754944e-38, %v1696
        %v1698 = vsel %vm1695, %v1697, %v1693
        %v1699 = vmul.f32 1.0, %v1698
        %v1700 = vrcp.pop %v1428
        %v1701 = vmul.f32 %v1428, %v1700
        %v1702 = vsub.f32 1.0, %v1701
        %v1703 = vmul.f32 %v1700, %v1702
        %v1704 = vadd.f32 %v1700, %v1703
        %vm1705 = vweird.f32 %v1428
        %vm1706 = vweird.f32 %v1700
        %vm1707 = vmor %vm1705, %vm1706
        %v1708 = vsel %vm1707, %v1700, %v1704
        %v1709 = vand.u32 2147483647, %v1428
        %vm1710 = vcmp.eq.f32.partialorder %v1709, 8.507059e+37
        %v1711 = vand.u32 %v1428, 2147483648
        %v1712 = vor.u32 1.1754944e-38, %v1711
        %v1713 = vsel %vm1710, %v1712, %v1708
        %v1714 = vmul.f32 1.0, %v1713
        %v1715 = vrcp.pop %v1429
        %v1716 = vmul.f32 %v1429, %v1715
        %v1717 = vsub.f32 1.0, %v1716
        %v1718 = vmul.f32 %v1715, %v1717
        %v1719 = vadd.f32 %v1715, %v1718
        %vm1720 = vweird.f32 %v1429
        %vm1721 = vweird.f32 %v1715
        %vm1722 = vmor %vm1720, %vm1721
        %v1723 = vsel %vm1722, %v1715, %v1719
        %v1724 = vand.u32 2147483647, %v1429
        %vm1725 = vcmp.eq.f32.partialorder %v1724, 8.507059e+37
        %v1726 = vand.u32 %v1429, 2147483648
        %v1727 = vor.u32 1.1754944e-38, %v1726
        %v1728 = vsel %vm1725, %v1727, %v1723
        %v1729 = vmul.f32 1.0, %v1728
        %v1730 = vmul.f32 %v1330, %v1444
        %v1731 = vmul.f32 %v1331, %v1459
        %v1732 = vmul.f32 %v1332, %v1474
        %v1733 = vmul.f32 %v1333, %v1489
        %v1734 = vmul.f32 %v1334, %v1504
        %v1735 = vmul.f32 %v1335, %v1519
        %v1736 = vmul.f32 %v1336, %v1534
        %v1737 = vmul.f32 %v1337, %v1549
        %v1738 = vmul.f32 %v1338, %v1564
        %v1739 = vmul.f32 %v1339, %v1579
        %v1740 = vmul.f32 %v1340, %v1594
        %v1741 = vmul.f32 %v1341, %v1609
        %v1742 = vmul.f32 %v1342, %v1624
        %v1743 = vmul.f32 %v1343, %v1639
        %v1744 = vmul.f32 %v1344, %v1654
        %v1745 = vmul.f32 %v1345, %v1669
        %v1746 = vmul.f32 %v1346, %v1684
        %v1747 = vmul.f32 %v1347, %v1699
        %v1748 = vmul.f32 %v1348, %v1714
        %v1749 = vmul.f32 %v1349, %v1729
        %p1750 = scmp.gt.s32.totalorder %s25, 0
        %s1751 = scalar_select %p1750, 1, 0
        %v1752 = vstv %s1751
        %vm1753 = vcmp.eq.s32.totalorder %v1752, 1
        %p1754 = scmp.lt.s32.totalorder %s25, 1
        %s1755 = scalar_select %p1754, 1, 0
        %v1756 = vstv %s1755
        %vm1757 = vcmp.eq.s32.totalorder %v1756, 1
        %v1758 = vsel %vm1753, 1, 0
        %v1759 = vsel %vm1757, 1, 0
        %vm1760 = vcmp.eq.s32.totalorder %v1758, 1
        %vm1761 = vcmp.eq.s32.totalorder %v1759, 1
        %v1762 = vsel %vm1760, %v1730, 0.0
        %v1763 = vsel %vm1760, %v1731, 0.0
        %v1764 = vsel 1, %v1732, 0.0
        %v1765 = vsel 1, %v1733, 0.0
        %v1766 = vsel 1, %v1734, 0.0
        %v1767 = vsel 1, %v1735, 0.0
        %v1768 = vsel 1, %v1736, 0.0
        %v1769 = vsel 1, %v1737, 0.0
        %v1770 = vsel 1, %v1738, 0.0
        %v1771 = vsel 1, %v1739, 0.0
        %v1772 = vsel 1, %v1740, 0.0
        %v1773 = vsel 1, %v1741, 0.0
        %v1774 = vsel 1, %v1742, 0.0
        %v1775 = vsel 1, %v1743, 0.0
        %v1776 = vsel 1, %v1744, 0.0
        %v1777 = vsel 1, %v1745, 0.0
        %v1778 = vsel 1, %v1746, 0.0
        %v1779 = vsel 1, %v1747, 0.0
        %v1780 = vsel %vm1761, %v1748, 0.0
        %v1781 = vsel %vm1761, %v1749, 0.0
        %1782 = vst [vmem:[#allocation2] sm:$0x1] 0.0
        %1783 = vst [vmem:[#allocation2 + $0x18] sm:$0x1] 0.0
        %1784 = vst [vmem:[#allocation2 + $0x30] sm:$0x1] 0.0
        %1785 = vst [vmem:[#allocation2 + $0x48] sm:$0x1] 0.0
        %1786 = vst [vmem:[#allocation2 + $0x60] sm:$0x1] 0.0
        %1787 = vst [vmem:[#allocation2 + $0x78] sm:$0x1] 0.0
        %1788 = vst [vmem:[#allocation2 + $0x90] sm:$0x1] 0.0
        %1789 = vst [vmem:[#allocation2 + $0xa8] sm:$0x1] 0.0
        %1790 = vst [vmem:[#allocation2 + $0xc0] sm:$0x1] 0.0
        %1791 = vst [vmem:[#allocation2 + $0xd8] sm:$0x1] 0.0
        %1792 = vst [vmem:[#allocation2 + $0x11] sm:$0x1] 0.0
        %1793 = vst [vmem:[#allocation2 + $0x29] sm:$0x1] 0.0
        %1794 = vst [vmem:[#allocation2 + $0x41] sm:$0x1] 0.0
        %1795 = vst [vmem:[#allocation2 + $0x59] sm:$0x1] 0.0
        %1796 = vst [vmem:[#allocation2 + $0x71] sm:$0x1] 0.0
        %1797 = vst [vmem:[#allocation2 + $0x89] sm:$0x1] 0.0
        %1798 = vst [vmem:[#allocation2 + $0xa1] sm:$0x1] 0.0
        %1799 = vst [vmem:[#allocation2 + $0xb9] sm:$0x1] 0.0
        %1800 = vst [vmem:[#allocation2 + $0xd1] sm:$0x1] 0.0
        %1801 = vst [vmem:[#allocation2 + $0xe9] sm:$0x1] 0.0
        %1802 = vst [vmem:[#allocation2 + $0x1] sm:$0xff] %v1762
        %1803 = vst [vmem:[#allocation2 + $0x9] sm:$0xff] %v1763
        %1804 = vst [vmem:[#allocation2 + $0x19] sm:$0xff] %v1764
        %1805 = vst [vmem:[#allocation2 + $0x21] sm:$0xff] %v1765
        %1806 = vst [vmem:[#allocation2 + $0x31] sm:$0xff] %v1766
        %1807 = vst [vmem:[#allocation2 + $0x39] sm:$0xff] %v1767
        %1808 = vst [vmem:[#allocation2 + $0x49] sm:$0xff] %v1768
        %1809 = vst [vmem:[#allocation2 + $0x51] sm:$0xff] %v1769
        %1810 = vst [vmem:[#allocation2 + $0x61] sm:$0xff] %v1770
        %1811 = vst [vmem:[#allocation2 + $0x69] sm:$0xff] %v1771
        %1812 = vst [vmem:[#allocation2 + $0x79] sm:$0xff] %v1772
        %1813 = vst [vmem:[#allocation2 + $0x81] sm:$0xff] %v1773
        %1814 = vst [vmem:[#allocation2 + $0x91] sm:$0xff] %v1774
        %1815 = vst [vmem:[#allocation2 + $0x99] sm:$0xff] %v1775
        %1816 = vst [vmem:[#allocation2 + $0xa9] sm:$0xff] %v1776
        %1817 = vst [vmem:[#allocation2 + $0xb1] sm:$0xff] %v1777
        %1818 = vst [vmem:[#allocation2 + $0xc1] sm:$0xff] %v1778
        %1819 = vst [vmem:[#allocation2 + $0xc9] sm:$0xff] %v1779
        %1820 = vst [vmem:[#allocation2 + $0xd9] sm:$0xff] %v1780
        %1821 = vst [vmem:[#allocation2 + $0xe1] sm:$0xff] %v1781
        %v1822 = vld [vmem:[#allocation2] sm:$0xff]
        %v1823 = vld [vmem:[#allocation2 + $0x8] sm:$0xff]
        %v1824 = vld [vmem:[#allocation2 + $0x18] sm:$0xff]
        %v1825 = vld [vmem:[#allocation2 + $0x20] sm:$0xff]
        %v1826 = vld [vmem:[#allocation2 + $0x30] sm:$0xff]
        %v1827 = vld [vmem:[#allocation2 + $0x38] sm:$0xff]
        %v1828 = vld [vmem:[#allocation2 + $0x48] sm:$0xff]
        %v1829 = vld [vmem:[#allocation2 + $0x50] sm:$0xff]
        %v1830 = vld [vmem:[#allocation2 + $0x60] sm:$0xff]
        %v1831 = vld [vmem:[#allocation2 + $0x68] sm:$0xff]
        %v1832 = vld [vmem:[#allocation2 + $0x78] sm:$0xff]
        %v1833 = vld [vmem:[#allocation2 + $0x80] sm:$0xff]
        %v1834 = vld [vmem:[#allocation2 + $0x90] sm:$0xff]
        %v1835 = vld [vmem:[#allocation2 + $0x98] sm:$0xff]
        %v1836 = vld [vmem:[#allocation2 + $0xa8] sm:$0xff]
        %v1837 = vld [vmem:[#allocation2 + $0xb0] sm:$0xff]
        %v1838 = vld [vmem:[#allocation2 + $0xc0] sm:$0xff]
        %v1839 = vld [vmem:[#allocation2 + $0xc8] sm:$0xff]
        %v1840 = vld [vmem:[#allocation2 + $0xd8] sm:$0xff]
        %v1841 = vld [vmem:[#allocation2 + $0xe0] sm:$0xff]
        %v1842 = vld [vmem:[#allocation2 + $0x1] sm:$0xff]
        %v1843 = vld [vmem:[#allocation2 + $0x9] sm:$0xff]
        %v1844 = vld [vmem:[#allocation2 + $0x19] sm:$0xff]
        %v1845 = vld [vmem:[#allocation2 + $0x21] sm:$0xff]
        %v1846 = vld [vmem:[#allocation2 + $0x31] sm:$0xff]
        %v1847 = vld [vmem:[#allocation2 + $0x39] sm:$0xff]
        %v1848 = vld [vmem:[#allocation2 + $0x49] sm:$0xff]
        %v1849 = vld [vmem:[#allocation2 + $0x51] sm:$0xff]
        %v1850 = vld [vmem:[#allocation2 + $0x61] sm:$0xff]
        %v1851 = vld [vmem:[#allocation2 + $0x69] sm:$0xff]
        %v1852 = vld [vmem:[#allocation2 + $0x79] sm:$0xff]
        %v1853 = vld [vmem:[#allocation2 + $0x81] sm:$0xff]
        %v1854 = vld [vmem:[#allocation2 + $0x91] sm:$0xff]
        %v1855 = vld [vmem:[#allocation2 + $0x99] sm:$0xff]
        %v1856 = vld [vmem:[#allocation2 + $0xa9] sm:$0xff]
        %v1857 = vld [vmem:[#allocation2 + $0xb1] sm:$0xff]
        %v1858 = vld [vmem:[#allocation2 + $0xc1] sm:$0xff]
        %v1859 = vld [vmem:[#allocation2 + $0xc9] sm:$0xff]
        %v1860 = vld [vmem:[#allocation2 + $0xd9] sm:$0xff]
        %v1861 = vld [vmem:[#allocation2 + $0xe1] sm:$0xff]
        %v1862 = vld [vmem:[#allocation2 + $0x2] sm:$0xff]
        %v1863 = vld [vmem:[#allocation2 + $0xa] sm:$0xff]
        %v1864 = vld [vmem:[#allocation2 + $0x1a] sm:$0xff]
        %v1865 = vld [vmem:[#allocation2 + $0x22] sm:$0xff]
        %v1866 = vld [vmem:[#allocation2 + $0x32] sm:$0xff]
        %v1867 = vld [vmem:[#allocation2 + $0x3a] sm:$0xff]
        %v1868 = vld [vmem:[#allocation2 + $0x4a] sm:$0xff]
        %v1869 = vld [vmem:[#allocation2 + $0x52] sm:$0xff]
        %v1870 = vld [vmem:[#allocation2 + $0x62] sm:$0xff]
        %v1871 = vld [vmem:[#allocation2 + $0x6a] sm:$0xff]
        %v1872 = vld [vmem:[#allocation2 + $0x7a] sm:$0xff]
        %v1873 = vld [vmem:[#allocation2 + $0x82] sm:$0xff]
        %v1874 = vld [vmem:[#allocation2 + $0x92] sm:$0xff]
        %v1875 = vld [vmem:[#allocation2 + $0x9a] sm:$0xff]
        %v1876 = vld [vmem:[#allocation2 + $0xaa] sm:$0xff]
        %v1877 = vld [vmem:[#allocation2 + $0xb2] sm:$0xff]
        %v1878 = vld [vmem:[#allocation2 + $0xc2] sm:$0xff]
        %v1879 = vld [vmem:[#allocation2 + $0xca] sm:$0xff]
        %v1880 = vld [vmem:[#allocation2 + $0xda] sm:$0xff]
        %v1881 = vld [vmem:[#allocation2 + $0xe2] sm:$0xff]
        %v1882 = vld [vmem:[#allocation3] sm:$0xff]
        %v1883 = vld [vmem:[#allocation3 + $0x8] sm:$0xff]
        %v1884 = vld [vmem:[#allocation3 + $0x10] sm:$0xff]
        %v1885 = vld [vmem:[#allocation3 + $0x18] sm:$0xff]
        %v1886 = vld [vmem:[#allocation3 + $0x20] sm:$0xff]
        %v1887 = vld [vmem:[#allocation3 + $0x28] sm:$0xff]
        %v1888 = vld [vmem:[#allocation3 + $0x30] sm:$0xff]
        %v1889 = vld [vmem:[#allocation3 + $0x38] sm:$0xff]
        %v1890 = vld [vmem:[#allocation3 + $0x40] sm:$0xff]
        %v1891 = vld [vmem:[#allocation3 + $0x48] sm:$0xff]
        %v1892 = vld [vmem:[#allocation3 + $0x50] sm:$0xff]
        %v1893 = vld [vmem:[#allocation3 + $0x58] sm:$0xff]
        %v1894 = vld [vmem:[#allocation3 + $0x60] sm:$0xff]
        %v1895 = vld [vmem:[#allocation3 + $0x68] sm:$0xff]
        %v1896 = vld [vmem:[#allocation3 + $0x70] sm:$0xff]
        %v1897 = vld [vmem:[#allocation3 + $0x78] sm:$0xff]
        %s1898 = scalar_lea.vmem [#allocation3], 128
        %v1899 = vld [vmem:[%s1898] sm:$0xff]
        %v1900 = vld [vmem:[%s1898 + $0x8] sm:$0xff]
        %v1901 = vld [vmem:[%s1898 + $0x10] sm:$0xff]
        %v1902 = vld [vmem:[%s1898 + $0x18] sm:$0xff]
        %v1903 = vld [vmem:[%s1898 + $0x20] sm:$0xff]
        %v1904 = vld [vmem:[%s1898 + $0x28] sm:$0xff]
        %v1905 = vld [vmem:[%s1898 + $0x30] sm:$0xff]
        %v1906 = vld [vmem:[%s1898 + $0x38] sm:$0xff]
        %v1907 = vld [vmem:[%s1898 + $0x40] sm:$0xff]
        %v1908 = vld [vmem:[%s1898 + $0x48] sm:$0xff]
        %v1909 = vld [vmem:[%s1898 + $0x50] sm:$0xff]
        %v1910 = vld [vmem:[%s1898 + $0x58] sm:$0xff]
        %v1911 = vld [vmem:[%s1898 + $0x60] sm:$0xff]
        %v1912 = vld [vmem:[%s1898 + $0x68] sm:$0xff]
        %v1913 = vld [vmem:[%s1898 + $0x70] sm:$0xff]
        %v1914 = vld [vmem:[%s1898 + $0x78] sm:$0xff]
        %1915 = vmatpush.msra.mxu0 %v1914
        %1916 = vmatpush.msra.mxu0 %v1913
        %1917 = vmatpush.msra.mxu0 %v1912
        %1918 = vmatpush.msra.mxu0 %v1911
        %1919 = vmatpush.msra.mxu0 %v1910
        %1920 = vmatpush.msra.mxu0 %v1909
        %1921 = vmatpush.msra.mxu0 %v1908
        %1922 = vmatpush.msra.mxu0 %v1907
        %1923 = vmatpush.msra.mxu0 %v1906
        %1924 = vmatpush.msra.mxu0 %v1905
        %1925 = vmatpush.msra.mxu0 %v1904
        %1926 = vmatpush.msra.mxu0 %v1903
        %1927 = vmatpush.msra.mxu0 %v1902
        %1928 = vmatpush.msra.mxu0 %v1901
        %1929 = vmatpush.msra.mxu0 %v1900
        %1930 = vmatpush.msra.mxu0 %v1899
        %1931 = vmatmul.f32.gmra.mxu0 %v1842
        %v1932 = vpop.f32.mrf.mxu0
        %v1933 = vadd.f32 0.0, %v1932
        %1934 = vmatmul.f32.gmra.mxu0 %v1843
        %v1935 = vpop.f32.mrf.mxu0
        %v1936 = vadd.f32 0.0, %v1935
        %1937 = vmatmul.f32.gmra.mxu0 %v1844
        %v1938 = vpop.f32.mrf.mxu0
        %v1939 = vadd.f32 0.0, %v1938
        %1940 = vmatmul.f32.gmra.mxu0 %v1845
        %v1941 = vpop.f32.mrf.mxu0
        %v1942 = vadd.f32 0.0, %v1941
        %1943 = vmatmul.f32.gmra.mxu0 %v1846
        %v1944 = vpop.f32.mrf.mxu0
        %v1945 = vadd.f32 0.0, %v1944
        %1946 = vmatmul.f32.gmra.mxu0 %v1847
        %v1947 = vpop.f32.mrf.mxu0
        %v1948 = vadd.f32 0.0, %v1947
        %1949 = vmatmul.f32.gmra.mxu0 %v1848
        %v1950 = vpop.f32.mrf.mxu0
        %v1951 = vadd.f32 0.0, %v1950
        %1952 = vmatmul.f32.gmra.mxu0 %v1849
        %v1953 = vpop.f32.mrf.mxu0
        %v1954 = vadd.f32 0.0, %v1953
        %1955 = vmatmul.f32.gmra.mxu0 %v1850
        %v1956 = vpop.f32.mrf.mxu0
        %v1957 = vadd.f32 0.0, %v1956
        %1958 = vmatmul.f32.gmra.mxu0 %v1851
        %v1959 = vpop.f32.mrf.mxu0
        %v1960 = vadd.f32 0.0, %v1959
        %1961 = vmatmul.f32.gmra.mxu0 %v1852
        %v1962 = vpop.f32.mrf.mxu0
        %v1963 = vadd.f32 0.0, %v1962
        %1964 = vmatmul.f32.gmra.mxu0 %v1853
        %v1965 = vpop.f32.mrf.mxu0
        %v1966 = vadd.f32 0.0, %v1965
        %1967 = vmatmul.f32.gmra.mxu0 %v1854
        %v1968 = vpop.f32.mrf.mxu0
        %v1969 = vadd.f32 0.0, %v1968
        %1970 = vmatmul.f32.gmra.mxu0 %v1855
        %v1971 = vpop.f32.mrf.mxu0
        %v1972 = vadd.f32 0.0, %v1971
        %1973 = vmatmul.f32.gmra.mxu0 %v1856
        %v1974 = vpop.f32.mrf.mxu0
        %v1975 = vadd.f32 0.0, %v1974
        %1976 = vmatmul.f32.gmra.mxu0 %v1857
        %v1977 = vpop.f32.mrf.mxu0
        %v1978 = vadd.f32 0.0, %v1977
        %1979 = vdwg.mxu0
        %1980 = vmatpush.msra.mxu0 %v1897
        %1981 = vmatpush.msra.mxu0 %v1896
        %1982 = vmatpush.msra.mxu0 %v1895
        %1983 = vmatpush.msra.mxu0 %v1894
        %1984 = vmatpush.msra.mxu0 %v1893
        %1985 = vmatpush.msra.mxu0 %v1892
        %1986 = vmatpush.msra.mxu0 %v1891
        %1987 = vmatpush.msra.mxu0 %v1890
        %1988 = vmatpush.msra.mxu0 %v1889
        %1989 = vmatpush.msra.mxu0 %v1888
        %1990 = vmatpush.msra.mxu0 %v1887
        %1991 = vmatpush.msra.mxu0 %v1886
        %1992 = vmatpush.msra.mxu0 %v1885
        %1993 = vmatpush.msra.mxu0 %v1884
        %1994 = vmatpush.msra.mxu0 %v1883
        %1995 = vmatpush.msra.mxu0 %v1882
        %1996 = vmatmul.f32.gmra.mxu0 %v1822
        %v1997 = vpop.f32.mrf.mxu0
        %v1998 = vadd.f32 %v1933, %v1997
        %1999 = vmatmul.f32.gmra.mxu0 %v1823
        %v2000 = vpop.f32.mrf.mxu0
        %v2001 = vadd.f32 %v1936, %v2000
        %2002 = vmatmul.f32.gmra.mxu0 %v1824
        %v2003 = vpop.f32.mrf.mxu0
        %v2004 = vadd.f32 %v1939, %v2003
        %2005 = vmatmul.f32.gmra.mxu0 %v1825
        %v2006 = vpop.f32.mrf.mxu0
        %v2007 = vadd.f32 %v1942, %v2006
        %2008 = vmatmul.f32.gmra.mxu0 %v1826
        %v2009 = vpop.f32.mrf.mxu0
        %v2010 = vadd.f32 %v1945, %v2009
        %2011 = vmatmul.f32.gmra.mxu0 %v1827
        %v2012 = vpop.f32.mrf.mxu0
        %v2013 = vadd.f32 %v1948, %v2012
        %2014 = vmatmul.f32.gmra.mxu0 %v1828
        %v2015 = vpop.f32.mrf.mxu0
        %v2016 = vadd.f32 %v1951, %v2015
        %2017 = vmatmul.f32.gmra.mxu0 %v1829
        %v2018 = vpop.f32.mrf.mxu0
        %v2019 = vadd.f32 %v1954, %v2018
        %2020 = vmatmul.f32.gmra.mxu0 %v1830
        %v2021 = vpop.f32.mrf.mxu0
        %v2022 = vadd.f32 %v1957, %v2021
        %2023 = vmatmul.f32.gmra.mxu0 %v1831
        %v2024 = vpop.f32.mrf.mxu0
        %v2025 = vadd.f32 %v1960, %v2024
        %2026 = vmatmul.f32.gmra.mxu0 %v1832
        %v2027 = vpop.f32.mrf.mxu0
        %v2028 = vadd.f32 %v1963, %v2027
        %2029 = vmatmul.f32.gmra.mxu0 %v1833
        %v2030 = vpop.f32.mrf.mxu0
        %v2031 = vadd.f32 %v1966, %v2030
        %2032 = vmatmul.f32.gmra.mxu0 %v1834
        %v2033 = vpop.f32.mrf.mxu0
        %v2034 = vadd.f32 %v1969, %v2033
        %2035 = vmatmul.f32.gmra.mxu0 %v1835
        %v2036 = vpop.f32.mrf.mxu0
        %v2037 = vadd.f32 %v1972, %v2036
        %2038 = vmatmul.f32.gmra.mxu0 %v1836
        %v2039 = vpop.f32.mrf.mxu0
        %v2040 = vadd.f32 %v1975, %v2039
        %2041 = vmatmul.f32.gmra.mxu0 %v1837
        %v2042 = vpop.f32.mrf.mxu0
        %v2043 = vadd.f32 %v1978, %v2042
        %2044 = vdwg.mxu0
        %s2045 = scalar_lea.vmem [#allocation3], 256
        %v2046 = vld [vmem:[%s2045] sm:$0xff]
        %v2047 = vld [vmem:[%s2045 + $0x8] sm:$0xff]
        %v2048 = vld [vmem:[%s2045 + $0x10] sm:$0xff]
        %v2049 = vld [vmem:[%s2045 + $0x18] sm:$0xff]
        %v2050 = vld [vmem:[%s2045 + $0x20] sm:$0xff]
        %v2051 = vld [vmem:[%s2045 + $0x28] sm:$0xff]
        %v2052 = vld [vmem:[%s2045 + $0x30] sm:$0xff]
        %v2053 = vld [vmem:[%s2045 + $0x38] sm:$0xff]
        %v2054 = vld [vmem:[%s2045 + $0x40] sm:$0xff]
        %v2055 = vld [vmem:[%s2045 + $0x48] sm:$0xff]
        %v2056 = vld [vmem:[%s2045 + $0x50] sm:$0xff]
        %v2057 = vld [vmem:[%s2045 + $0x58] sm:$0xff]
        %v2058 = vld [vmem:[%s2045 + $0x60] sm:$0xff]
        %v2059 = vld [vmem:[%s2045 + $0x68] sm:$0xff]
        %v2060 = vld [vmem:[%s2045 + $0x70] sm:$0xff]
        %v2061 = vld [vmem:[%s2045 + $0x78] sm:$0xff]
        %2062 = vmatpush.msra.mxu0 %v2061
        %2063 = vmatpush.msra.mxu0 %v2060
        %2064 = vmatpush.msra.mxu0 %v2059
        %2065 = vmatpush.msra.mxu0 %v2058
        %2066 = vmatpush.msra.mxu0 %v2057
        %2067 = vmatpush.msra.mxu0 %v2056
        %2068 = vmatpush.msra.mxu0 %v2055
        %2069 = vmatpush.msra.mxu0 %v2054
        %2070 = vmatpush.msra.mxu0 %v2053
        %2071 = vmatpush.msra.mxu0 %v2052
        %2072 = vmatpush.msra.mxu0 %v2051
        %2073 = vmatpush.msra.mxu0 %v2050
        %2074 = vmatpush.msra.mxu0 %v2049
        %2075 = vmatpush.msra.mxu0 %v2048
        %2076 = vmatpush.msra.mxu0 %v2047
        %2077 = vmatpush.msra.mxu0 %v2046
        %2078 = vmatmul.f32.gmra.mxu0 %v1862
        %v2079 = vpop.f32.mrf.mxu0
        %v2080 = vadd.f32 0.0, %v2079
        %2081 = vmatmul.f32.gmra.mxu0 %v1863
        %v2082 = vpop.f32.mrf.mxu0
        %v2083 = vadd.f32 0.0, %v2082
        %2084 = vmatmul.f32.gmra.mxu0 %v1864
        %v2085 = vpop.f32.mrf.mxu0
        %v2086 = vadd.f32 0.0, %v2085
        %2087 = vmatmul.f32.gmra.mxu0 %v1865
        %v2088 = vpop.f32.mrf.mxu0
        %v2089 = vadd.f32 0.0, %v2088
        %2090 = vmatmul.f32.gmra.mxu0 %v1866
        %v2091 = vpop.f32.mrf.mxu0
        %v2092 = vadd.f32 0.0, %v2091
        %2093 = vmatmul.f32.gmra.mxu0 %v1867
        %v2094 = vpop.f32.mrf.mxu0
        %v2095 = vadd.f32 0.0, %v2094
        %2096 = vmatmul.f32.gmra.mxu0 %v1868
        %v2097 = vpop.f32.mrf.mxu0
        %v2098 = vadd.f32 0.0, %v2097
        %2099 = vmatmul.f32.gmra.mxu0 %v1869
        %v2100 = vpop.f32.mrf.mxu0
        %v2101 = vadd.f32 0.0, %v2100
        %2102 = vmatmul.f32.gmra.mxu0 %v1870
        %v2103 = vpop.f32.mrf.mxu0
        %v2104 = vadd.f32 0.0, %v2103
        %2105 = vmatmul.f32.gmra.mxu0 %v1871
        %v2106 = vpop.f32.mrf.mxu0
        %v2107 = vadd.f32 0.0, %v2106
        %2108 = vmatmul.f32.gmra.mxu0 %v1872
        %v2109 = vpop.f32.mrf.mxu0
        %v2110 = vadd.f32 0.0, %v2109
        %2111 = vmatmul.f32.gmra.mxu0 %v1873
        %v2112 = vpop.f32.mrf.mxu0
        %v2113 = vadd.f32 0.0, %v2112
        %2114 = vmatmul.f32.gmra.mxu0 %v1874
        %v2115 = vpop.f32.mrf.mxu0
        %v2116 = vadd.f32 0.0, %v2115
        %2117 = vmatmul.f32.gmra.mxu0 %v1875
        %v2118 = vpop.f32.mrf.mxu0
        %v2119 = vadd.f32 0.0, %v2118
        %2120 = vmatmul.f32.gmra.mxu0 %v1876
        %v2121 = vpop.f32.mrf.mxu0
        %v2122 = vadd.f32 0.0, %v2121
        %2123 = vmatmul.f32.gmra.mxu0 %v1877
        %v2124 = vpop.f32.mrf.mxu0
        %v2125 = vadd.f32 0.0, %v2124
        %2126 = vdwg.mxu0
        %v2127 = vadd.f32 %v1998, %v2080
        %v2128 = vadd.f32 %v2001, %v2083
        %v2129 = vadd.f32 %v2004, %v2086
        %v2130 = vadd.f32 %v2007, %v2089
        %v2131 = vadd.f32 %v2010, %v2092
        %v2132 = vadd.f32 %v2013, %v2095
        %v2133 = vadd.f32 %v2016, %v2098
        %v2134 = vadd.f32 %v2019, %v2101
        %v2135 = vadd.f32 %v2022, %v2104
        %v2136 = vadd.f32 %v2025, %v2107
        %v2137 = vadd.f32 %v2028, %v2110
        %v2138 = vadd.f32 %v2031, %v2113
        %v2139 = vadd.f32 %v2034, %v2116
        %v2140 = vadd.f32 %v2037, %v2119
        %v2141 = vadd.f32 %v2040, %v2122
        %v2142 = vadd.f32 %v2043, %v2125
        %s2143 = scalar_lea.vmem [#allocation3], 384
        %v2144 = vld [vmem:[%s2143] sm:$0xff]
        %v2145 = vld [vmem:[%s2143 + $0x8] sm:$0xff]
        %v2146 = vld [vmem:[%s2143 + $0x10] sm:$0xff]
        %v2147 = vld [vmem:[%s2143 + $0x18] sm:$0xff]
        %v2148 = vld [vmem:[%s2143 + $0x20] sm:$0xff]
        %v2149 = vld [vmem:[%s2143 + $0x28] sm:$0xff]
        %v2150 = vld [vmem:[%s2143 + $0x30] sm:$0xff]
        %v2151 = vld [vmem:[%s2143 + $0x38] sm:$0xff]
        %v2152 = vld [vmem:[%s2143 + $0x40] sm:$0xff]
        %v2153 = vld [vmem:[%s2143 + $0x48] sm:$0xff]
        %v2154 = vld [vmem:[%s2143 + $0x50] sm:$0xff]
        %v2155 = vld [vmem:[%s2143 + $0x58] sm:$0xff]
        %v2156 = vld [vmem:[%s2143 + $0x60] sm:$0xff]
        %v2157 = vld [vmem:[%s2143 + $0x68] sm:$0xff]
        %v2158 = vld [vmem:[%s2143 + $0x70] sm:$0xff]
        %v2159 = vld [vmem:[%s2143 + $0x78] sm:$0xff]
        %2160 = vmatpush.msra.mxu0 %v2159
        %2161 = vmatpush.msra.mxu0 %v2158
        %2162 = vmatpush.msra.mxu0 %v2157
        %2163 = vmatpush.msra.mxu0 %v2156
        %2164 = vmatpush.msra.mxu0 %v2155
        %2165 = vmatpush.msra.mxu0 %v2154
        %2166 = vmatpush.msra.mxu0 %v2153
        %2167 = vmatpush.msra.mxu0 %v2152
        %2168 = vmatpush.msra.mxu0 %v2151
        %2169 = vmatpush.msra.mxu0 %v2150
        %2170 = vmatpush.msra.mxu0 %v2149
        %2171 = vmatpush.msra.mxu0 %v2148
        %2172 = vmatpush.msra.mxu0 %v2147
        %2173 = vmatpush.msra.mxu0 %v2146
        %2174 = vmatpush.msra.mxu0 %v2145
        %2175 = vmatpush.msra.mxu0 %v2144
        %2176 = vmatmul.f32.gmra.mxu0 %v1824
        %v2177 = vpop.f32.mrf.mxu0
        %v2178 = vadd.f32 0.0, %v2177
        %2179 = vmatmul.f32.gmra.mxu0 %v1825
        %v2180 = vpop.f32.mrf.mxu0
        %v2181 = vadd.f32 0.0, %v2180
        %2182 = vmatmul.f32.gmra.mxu0 %v1826
        %v2183 = vpop.f32.mrf.mxu0
        %v2184 = vadd.f32 0.0, %v2183
        %2185 = vmatmul.f32.gmra.mxu0 %v1827
        %v2186 = vpop.f32.mrf.mxu0
        %v2187 = vadd.f32 0.0, %v2186
        %2188 = vmatmul.f32.gmra.mxu0 %v1828
        %v2189 = vpop.f32.mrf.mxu0
        %v2190 = vadd.f32 0.0, %v2189
        %2191 = vmatmul.f32.gmra.mxu0 %v1829
        %v2192 = vpop.f32.mrf.mxu0
        %v2193 = vadd.f32 0.0, %v2192
        %2194 = vmatmul.f32.gmra.mxu0 %v1830
        %v2195 = vpop.f32.mrf.mxu0
        %v2196 = vadd.f32 0.0, %v2195
        %2197 = vmatmul.f32.gmra.mxu0 %v1831
        %v2198 = vpop.f32.mrf.mxu0
        %v2199 = vadd.f32 0.0, %v2198
        %2200 = vmatmul.f32.gmra.mxu0 %v1832
        %v2201 = vpop.f32.mrf.mxu0
        %v2202 = vadd.f32 0.0, %v2201
        %2203 = vmatmul.f32.gmra.mxu0 %v1833
        %v2204 = vpop.f32.mrf.mxu0
        %v2205 = vadd.f32 0.0, %v2204
        %2206 = vmatmul.f32.gmra.mxu0 %v1834
        %v2207 = vpop.f32.mrf.mxu0
        %v2208 = vadd.f32 0.0, %v2207
        %2209 = vmatmul.f32.gmra.mxu0 %v1835
        %v2210 = vpop.f32.mrf.mxu0
        %v2211 = vadd.f32 0.0, %v2210
        %2212 = vmatmul.f32.gmra.mxu0 %v1836
        %v2213 = vpop.f32.mrf.mxu0
        %v2214 = vadd.f32 0.0, %v2213
        %2215 = vmatmul.f32.gmra.mxu0 %v1837
        %v2216 = vpop.f32.mrf.mxu0
        %v2217 = vadd.f32 0.0, %v2216
        %2218 = vmatmul.f32.gmra.mxu0 %v1838
        %v2219 = vpop.f32.mrf.mxu0
        %v2220 = vadd.f32 0.0, %v2219
        %2221 = vmatmul.f32.gmra.mxu0 %v1839
        %v2222 = vpop.f32.mrf.mxu0
        %v2223 = vadd.f32 0.0, %v2222
        %2224 = vdwg.mxu0
        %v2225 = vadd.f32 %v2127, %v2178
        %v2226 = vadd.f32 %v2128, %v2181
        %v2227 = vadd.f32 %v2129, %v2184
        %v2228 = vadd.f32 %v2130, %v2187
        %v2229 = vadd.f32 %v2131, %v2190
        %v2230 = vadd.f32 %v2132, %v2193
        %v2231 = vadd.f32 %v2133, %v2196
        %v2232 = vadd.f32 %v2134, %v2199
        %v2233 = vadd.f32 %v2135, %v2202
        %v2234 = vadd.f32 %v2136, %v2205
        %v2235 = vadd.f32 %v2137, %v2208
        %v2236 = vadd.f32 %v2138, %v2211
        %v2237 = vadd.f32 %v2139, %v2214
        %v2238 = vadd.f32 %v2140, %v2217
        %v2239 = vadd.f32 %v2141, %v2220
        %v2240 = vadd.f32 %v2142, %v2223
        %s2241 = scalar_lea.vmem [#allocation3], 512
        %v2242 = vld [vmem:[%s2241] sm:$0xff]
        %v2243 = vld [vmem:[%s2241 + $0x8] sm:$0xff]
        %v2244 = vld [vmem:[%s2241 + $0x10] sm:$0xff]
        %v2245 = vld [vmem:[%s2241 + $0x18] sm:$0xff]
        %v2246 = vld [vmem:[%s2241 + $0x20] sm:$0xff]
        %v2247 = vld [vmem:[%s2241 + $0x28] sm:$0xff]
        %v2248 = vld [vmem:[%s2241 + $0x30] sm:$0xff]
        %v2249 = vld [vmem:[%s2241 + $0x38] sm:$0xff]
        %v2250 = vld [vmem:[%s2241 + $0x40] sm:$0xff]
        %v2251 = vld [vmem:[%s2241 + $0x48] sm:$0xff]
        %v2252 = vld [vmem:[%s2241 + $0x50] sm:$0xff]
        %v2253 = vld [vmem:[%s2241 + $0x58] sm:$0xff]
        %v2254 = vld [vmem:[%s2241 + $0x60] sm:$0xff]
        %v2255 = vld [vmem:[%s2241 + $0x68] sm:$0xff]
        %v2256 = vld [vmem:[%s2241 + $0x70] sm:$0xff]
        %v2257 = vld [vmem:[%s2241 + $0x78] sm:$0xff]
        %2258 = vmatpush.msra.mxu0 %v2257
        %2259 = vmatpush.msra.mxu0 %v2256
        %2260 = vmatpush.msra.mxu0 %v2255
        %2261 = vmatpush.msra.mxu0 %v2254
        %2262 = vmatpush.msra.mxu0 %v2253
        %2263 = vmatpush.msra.mxu0 %v2252
        %2264 = vmatpush.msra.mxu0 %v2251
        %2265 = vmatpush.msra.mxu0 %v2250
        %2266 = vmatpush.msra.mxu0 %v2249
        %2267 = vmatpush.msra.mxu0 %v2248
        %2268 = vmatpush.msra.mxu0 %v2247
        %2269 = vmatpush.msra.mxu0 %v2246
        %2270 = vmatpush.msra.mxu0 %v2245
        %2271 = vmatpush.msra.mxu0 %v2244
        %2272 = vmatpush.msra.mxu0 %v2243
        %2273 = vmatpush.msra.mxu0 %v2242
        %2274 = vmatmul.f32.gmra.mxu0 %v1844
        %v2275 = vpop.f32.mrf.mxu0
        %v2276 = vadd.f32 0.0, %v2275
        %2277 = vmatmul.f32.gmra.mxu0 %v1845
        %v2278 = vpop.f32.mrf.mxu0
        %v2279 = vadd.f32 0.0, %v2278
        %2280 = vmatmul.f32.gmra.mxu0 %v1846
        %v2281 = vpop.f32.mrf.mxu0
        %v2282 = vadd.f32 0.0, %v2281
        %2283 = vmatmul.f32.gmra.mxu0 %v1847
        %v2284 = vpop.f32.mrf.mxu0
        %v2285 = vadd.f32 0.0, %v2284
        %2286 = vmatmul.f32.gmra.mxu0 %v1848
        %v2287 = vpop.f32.mrf.mxu0
        %v2288 = vadd.f32 0.0, %v2287
        %2289 = vmatmul.f32.gmra.mxu0 %v1849
        %v2290 = vpop.f32.mrf.mxu0
        %v2291 = vadd.f32 0.0, %v2290
        %2292 = vmatmul.f32.gmra.mxu0 %v1850
        %v2293 = vpop.f32.mrf.mxu0
        %v2294 = vadd.f32 0.0, %v2293
        %2295 = vmatmul.f32.gmra.mxu0 %v1851
        %v2296 = vpop.f32.mrf.mxu0
        %v2297 = vadd.f32 0.0, %v2296
        %2298 = vmatmul.f32.gmra.mxu0 %v1852
        %v2299 = vpop.f32.mrf.mxu0
        %v2300 = vadd.f32 0.0, %v2299
        %2301 = vmatmul.f32.gmra.mxu0 %v1853
        %v2302 = vpop.f32.mrf.mxu0
        %v2303 = vadd.f32 0.0, %v2302
        %2304 = vmatmul.f32.gmra.mxu0 %v1854
        %v2305 = vpop.f32.mrf.mxu0
        %v2306 = vadd.f32 0.0, %v2305
        %2307 = vmatmul.f32.gmra.mxu0 %v1855
        %v2308 = vpop.f32.mrf.mxu0
        %v2309 = vadd.f32 0.0, %v2308
        %2310 = vmatmul.f32.gmra.mxu0 %v1856
        %v2311 = vpop.f32.mrf.mxu0
        %v2312 = vadd.f32 0.0, %v2311
        %2313 = vmatmul.f32.gmra.mxu0 %v1857
        %v2314 = vpop.f32.mrf.mxu0
        %v2315 = vadd.f32 0.0, %v2314
        %2316 = vmatmul.f32.gmra.mxu0 %v1858
        %v2317 = vpop.f32.mrf.mxu0
        %v2318 = vadd.f32 0.0, %v2317
        %2319 = vmatmul.f32.gmra.mxu0 %v1859
        %v2320 = vpop.f32.mrf.mxu0
        %v2321 = vadd.f32 0.0, %v2320
        %2322 = vdwg.mxu0
        %v2323 = vadd.f32 %v2225, %v2276
        %v2324 = vadd.f32 %v2226, %v2279
        %v2325 = vadd.f32 %v2227, %v2282
        %v2326 = vadd.f32 %v2228, %v2285
        %v2327 = vadd.f32 %v2229, %v2288
        %v2328 = vadd.f32 %v2230, %v2291
        %v2329 = vadd.f32 %v2231, %v2294
        %v2330 = vadd.f32 %v2232, %v2297
        %v2331 = vadd.f32 %v2233, %v2300
        %v2332 = vadd.f32 %v2234, %v2303
        %v2333 = vadd.f32 %v2235, %v2306
        %v2334 = vadd.f32 %v2236, %v2309
        %v2335 = vadd.f32 %v2237, %v2312
        %v2336 = vadd.f32 %v2238, %v2315
        %v2337 = vadd.f32 %v2239, %v2318
        %v2338 = vadd.f32 %v2240, %v2321
        %s2339 = scalar_lea.vmem [#allocation3], 640
        %v2340 = vld [vmem:[%s2339] sm:$0xff]
        %v2341 = vld [vmem:[%s2339 + $0x8] sm:$0xff]
        %v2342 = vld [vmem:[%s2339 + $0x10] sm:$0xff]
        %v2343 = vld [vmem:[%s2339 + $0x18] sm:$0xff]
        %v2344 = vld [vmem:[%s2339 + $0x20] sm:$0xff]
        %v2345 = vld [vmem:[%s2339 + $0x28] sm:$0xff]
        %v2346 = vld [vmem:[%s2339 + $0x30] sm:$0xff]
        %v2347 = vld [vmem:[%s2339 + $0x38] sm:$0xff]
        %v2348 = vld [vmem:[%s2339 + $0x40] sm:$0xff]
        %v2349 = vld [vmem:[%s2339 + $0x48] sm:$0xff]
        %v2350 = vld [vmem:[%s2339 + $0x50] sm:$0xff]
        %v2351 = vld [vmem:[%s2339 + $0x58] sm:$0xff]
        %v2352 = vld [vmem:[%s2339 + $0x60] sm:$0xff]
        %v2353 = vld [vmem:[%s2339 + $0x68] sm:$0xff]
        %v2354 = vld [vmem:[%s2339 + $0x70] sm:$0xff]
        %v2355 = vld [vmem:[%s2339 + $0x78] sm:$0xff]
        %2356 = vmatpush.msra.mxu0 %v2355
        %2357 = vmatpush.msra.mxu0 %v2354
        %2358 = vmatpush.msra.mxu0 %v2353
        %2359 = vmatpush.msra.mxu0 %v2352
        %2360 = vmatpush.msra.mxu0 %v2351
        %2361 = vmatpush.msra.mxu0 %v2350
        %2362 = vmatpush.msra.mxu0 %v2349
        %2363 = vmatpush.msra.mxu0 %v2348
        %2364 = vmatpush.msra.mxu0 %v2347
        %2365 = vmatpush.msra.mxu0 %v2346
        %2366 = vmatpush.msra.mxu0 %v2345
        %2367 = vmatpush.msra.mxu0 %v2344
        %2368 = vmatpush.msra.mxu0 %v2343
        %2369 = vmatpush.msra.mxu0 %v2342
        %2370 = vmatpush.msra.mxu0 %v2341
        %2371 = vmatpush.msra.mxu0 %v2340
        %2372 = vmatmul.f32.gmra.mxu0 %v1864
        %v2373 = vpop.f32.mrf.mxu0
        %v2374 = vadd.f32 0.0, %v2373
        %2375 = vmatmul.f32.gmra.mxu0 %v1865
        %v2376 = vpop.f32.mrf.mxu0
        %v2377 = vadd.f32 0.0, %v2376
        %2378 = vmatmul.f32.gmra.mxu0 %v1866
        %v2379 = vpop.f32.mrf.mxu0
        %v2380 = vadd.f32 0.0, %v2379
        %2381 = vmatmul.f32.gmra.mxu0 %v1867
        %v2382 = vpop.f32.mrf.mxu0
        %v2383 = vadd.f32 0.0, %v2382
        %2384 = vmatmul.f32.gmra.mxu0 %v1868
        %v2385 = vpop.f32.mrf.mxu0
        %v2386 = vadd.f32 0.0, %v2385
        %2387 = vmatmul.f32.gmra.mxu0 %v1869
        %v2388 = vpop.f32.mrf.mxu0
        %v2389 = vadd.f32 0.0, %v2388
        %2390 = vmatmul.f32.gmra.mxu0 %v1870
        %v2391 = vpop.f32.mrf.mxu0
        %v2392 = vadd.f32 0.0, %v2391
        %2393 = vmatmul.f32.gmra.mxu0 %v1871
        %v2394 = vpop.f32.mrf.mxu0
        %v2395 = vadd.f32 0.0, %v2394
        %2396 = vmatmul.f32.gmra.mxu0 %v1872
        %v2397 = vpop.f32.mrf.mxu0
        %v2398 = vadd.f32 0.0, %v2397
        %2399 = vmatmul.f32.gmra.mxu0 %v1873
        %v2400 = vpop.f32.mrf.mxu0
        %v2401 = vadd.f32 0.0, %v2400
        %2402 = vmatmul.f32.gmra.mxu0 %v1874
        %v2403 = vpop.f32.mrf.mxu0
        %v2404 = vadd.f32 0.0, %v2403
        %2405 = vmatmul.f32.gmra.mxu0 %v1875
        %v2406 = vpop.f32.mrf.mxu0
        %v2407 = vadd.f32 0.0, %v2406
        %2408 = vmatmul.f32.gmra.mxu0 %v1876
        %v2409 = vpop.f32.mrf.mxu0
        %v2410 = vadd.f32 0.0, %v2409
        %2411 = vmatmul.f32.gmra.mxu0 %v1877
        %v2412 = vpop.f32.mrf.mxu0
        %v2413 = vadd.f32 0.0, %v2412
        %2414 = vmatmul.f32.gmra.mxu0 %v1878
        %v2415 = vpop.f32.mrf.mxu0
        %v2416 = vadd.f32 0.0, %v2415
        %2417 = vmatmul.f32.gmra.mxu0 %v1879
        %v2418 = vpop.f32.mrf.mxu0
        %v2419 = vadd.f32 0.0, %v2418
        %2420 = vdwg.mxu0
        %v2421 = vadd.f32 %v2323, %v2374
        %v2422 = vadd.f32 %v2324, %v2377
        %v2423 = vadd.f32 %v2325, %v2380
        %v2424 = vadd.f32 %v2326, %v2383
        %v2425 = vadd.f32 %v2327, %v2386
        %v2426 = vadd.f32 %v2328, %v2389
        %v2427 = vadd.f32 %v2329, %v2392
        %v2428 = vadd.f32 %v2330, %v2395
        %v2429 = vadd.f32 %v2331, %v2398
        %v2430 = vadd.f32 %v2332, %v2401
        %v2431 = vadd.f32 %v2333, %v2404
        %v2432 = vadd.f32 %v2334, %v2407
        %v2433 = vadd.f32 %v2335, %v2410
        %v2434 = vadd.f32 %v2336, %v2413
        %v2435 = vadd.f32 %v2337, %v2416
        %v2436 = vadd.f32 %v2338, %v2419
        %s2437 = scalar_lea.vmem [#allocation3], 768
        %v2438 = vld [vmem:[%s2437] sm:$0xff]
        %v2439 = vld [vmem:[%s2437 + $0x8] sm:$0xff]
        %v2440 = vld [vmem:[%s2437 + $0x10] sm:$0xff]
        %v2441 = vld [vmem:[%s2437 + $0x18] sm:$0xff]
        %v2442 = vld [vmem:[%s2437 + $0x20] sm:$0xff]
        %v2443 = vld [vmem:[%s2437 + $0x28] sm:$0xff]
        %v2444 = vld [vmem:[%s2437 + $0x30] sm:$0xff]
        %v2445 = vld [vmem:[%s2437 + $0x38] sm:$0xff]
        %v2446 = vld [vmem:[%s2437 + $0x40] sm:$0xff]
        %v2447 = vld [vmem:[%s2437 + $0x48] sm:$0xff]
        %v2448 = vld [vmem:[%s2437 + $0x50] sm:$0xff]
        %v2449 = vld [vmem:[%s2437 + $0x58] sm:$0xff]
        %v2450 = vld [vmem:[%s2437 + $0x60] sm:$0xff]
        %v2451 = vld [vmem:[%s2437 + $0x68] sm:$0xff]
        %v2452 = vld [vmem:[%s2437 + $0x70] sm:$0xff]
        %v2453 = vld [vmem:[%s2437 + $0x78] sm:$0xff]
        %2454 = vmatpush.msra.mxu0 %v2453
        %2455 = vmatpush.msra.mxu0 %v2452
        %2456 = vmatpush.msra.mxu0 %v2451
        %2457 = vmatpush.msra.mxu0 %v2450
        %2458 = vmatpush.msra.mxu0 %v2449
        %2459 = vmatpush.msra.mxu0 %v2448
        %2460 = vmatpush.msra.mxu0 %v2447
        %2461 = vmatpush.msra.mxu0 %v2446
        %2462 = vmatpush.msra.mxu0 %v2445
        %2463 = vmatpush.msra.mxu0 %v2444
        %2464 = vmatpush.msra.mxu0 %v2443
        %2465 = vmatpush.msra.mxu0 %v2442
        %2466 = vmatpush.msra.mxu0 %v2441
        %2467 = vmatpush.msra.mxu0 %v2440
        %2468 = vmatpush.msra.mxu0 %v2439
        %2469 = vmatpush.msra.mxu0 %v2438
        %2470 = vmatmul.f32.gmra.mxu0 %v1826
        %v2471 = vpop.f32.mrf.mxu0
        %v2472 = vadd.f32 0.0, %v2471
        %2473 = vmatmul.f32.gmra.mxu0 %v1827
        %v2474 = vpop.f32.mrf.mxu0
        %v2475 = vadd.f32 0.0, %v2474
        %2476 = vmatmul.f32.gmra.mxu0 %v1828
        %v2477 = vpop.f32.mrf.mxu0
        %v2478 = vadd.f32 0.0, %v2477
        %2479 = vmatmul.f32.gmra.mxu0 %v1829
        %v2480 = vpop.f32.mrf.mxu0
        %v2481 = vadd.f32 0.0, %v2480
        %2482 = vmatmul.f32.gmra.mxu0 %v1830
        %v2483 = vpop.f32.mrf.mxu0
        %v2484 = vadd.f32 0.0, %v2483
        %2485 = vmatmul.f32.gmra.mxu0 %v1831
        %v2486 = vpop.f32.mrf.mxu0
        %v2487 = vadd.f32 0.0, %v2486
        %2488 = vmatmul.f32.gmra.mxu0 %v1832
        %v2489 = vpop.f32.mrf.mxu0
        %v2490 = vadd.f32 0.0, %v2489
        %2491 = vmatmul.f32.gmra.mxu0 %v1833
        %v2492 = vpop.f32.mrf.mxu0
        %v2493 = vadd.f32 0.0, %v2492
        %2494 = vmatmul.f32.gmra.mxu0 %v1834
        %v2495 = vpop.f32.mrf.mxu0
        %v2496 = vadd.f32 0.0, %v2495
        %2497 = vmatmul.f32.gmra.mxu0 %v1835
        %v2498 = vpop.f32.mrf.mxu0
        %v2499 = vadd.f32 0.0, %v2498
        %2500 = vmatmul.f32.gmra.mxu0 %v1836
        %v2501 = vpop.f32.mrf.mxu0
        %v2502 = vadd.f32 0.0, %v2501
        %2503 = vmatmul.f32.gmra.mxu0 %v1837
        %v2504 = vpop.f32.mrf.mxu0
        %v2505 = vadd.f32 0.0, %v2504
        %2506 = vmatmul.f32.gmra.mxu0 %v1838
        %v2507 = vpop.f32.mrf.mxu0
        %v2508 = vadd.f32 0.0, %v2507
        %2509 = vmatmul.f32.gmra.mxu0 %v1839
        %v2510 = vpop.f32.mrf.mxu0
        %v2511 = vadd.f32 0.0, %v2510
        %2512 = vmatmul.f32.gmra.mxu0 %v1840
        %v2513 = vpop.f32.mrf.mxu0
        %v2514 = vadd.f32 0.0, %v2513
        %2515 = vmatmul.f32.gmra.mxu0 %v1841
        %v2516 = vpop.f32.mrf.mxu0
        %v2517 = vadd.f32 0.0, %v2516
        %2518 = vdwg.mxu0
        %v2519 = vadd.f32 %v2421, %v2472
        %v2520 = vadd.f32 %v2422, %v2475
        %v2521 = vadd.f32 %v2423, %v2478
        %v2522 = vadd.f32 %v2424, %v2481
        %v2523 = vadd.f32 %v2425, %v2484
        %v2524 = vadd.f32 %v2426, %v2487
        %v2525 = vadd.f32 %v2427, %v2490
        %v2526 = vadd.f32 %v2428, %v2493
        %v2527 = vadd.f32 %v2429, %v2496
        %v2528 = vadd.f32 %v2430, %v2499
        %v2529 = vadd.f32 %v2431, %v2502
        %v2530 = vadd.f32 %v2432, %v2505
        %v2531 = vadd.f32 %v2433, %v2508
        %v2532 = vadd.f32 %v2434, %v2511
        %v2533 = vadd.f32 %v2435, %v2514
        %v2534 = vadd.f32 %v2436, %v2517
        %s2535 = scalar_lea.vmem [#allocation3], 896
        %v2536 = vld [vmem:[%s2535] sm:$0xff]
        %v2537 = vld [vmem:[%s2535 + $0x8] sm:$0xff]
        %v2538 = vld [vmem:[%s2535 + $0x10] sm:$0xff]
        %v2539 = vld [vmem:[%s2535 + $0x18] sm:$0xff]
        %v2540 = vld [vmem:[%s2535 + $0x20] sm:$0xff]
        %v2541 = vld [vmem:[%s2535 + $0x28] sm:$0xff]
        %v2542 = vld [vmem:[%s2535 + $0x30] sm:$0xff]
        %v2543 = vld [vmem:[%s2535 + $0x38] sm:$0xff]
        %v2544 = vld [vmem:[%s2535 + $0x40] sm:$0xff]
        %v2545 = vld [vmem:[%s2535 + $0x48] sm:$0xff]
        %v2546 = vld [vmem:[%s2535 + $0x50] sm:$0xff]
        %v2547 = vld [vmem:[%s2535 + $0x58] sm:$0xff]
        %v2548 = vld [vmem:[%s2535 + $0x60] sm:$0xff]
        %v2549 = vld [vmem:[%s2535 + $0x68] sm:$0xff]
        %v2550 = vld [vmem:[%s2535 + $0x70] sm:$0xff]
        %v2551 = vld [vmem:[%s2535 + $0x78] sm:$0xff]
        %2552 = vmatpush.msra.mxu0 %v2551
        %2553 = vmatpush.msra.mxu0 %v2550
        %2554 = vmatpush.msra.mxu0 %v2549
        %2555 = vmatpush.msra.mxu0 %v2548
        %2556 = vmatpush.msra.mxu0 %v2547
        %2557 = vmatpush.msra.mxu0 %v2546
        %2558 = vmatpush.msra.mxu0 %v2545
        %2559 = vmatpush.msra.mxu0 %v2544
        %2560 = vmatpush.msra.mxu0 %v2543
        %2561 = vmatpush.msra.mxu0 %v2542
        %2562 = vmatpush.msra.mxu0 %v2541
        %2563 = vmatpush.msra.mxu0 %v2540
        %2564 = vmatpush.msra.mxu0 %v2539
        %2565 = vmatpush.msra.mxu0 %v2538
        %2566 = vmatpush.msra.mxu0 %v2537
        %2567 = vmatpush.msra.mxu0 %v2536
        %2568 = vmatmul.f32.gmra.mxu0 %v1846
        %v2569 = vpop.f32.mrf.mxu0
        %v2570 = vadd.f32 0.0, %v2569
        %2571 = vmatmul.f32.gmra.mxu0 %v1847
        %v2572 = vpop.f32.mrf.mxu0
        %v2573 = vadd.f32 0.0, %v2572
        %2574 = vmatmul.f32.gmra.mxu0 %v1848
        %v2575 = vpop.f32.mrf.mxu0
        %v2576 = vadd.f32 0.0, %v2575
        %2577 = vmatmul.f32.gmra.mxu0 %v1849
        %v2578 = vpop.f32.mrf.mxu0
        %v2579 = vadd.f32 0.0, %v2578
        %2580 = vmatmul.f32.gmra.mxu0 %v1850
        %v2581 = vpop.f32.mrf.mxu0
        %v2582 = vadd.f32 0.0, %v2581
        %2583 = vmatmul.f32.gmra.mxu0 %v1851
        %v2584 = vpop.f32.mrf.mxu0
        %v2585 = vadd.f32 0.0, %v2584
        %2586 = vmatmul.f32.gmra.mxu0 %v1852
        %v2587 = vpop.f32.mrf.mxu0
        %v2588 = vadd.f32 0.0, %v2587
        %2589 = vmatmul.f32.gmra.mxu0 %v1853
        %v2590 = vpop.f32.mrf.mxu0
        %v2591 = vadd.f32 0.0, %v2590
        %2592 = vmatmul.f32.gmra.mxu0 %v1854
        %v2593 = vpop.f32.mrf.mxu0
        %v2594 = vadd.f32 0.0, %v2593
        %2595 = vmatmul.f32.gmra.mxu0 %v1855
        %v2596 = vpop.f32.mrf.mxu0
        %v2597 = vadd.f32 0.0, %v2596
        %2598 = vmatmul.f32.gmra.mxu0 %v1856
        %v2599 = vpop.f32.mrf.mxu0
        %v2600 = vadd.f32 0.0, %v2599
        %2601 = vmatmul.f32.gmra.mxu0 %v1857
        %v2602 = vpop.f32.mrf.mxu0
        %v2603 = vadd.f32 0.0, %v2602
        %2604 = vmatmul.f32.gmra.mxu0 %v1858
        %v2605 = vpop.f32.mrf.mxu0
        %v2606 = vadd.f32 0.0, %v2605
        %2607 = vmatmul.f32.gmra.mxu0 %v1859
        %v2608 = vpop.f32.mrf.mxu0
        %v2609 = vadd.f32 0.0, %v2608
        %2610 = vmatmul.f32.gmra.mxu0 %v1860
        %v2611 = vpop.f32.mrf.mxu0
        %v2612 = vadd.f32 0.0, %v2611
        %2613 = vmatmul.f32.gmra.mxu0 %v1861
        %v2614 = vpop.f32.mrf.mxu0
        %v2615 = vadd.f32 0.0, %v2614
        %2616 = vdwg.mxu0
        %v2617 = vadd.f32 %v2519, %v2570
        %v2618 = vadd.f32 %v2520, %v2573
        %v2619 = vadd.f32 %v2521, %v2576
        %v2620 = vadd.f32 %v2522, %v2579
        %v2621 = vadd.f32 %v2523, %v2582
        %v2622 = vadd.f32 %v2524, %v2585
        %v2623 = vadd.f32 %v2525, %v2588
        %v2624 = vadd.f32 %v2526, %v2591
        %v2625 = vadd.f32 %v2527, %v2594
        %v2626 = vadd.f32 %v2528, %v2597
        %v2627 = vadd.f32 %v2529, %v2600
        %v2628 = vadd.f32 %v2530, %v2603
        %v2629 = vadd.f32 %v2531, %v2606
        %v2630 = vadd.f32 %v2532, %v2609
        %v2631 = vadd.f32 %v2533, %v2612
        %v2632 = vadd.f32 %v2534, %v2615
        %s2633 = scalar_lea.vmem [#allocation3], 1024
        %v2634 = vld [vmem:[%s2633] sm:$0xff]
        %v2635 = vld [vmem:[%s2633 + $0x8] sm:$0xff]
        %v2636 = vld [vmem:[%s2633 + $0x10] sm:$0xff]
        %v2637 = vld [vmem:[%s2633 + $0x18] sm:$0xff]
        %v2638 = vld [vmem:[%s2633 + $0x20] sm:$0xff]
        %v2639 = vld [vmem:[%s2633 + $0x28] sm:$0xff]
        %v2640 = vld [vmem:[%s2633 + $0x30] sm:$0xff]
        %v2641 = vld [vmem:[%s2633 + $0x38] sm:$0xff]
        %v2642 = vld [vmem:[%s2633 + $0x40] sm:$0xff]
        %v2643 = vld [vmem:[%s2633 + $0x48] sm:$0xff]
        %v2644 = vld [vmem:[%s2633 + $0x50] sm:$0xff]
        %v2645 = vld [vmem:[%s2633 + $0x58] sm:$0xff]
        %v2646 = vld [vmem:[%s2633 + $0x60] sm:$0xff]
        %v2647 = vld [vmem:[%s2633 + $0x68] sm:$0xff]
        %v2648 = vld [vmem:[%s2633 + $0x70] sm:$0xff]
        %v2649 = vld [vmem:[%s2633 + $0x78] sm:$0xff]
        %2650 = vmatpush.msra.mxu0 %v2649
        %2651 = vmatpush.msra.mxu0 %v2648
        %2652 = vmatpush.msra.mxu0 %v2647
        %2653 = vmatpush.msra.mxu0 %v2646
        %2654 = vmatpush.msra.mxu0 %v2645
        %2655 = vmatpush.msra.mxu0 %v2644
        %2656 = vmatpush.msra.mxu0 %v2643
        %2657 = vmatpush.msra.mxu0 %v2642
        %2658 = vmatpush.msra.mxu0 %v2641
        %2659 = vmatpush.msra.mxu0 %v2640
        %2660 = vmatpush.msra.mxu0 %v2639
        %2661 = vmatpush.msra.mxu0 %v2638
        %2662 = vmatpush.msra.mxu0 %v2637
        %2663 = vmatpush.msra.mxu0 %v2636
        %2664 = vmatpush.msra.mxu0 %v2635
        %2665 = vmatpush.msra.mxu0 %v2634
        %2666 = vmatmul.f32.gmra.mxu0 %v1866
        %v2667 = vpop.f32.mrf.mxu0
        %v2668 = vadd.f32 0.0, %v2667
        %2669 = vmatmul.f32.gmra.mxu0 %v1867
        %v2670 = vpop.f32.mrf.mxu0
        %v2671 = vadd.f32 0.0, %v2670
        %2672 = vmatmul.f32.gmra.mxu0 %v1868
        %v2673 = vpop.f32.mrf.mxu0
        %v2674 = vadd.f32 0.0, %v2673
        %2675 = vmatmul.f32.gmra.mxu0 %v1869
        %v2676 = vpop.f32.mrf.mxu0
        %v2677 = vadd.f32 0.0, %v2676
        %2678 = vmatmul.f32.gmra.mxu0 %v1870
        %v2679 = vpop.f32.mrf.mxu0
        %v2680 = vadd.f32 0.0, %v2679
        %2681 = vmatmul.f32.gmra.mxu0 %v1871
        %v2682 = vpop.f32.mrf.mxu0
        %v2683 = vadd.f32 0.0, %v2682
        %2684 = vmatmul.f32.gmra.mxu0 %v1872
        %v2685 = vpop.f32.mrf.mxu0
        %v2686 = vadd.f32 0.0, %v2685
        %2687 = vmatmul.f32.gmra.mxu0 %v1873
        %v2688 = vpop.f32.mrf.mxu0
        %v2689 = vadd.f32 0.0, %v2688
        %2690 = vmatmul.f32.gmra.mxu0 %v1874
        %v2691 = vpop.f32.mrf.mxu0
        %v2692 = vadd.f32 0.0, %v2691
        %2693 = vmatmul.f32.gmra.mxu0 %v1875
        %v2694 = vpop.f32.mrf.mxu0
        %v2695 = vadd.f32 0.0, %v2694
        %2696 = vmatmul.f32.gmra.mxu0 %v1876
        %v2697 = vpop.f32.mrf.mxu0
        %v2698 = vadd.f32 0.0, %v2697
        %2699 = vmatmul.f32.gmra.mxu0 %v1877
        %v2700 = vpop.f32.mrf.mxu0
        %v2701 = vadd.f32 0.0, %v2700
        %2702 = vmatmul.f32.gmra.mxu0 %v1878
        %v2703 = vpop.f32.mrf.mxu0
        %v2704 = vadd.f32 0.0, %v2703
        %2705 = vmatmul.f32.gmra.mxu0 %v1879
        %v2706 = vpop.f32.mrf.mxu0
        %v2707 = vadd.f32 0.0, %v2706
        %2708 = vmatmul.f32.gmra.mxu0 %v1880
        %v2709 = vpop.f32.mrf.mxu0
        %v2710 = vadd.f32 0.0, %v2709
        %2711 = vmatmul.f32.gmra.mxu0 %v1881
        %v2712 = vpop.f32.mrf.mxu0
        %v2713 = vadd.f32 0.0, %v2712
        %2714 = vdwg.mxu0
        %v2715 = vadd.f32 %v2617, %v2668
        %v2716 = vadd.f32 %v2618, %v2671
        %v2717 = vadd.f32 %v2619, %v2674
        %v2718 = vadd.f32 %v2620, %v2677
        %v2719 = vadd.f32 %v2621, %v2680
        %v2720 = vadd.f32 %v2622, %v2683
        %v2721 = vadd.f32 %v2623, %v2686
        %v2722 = vadd.f32 %v2624, %v2689
        %v2723 = vadd.f32 %v2625, %v2692
        %v2724 = vadd.f32 %v2626, %v2695
        %v2725 = vadd.f32 %v2627, %v2698
        %v2726 = vadd.f32 %v2628, %v2701
        %v2727 = vadd.f32 %v2629, %v2704
        %v2728 = vadd.f32 %v2630, %v2707
        %v2729 = vadd.f32 %v2631, %v2710
        %v2730 = vadd.f32 %v2632, %v2713
        %v2731 = vld [vmem:[%s4] sm:$0x1]
        %v2733 = vperm.slane %v2731, 0
        %v2735 = vadd.f32 %v2715, %v2733
        %v2736 = vadd.f32 %v2716, %v2733
        %v2737 = vadd.f32 %v2717, %v2733
        %v2738 = vadd.f32 %v2718, %v2733
        %v2739 = vadd.f32 %v2719, %v2733
        %v2740 = vadd.f32 %v2720, %v2733
        %v2741 = vadd.f32 %v2721, %v2733
        %v2742 = vadd.f32 %v2722, %v2733
        %v2743 = vadd.f32 %v2723, %v2733
        %v2744 = vadd.f32 %v2724, %v2733
        %v2745 = vadd.f32 %v2725, %v2733
        %v2746 = vadd.f32 %v2726, %v2733
        %v2747 = vadd.f32 %v2727, %v2733
        %v2748 = vadd.f32 %v2728, %v2733
        %v2749 = vadd.f32 %v2729, %v2733
        %v2750 = vadd.f32 %v2730, %v2733
        %v2751 = vxor.u32 %v2735, 2147483648
        %v2752 = vxor.u32 %v2736, 2147483648
        %v2753 = vxor.u32 %v2737, 2147483648
        %v2754 = vxor.u32 %v2738, 2147483648
        %v2755 = vxor.u32 %v2739, 2147483648
        %v2756 = vxor.u32 %v2740, 2147483648
        %v2757 = vxor.u32 %v2741, 2147483648
        %v2758 = vxor.u32 %v2742, 2147483648
        %v2759 = vxor.u32 %v2743, 2147483648
        %v2760 = vxor.u32 %v2744, 2147483648
        %v2761 = vxor.u32 %v2745, 2147483648
        %v2762 = vxor.u32 %v2746, 2147483648
        %v2763 = vxor.u32 %v2747, 2147483648
        %v2764 = vxor.u32 %v2748, 2147483648
        %v2765 = vxor.u32 %v2749, 2147483648
        %v2766 = vxor.u32 %v2750, 2147483648
        %v2767 = vmul.f32 %v2751, 1.442695
        %v2768 = vpow.pop %v2767
        %v2769 = vmul.f32 %v2752, 1.442695
        %v2770 = vpow.pop %v2769
        %v2771 = vmul.f32 %v2753, 1.442695
        %v2772 = vpow.pop %v2771
        %v2773 = vmul.f32 %v2754, 1.442695
        %v2774 = vpow.pop %v2773
        %v2775 = vmul.f32 %v2755, 1.442695
        %v2776 = vpow.pop %v2775
        %v2777 = vmul.f32 %v2756, 1.442695
        %v2778 = vpow.pop %v2777
        %v2779 = vmul.f32 %v2757, 1.442695
        %v2780 = vpow.pop %v2779
        %v2781 = vmul.f32 %v2758, 1.442695
        %v2782 = vpow.pop %v2781
        %v2783 = vmul.f32 %v2759, 1.442695
        %v2784 = vpow.pop %v2783
        %v2785 = vmul.f32 %v2760, 1.442695
        %v2786 = vpow.pop %v2785
        %v2787 = vmul.f32 %v2761, 1.442695
        %v2788 = vpow.pop %v2787
        %v2789 = vmul.f32 %v2762, 1.442695
        %v2790 = vpow.pop %v2789
        %v2791 = vmul.f32 %v2763, 1.442695
        %v2792 = vpow.pop %v2791
        %v2793 = vmul.f32 %v2764, 1.442695
        %v2794 = vpow.pop %v2793
        %v2795 = vmul.f32 %v2765, 1.442695
        %v2796 = vpow.pop %v2795
        %v2797 = vmul.f32 %v2766, 1.442695
        %v2798 = vpow.pop %v2797
        %v2799 = vadd.f32 %v2768, 1.0
        %v2800 = vadd.f32 %v2770, 1.0
        %v2801 = vadd.f32 %v2772, 1.0
        %v2802 = vadd.f32 %v2774, 1.0
        %v2803 = vadd.f32 %v2776, 1.0
        %v2804 = vadd.f32 %v2778, 1.0
        %v2805 = vadd.f32 %v2780, 1.0
        %v2806 = vadd.f32 %v2782, 1.0
        %v2807 = vadd.f32 %v2784, 1.0
        %v2808 = vadd.f32 %v2786, 1.0
        %v2809 = vadd.f32 %v2788, 1.0
        %v2810 = vadd.f32 %v2790, 1.0
        %v2811 = vadd.f32 %v2792, 1.0
        %v2812 = vadd.f32 %v2794, 1.0
        %v2813 = vadd.f32 %v2796, 1.0
        %v2814 = vadd.f32 %v2798, 1.0
        %v2815 = vrcp.pop %v2799
        %v2816 = vmul.f32 %v2799, %v2815
        %v2817 = vsub.f32 1.0, %v2816
        %v2818 = vmul.f32 %v2815, %v2817
        %v2819 = vadd.f32 %v2815, %v2818
        %vm2820 = vweird.f32 %v2799
        %vm2821 = vweird.f32 %v2815
        %vm2822 = vmor %vm2820, %vm2821
        %v2823 = vsel %vm2822, %v2815, %v2819
        %v2824 = vand.u32 2147483647, %v2799
        %vm2825 = vcmp.eq.f32.partialorder %v2824, 8.507059e+37
        %v2826 = vand.u32 %v2799, 2147483648
        %v2827 = vor.u32 1.1754944e-38, %v2826
        %v2828 = vsel %vm2825, %v2827, %v2823
        %v2829 = vmul.f32 1.0, %v2828
        %v2830 = vrcp.pop %v2800
        %v2831 = vmul.f32 %v2800, %v2830
        %v2832 = vsub.f32 1.0, %v2831
        %v2833 = vmul.f32 %v2830, %v2832
        %v2834 = vadd.f32 %v2830, %v2833
        %vm2835 = vweird.f32 %v2800
        %vm2836 = vweird.f32 %v2830
        %vm2837 = vmor %vm2835, %vm2836
        %v2838 = vsel %vm2837, %v2830, %v2834
        %v2839 = vand.u32 2147483647, %v2800
        %vm2840 = vcmp.eq.f32.partialorder %v2839, 8.507059e+37
        %v2841 = vand.u32 %v2800, 2147483648
        %v2842 = vor.u32 1.1754944e-38, %v2841
        %v2843 = vsel %vm2840, %v2842, %v2838
        %v2844 = vmul.f32 1.0, %v2843
        %v2845 = vrcp.pop %v2801
        %v2846 = vmul.f32 %v2801, %v2845
        %v2847 = vsub.f32 1.0, %v2846
        %v2848 = vmul.f32 %v2845, %v2847
        %v2849 = vadd.f32 %v2845, %v2848
        %vm2850 = vweird.f32 %v2801
        %vm2851 = vweird.f32 %v2845
        %vm2852 = vmor %vm2850, %vm2851
        %v2853 = vsel %vm2852, %v2845, %v2849
        %v2854 = vand.u32 2147483647, %v2801
        %vm2855 = vcmp.eq.f32.partialorder %v2854, 8.507059e+37
        %v2856 = vand.u32 %v2801, 2147483648
        %v2857 = vor.u32 1.1754944e-38, %v2856
        %v2858 = vsel %vm2855, %v2857, %v2853
        %v2859 = vmul.f32 1.0, %v2858
        %v2860 = vrcp.pop %v2802
        %v2861 = vmul.f32 %v2802, %v2860
        %v2862 = vsub.f32 1.0, %v2861
        %v2863 = vmul.f32 %v2860, %v2862
        %v2864 = vadd.f32 %v2860, %v2863
        %vm2865 = vweird.f32 %v2802
        %vm2866 = vweird.f32 %v2860
        %vm2867 = vmor %vm2865, %vm2866
        %v2868 = vsel %vm2867, %v2860, %v2864
        %v2869 = vand.u32 2147483647, %v2802
        %vm2870 = vcmp.eq.f32.partialorder %v2869, 8.507059e+37
        %v2871 = vand.u32 %v2802, 2147483648
        %v2872 = vor.u32 1.1754944e-38, %v2871
        %v2873 = vsel %vm2870, %v2872, %v2868
        %v2874 = vmul.f32 1.0, %v2873
        %v2875 = vrcp.pop %v2803
        %v2876 = vmul.f32 %v2803, %v2875
        %v2877 = vsub.f32 1.0, %v2876
        %v2878 = vmul.f32 %v2875, %v2877
        %v2879 = vadd.f32 %v2875, %v2878
        %vm2880 = vweird.f32 %v2803
        %vm2881 = vweird.f32 %v2875
        %vm2882 = vmor %vm2880, %vm2881
        %v2883 = vsel %vm2882, %v2875, %v2879
        %v2884 = vand.u32 2147483647, %v2803
        %vm2885 = vcmp.eq.f32.partialorder %v2884, 8.507059e+37
        %v2886 = vand.u32 %v2803, 2147483648
        %v2887 = vor.u32 1.1754944e-38, %v2886
        %v2888 = vsel %vm2885, %v2887, %v2883
        %v2889 = vmul.f32 1.0, %v2888
        %v2890 = vrcp.pop %v2804
        %v2891 = vmul.f32 %v2804, %v2890
        %v2892 = vsub.f32 1.0, %v2891
        %v2893 = vmul.f32 %v2890, %v2892
        %v2894 = vadd.f32 %v2890, %v2893
        %vm2895 = vweird.f32 %v2804
        %vm2896 = vweird.f32 %v2890
        %vm2897 = vmor %vm2895, %vm2896
        %v2898 = vsel %vm2897, %v2890, %v2894
        %v2899 = vand.u32 2147483647, %v2804
        %vm2900 = vcmp.eq.f32.partialorder %v2899, 8.507059e+37
        %v2901 = vand.u32 %v2804, 2147483648
        %v2902 = vor.u32 1.1754944e-38, %v2901
        %v2903 = vsel %vm2900, %v2902, %v2898
        %v2904 = vmul.f32 1.0, %v2903
        %v2905 = vrcp.pop %v2805
        %v2906 = vmul.f32 %v2805, %v2905
        %v2907 = vsub.f32 1.0, %v2906
        %v2908 = vmul.f32 %v2905, %v2907
        %v2909 = vadd.f32 %v2905, %v2908
        %vm2910 = vweird.f32 %v2805
        %vm2911 = vweird.f32 %v2905
        %vm2912 = vmor %vm2910, %vm2911
        %v2913 = vsel %vm2912, %v2905, %v2909
        %v2914 = vand.u32 2147483647, %v2805
        %vm2915 = vcmp.eq.f32.partialorder %v2914, 8.507059e+37
        %v2916 = vand.u32 %v2805, 2147483648
        %v2917 = vor.u32 1.1754944e-38, %v2916
        %v2918 = vsel %vm2915, %v2917, %v2913
        %v2919 = vmul.f32 1.0, %v2918
        %v2920 = vrcp.pop %v2806
        %v2921 = vmul.f32 %v2806, %v2920
        %v2922 = vsub.f32 1.0, %v2921
        %v2923 = vmul.f32 %v2920, %v2922
        %v2924 = vadd.f32 %v2920, %v2923
        %vm2925 = vweird.f32 %v2806
        %vm2926 = vweird.f32 %v2920
        %vm2927 = vmor %vm2925, %vm2926
        %v2928 = vsel %vm2927, %v2920, %v2924
        %v2929 = vand.u32 2147483647, %v2806
        %vm2930 = vcmp.eq.f32.partialorder %v2929, 8.507059e+37
        %v2931 = vand.u32 %v2806, 2147483648
        %v2932 = vor.u32 1.1754944e-38, %v2931
        %v2933 = vsel %vm2930, %v2932, %v2928
        %v2934 = vmul.f32 1.0, %v2933
        %v2935 = vrcp.pop %v2807
        %v2936 = vmul.f32 %v2807, %v2935
        %v2937 = vsub.f32 1.0, %v2936
        %v2938 = vmul.f32 %v2935, %v2937
        %v2939 = vadd.f32 %v2935, %v2938
        %vm2940 = vweird.f32 %v2807
        %vm2941 = vweird.f32 %v2935
        %vm2942 = vmor %vm2940, %vm2941
        %v2943 = vsel %vm2942, %v2935, %v2939
        %v2944 = vand.u32 2147483647, %v2807
        %vm2945 = vcmp.eq.f32.partialorder %v2944, 8.507059e+37
        %v2946 = vand.u32 %v2807, 2147483648
        %v2947 = vor.u32 1.1754944e-38, %v2946
        %v2948 = vsel %vm2945, %v2947, %v2943
        %v2949 = vmul.f32 1.0, %v2948
        %v2950 = vrcp.pop %v2808
        %v2951 = vmul.f32 %v2808, %v2950
        %v2952 = vsub.f32 1.0, %v2951
        %v2953 = vmul.f32 %v2950, %v2952
        %v2954 = vadd.f32 %v2950, %v2953
        %vm2955 = vweird.f32 %v2808
        %vm2956 = vweird.f32 %v2950
        %vm2957 = vmor %vm2955, %vm2956
        %v2958 = vsel %vm2957, %v2950, %v2954
        %v2959 = vand.u32 2147483647, %v2808
        %vm2960 = vcmp.eq.f32.partialorder %v2959, 8.507059e+37
        %v2961 = vand.u32 %v2808, 2147483648
        %v2962 = vor.u32 1.1754944e-38, %v2961
        %v2963 = vsel %vm2960, %v2962, %v2958
        %v2964 = vmul.f32 1.0, %v2963
        %v2965 = vrcp.pop %v2809
        %v2966 = vmul.f32 %v2809, %v2965
        %v2967 = vsub.f32 1.0, %v2966
        %v2968 = vmul.f32 %v2965, %v2967
        %v2969 = vadd.f32 %v2965, %v2968
        %vm2970 = vweird.f32 %v2809
        %vm2971 = vweird.f32 %v2965
        %vm2972 = vmor %vm2970, %vm2971
        %v2973 = vsel %vm2972, %v2965, %v2969
        %v2974 = vand.u32 2147483647, %v2809
        %vm2975 = vcmp.eq.f32.partialorder %v2974, 8.507059e+37
        %v2976 = vand.u32 %v2809, 2147483648
        %v2977 = vor.u32 1.1754944e-38, %v2976
        %v2978 = vsel %vm2975, %v2977, %v2973
        %v2979 = vmul.f32 1.0, %v2978
        %v2980 = vrcp.pop %v2810
        %v2981 = vmul.f32 %v2810, %v2980
        %v2982 = vsub.f32 1.0, %v2981
        %v2983 = vmul.f32 %v2980, %v2982
        %v2984 = vadd.f32 %v2980, %v2983
        %vm2985 = vweird.f32 %v2810
        %vm2986 = vweird.f32 %v2980
        %vm2987 = vmor %vm2985, %vm2986
        %v2988 = vsel %vm2987, %v2980, %v2984
        %v2989 = vand.u32 2147483647, %v2810
        %vm2990 = vcmp.eq.f32.partialorder %v2989, 8.507059e+37
        %v2991 = vand.u32 %v2810, 2147483648
        %v2992 = vor.u32 1.1754944e-38, %v2991
        %v2993 = vsel %vm2990, %v2992, %v2988
        %v2994 = vmul.f32 1.0, %v2993
        %v2995 = vrcp.pop %v2811
        %v2996 = vmul.f32 %v2811, %v2995
        %v2997 = vsub.f32 1.0, %v2996
        %v2998 = vmul.f32 %v2995, %v2997
        %v2999 = vadd.f32 %v2995, %v2998
        %vm3000 = vweird.f32 %v2811
        %vm3001 = vweird.f32 %v2995
        %vm3002 = vmor %vm3000, %vm3001
        %v3003 = vsel %vm3002, %v2995, %v2999
        %v3004 = vand.u32 2147483647, %v2811
        %vm3005 = vcmp.eq.f32.partialorder %v3004, 8.507059e+37
        %v3006 = vand.u32 %v2811, 2147483648
        %v3007 = vor.u32 1.1754944e-38, %v3006
        %v3008 = vsel %vm3005, %v3007, %v3003
        %v3009 = vmul.f32 1.0, %v3008
        %v3010 = vrcp.pop %v2812
        %v3011 = vmul.f32 %v2812, %v3010
        %v3012 = vsub.f32 1.0, %v3011
        %v3013 = vmul.f32 %v3010, %v3012
        %v3014 = vadd.f32 %v3010, %v3013
        %vm3015 = vweird.f32 %v2812
        %vm3016 = vweird.f32 %v3010
        %vm3017 = vmor %vm3015, %vm3016
        %v3018 = vsel %vm3017, %v3010, %v3014
        %v3019 = vand.u32 2147483647, %v2812
        %vm3020 = vcmp.eq.f32.partialorder %v3019, 8.507059e+37
        %v3021 = vand.u32 %v2812, 2147483648
        %v3022 = vor.u32 1.1754944e-38, %v3021
        %v3023 = vsel %vm3020, %v3022, %v3018
        %v3024 = vmul.f32 1.0, %v3023
        %v3025 = vrcp.pop %v2813
        %v3026 = vmul.f32 %v2813, %v3025
        %v3027 = vsub.f32 1.0, %v3026
        %v3028 = vmul.f32 %v3025, %v3027
        %v3029 = vadd.f32 %v3025, %v3028
        %vm3030 = vweird.f32 %v2813
        %vm3031 = vweird.f32 %v3025
        %vm3032 = vmor %vm3030, %vm3031
        %v3033 = vsel %vm3032, %v3025, %v3029
        %v3034 = vand.u32 2147483647, %v2813
        %vm3035 = vcmp.eq.f32.partialorder %v3034, 8.507059e+37
        %v3036 = vand.u32 %v2813, 2147483648
        %v3037 = vor.u32 1.1754944e-38, %v3036
        %v3038 = vsel %vm3035, %v3037, %v3033
        %v3039 = vmul.f32 1.0, %v3038
        %v3040 = vrcp.pop %v2814
        %v3041 = vmul.f32 %v2814, %v3040
        %v3042 = vsub.f32 1.0, %v3041
        %v3043 = vmul.f32 %v3040, %v3042
        %v3044 = vadd.f32 %v3040, %v3043
        %vm3045 = vweird.f32 %v2814
        %vm3046 = vweird.f32 %v3040
        %vm3047 = vmor %vm3045, %vm3046
        %v3048 = vsel %vm3047, %v3040, %v3044
        %v3049 = vand.u32 2147483647, %v2814
        %vm3050 = vcmp.eq.f32.partialorder %v3049, 8.507059e+37
        %v3051 = vand.u32 %v2814, 2147483648
        %v3052 = vor.u32 1.1754944e-38, %v3051
        %v3053 = vsel %vm3050, %v3052, %v3048
        %v3054 = vmul.f32 1.0, %v3053
        %v3055 = vmul.f32 %v2735, %v2829
        %v3056 = vmul.f32 %v2736, %v2844
        %v3057 = vmul.f32 %v2737, %v2859
        %v3058 = vmul.f32 %v2738, %v2874
        %v3059 = vmul.f32 %v2739, %v2889
        %v3060 = vmul.f32 %v2740, %v2904
        %v3061 = vmul.f32 %v2741, %v2919
        %v3062 = vmul.f32 %v2742, %v2934
        %v3063 = vmul.f32 %v2743, %v2949
        %v3064 = vmul.f32 %v2744, %v2964
        %v3065 = vmul.f32 %v2745, %v2979
        %v3066 = vmul.f32 %v2746, %v2994
        %v3067 = vmul.f32 %v2747, %v3009
        %v3068 = vmul.f32 %v2748, %v3024
        %v3069 = vmul.f32 %v2749, %v3039
        %v3070 = vmul.f32 %v2750, %v3054
        %3071 = vst [vmem:[%s258] sm:$0xff] %v3055
        %3072 = vst [vmem:[%s258 + $0x8] sm:$0xff] %v3056
        %3073 = vst [vmem:[%s258 + $0x10] sm:$0xff] %v3057
        %3074 = vst [vmem:[%s258 + $0x18] sm:$0xff] %v3058
        %3075 = vst [vmem:[%s258 + $0x20] sm:$0xff] %v3059
        %3076 = vst [vmem:[%s258 + $0x28] sm:$0xff] %v3060
        %3077 = vst [vmem:[%s258 + $0x30] sm:$0xff] %v3061
        %3078 = vst [vmem:[%s258 + $0x38] sm:$0xff] %v3062
        %3079 = vst [vmem:[%s258 + $0x40] sm:$0xff] %v3063
        %3080 = vst [vmem:[%s258 + $0x48] sm:$0xff] %v3064
        %3081 = vst [vmem:[%s258 + $0x50] sm:$0xff] %v3065
        %3082 = vst [vmem:[%s258 + $0x58] sm:$0xff] %v3066
        %3083 = vst [vmem:[%s258 + $0x60] sm:$0xff] %v3067
        %3084 = vst [vmem:[%s258 + $0x68] sm:$0xff] %v3068
        %3085 = vst [vmem:[%s258 + $0x70] sm:$0xff] %v3069
        %3086 = vst [vmem:[%s258 + $0x78] sm:$0xff] %v3070
        %s3087 = sand.u32 %s156, 1
        %s3088 = scalar_lea.sflag [#allocation5], %s3087
        %s3089 = sand.u32 %s156, 1
        %s3090 = smul.addr %s3089, 128
        %s3091 = scalar_lea.vmem [#allocation6], %s3090
        // Predicated region
        $region45: #{tpu_custom_call.1} parent=39 // pred_check
          %p3092 = pneg %p166
        $region46: #{tpu_custom_call.1} parent=39 // pred_check_branch
          %3094 = sbr.rel (%p3092) target = $region48
        $region47: #{tpu_custom_call.1} parent=39 // pred_region
          %s3095 = smul.u32 8, %s25
          %3097 = vsyncadd %s3088, 0
          %s3098 = smul.addr %s3095, 2
          %s3099 = smul.addr %s24, 32
          %s3100 = sadd.s32 %s3098, %s3099
          %s3101 = smul.addr %s3100, 8
          %s3102 = scalar_lea.hbm %s5, %s3101
          %s3103 = sshll.u32 %s3091, 4
          %s3104 = int_to_ptr.vmem [resolvable:$true] %s3103
          %s3105 = sshll.u32 %s3102, 4
          %s3106 = int_to_ptr.hbm [resolvable:$true] %s3105
          %3111 = dma.vmem_to_hbm [thread:$0]  %s3104, 2048, %s3106, %s3088, 128, 128, 8
        $region48: #{tpu_custom_call.1} parent=39 // pred_fallthru
          _
      $region40: #{tpu_custom_call.1} parent=5 // pred_fallthru
        _
      %p3112 = scmp.le.s32.totalorder 2, %s15
      // Predicated region
      $region49: #{tpu_custom_call.1} parent=5 // pred_check
        %p3113 = pneg %p3112
      $region50: #{tpu_custom_call.1} parent=5 // pred_check_branch
        %3115 = sbr.rel (%p3113) target = $region52
      $region51: #{tpu_custom_call.1} parent=5 // pred_region
        %s3116 = ssub.s32 %s15, 2
        // Predicated region
        $region53: #{tpu_custom_call.1} parent=51 // pred_check
          %p3117 = pneg %p172
        $region54: #{tpu_custom_call.1} parent=51 // pred_check_branch
          %3119 = sbr.rel (%p3117) target = $region56
        $region55: #{tpu_custom_call.1} parent=51 // pred_region
          %s3120 = sand.u32 %s157, 1
          %s3121 = scalar_lea.sflag [#allocation5], %s3120
          %s3122 = sand.u32 %s157, 1
          %s3123 = smul.addr %s3122, 128
          %s3124 = scalar_lea.vmem [#allocation6], %s3123
          %3126 = dma.done %s3121, 2048
        $region56: #{tpu_custom_call.1} parent=51 // pred_fallthru
          _
      $region52: #{tpu_custom_call.1} parent=5 // pred_fallthru
        _
    $region6: #{tpu_custom_call.1} parent=1 // loop_footer
      %s19 = sadd.s32 1, %s15
    $region7: #{tpu_custom_call.1} parent=1 // loop_footer_branch
      %14 = sbr.rel target = $region3
    $region8: #{tpu_custom_call.1} parent=1 // loop_exit
      _
    %3127 = vsyncpa [#allocation4], 1
    %s3128 = scalar_lea.sflag [#allocation4], 1
    %3129 = vsyncpa %s3128, 1
    %3130 = vsyncpa [#allocation5], 1
    %s3131 = scalar_lea.sflag [#allocation5], 1
    %3132 = vsyncpa %s3131, 1

</llo_original>
